<compile_context>
chip_gen: v6e
topology: v6e:2x2x1
jax: 0.10.0
libtpu: 0.0.40
codegen_flags: <defaults>
</compile_context>

<pallas_src>
import jax
import jax.numpy as jnp
from jax.experimental import pallas as pl
from jax.experimental.pallas import tpu as pltpu

LEAKY_SLOPE = 0.2
BN_EPS = 1e-5


# ---------------------------------------------------------------------------
# in-kernel helpers
# ---------------------------------------------------------------------------
def _zero_halo(pad_ref):
    """Zero only the 1-pixel halo strips of an (H+2, W+2, C) VMEM scratch."""
    hp, wp, c = pad_ref.shape
    zrow = jnp.zeros((1, wp, c), pad_ref.dtype)
    zcol = jnp.zeros((hp, 1, c), pad_ref.dtype)
    pad_ref[0:1, :, :] = zrow
    pad_ref[hp - 1:hp, :, :] = zrow
    pad_ref[:, 0:1, :] = zcol
    pad_ref[:, wp - 1:wp, :] = zcol


def _conv3x3(pad_ref, w_ref):
    """3x3 / stride-1 conv of a padded VMEM image (halo already zero).

    The 9 taps are gathered into an im2col value and contracted with ONE MXU
    dot of K = 9*C_in (instead of 9 taps of K = C_in), bf16 operands, f32
    accumulation.  Returns (H*W, C_out) float32.  Conv bias is intentionally
    omitted: it is exactly cancelled by training-mode BatchNorm.
    """
    hp, wp, cin = pad_ref.shape
    h, w = hp - 2, wp - 2
    taps = []
    for ky in range(3):
        for kx in range(3):
            taps.append(pad_ref[ky:ky + h, kx:kx + w, :].reshape(h * w, cin))
    col = jnp.concatenate(taps, axis=-1)                    # (H*W, 9*Cin) bf16
    return jnp.dot(col, w_ref[...], preferred_element_type=jnp.float32)


# ---------------------------------------------------------------------------
# pass 1: conv1 + per-image BN1 partial stats
# ---------------------------------------------------------------------------
def _conv1_stats_kernel(x_ref, w_ref, y_ref, s_ref, q_ref, xpad_ref):
    _, h, w, cin = x_ref.shape
    cout = y_ref.shape[-1]
    _zero_halo(xpad_ref)                                    # halo only, every step
    xpad_ref[1:1 + h, 1:1 + w, :] = x_ref[...].reshape(h, w, cin).astype(xpad_ref.dtype)
    acc = _conv3x3(xpad_ref, w_ref)                         # (H*W, Cout) f32
    s_ref[...] = jnp.sum(acc, axis=0, keepdims=True).reshape(1, 1, cout)
    q_ref[...] = jnp.sum(acc * acc, axis=0, keepdims=True).reshape(1, 1, cout)
    y_ref[...] = acc.reshape(1, h * w, cout).astype(y_ref.dtype)


# ---------------------------------------------------------------------------
# pass 2: BN1 affine + LeakyReLU -> conv2 + per-image BN2 partial stats
# ---------------------------------------------------------------------------
def _bn1_conv2_stats_kernel(y1_ref, sc_ref, sh_ref, w_ref,
                            y2_ref, s_ref, q_ref, hpad_ref):
    hp, wp, cout = hpad_ref.shape
    h, w = hp - 2, wp - 2
    a = y1_ref[...].reshape(h * w, cout).astype(jnp.float32)
    a = a * sc_ref[...] + sh_ref[...]                       # BN1 (batch stats folded)
    a = jnp.where(a > 0, a, LEAKY_SLOPE * a)                # LeakyReLU(0.2), f32 math
    _zero_halo(hpad_ref)
    hpad_ref[1:1 + h, 1:1 + w, :] = a.reshape(h, w, cout).astype(hpad_ref.dtype)
    acc = _conv3x3(hpad_ref, w_ref)
    s_ref[...] = jnp.sum(acc, axis=0, keepdims=True).reshape(1, 1, cout)
    q_ref[...] = jnp.sum(acc * acc, axis=0, keepdims=True).reshape(1, 1, cout)
    y2_ref[...] = acc.reshape(1, h * w, cout).astype(y2_ref.dtype)


# ---------------------------------------------------------------------------
# pass 3: BN2 affine + LeakyReLU, lane-dense (W*Cout) output layout
# ---------------------------------------------------------------------------
def _bn2_lrelu_kernel(y2_ref, sc_ref, sh_ref, o_ref):
    _, h, wc = y2_ref.shape
    a = y2_ref[...].reshape(h, wc).astype(jnp.float32)
    a = a * sc_ref[...] + sh_ref[...]                       # per-channel params tiled over W
    o_ref[...] = jnp.where(a > 0, a, LEAKY_SLOPE * a).reshape(1, h, wc)


# ---------------------------------------------------------------------------
# wrapper
# ---------------------------------------------------------------------------
def _bn_affine(psum, psumsq, count, gamma, beta):
    """Fold training-mode batch-norm stats (one-pass sum/sumsq) into an affine."""
    mean = psum / count
    var = jnp.maximum(psumsq / count - mean * mean, 0.0)    # biased variance
    scale = gamma * jax.lax.rsqrt(var + BN_EPS)
    return scale, beta - mean * scale


def _vmem_limit_bytes(*nbytes):
    """Scoped-VMEM request sized from actual per-step buffers (+headroom)."""
    need = 2 * sum(int(b) for b in nbytes) + (8 << 20)      # x2 for double buffering
    return int(min(max(need, 16 << 20), 48 << 20))


@jax.jit
def doubleconv_forward(x_nchw, params):
    """Doubleconv forward.  x_nchw: (N, Cin, H, W) f32 -> (N, Cout, H, W) f32."""
    w1, b1, g1, be1, w2, b2, g2, be2 = params
    del b1, b2  # conv biases are exactly cancelled by training-mode BatchNorm
    n, cin, h, w = x_nchw.shape
    cout = w1.shape[-1]
    m = n * h * w

    # NCHW -> NHWC (channels on the lane dim).  MXU operands are bf16; the
    # activation f32->bf16 cast happens inside the kernel (no extra HBM pass).
    x = jnp.transpose(x_nchw, (0, 2, 3, 1)).astype(jnp.float32)
    w1c = w1.reshape(9 * cin, cout).astype(jnp.bfloat16)    # row = (ky*3+kx)*Cin + ci
    w2c = w2.reshape(9 * cout, cout).astype(jnp.bfloat16)

    cmax = max(cin, cout)
    cparams = pltpu.CompilerParams(
        dimension_semantics=("parallel",),                  # megacore across images (v7x)
        vmem_limit_bytes=_vmem_limit_bytes(
            h * w * cin * 4,                                # input block (f32)
            2 * h * w * cout * 2,                           # y1 / y2 blocks (bf16)
            (h + 2) * (w + 2) * cmax * 2,                   # padded scratch (bf16)
            h * w * 9 * cmax * 2,                           # im2col value (bf16)
            9 * cmax * cout * 2))                           # weights (bf16)

    # ---- pass 1: conv1 (single K=9*Cin bf16 MXU dot) + BN1 partial stats ----
    y1, s1, q1 = pl.pallas_call(
        _conv1_stats_kernel,
        grid_spec=pltpu.PrefetchScalarGridSpec(
            num_scalar_prefetch=0,
            grid=(n,),
            in_specs=[
                pl.BlockSpec((1, h, w, cin), lambda i: (i, 0, 0, 0)),
                pl.BlockSpec((9 * cin, cout), lambda i: (0, 0)),
            ],
            out_specs=[
                pl.BlockSpec((1, h * w, cout), lambda i: (i, 0, 0)),
                pl.BlockSpec((1, 1, cout), lambda i: (i, 0, 0)),
                pl.BlockSpec((1, 1, cout), lambda i: (i, 0, 0)),
            ],
            scratch_shapes=[pltpu.VMEM((h + 2, w + 2, cin), jnp.bfloat16)]),
        out_shape=(
            jax.ShapeDtypeStruct((n, h * w, cout), jnp.bfloat16),
            jax.ShapeDtypeStruct((n, 1, cout), jnp.float32),
            jax.ShapeDtypeStruct((n, 1, cout), jnp.float32),
        ),
        compiler_params=cparams,
    )(x, w1c)

    scale1, shift1 = _bn_affine(jnp.sum(s1, axis=(0, 1)), jnp.sum(q1, axis=(0, 1)),
                                m, g1, be1)

    # ---- pass 2: BN1 affine + LeakyReLU -> conv2 + BN2 partial stats ----
    y2, s2, q2 = pl.pallas_call(
        _bn1_conv2_stats_kernel,
        grid_spec=pltpu.PrefetchScalarGridSpec(
            num_scalar_prefetch=0,
            grid=(n,),
            in_specs=[
                pl.BlockSpec((1, h * w, cout), lambda i: (i, 0, 0)),
                pl.BlockSpec((1, cout), lambda i: (0, 0)),
                pl.BlockSpec((1, cout), lambda i: (0, 0)),
                pl.BlockSpec((9 * cout, cout), lambda i: (0, 0)),
            ],
            out_specs=[
                pl.BlockSpec((1, h * w, cout), lambda i: (i, 0, 0)),
                pl.BlockSpec((1, 1, cout), lambda i: (i, 0, 0)),
                pl.BlockSpec((1, 1, cout), lambda i: (i, 0, 0)),
            ],
            scratch_shapes=[pltpu.VMEM((h + 2, w + 2, cout), jnp.bfloat16)]),
        out_shape=(
            jax.ShapeDtypeStruct((n, h * w, cout), jnp.bfloat16),
            jax.ShapeDtypeStruct((n, 1, cout), jnp.float32),
            jax.ShapeDtypeStruct((n, 1, cout), jnp.float32),
        ),
        compiler_params=cparams,
    )(y1, scale1.reshape(1, cout), shift1.reshape(1, cout), w2c)

    scale2, shift2 = _bn_affine(jnp.sum(s2, axis=(0, 1)), jnp.sum(q2, axis=(0, 1)),
                                m, g2, be2)

    # ---- pass 3: BN2 affine + LeakyReLU, lane-dense (W*Cout) output ----
    y2_ld = y2.reshape(n, h, w * cout)                      # contiguity-preserving view
    sc_t = jnp.tile(scale2, w).reshape(1, w * cout)         # channel params tiled over W
    sh_t = jnp.tile(shift2, w).reshape(1, w * cout)
    out_ld = pl.pallas_call(
        _bn2_lrelu_kernel,
        grid_spec=pltpu.PrefetchScalarGridSpec(
            num_scalar_prefetch=0,
            grid=(n,),
            in_specs=[
                pl.BlockSpec((1, h, w * cout), lambda i: (i, 0, 0)),
                pl.BlockSpec((1, w * cout), lambda i: (0, 0)),
                pl.BlockSpec((1, w * cout), lambda i: (0, 0)),
            ],
            out_specs=pl.BlockSpec((1, h, w * cout), lambda i: (i, 0, 0))),
        out_shape=jax.ShapeDtypeStruct((n, h, w * cout), jnp.float32),
        compiler_params=cparams,
    )(y2_ld, sc_t, sh_t)

    # lane-dense -> NHWC -> NCHW (PyTorch convention)
    return jnp.transpose(out_ld.reshape(n, h, w, cout), (0, 3, 1, 2))


# ---------------------------------------------------------------------------
# params / reference / test
# ---------------------------------------------------------------------------
def init_params(key, in_channels, out_channels):
    """Parameter init (shapes mirror nn.Conv2d / nn.BatchNorm2d of the module)."""
    k1, k2, k3, k4 = jax.random.split(key, 4)
    # Conv weights stored in HWIO layout for the NHWC kernels (PyTorch is OIHW).
    w1 = 0.1 * jax.random.normal(k1, (3, 3, in_channels, out_channels), jnp.float32)
    b1 = 0.1 * jax.random.normal(k2, (out_channels,), jnp.float32)
    w2 = 0.1 * jax.random.normal(k3, (3, 3, out_channels, out_channels), jnp.float32)
    b2 = 0.1 * jax.random.normal(k4, (out_channels,), jnp.float32)
    # BatchNorm2d default init: weight (gamma) = 1, bias (beta) = 0.
    g1 = jnp.ones((out_channels,), jnp.float32)
    be1 = jnp.zeros((out_channels,), jnp.float32)
    g2 = jnp.ones((out_channels,), jnp.float32)
    be2 = jnp.zeros((out_channels,), jnp.float32)
    return (w1, b1, g1, be1, w2, b2, g2, be2)


def _reference_doubleconv(x_nchw, params):
    """Pure-JAX f32 reference matching the PyTorch module in training mode."""
    w1, b1, g1, be1, w2, b2, g2, be2 = params

    def block(hh, wgt, b, g, be):
        y = jax.lax.conv_general_dilated(
            hh, wgt, window_strides=(1, 1), padding=((1, 1), (1, 1)),
            dimension_numbers=("NHWC", "HWIO", "NHWC")) + b
        mu = jnp.mean(y, axis=(0, 1, 2))
        var = jnp.mean(jnp.square(y - mu), axis=(0, 1, 2))   # biased (training mode)
        y = (y - mu) * jax.lax.rsqrt(var + BN_EPS) * g + be
        return jnp.where(y > 0, y, LEAKY_SLOPE * y)

    hh = jnp.transpose(x_nchw, (0, 2, 3, 1)).astype(jnp.float32)
    hh = block(hh, w1, b1, g1, be1)
    hh = block(hh, w2, b2, g2, be2)
    return jnp.transpose(hh, (0, 3, 1, 2))


if __name__ == "__main__":
    N, Cin, Cout, H, W = 2, 4, 8, 16, 16
    key = jax.random.PRNGKey(0)
    kx, kp = jax.random.split(key)
    x = jax.random.normal(kx, (N, Cin, H, W), jnp.float32)    # NCHW, like PyTorch
    params = init_params(kp, Cin, Cout)

    y = doubleconv_forward(x, params)
    jax.block_until_ready(y)
    assert y.shape == (N, Cout, H, W), y.shape

    # bf16 MXU operands -> small numerical differences vs the pure-f32 reference.
    y_ref = _reference_doubleconv(x, params)
    err = float(jnp.max(jnp.abs(y - y_ref)))
    assert err < 0.3, f"max |pallas - reference| = {err}"

    print("KERNEL_OK")
</pallas_src>

<mosaic_0001>
module attributes {stable_mosaic.version = 11 : i64} {
  func.func @_conv1_stats_kernel(%arg0: i32, %arg1: memref<1x16x16x4xf32, #tpu.memory_space<vmem>>, %arg2: memref<36x8xbf16, #tpu.memory_space<vmem>>, %arg3: memref<1x256x8xbf16, #tpu.memory_space<vmem>>, %arg4: memref<1x1x8xf32, #tpu.memory_space<vmem>>, %arg5: memref<1x1x8xf32, #tpu.memory_space<vmem>>, %arg6: memref<18x18x4xbf16, #tpu.memory_space<vmem>>) attributes {dimension_semantics = [#tpu.dimension_semantics<parallel>], iteration_bounds = array<i64: 2>, scalar_prefetch = 0 : i64, scratch_operands = 1 : i64, tpu.core_type = #tpu.core_type<tc>, window_params = [{transform_indices = @transform_0, window_bounds = array<i64: 1, 16, 16, 4>}, {pipeline_mode = #tpu.pipeline_mode<synchronous>, transform_indices = @transform_1, window_bounds = array<i64: 36, 8>}, {transform_indices = @transform_2, window_bounds = array<i64: 1, 256, 8>}, {transform_indices = @transform_3, window_bounds = array<i64: 1, 1, 8>}, {transform_indices = @transform_4, window_bounds = array<i64: 1, 1, 8>}]} {
    %cst = arith.constant 0.000000e+00 : bf16
    %0 = vector.broadcast %cst : bf16 to vector<1x18x4xbf16>
    %cst_0 = arith.constant 0.000000e+00 : bf16
    %1 = vector.broadcast %cst_0 : bf16 to vector<18x1x4xbf16>
    %c0 = arith.constant 0 : index
    %c0_1 = arith.constant 0 : index
    %c0_2 = arith.constant 0 : index
    %2 = vector.load %arg6[%c0, %c0_1, %c0_2] : memref<18x18x4xbf16, #tpu.memory_space<vmem>>, vector<1x18x4xbf16>
    tpu.vector_store %arg6[%c0, %c0_1, %c0_2], %0 {strides = array<i32>} : memref<18x18x4xbf16, #tpu.memory_space<vmem>>, vector<1x18x4xbf16>,
    %c17 = arith.constant 17 : index
    %c0_3 = arith.constant 0 : index
    %c0_4 = arith.constant 0 : index
    %3 = vector.load %arg6[%c17, %c0_3, %c0_4] : memref<18x18x4xbf16, #tpu.memory_space<vmem>>, vector<1x18x4xbf16>
    tpu.vector_store %arg6[%c17, %c0_3, %c0_4], %0 {strides = array<i32>} : memref<18x18x4xbf16, #tpu.memory_space<vmem>>, vector<1x18x4xbf16>,
    %c0_5 = arith.constant 0 : index
    %c0_6 = arith.constant 0 : index
    %c0_7 = arith.constant 0 : index
    %4 = vector.load %arg6[%c0_5, %c0_6, %c0_7] : memref<18x18x4xbf16, #tpu.memory_space<vmem>>, vector<18x1x4xbf16>
    tpu.vector_store %arg6[%c0_5, %c0_6, %c0_7], %1 {strides = array<i32>} : memref<18x18x4xbf16, #tpu.memory_space<vmem>>, vector<18x1x4xbf16>,
    %c0_8 = arith.constant 0 : index
    %c17_9 = arith.constant 17 : index
    %c0_10 = arith.constant 0 : index
    %5 = vector.load %arg6[%c0_8, %c17_9, %c0_10] : memref<18x18x4xbf16, #tpu.memory_space<vmem>>, vector<18x1x4xbf16>
    tpu.vector_store %arg6[%c0_8, %c17_9, %c0_10], %1 {strides = array<i32>} : memref<18x18x4xbf16, #tpu.memory_space<vmem>>, vector<18x1x4xbf16>,
    %c0_11 = arith.constant 0 : index
    %c0_12 = arith.constant 0 : index
    %c0_13 = arith.constant 0 : index
    %c0_14 = arith.constant 0 : index
    %6 = vector.load %arg1[%c0_11, %c0_12, %c0_13, %c0_14] : memref<1x16x16x4xf32, #tpu.memory_space<vmem>>, vector<1x16x16x4xf32>
    %7 = vector.shape_cast %6 : vector<1x16x16x4xf32> to vector<16x16x4xf32>
    %8 = arith.truncf %7 : vector<16x16x4xf32> to vector<16x16x4xbf16>
    %c1 = arith.constant 1 : index
    %c1_15 = arith.constant 1 : index
    %c0_16 = arith.constant 0 : index
    %9 = vector.load %arg6[%c1, %c1_15, %c0_16] : memref<18x18x4xbf16, #tpu.memory_space<vmem>>, vector<16x16x4xbf16>
    tpu.vector_store %arg6[%c1, %c1_15, %c0_16], %8 {strides = array<i32>} : memref<18x18x4xbf16, #tpu.memory_space<vmem>>, vector<16x16x4xbf16>,
    %c0_17 = arith.constant 0 : index
    %c0_18 = arith.constant 0 : index
    %c0_19 = arith.constant 0 : index
    %10 = vector.load %arg6[%c0_17, %c0_18, %c0_19] : memref<18x18x4xbf16, #tpu.memory_space<vmem>>, vector<16x16x4xbf16>
    %11 = vector.shape_cast %10 : vector<16x16x4xbf16> to vector<256x4xbf16>
    %c0_20 = arith.constant 0 : index
    %c1_21 = arith.constant 1 : index
    %c0_22 = arith.constant 0 : index
    %12 = vector.load %arg6[%c0_20, %c1_21, %c0_22] : memref<18x18x4xbf16, #tpu.memory_space<vmem>>, vector<16x16x4xbf16>
    %13 = vector.shape_cast %12 : vector<16x16x4xbf16> to vector<256x4xbf16>
    %c0_23 = arith.constant 0 : index
    %c2 = arith.constant 2 : index
    %c0_24 = arith.constant 0 : index
    %14 = vector.load %arg6[%c0_23, %c2, %c0_24] : memref<18x18x4xbf16, #tpu.memory_space<vmem>>, vector<16x16x4xbf16>
    %15 = vector.shape_cast %14 : vector<16x16x4xbf16> to vector<256x4xbf16>
    %c1_25 = arith.constant 1 : index
    %c0_26 = arith.constant 0 : index
    %c0_27 = arith.constant 0 : index
    %16 = vector.load %arg6[%c1_25, %c0_26, %c0_27] : memref<18x18x4xbf16, #tpu.memory_space<vmem>>, vector<16x16x4xbf16>
    %17 = vector.shape_cast %16 : vector<16x16x4xbf16> to vector<256x4xbf16>
    %c1_28 = arith.constant 1 : index
    %c1_29 = arith.constant 1 : index
    %c0_30 = arith.constant 0 : index
    %18 = vector.load %arg6[%c1_28, %c1_29, %c0_30] : memref<18x18x4xbf16, #tpu.memory_space<vmem>>, vector<16x16x4xbf16>
    %19 = vector.shape_cast %18 : vector<16x16x4xbf16> to vector<256x4xbf16>
    %c1_31 = arith.constant 1 : index
    %c2_32 = arith.constant 2 : index
    %c0_33 = arith.constant 0 : index
    %20 = vector.load %arg6[%c1_31, %c2_32, %c0_33] : memref<18x18x4xbf16, #tpu.memory_space<vmem>>, vector<16x16x4xbf16>
    %21 = vector.shape_cast %20 : vector<16x16x4xbf16> to vector<256x4xbf16>
    %c2_34 = arith.constant 2 : index
    %c0_35 = arith.constant 0 : index
    %c0_36 = arith.constant 0 : index
    %22 = vector.load %arg6[%c2_34, %c0_35, %c0_36] : memref<18x18x4xbf16, #tpu.memory_space<vmem>>, vector<16x16x4xbf16>
    %23 = vector.shape_cast %22 : vector<16x16x4xbf16> to vector<256x4xbf16>
    %c2_37 = arith.constant 2 : index
    %c1_38 = arith.constant 1 : index
    %c0_39 = arith.constant 0 : index
    %24 = vector.load %arg6[%c2_37, %c1_38, %c0_39] : memref<18x18x4xbf16, #tpu.memory_space<vmem>>, vector<16x16x4xbf16>
    %25 = vector.shape_cast %24 : vector<16x16x4xbf16> to vector<256x4xbf16>
    %c2_40 = arith.constant 2 : index
    %c2_41 = arith.constant 2 : index
    %c0_42 = arith.constant 0 : index
    %26 = vector.load %arg6[%c2_40, %c2_41, %c0_42] : memref<18x18x4xbf16, #tpu.memory_space<vmem>>, vector<16x16x4xbf16>
    %27 = vector.shape_cast %26 : vector<16x16x4xbf16> to vector<256x4xbf16>
    %28 = tpu.concatenate %11, %13, %15, %17, %19, %21, %23, %25, %27 in 1 : vector<256x4xbf16>, vector<256x4xbf16>, vector<256x4xbf16>, vector<256x4xbf16>, vector<256x4xbf16>, vector<256x4xbf16>, vector<256x4xbf16>, vector<256x4xbf16>, vector<256x4xbf16> -> vector<256x36xbf16>
    %c0_43 = arith.constant 0 : index
    %c0_44 = arith.constant 0 : index
    %29 = vector.load %arg2[%c0_43, %c0_44] : memref<36x8xbf16, #tpu.memory_space<vmem>>, vector<36x8xbf16>
    %cst_45 = arith.constant dense<0.000000e+00> : vector<256x8xf32>
    %30 = tpu.matmul %28, %29, %cst_45 {dimension_numbers = #tpu.dot_dimension_numbers<[1], [0], [0], [1], [0, 0, 1, 1], [], []>} : vector<256x36xbf16>, vector<36x8xbf16>, vector<256x8xf32> -> vector<256x8xf32>
    %cst_46 = arith.constant dense<0.000000e+00> : vector<8xf32>
    %31 = vector.multi_reduction <add>, %30, %cst_46 [0] : vector<256x8xf32> to vector<8xf32>
    %32 = vector.shape_cast %31 : vector<8xf32> to vector<1x8xf32>
    %33 = vector.shape_cast %32 : vector<1x8xf32> to vector<1x1x8xf32>
    %c0_47 = arith.constant 0 : index
    %c0_48 = arith.constant 0 : index
    %c0_49 = arith.constant 0 : index
    %34 = vector.load %arg4[%c0_47, %c0_48, %c0_49] : memref<1x1x8xf32, #tpu.memory_space<vmem>>, vector<1x1x8xf32>
    tpu.vector_store %arg4[%c0_47, %c0_48, %c0_49], %33 {strides = array<i32>} : memref<1x1x8xf32, #tpu.memory_space<vmem>>, vector<1x1x8xf32>,
    %35 = arith.mulf %30, %30 : vector<256x8xf32>
    %cst_50 = arith.constant dense<0.000000e+00> : vector<8xf32>
    %36 = vector.multi_reduction <add>, %35, %cst_50 [0] : vector<256x8xf32> to vector<8xf32>
    %37 = vector.shape_cast %36 : vector<8xf32> to vector<1x8xf32>
    %38 = vector.shape_cast %37 : vector<1x8xf32> to vector<1x1x8xf32>
    %c0_51 = arith.constant 0 : index
    %c0_52 = arith.constant 0 : index
    %c0_53 = arith.constant 0 : index
    %39 = vector.load %arg5[%c0_51, %c0_52, %c0_53] : memref<1x1x8xf32, #tpu.memory_space<vmem>>, vector<1x1x8xf32>
    tpu.vector_store %arg5[%c0_51, %c0_52, %c0_53], %38 {strides = array<i32>} : memref<1x1x8xf32, #tpu.memory_space<vmem>>, vector<1x1x8xf32>,
    %40 = vector.shape_cast %30 : vector<256x8xf32> to vector<1x256x8xf32>
    %41 = arith.truncf %40 : vector<1x256x8xf32> to vector<1x256x8xbf16>
    %c0_54 = arith.constant 0 : index
    %c0_55 = arith.constant 0 : index
    %c0_56 = arith.constant 0 : index
    %42 = vector.load %arg3[%c0_54, %c0_55, %c0_56] : memref<1x256x8xbf16, #tpu.memory_space<vmem>>, vector<1x256x8xbf16>
    tpu.vector_store %arg3[%c0_54, %c0_55, %c0_56], %41 {strides = array<i32>} : memref<1x256x8xbf16, #tpu.memory_space<vmem>>, vector<1x256x8xbf16>,
    return
  }
  func.func @transform_0(%arg0: i32) -> (i32, i32, i32, i32) {
    %c0_i32 = arith.constant 0 : i32
    %c0_i32_0 = arith.constant 0 : i32
    %c0_i32_1 = arith.constant 0 : i32
    %c0_i32_2 = arith.constant 0 : i32
    return %arg0, %c0_i32, %c0_i32_0, %c0_i32_1 : i32, i32, i32, i32
  }
  func.func @transform_1(%arg0: i32) -> (i32, i32) {
    %c0_i32 = arith.constant 0 : i32
    %c0_i32_0 = arith.constant 0 : i32
    %c0_i32_1 = arith.constant 0 : i32
    return %c0_i32, %c0_i32_0 : i32, i32
  }
  func.func @transform_2(%arg0: i32) -> (i32, i32, i32) {
    %c0_i32 = arith.constant 0 : i32
    %c0_i32_0 = arith.constant 0 : i32
    %c0_i32_1 = arith.constant 0 : i32
    return %arg0, %c0_i32, %c0_i32_0 : i32, i32, i32
  }
  func.func @transform_3(%arg0: i32) -> (i32, i32, i32) {
    %c0_i32 = arith.constant 0 : i32
    %c0_i32_0 = arith.constant 0 : i32
    %c0_i32_1 = arith.constant 0 : i32
    return %arg0, %c0_i32, %c0_i32_0 : i32, i32, i32
  }
  func.func @transform_4(%arg0: i32) -> (i32, i32, i32) {
    %c0_i32 = arith.constant 0 : i32
    %c0_i32_0 = arith.constant 0 : i32
    %c0_i32_1 = arith.constant 0 : i32
    return %arg0, %c0_i32, %c0_i32_0 : i32, i32, i32
  }
}

module attributes {stable_mosaic.version = 11 : i64} {
  func.func @_bn1_conv2_stats_kernel(%arg0: i32, %arg1: memref<1x256x8xbf16, #tpu.memory_space<vmem>>, %arg2: memref<1x8xf32, #tpu.memory_space<vmem>>, %arg3: memref<1x8xf32, #tpu.memory_space<vmem>>, %arg4: memref<72x8xbf16, #tpu.memory_space<vmem>>, %arg5: memref<1x256x8xbf16, #tpu.memory_space<vmem>>, %arg6: memref<1x1x8xf32, #tpu.memory_space<vmem>>, %arg7: memref<1x1x8xf32, #tpu.memory_space<vmem>>, %arg8: memref<18x18x8xbf16, #tpu.memory_space<vmem>>) attributes {dimension_semantics = [#tpu.dimension_semantics<parallel>], iteration_bounds = array<i64: 2>, scalar_prefetch = 0 : i64, scratch_operands = 1 : i64, tpu.core_type = #tpu.core_type<tc>, window_params = [{transform_indices = @transform_0, window_bounds = array<i64: 1, 256, 8>}, {pipeline_mode = #tpu.pipeline_mode<synchronous>, transform_indices = @transform_1, window_bounds = array<i64: 1, 8>}, {pipeline_mode = #tpu.pipeline_mode<synchronous>, transform_indices = @transform_2, window_bounds = array<i64: 1, 8>}, {pipeline_mode = #tpu.pipeline_mode<synchronous>, transform_indices = @transform_3, window_bounds = array<i64: 72, 8>}, {transform_indices = @transform_4, window_bounds = array<i64: 1, 256, 8>}, {transform_indices = @transform_5, window_bounds = array<i64: 1, 1, 8>}, {transform_indices = @transform_6, window_bounds = array<i64: 1, 1, 8>}]} {
    %c0 = arith.constant 0 : index
    %c0_0 = arith.constant 0 : index
    %c0_1 = arith.constant 0 : index
    %0 = vector.load %arg1[%c0, %c0_0, %c0_1] : memref<1x256x8xbf16, #tpu.memory_space<vmem>>, vector<1x256x8xbf16>
    %1 = vector.shape_cast %0 : vector<1x256x8xbf16> to vector<256x8xbf16>
    %2 = arith.extf %1 : vector<256x8xbf16> to vector<256x8xf32>
    %c0_2 = arith.constant 0 : index
    %c0_3 = arith.constant 0 : index
    %3 = vector.load %arg2[%c0_2, %c0_3] : memref<1x8xf32, #tpu.memory_space<vmem>>, vector<1x8xf32>
    %4 = vector.broadcast %3 : vector<1x8xf32> to vector<256x8xf32>
    %5 = arith.mulf %2, %4 : vector<256x8xf32>
    %c0_4 = arith.constant 0 : index
    %c0_5 = arith.constant 0 : index
    %6 = vector.load %arg3[%c0_4, %c0_5] : memref<1x8xf32, #tpu.memory_space<vmem>>, vector<1x8xf32>
    %7 = vector.broadcast %6 : vector<1x8xf32> to vector<256x8xf32>
    %8 = arith.addf %5, %7 : vector<256x8xf32>
    %cst = arith.constant 0.000000e+00 : f32
    %9 = vector.broadcast %cst : f32 to vector<256x8xf32>
    %10 = arith.cmpf ogt, %8, %9 : vector<256x8xf32>
    %cst_6 = arith.constant 2.000000e-01 : f32
    %11 = vector.broadcast %cst_6 : f32 to vector<256x8xf32>
    %12 = arith.mulf %11, %8 : vector<256x8xf32>
    %13 = arith.select %10, %8, %12 : vector<256x8xi1>, vector<256x8xf32>
    %cst_7 = arith.constant 0.000000e+00 : bf16
    %14 = vector.broadcast %cst_7 : bf16 to vector<1x18x8xbf16>
    %cst_8 = arith.constant 0.000000e+00 : bf16
    %15 = vector.broadcast %cst_8 : bf16 to vector<18x1x8xbf16>
    %c0_9 = arith.constant 0 : index
    %c0_10 = arith.constant 0 : index
    %c0_11 = arith.constant 0 : index
    %16 = vector.load %arg8[%c0_9, %c0_10, %c0_11] : memref<18x18x8xbf16, #tpu.memory_space<vmem>>, vector<1x18x8xbf16>
    tpu.vector_store %arg8[%c0_9, %c0_10, %c0_11], %14 {strides = array<i32>} : memref<18x18x8xbf16, #tpu.memory_space<vmem>>, vector<1x18x8xbf16>,
    %c17 = arith.constant 17 : index
    %c0_12 = arith.constant 0 : index
    %c0_13 = arith.constant 0 : index
    %17 = vector.load %arg8[%c17, %c0_12, %c0_13] : memref<18x18x8xbf16, #tpu.memory_space<vmem>>, vector<1x18x8xbf16>
    tpu.vector_store %arg8[%c17, %c0_12, %c0_13], %14 {strides = array<i32>} : memref<18x18x8xbf16, #tpu.memory_space<vmem>>, vector<1x18x8xbf16>,
    %c0_14 = arith.constant 0 : index
    %c0_15 = arith.constant 0 : index
    %c0_16 = arith.constant 0 : index
    %18 = vector.load %arg8[%c0_14, %c0_15, %c0_16] : memref<18x18x8xbf16, #tpu.memory_space<vmem>>, vector<18x1x8xbf16>
    tpu.vector_store %arg8[%c0_14, %c0_15, %c0_16], %15 {strides = array<i32>} : memref<18x18x8xbf16, #tpu.memory_space<vmem>>, vector<18x1x8xbf16>,
    %c0_17 = arith.constant 0 : index
    %c17_18 = arith.constant 17 : index
    %c0_19 = arith.constant 0 : index
    %19 = vector.load %arg8[%c0_17, %c17_18, %c0_19] : memref<18x18x8xbf16, #tpu.memory_space<vmem>>, vector<18x1x8xbf16>
    tpu.vector_store %arg8[%c0_17, %c17_18, %c0_19], %15 {strides = array<i32>} : memref<18x18x8xbf16, #tpu.memory_space<vmem>>, vector<18x1x8xbf16>,
    %20 = vector.shape_cast %13 : vector<256x8xf32> to vector<16x16x8xf32>
    %21 = arith.truncf %20 : vector<16x16x8xf32> to vector<16x16x8xbf16>
    %c1 = arith.constant 1 : index
    %c1_20 = arith.constant 1 : index
    %c0_21 = arith.constant 0 : index
    %22 = vector.load %arg8[%c1, %c1_20, %c0_21] : memref<18x18x8xbf16, #tpu.memory_space<vmem>>, vector<16x16x8xbf16>
    tpu.vector_store %arg8[%c1, %c1_20, %c0_21], %21 {strides = array<i32>} : memref<18x18x8xbf16, #tpu.memory_space<vmem>>, vector<16x16x8xbf16>,
    %c0_22 = arith.constant 0 : index
    %c0_23 = arith.constant 0 : index
    %c0_24 = arith.constant 0 : index
    %23 = vector.load %arg8[%c0_22, %c0_23, %c0_24] : memref<18x18x8xbf16, #tpu.memory_space<vmem>>, vector<16x16x8xbf16>
    %24 = vector.shape_cast %23 : vector<16x16x8xbf16> to vector<256x8xbf16>
    %c0_25 = arith.constant 0 : index
    %c1_26 = arith.constant 1 : index
    %c0_27 = arith.constant 0 : index
    %25 = vector.load %arg8[%c0_25, %c1_26, %c0_27] : memref<18x18x8xbf16, #tpu.memory_space<vmem>>, vector<16x16x8xbf16>
    %26 = vector.shape_cast %25 : vector<16x16x8xbf16> to vector<256x8xbf16>
    %c0_28 = arith.constant 0 : index
    %c2 = arith.constant 2 : index
    %c0_29 = arith.constant 0 : index
    %27 = vector.load %arg8[%c0_28, %c2, %c0_29] : memref<18x18x8xbf16, #tpu.memory_space<vmem>>, vector<16x16x8xbf16>
    %28 = vector.shape_cast %27 : vector<16x16x8xbf16> to vector<256x8xbf16>
    %c1_30 = arith.constant 1 : index
    %c0_31 = arith.constant 0 : index
    %c0_32 = arith.constant 0 : index
    %29 = vector.load %arg8[%c1_30, %c0_31, %c0_32] : memref<18x18x8xbf16, #tpu.memory_space<vmem>>, vector<16x16x8xbf16>
    %30 = vector.shape_cast %29 : vector<16x16x8xbf16> to vector<256x8xbf16>
    %c1_33 = arith.constant 1 : index
    %c1_34 = arith.constant 1 : index
    %c0_35 = arith.constant 0 : index
    %31 = vector.load %arg8[%c1_33, %c1_34, %c0_35] : memref<18x18x8xbf16, #tpu.memory_space<vmem>>, vector<16x16x8xbf16>
    %32 = vector.shape_cast %31 : vector<16x16x8xbf16> to vector<256x8xbf16>
    %c1_36 = arith.constant 1 : index
    %c2_37 = arith.constant 2 : index
    %c0_38 = arith.constant 0 : index
    %33 = vector.load %arg8[%c1_36, %c2_37, %c0_38] : memref<18x18x8xbf16, #tpu.memory_space<vmem>>, vector<16x16x8xbf16>
    %34 = vector.shape_cast %33 : vector<16x16x8xbf16> to vector<256x8xbf16>
    %c2_39 = arith.constant 2 : index
    %c0_40 = arith.constant 0 : index
    %c0_41 = arith.constant 0 : index
    %35 = vector.load %arg8[%c2_39, %c0_40, %c0_41] : memref<18x18x8xbf16, #tpu.memory_space<vmem>>, vector<16x16x8xbf16>
    %36 = vector.shape_cast %35 : vector<16x16x8xbf16> to vector<256x8xbf16>
    %c2_42 = arith.constant 2 : index
    %c1_43 = arith.constant 1 : index
    %c0_44 = arith.constant 0 : index
    %37 = vector.load %arg8[%c2_42, %c1_43, %c0_44] : memref<18x18x8xbf16, #tpu.memory_space<vmem>>, vector<16x16x8xbf16>
    %38 = vector.shape_cast %37 : vector<16x16x8xbf16> to vector<256x8xbf16>
    %c2_45 = arith.constant 2 : index
    %c2_46 = arith.constant 2 : index
    %c0_47 = arith.constant 0 : index
    %39 = vector.load %arg8[%c2_45, %c2_46, %c0_47] : memref<18x18x8xbf16, #tpu.memory_space<vmem>>, vector<16x16x8xbf16>
    %40 = vector.shape_cast %39 : vector<16x16x8xbf16> to vector<256x8xbf16>
    %41 = tpu.concatenate %24, %26, %28, %30, %32, %34, %36, %38, %40 in 1 : vector<256x8xbf16>, vector<256x8xbf16>, vector<256x8xbf16>, vector<256x8xbf16>, vector<256x8xbf16>, vector<256x8xbf16>, vector<256x8xbf16>, vector<256x8xbf16>, vector<256x8xbf16> -> vector<256x72xbf16>
    %c0_48 = arith.constant 0 : index
    %c0_49 = arith.constant 0 : index
    %42 = vector.load %arg4[%c0_48, %c0_49] : memref<72x8xbf16, #tpu.memory_space<vmem>>, vector<72x8xbf16>
    %cst_50 = arith.constant dense<0.000000e+00> : vector<256x8xf32>
    %43 = tpu.matmul %41, %42, %cst_50 {dimension_numbers = #tpu.dot_dimension_numbers<[1], [0], [0], [1], [0, 0, 1, 1], [], []>} : vector<256x72xbf16>, vector<72x8xbf16>, vector<256x8xf32> -> vector<256x8xf32>
    %cst_51 = arith.constant dense<0.000000e+00> : vector<8xf32>
    %44 = vector.multi_reduction <add>, %43, %cst_51 [0] : vector<256x8xf32> to vector<8xf32>
    %45 = vector.shape_cast %44 : vector<8xf32> to vector<1x8xf32>
    %46 = vector.shape_cast %45 : vector<1x8xf32> to vector<1x1x8xf32>
    %c0_52 = arith.constant 0 : index
    %c0_53 = arith.constant 0 : index
    %c0_54 = arith.constant 0 : index
    %47 = vector.load %arg6[%c0_52, %c0_53, %c0_54] : memref<1x1x8xf32, #tpu.memory_space<vmem>>, vector<1x1x8xf32>
    tpu.vector_store %arg6[%c0_52, %c0_53, %c0_54], %46 {strides = array<i32>} : memref<1x1x8xf32, #tpu.memory_space<vmem>>, vector<1x1x8xf32>,
    %48 = arith.mulf %43, %43 : vector<256x8xf32>
    %cst_55 = arith.constant dense<0.000000e+00> : vector<8xf32>
    %49 = vector.multi_reduction <add>, %48, %cst_55 [0] : vector<256x8xf32> to vector<8xf32>
    %50 = vector.shape_cast %49 : vector<8xf32> to vector<1x8xf32>
    %51 = vector.shape_cast %50 : vector<1x8xf32> to vector<1x1x8xf32>
    %c0_56 = arith.constant 0 : index
    %c0_57 = arith.constant 0 : index
    %c0_58 = arith.constant 0 : index
    %52 = vector.load %arg7[%c0_56, %c0_57, %c0_58] : memref<1x1x8xf32, #tpu.memory_space<vmem>>, vector<1x1x8xf32>
    tpu.vector_store %arg7[%c0_56, %c0_57, %c0_58], %51 {strides = array<i32>} : memref<1x1x8xf32, #tpu.memory_space<vmem>>, vector<1x1x8xf32>,
    %53 = vector.shape_cast %43 : vector<256x8xf32> to vector<1x256x8xf32>
    %54 = arith.truncf %53 : vector<1x256x8xf32> to vector<1x256x8xbf16>
    %c0_59 = arith.constant 0 : index
    %c0_60 = arith.constant 0 : index
    %c0_61 = arith.constant 0 : index
    %55 = vector.load %arg5[%c0_59, %c0_60, %c0_61] : memref<1x256x8xbf16, #tpu.memory_space<vmem>>, vector<1x256x8xbf16>
    tpu.vector_store %arg5[%c0_59, %c0_60, %c0_61], %54 {strides = array<i32>} : memref<1x256x8xbf16, #tpu.memory_space<vmem>>, vector<1x256x8xbf16>,
    return
  }
  func.func @transform_0(%arg0: i32) -> (i32, i32, i32) {
    %c0_i32 = arith.constant 0 : i32
    %c0_i32_0 = arith.constant 0 : i32
    %c0_i32_1 = arith.constant 0 : i32
    return %arg0, %c0_i32, %c0_i32_0 : i32, i32, i32
  }
  func.func @transform_1(%arg0: i32) -> (i32, i32) {
    %c0_i32 = arith.constant 0 : i32
    %c0_i32_0 = arith.constant 0 : i32
    %c0_i32_1 = arith.constant 0 : i32
    return %c0_i32, %c0_i32_0 : i32, i32
  }
  func.func @transform_2(%arg0: i32) -> (i32, i32) {
    %c0_i32 = arith.constant 0 : i32
    %c0_i32_0 = arith.constant 0 : i32
    %c0_i32_1 = arith.constant 0 : i32
    return %c0_i32, %c0_i32_0 : i32, i32
  }
  func.func @transform_3(%arg0: i32) -> (i32, i32) {
    %c0_i32 = arith.constant 0 : i32
    %c0_i32_0 = arith.constant 0 : i32
    %c0_i32_1 = arith.constant 0 : i32
    return %c0_i32, %c0_i32_0 : i32, i32
  }
  func.func @transform_4(%arg0: i32) -> (i32, i32, i32) {
    %c0_i32 = arith.constant 0 : i32
    %c0_i32_0 = arith.constant 0 : i32
    %c0_i32_1 = arith.constant 0 : i32
    return %arg0, %c0_i32, %c0_i32_0 : i32, i32, i32
  }
  func.func @transform_5(%arg0: i32) -> (i32, i32, i32) {
    %c0_i32 = arith.constant 0 : i32
    %c0_i32_0 = arith.constant 0 : i32
    %c0_i32_1 = arith.constant 0 : i32
    return %arg0, %c0_i32, %c0_i32_0 : i32, i32, i32
  }
  func.func @transform_6(%arg0: i32) -> (i32, i32, i32) {
    %c0_i32 = arith.constant 0 : i32
    %c0_i32_0 = arith.constant 0 : i32
    %c0_i32_1 = arith.constant 0 : i32
    return %arg0, %c0_i32, %c0_i32_0 : i32, i32, i32
  }
}

module attributes {stable_mosaic.version = 11 : i64} {
  func.func @_bn2_lrelu_kernel(%arg0: i32, %arg1: memref<1x16x128xbf16, #tpu.memory_space<vmem>>, %arg2: memref<1x128xf32, #tpu.memory_space<vmem>>, %arg3: memref<1x128xf32, #tpu.memory_space<vmem>>, %arg4: memref<1x16x128xf32, #tpu.memory_space<vmem>>) attributes {dimension_semantics = [#tpu.dimension_semantics<parallel>], iteration_bounds = array<i64: 2>, scalar_prefetch = 0 : i64, scratch_operands = 0 : i64, tpu.core_type = #tpu.core_type<tc>, window_params = [{transform_indices = @transform_0, window_bounds = array<i64: 1, 16, 128>}, {pipeline_mode = #tpu.pipeline_mode<synchronous>, transform_indices = @transform_1, window_bounds = array<i64: 1, 128>}, {pipeline_mode = #tpu.pipeline_mode<synchronous>, transform_indices = @transform_2, window_bounds = array<i64: 1, 128>}, {transform_indices = @transform_3, window_bounds = array<i64: 1, 16, 128>}]} {
    %c0 = arith.constant 0 : index
    %c0_0 = arith.constant 0 : index
    %c0_1 = arith.constant 0 : index
    %0 = vector.load %arg1[%c0, %c0_0, %c0_1] : memref<1x16x128xbf16, #tpu.memory_space<vmem>>, vector<1x16x128xbf16>
    %1 = vector.shape_cast %0 : vector<1x16x128xbf16> to vector<16x128xbf16>
    %2 = arith.extf %1 : vector<16x128xbf16> to vector<16x128xf32>
    %c0_2 = arith.constant 0 : index
    %c0_3 = arith.constant 0 : index
    %3 = vector.load %arg2[%c0_2, %c0_3] : memref<1x128xf32, #tpu.memory_space<vmem>>, vector<1x128xf32>
    %4 = vector.broadcast %3 : vector<1x128xf32> to vector<16x128xf32>
    %5 = arith.mulf %2, %4 : vector<16x128xf32>
    %c0_4 = arith.constant 0 : index
    %c0_5 = arith.constant 0 : index
    %6 = vector.load %arg3[%c0_4, %c0_5] : memref<1x128xf32, #tpu.memory_space<vmem>>, vector<1x128xf32>
    %7 = vector.broadcast %6 : vector<1x128xf32> to vector<16x128xf32>
    %8 = arith.addf %5, %7 : vector<16x128xf32>
    %cst = arith.constant 0.000000e+00 : f32
    %9 = vector.broadcast %cst : f32 to vector<16x128xf32>
    %10 = arith.cmpf ogt, %8, %9 : vector<16x128xf32>
    %cst_6 = arith.constant 2.000000e-01 : f32
    %11 = vector.broadcast %cst_6 : f32 to vector<16x128xf32>
    %12 = arith.mulf %11, %8 : vector<16x128xf32>
    %13 = arith.select %10, %8, %12 : vector<16x128xi1>, vector<16x128xf32>
    %14 = vector.shape_cast %13 : vector<16x128xf32> to vector<1x16x128xf32>
    %c0_7 = arith.constant 0 : index
    %c0_8 = arith.constant 0 : index
    %c0_9 = arith.constant 0 : index
    %15 = vector.load %arg4[%c0_7, %c0_8, %c0_9] : memref<1x16x128xf32, #tpu.memory_space<vmem>>, vector<1x16x128xf32>
    tpu.vector_store %arg4[%c0_7, %c0_8, %c0_9], %14 {strides = array<i32>} : memref<1x16x128xf32, #tpu.memory_space<vmem>>, vector<1x16x128xf32>,
    return
  }
  func.func @transform_0(%arg0: i32) -> (i32, i32, i32) {
    %c0_i32 = arith.constant 0 : i32
    %c0_i32_0 = arith.constant 0 : i32
    %c0_i32_1 = arith.constant 0 : i32
    return %arg0, %c0_i32, %c0_i32_0 : i32, i32, i32
  }
  func.func @transform_1(%arg0: i32) -> (i32, i32) {
    %c0_i32 = arith.constant 0 : i32
    %c0_i32_0 = arith.constant 0 : i32
    %c0_i32_1 = arith.constant 0 : i32
    return %c0_i32, %c0_i32_0 : i32, i32
  }
  func.func @transform_2(%arg0: i32) -> (i32, i32) {
    %c0_i32 = arith.constant 0 : i32
    %c0_i32_0 = arith.constant 0 : i32
    %c0_i32_1 = arith.constant 0 : i32
    return %c0_i32, %c0_i32_0 : i32, i32
  }
  func.func @transform_3(%arg0: i32) -> (i32, i32, i32) {
    %c0_i32 = arith.constant 0 : i32
    %c0_i32_0 = arith.constant 0 : i32
    %c0_i32_1 = arith.constant 0 : i32
    return %arg0, %c0_i32, %c0_i32_0 : i32, i32, i32
  }
}

</mosaic_0001>

<llo_original>
// kernel: tile.13
$region0: #{tile.13}
  #allocation0 [shape = 's32[1]{0}', space=sflag, size = 0x4, scoped, tag = 'scoped memory for tile.13']
  %s0 = inlined_call_operand.vmem [shape: f32[8], index: 0, kind: input, shape index: {}]
  %s1 = inlined_call_operand.vmem [shape: f32[16,8], index: 1, kind: output, shape index: {}]
  // Predicated region
  $region2: #{tile.13} parent=0 // pred_check
    _
  $region3: #{tile.13} parent=0 // pred_check_branch
    %3 = sbr.rel (0) target = $region5
  $region4: #{tile.13} parent=0 // pred_region
    _
  $region5: #{tile.13} parent=0 // pred_fallthru
    _
  %v4 = vld [vmem:[%s0] ss:$0 sm:$0xff]
  %5 = vst [vmem:[%s1] sm:$0xff] %v4
  %s6 = scalar_lea.vmem %s1, 8
  %7 = vst [vmem:[%s6] sm:$0xff] %v4

// kernel: tile.14
$region0: #{tile.14}
  %s0 = inlined_call_operand.vmem [shape: f32[16,8], index: 0, kind: input, shape index: {}]
  %s1 = inlined_call_operand.vmem [shape: f32[1,128], index: 1, kind: output, shape index: {}]
  $region1: #{tile.14} parent=0
    #allocation0 [shape = 'u8[4096]{0}', space=vmem, size = 0x1000, scoped, tag = 'scoped mem for output reshape']
    %v2 = vld [vmem:[%s0] sm:$0x1]
    %vm3 = vcmask 64512
    %4 = vst.msk [vmem:[#allocation0] sm:$0x1] %vm3, %v2
    %s5 = scalar_lea.vmem %s0, 15
    %v6 = vld [vmem:[%s5] sm:$0x1]
    %7 = vrot.lane.b32.xlu0 %v6, 120
    %v8 = vpop.permute.xlu0 %7
    %vm9 = vcmask 1048512
    %10 = vst.msk [vmem:[#allocation0] sm:$0x1] %vm9, %v8
    %s11 = scalar_lea.vmem %s0, 14
    %v12 = vld [vmem:[%s11] sm:$0x1]
    %13 = vrot.lane.b32.xlu0 %v12, 112
    %v14 = vpop.permute.xlu0 %13
    %vm15 = vcmask 982912
    %16 = vst.msk [vmem:[#allocation0] sm:$0x1] %vm15, %v14
    %s17 = scalar_lea.vmem %s0, 13
    %v18 = vld [vmem:[%s17] sm:$0x1]
    %19 = vrot.lane.b32.xlu0 %v18, 104
    %v20 = vpop.permute.xlu0 %19
    %vm21 = vcmask 917312
    %22 = vst.msk [vmem:[#allocation0] sm:$0x1] %vm21, %v20
    %s23 = scalar_lea.vmem %s0, 12
    %v24 = vld [vmem:[%s23] sm:$0x1]
    %25 = vrot.lane.b32.xlu0 %v24, 96
    %v26 = vpop.permute.xlu0 %25
    %vm27 = vcmask 851712
    %28 = vst.msk [vmem:[#allocation0] sm:$0x1] %vm27, %v26
    %s29 = scalar_lea.vmem %s0, 11
    %v30 = vld [vmem:[%s29] sm:$0x1]
    %31 = vrot.lane.b32.xlu0 %v30, 88
    %v32 = vpop.permute.xlu0 %31
    %vm33 = vcmask 786112
    %34 = vst.msk [vmem:[#allocation0] sm:$0x1] %vm33, %v32
    %s35 = scalar_lea.vmem %s0, 10
    %v36 = vld [vmem:[%s35] sm:$0x1]
    %37 = vrot.lane.b32.xlu0 %v36, 80
    %v38 = vpop.permute.xlu0 %37
    %vm39 = vcmask 720512
    %40 = vst.msk [vmem:[#allocation0] sm:$0x1] %vm39, %v38
    %s41 = scalar_lea.vmem %s0, 9
    %v42 = vld [vmem:[%s41] sm:$0x1]
    %43 = vrot.lane.b32.xlu0 %v42, 72
    %v44 = vpop.permute.xlu0 %43
    %vm45 = vcmask 654912
    %46 = vst.msk [vmem:[#allocation0] sm:$0x1] %vm45, %v44
    %s47 = scalar_lea.vmem %s0, 8
    %v48 = vld [vmem:[%s47] sm:$0x1]
    %49 = vrot.lane.b32.xlu0 %v48, 64
    %v50 = vpop.permute.xlu0 %49
    %vm51 = vcmask 589312
    %52 = vst.msk [vmem:[#allocation0] sm:$0x1] %vm51, %v50
    %s53 = scalar_lea.vmem %s0, 7
    %v54 = vld [vmem:[%s53] sm:$0x1]
    %55 = vrot.lane.b32.xlu0 %v54, 56
    %v56 = vpop.permute.xlu0 %55
    %vm57 = vcmask 523712
    %58 = vst.msk [vmem:[#allocation0] sm:$0x1] %vm57, %v56
    %s59 = scalar_lea.vmem %s0, 6
    %v60 = vld [vmem:[%s59] sm:$0x1]
    %61 = vrot.lane.b32.xlu0 %v60, 48
    %v62 = vpop.permute.xlu0 %61
    %vm63 = vcmask 458112
    %64 = vst.msk [vmem:[#allocation0] sm:$0x1] %vm63, %v62
    %s65 = scalar_lea.vmem %s0, 5
    %v66 = vld [vmem:[%s65] sm:$0x1]
    %67 = vrot.lane.b32.xlu0 %v66, 40
    %v68 = vpop.permute.xlu0 %67
    %vm69 = vcmask 392512
    %70 = vst.msk [vmem:[#allocation0] sm:$0x1] %vm69, %v68
    %s71 = scalar_lea.vmem %s0, 4
    %v72 = vld [vmem:[%s71] sm:$0x1]
    %73 = vrot.lane.b32.xlu0 %v72, 32
    %v74 = vpop.permute.xlu0 %73
    %vm75 = vcmask 326912
    %76 = vst.msk [vmem:[#allocation0] sm:$0x1] %vm75, %v74
    %s77 = scalar_lea.vmem %s0, 3
    %v78 = vld [vmem:[%s77] sm:$0x1]
    %79 = vrot.lane.b32.xlu0 %v78, 24
    %v80 = vpop.permute.xlu0 %79
    %vm81 = vcmask 261312
    %82 = vst.msk [vmem:[#allocation0] sm:$0x1] %vm81, %v80
    %s83 = scalar_lea.vmem %s0, 2
    %v84 = vld [vmem:[%s83] sm:$0x1]
    %85 = vrot.lane.b32.xlu0 %v84, 16
    %v86 = vpop.permute.xlu0 %85
    %vm87 = vcmask 195712
    %88 = vst.msk [vmem:[#allocation0] sm:$0x1] %vm87, %v86
    %s89 = scalar_lea.vmem %s0, 1
    %v90 = vld [vmem:[%s89] sm:$0x1]
    %91 = vrot.lane.b32.xlu0 %v90, 8
    %v92 = vpop.permute.xlu0 %91
    %vm93 = vcmask 130112
    %94 = vst.msk [vmem:[#allocation0] sm:$0x1] %vm93, %v92
    %s96 = sshll.u32 1, 1
    %s97 = ssub.s32 %s96, 1
    %v99 = vld [vmem:[#allocation0] sm:%s97]
    %s100 = sshll.u32 1, 1
    %s101 = ssub.s32 %s100, 1
    %102 = vst [vmem:[%s1] sm:%s101] %v99

// kernel: doubleconv_forward.5
$region0: #{doubleconv_forward.5}
  #allocation0 [shape = 'u32[]', space=smem, size = 0x4, offset = 0x4, fixed_abs, tag = 'smem constant byte address 0x4 - core index']
  #allocation1 [shape = 'u32[144,128]{1,0:T(1,128)}', space=vmem, size = 0x12000, scoped, tag = 'internal scratch']
  %s0 = inlined_call_operand.vmem [shape: bf16[2,16,128], index: 0, kind: input, shape index: {}]
  %s1 = inlined_call_operand.vmem [shape: f32[1,128], index: 1, kind: input, shape index: {}]
  %s2 = inlined_call_operand.vmem [shape: f32[1,128], index: 2, kind: input, shape index: {}]
  %s3 = inlined_call_operand.vmem [shape: f32[2,16,128], index: 3, kind: output, shape index: {}]
  %s4 = sld [smem:[#allocation0]]
  $region45: #{doubleconv_forward.5} parent=0
    _
  %s6 = ssub.s32 1, %s4
  %s7 = scalar_select 0, %s6, %s4
  loop: start=0, step=1, limit=4
  $region2: #{doubleconv_forward.5} parent=0 // loop_pre_header
    _
  $region3: #{doubleconv_forward.5} parent=0 // loop_header
    %s9 = sphi 0, %s13
    %p10 = scmp.ge.s32.totalorder %s9, 4
    %s19 = sphi 0, %s21
    %s22 = sphi 0, %s19
    %s23 = sphi 0, %s22
    %s39 = sphi 0, %s23
    %s43 = sphi 0, %s43
    %s45 = sphi 0, %s43
    %s46 = sphi 0, %s45
    %s60 = sphi 0, %s46
    %s64 = sphi 0, %s64
    %s66 = sphi 0, %s64
    %s67 = sphi 0, %s66
    %s81 = sphi 0, %s67
    %s87 = sphi 0, %s89
    %s90 = sphi 0, %s87
    %s91 = sphi 0, %s90
    %s107 = sphi 0, %s91
  $region4: #{doubleconv_forward.5} parent=0 // loop_header_branch
    %12 = sbr.rel (%p10) target = $region8
  $region5: #{doubleconv_forward.5} parent=0 // loop_body
    %s14 = ssub.s32 %s9, 1
    %s15 = ssub.s32 %s9, 2
    %s16 = sadd.s32 %s9, 1
    %s17 = ssub.s32 %s9, %s16
    %p18 = scmp.eq.s32.totalorder %s17, 0
    %s20 = sadd.s32 %s19, 1
    %s21 = scalar_select %p18, %s19, %s20
    %p24 = pneg %p18
    %p25 = scmp.eq.s32.totalorder %s9, 1
    %p26 = por %p24, %p25
    %p27 = scmp.ne.s32.totalorder %s19, %s22
    %p28 = scmp.eq.s32.totalorder %s9, 0
    %p29 = por %p27, %p28
    %p30 = scmp.ne.s32.totalorder %s19, %s22
    %p31 = scmp.eq.s32.totalorder %s14, 1
    %p32 = por %p30, %p31
    %p33 = scmp.ne.s32.totalorder %s22, %s23
    %p34 = scmp.eq.s32.totalorder %s14, 0
    %p35 = por %p33, %p34
    %p36 = scmp.ne.s32.totalorder %s22, %s23
    %p37 = scmp.eq.s32.totalorder %s15, 1
    %p38 = por %p36, %p37
    %p40 = scmp.ne.s32.totalorder %s23, %s39
    %p41 = scmp.eq.s32.totalorder %s15, 0
    %p42 = por %p40, %p41
    %s44 = sadd.s32 %s43, 1
    %p47 = scmp.eq.s32.totalorder %s9, 1
    %p48 = scmp.ne.s32.totalorder %s43, %s45
    %p49 = scmp.eq.s32.totalorder %s9, 0
    %p50 = por %p48, %p49
    %p51 = scmp.ne.s32.totalorder %s43, %s45
    %p52 = scmp.eq.s32.totalorder %s14, 1
    %p53 = por %p51, %p52
    %p54 = scmp.ne.s32.totalorder %s45, %s46
    %p55 = scmp.eq.s32.totalorder %s14, 0
    %p56 = por %p54, %p55
    %p57 = scmp.ne.s32.totalorder %s45, %s46
    %p58 = scmp.eq.s32.totalorder %s15, 1
    %p59 = por %p57, %p58
    %p61 = scmp.ne.s32.totalorder %s46, %s60
    %p62 = scmp.eq.s32.totalorder %s15, 0
    %p63 = por %p61, %p62
    %s65 = sadd.s32 %s64, 1
    %p68 = scmp.eq.s32.totalorder %s9, 1
    %p69 = scmp.ne.s32.totalorder %s64, %s66
    %p70 = scmp.eq.s32.totalorder %s9, 0
    %p71 = por %p69, %p70
    %p72 = scmp.ne.s32.totalorder %s64, %s66
    %p73 = scmp.eq.s32.totalorder %s14, 1
    %p74 = por %p72, %p73
    %p75 = scmp.ne.s32.totalorder %s66, %s67
    %p76 = scmp.eq.s32.totalorder %s14, 0
    %p77 = por %p75, %p76
    %p78 = scmp.ne.s32.totalorder %s66, %s67
    %p79 = scmp.eq.s32.totalorder %s15, 1
    %p80 = por %p78, %p79
    %p82 = scmp.ne.s32.totalorder %s67, %s81
    %p83 = scmp.eq.s32.totalorder %s15, 0
    %p84 = por %p82, %p83
    %s85 = ssub.s32 %s9, %s16
    %p86 = scmp.eq.s32.totalorder %s85, 0
    %s88 = sadd.s32 %s87, 1
    %s89 = scalar_select %p86, %s87, %s88
    %p92 = pneg %p86
    %p93 = scmp.eq.s32.totalorder %s9, 1
    %p94 = por %p92, %p93
    %p95 = scmp.ne.s32.totalorder %s87, %s90
    %p96 = scmp.eq.s32.totalorder %s9, 0
    %p97 = por %p95, %p96
    %p98 = scmp.ne.s32.totalorder %s87, %s90
    %p99 = scmp.eq.s32.totalorder %s14, 1
    %p100 = por %p98, %p99
    %p101 = scmp.ne.s32.totalorder %s90, %s91
    %p102 = scmp.eq.s32.totalorder %s14, 0
    %p103 = por %p101, %p102
    %p104 = scmp.ne.s32.totalorder %s90, %s91
    %p105 = scmp.eq.s32.totalorder %s15, 1
    %p106 = por %p104, %p105
    %p108 = scmp.ne.s32.totalorder %s91, %s107
    %p109 = scmp.eq.s32.totalorder %s15, 0
    %p110 = por %p108, %p109
    %p111 = scmp.le.s32.totalorder 1, %s9
    %p112 = scmp.lt.s32.totalorder %s9, 3
    %p113 = pnand %p111, %p112
    %p114 = pneg %p113
    // Predicated region
    $region9: #{doubleconv_forward.5} parent=5 // pred_check
      _
    $region10: #{doubleconv_forward.5} parent=5 // pred_check_branch
      %116 = sbr.rel (%p113) target = $region12
    $region11: #{doubleconv_forward.5} parent=5 // pred_region
      %s117 = ssub.s32 %s9, 1
      // Predicated region
      $region13: #{doubleconv_forward.5} parent=11 // pred_check
        %p118 = pneg %p56
      $region14: #{doubleconv_forward.5} parent=11 // pred_check_branch
        %120 = sbr.rel (%p118) target = $region16
      $region15: #{doubleconv_forward.5} parent=11 // pred_region
        _
      $region16: #{doubleconv_forward.5} parent=11 // pred_fallthru
        _
      // Predicated region
      $region17: #{doubleconv_forward.5} parent=11 // pred_check
        %p121 = pneg %p77
      $region18: #{doubleconv_forward.5} parent=11 // pred_check_branch
        %123 = sbr.rel (%p121) target = $region20
      $region19: #{doubleconv_forward.5} parent=11 // pred_region
        _
      $region20: #{doubleconv_forward.5} parent=11 // pred_fallthru
        _
    $region12: #{doubleconv_forward.5} parent=5 // pred_fallthru
      _
    %p124 = scmp.lt.s32.totalorder %s9, 2
    // Predicated region
    $region21: #{doubleconv_forward.5} parent=5 // pred_check
      %p125 = pneg %p124
    $region22: #{doubleconv_forward.5} parent=5 // pred_check_branch
      %127 = sbr.rel (%p125) target = $region24
    $region23: #{doubleconv_forward.5} parent=5 // pred_region
      // Predicated region
      $region25: #{doubleconv_forward.5} parent=23 // pred_check
        %p128 = pneg %p29
      $region26: #{doubleconv_forward.5} parent=23 // pred_check_branch
        %130 = sbr.rel (%p128) target = $region28
      $region27: #{doubleconv_forward.5} parent=23 // pred_region
        %p131 = scmp.lt.s32.totalorder %s9, 1
        %s132 = scalar_select %p131, %s9, 1
        %s133 = smul.addr %s132, 2
        %s134 = smul.addr %s133, 4
        %s135 = scalar_lea.vmem %s0, %s134
      $region28: #{doubleconv_forward.5} parent=23 // pred_fallthru
        _
    $region24: #{doubleconv_forward.5} parent=5 // pred_fallthru
      _
    %p136 = scmp.le.s32.totalorder 1, %s9
    %p137 = scmp.lt.s32.totalorder %s9, 3
    %p138 = pnand %p136, %p137
    %p139 = pneg %p138
    // Predicated region
    $region29: #{doubleconv_forward.5} parent=5 // pred_check
      _
    $region30: #{doubleconv_forward.5} parent=5 // pred_check_branch
      %141 = sbr.rel (%p138) target = $region32
    $region31: #{doubleconv_forward.5} parent=5 // pred_region
      %s142 = ssub.s32 %s9, 1
      %p143 = scmp.lt.s32.totalorder %s14, 1
      %s144 = scalar_select %p143, %s14, 1
      %s145 = smul.addr %s144, 2
      %s146 = smul.addr %s145, 4
      %s147 = scalar_lea.vmem %s0, %s146
      %p148 = pneg %p35
      %p149 = pneg %p32
      %p150 = pneg %p56
      %p151 = pneg %p53
      %p152 = pneg %p77
      %p153 = pneg %p74
      %p154 = pneg %p103
      %p155 = pneg %p100
      %p156 = scmp.lt.s32.totalorder %s14, 1
      %s157 = scalar_select %p156, %s14, 1
      %s158 = smul.addr %s157, 2
      %s159 = smul.addr %s158, 8
      %s160 = scalar_lea.vmem %s3, %s159
      %p161 = scmp.lt.s32.totalorder %s14, 1
      %s162 = scalar_select %p161, %s14, 1
      %s163 = smul.addr %s162, 2
      %s164 = smul.addr %s163, 4
      %s165 = scalar_lea.vmem %s0, %s164
      %p166 = scmp.lt.s32.totalorder %s14, 1
      %s167 = scalar_select %p166, %s14, 1
      %s168 = smul.addr %s167, 2
      %s169 = smul.addr %s168, 8
      %s170 = scalar_lea.vmem %s3, %s169
      %v171 = vld [vmem:[%s165] sm:$0xf]
      %v172 = vld [vmem:[%s165 + $0x4] sm:$0xf]
      %v173 = vunpack.c.l.bf16 %v171
      %v174 = vunpack.c.l.bf16 %v172
      %v175 = vld [vmem:[%s1] sm:$0x1]
      %v177 = vlaneseq
      %v178 = vshrl.u32 %v177, 7
      %v179 = vsub.s32 0, %v178
      %v180 = vrot.slane %v175, %v179
      %v182 = vmul.f32 %v173, %v180
      %v183 = vmul.f32 %v174, %v180
      %v184 = vld [vmem:[%s2] sm:$0x1]
      %v186 = vlaneseq
      %v187 = vshrl.u32 %v186, 7
      %v188 = vsub.s32 0, %v187
      %v189 = vrot.slane %v184, %v188
      %v191 = vadd.f32 %v182, %v189
      %v192 = vadd.f32 %v183, %v189
      %vm193 = vcmp.gt.f32.partialorder %v191, 0.0
      %vm194 = vcmp.gt.f32.partialorder %v192, 0.0
      %v195 = vmul.f32 %v191, 0.2
      %v196 = vmul.f32 %v192, 0.2
      %v197 = vsel %vm193, %v191, %v195
      %v198 = vsel %vm194, %v192, %v196
      %199 = vst [vmem:[%s170] sm:$0xff] %v197
      %200 = vst [vmem:[%s170 + $0x8] sm:$0xff] %v198
      %p201 = scmp.lt.s32.totalorder %s14, 1
      %s202 = scalar_select %p201, %s14, 1
      %s203 = smul.addr %s202, 2
      %s204 = smul.addr %s203, 8
      %s205 = scalar_lea.vmem %s3, %s204
      // Predicated region
      $region33: #{doubleconv_forward.5} parent=31 // pred_check
        %p206 = pneg %p100
      $region34: #{doubleconv_forward.5} parent=31 // pred_check_branch
        %208 = sbr.rel (%p206) target = $region36
      $region35: #{doubleconv_forward.5} parent=31 // pred_region
        _
      $region36: #{doubleconv_forward.5} parent=31 // pred_fallthru
        _
    $region32: #{doubleconv_forward.5} parent=5 // pred_fallthru
      _
    %p209 = scmp.le.s32.totalorder 2, %s9
    // Predicated region
    $region37: #{doubleconv_forward.5} parent=5 // pred_check
      %p210 = pneg %p209
    $region38: #{doubleconv_forward.5} parent=5 // pred_check_branch
      %212 = sbr.rel (%p210) target = $region40
    $region39: #{doubleconv_forward.5} parent=5 // pred_region
      %s213 = ssub.s32 %s9, 2
      // Predicated region
      $region41: #{doubleconv_forward.5} parent=39 // pred_check
        %p214 = pneg %p106
      $region42: #{doubleconv_forward.5} parent=39 // pred_check_branch
        %216 = sbr.rel (%p214) target = $region44
      $region43: #{doubleconv_forward.5} parent=39 // pred_region
        %p217 = scmp.lt.s32.totalorder %s15, 1
        %s218 = scalar_select %p217, %s15, 1
        %s219 = smul.addr %s218, 2
        %s220 = smul.addr %s219, 8
        %s221 = scalar_lea.vmem %s3, %s220
      $region44: #{doubleconv_forward.5} parent=39 // pred_fallthru
        _
    $region40: #{doubleconv_forward.5} parent=5 // pred_fallthru
      _
  $region6: #{doubleconv_forward.5} parent=0 // loop_footer
    %s13 = sadd.s32 1, %s9
  $region7: #{doubleconv_forward.5} parent=0 // loop_footer_branch
    %8 = sbr.rel target = $region3
  $region8: #{doubleconv_forward.5} parent=0 // loop_exit
    _

// kernel: doubleconv_forward.3
$region0: #{doubleconv_forward.3}
  #allocation0 [shape = 'u32[]', space=smem, size = 0x4, offset = 0x4, fixed_abs, tag = 'smem constant byte address 0x4 - core index']
  #allocation1 [shape = 'u32[144,128]{1,0:T(1,128)}', space=vmem, size = 0x12000, scoped, tag = 'internal scratch']
  #allocation2 [shape = 'bf16[18,18,4]{2,1,0:T(8,128)(2,1)}', space=vmem, size = 0x1b000, scoped, tag = 'scratch operand']
  %s0 = inlined_call_operand.vmem [shape: f32[2,16,16,4], index: 0, kind: input, shape index: {}]
  %s1 = inlined_call_operand.vmem [shape: bf16[36,8], index: 1, kind: input, shape index: {}]
  %s2 = inlined_call_operand.vmem [shape: bf16[2,256,8], index: 2, kind: output, shape index: {0}]
  %s3 = inlined_call_operand.vmem [shape: f32[2,1,8], index: 3, kind: output, shape index: {1}]
  %s4 = inlined_call_operand.vmem [shape: f32[2,1,8], index: 4, kind: output, shape index: {2}]
  %5 = xla_tuple %s2, %s3, %s4
  %s6 = sld [smem:[#allocation0]]
  $region57: #{doubleconv_forward.3} parent=0
    _
  %s8 = ssub.s32 1, %s6
  %s9 = scalar_select 0, %s8, %s6
  loop: start=0, step=1, limit=4
  $region2: #{doubleconv_forward.3} parent=0 // loop_pre_header
    _
  $region3: #{doubleconv_forward.3} parent=0 // loop_header
    %s11 = sphi 0, %s15
    %p12 = scmp.ge.s32.totalorder %s11, 4
    %s21 = sphi 0, %s23
    %s24 = sphi 0, %s21
    %s25 = sphi 0, %s24
    %s41 = sphi 0, %s25
    %s45 = sphi 0, %s45
    %s47 = sphi 0, %s45
    %s48 = sphi 0, %s47
    %s62 = sphi 0, %s48
    %s68 = sphi 0, %s70
    %s71 = sphi 0, %s68
    %s72 = sphi 0, %s71
    %s88 = sphi 0, %s72
    %s94 = sphi 0, %s96
    %s97 = sphi 0, %s94
    %s98 = sphi 0, %s97
    %s114 = sphi 0, %s98
    %s120 = sphi 0, %s122
    %s123 = sphi 0, %s120
    %s124 = sphi 0, %s123
    %s140 = sphi 0, %s124
  $region4: #{doubleconv_forward.3} parent=0 // loop_header_branch
    %14 = sbr.rel (%p12) target = $region8
  $region5: #{doubleconv_forward.3} parent=0 // loop_body
    %s16 = ssub.s32 %s11, 1
    %s17 = ssub.s32 %s11, 2
    %s18 = sadd.s32 %s11, 1
    %s19 = ssub.s32 %s11, %s18
    %p20 = scmp.eq.s32.totalorder %s19, 0
    %s22 = sadd.s32 %s21, 1
    %s23 = scalar_select %p20, %s21, %s22
    %p26 = pneg %p20
    %p27 = scmp.eq.s32.totalorder %s11, 1
    %p28 = por %p26, %p27
    %p29 = scmp.ne.s32.totalorder %s21, %s24
    %p30 = scmp.eq.s32.totalorder %s11, 0
    %p31 = por %p29, %p30
    %p32 = scmp.ne.s32.totalorder %s21, %s24
    %p33 = scmp.eq.s32.totalorder %s16, 1
    %p34 = por %p32, %p33
    %p35 = scmp.ne.s32.totalorder %s24, %s25
    %p36 = scmp.eq.s32.totalorder %s16, 0
    %p37 = por %p35, %p36
    %p38 = scmp.ne.s32.totalorder %s24, %s25
    %p39 = scmp.eq.s32.totalorder %s17, 1
    %p40 = por %p38, %p39
    %p42 = scmp.ne.s32.totalorder %s25, %s41
    %p43 = scmp.eq.s32.totalorder %s17, 0
    %p44 = por %p42, %p43
    %s46 = sadd.s32 %s45, 1
    %p49 = scmp.eq.s32.totalorder %s11, 1
    %p50 = scmp.ne.s32.totalorder %s45, %s47
    %p51 = scmp.eq.s32.totalorder %s11, 0
    %p52 = por %p50, %p51
    %p53 = scmp.ne.s32.totalorder %s45, %s47
    %p54 = scmp.eq.s32.totalorder %s16, 1
    %p55 = por %p53, %p54
    %p56 = scmp.ne.s32.totalorder %s47, %s48
    %p57 = scmp.eq.s32.totalorder %s16, 0
    %p58 = por %p56, %p57
    %p59 = scmp.ne.s32.totalorder %s47, %s48
    %p60 = scmp.eq.s32.totalorder %s17, 1
    %p61 = por %p59, %p60
    %p63 = scmp.ne.s32.totalorder %s48, %s62
    %p64 = scmp.eq.s32.totalorder %s17, 0
    %p65 = por %p63, %p64
    %s66 = ssub.s32 %s11, %s18
    %p67 = scmp.eq.s32.totalorder %s66, 0
    %s69 = sadd.s32 %s68, 1
    %s70 = scalar_select %p67, %s68, %s69
    %p73 = pneg %p67
    %p74 = scmp.eq.s32.totalorder %s11, 1
    %p75 = por %p73, %p74
    %p76 = scmp.ne.s32.totalorder %s68, %s71
    %p77 = scmp.eq.s32.totalorder %s11, 0
    %p78 = por %p76, %p77
    %p79 = scmp.ne.s32.totalorder %s68, %s71
    %p80 = scmp.eq.s32.totalorder %s16, 1
    %p81 = por %p79, %p80
    %p82 = scmp.ne.s32.totalorder %s71, %s72
    %p83 = scmp.eq.s32.totalorder %s16, 0
    %p84 = por %p82, %p83
    %p85 = scmp.ne.s32.totalorder %s71, %s72
    %p86 = scmp.eq.s32.totalorder %s17, 1
    %p87 = por %p85, %p86
    %p89 = scmp.ne.s32.totalorder %s72, %s88
    %p90 = scmp.eq.s32.totalorder %s17, 0
    %p91 = por %p89, %p90
    %s92 = ssub.s32 %s11, %s18
    %p93 = scmp.eq.s32.totalorder %s92, 0
    %s95 = sadd.s32 %s94, 1
    %s96 = scalar_select %p93, %s94, %s95
    %p99 = pneg %p93
    %p100 = scmp.eq.s32.totalorder %s11, 1
    %p101 = por %p99, %p100
    %p102 = scmp.ne.s32.totalorder %s94, %s97
    %p103 = scmp.eq.s32.totalorder %s11, 0
    %p104 = por %p102, %p103
    %p105 = scmp.ne.s32.totalorder %s94, %s97
    %p106 = scmp.eq.s32.totalorder %s16, 1
    %p107 = por %p105, %p106
    %p108 = scmp.ne.s32.totalorder %s97, %s98
    %p109 = scmp.eq.s32.totalorder %s16, 0
    %p110 = por %p108, %p109
    %p111 = scmp.ne.s32.totalorder %s97, %s98
    %p112 = scmp.eq.s32.totalorder %s17, 1
    %p113 = por %p111, %p112
    %p115 = scmp.ne.s32.totalorder %s98, %s114
    %p116 = scmp.eq.s32.totalorder %s17, 0
    %p117 = por %p115, %p116
    %s118 = ssub.s32 %s11, %s18
    %p119 = scmp.eq.s32.totalorder %s118, 0
    %s121 = sadd.s32 %s120, 1
    %s122 = scalar_select %p119, %s120, %s121
    %p125 = pneg %p119
    %p126 = scmp.eq.s32.totalorder %s11, 1
    %p127 = por %p125, %p126
    %p128 = scmp.ne.s32.totalorder %s120, %s123
    %p129 = scmp.eq.s32.totalorder %s11, 0
    %p130 = por %p128, %p129
    %p131 = scmp.ne.s32.totalorder %s120, %s123
    %p132 = scmp.eq.s32.totalorder %s16, 1
    %p133 = por %p131, %p132
    %p134 = scmp.ne.s32.totalorder %s123, %s124
    %p135 = scmp.eq.s32.totalorder %s16, 0
    %p136 = por %p134, %p135
    %p137 = scmp.ne.s32.totalorder %s123, %s124
    %p138 = scmp.eq.s32.totalorder %s17, 1
    %p139 = por %p137, %p138
    %p141 = scmp.ne.s32.totalorder %s124, %s140
    %p142 = scmp.eq.s32.totalorder %s17, 0
    %p143 = por %p141, %p142
    %p144 = scmp.le.s32.totalorder 1, %s11
    %p145 = scmp.lt.s32.totalorder %s11, 3
    %p146 = pnand %p144, %p145
    %p147 = pneg %p146
    // Predicated region
    $region9: #{doubleconv_forward.3} parent=5 // pred_check
      _
    $region10: #{doubleconv_forward.3} parent=5 // pred_check_branch
      %149 = sbr.rel (%p146) target = $region12
    $region11: #{doubleconv_forward.3} parent=5 // pred_region
      %s150 = ssub.s32 %s11, 1
      // Predicated region
      $region13: #{doubleconv_forward.3} parent=11 // pred_check
        %p151 = pneg %p58
      $region14: #{doubleconv_forward.3} parent=11 // pred_check_branch
        %153 = sbr.rel (%p151) target = $region16
      $region15: #{doubleconv_forward.3} parent=11 // pred_region
        _
      $region16: #{doubleconv_forward.3} parent=11 // pred_fallthru
        _
    $region12: #{doubleconv_forward.3} parent=5 // pred_fallthru
      _
    %p154 = scmp.lt.s32.totalorder %s11, 2
    // Predicated region
    $region17: #{doubleconv_forward.3} parent=5 // pred_check
      %p155 = pneg %p154
    $region18: #{doubleconv_forward.3} parent=5 // pred_check_branch
      %157 = sbr.rel (%p155) target = $region20
    $region19: #{doubleconv_forward.3} parent=5 // pred_region
      // Predicated region
      $region21: #{doubleconv_forward.3} parent=19 // pred_check
        %p158 = pneg %p31
      $region22: #{doubleconv_forward.3} parent=19 // pred_check_branch
        %160 = sbr.rel (%p158) target = $region24
      $region23: #{doubleconv_forward.3} parent=19 // pred_region
        %p161 = scmp.lt.s32.totalorder %s11, 1
        %s162 = scalar_select %p161, %s11, 1
        %s163 = smul.addr %s162, 32
        %s164 = smul.addr %s163, 8
        %s165 = scalar_lea.vmem %s0, %s164
      $region24: #{doubleconv_forward.3} parent=19 // pred_fallthru
        _
    $region20: #{doubleconv_forward.3} parent=5 // pred_fallthru
      _
    %p166 = scmp.le.s32.totalorder 1, %s11
    %p167 = scmp.lt.s32.totalorder %s11, 3
    %p168 = pnand %p166, %p167
    %p169 = pneg %p168
    // Predicated region
    $region25: #{doubleconv_forward.3} parent=5 // pred_check
      _
    $region26: #{doubleconv_forward.3} parent=5 // pred_check_branch
      %171 = sbr.rel (%p168) target = $region28
    $region27: #{doubleconv_forward.3} parent=5 // pred_region
      %s172 = ssub.s32 %s11, 1
      %p173 = scmp.lt.s32.totalorder %s16, 1
      %s174 = scalar_select %p173, %s16, 1
      %s175 = smul.addr %s174, 32
      %s176 = smul.addr %s175, 8
      %s177 = scalar_lea.vmem %s0, %s176
      %p178 = pneg %p37
      %p179 = pneg %p34
      %p180 = pneg %p58
      %p181 = pneg %p55
      %p182 = pneg %p84
      %p183 = pneg %p81
      %p184 = scmp.lt.s32.totalorder %s16, 1
      %s185 = scalar_select %p184, %s16, 1
      %s186 = smul.addr %s185, 32
      %s187 = smul.addr %s186, 4
      %s188 = scalar_lea.vmem %s2, %s187
      %p189 = pneg %p110
      %p190 = pneg %p107
      %p191 = scmp.lt.s32.totalorder %s16, 1
      %s192 = scalar_select %p191, %s16, 1
      %s193 = scalar_lea.vmem %s3, %s192
      %p194 = pneg %p136
      %p195 = pneg %p133
      %p196 = scmp.lt.s32.totalorder %s16, 1
      %s197 = scalar_select %p196, %s16, 1
      %s198 = scalar_lea.vmem %s4, %s197
      %p199 = scmp.lt.s32.totalorder %s16, 1
      %s200 = scalar_select %p199, %s16, 1
      %s201 = smul.addr %s200, 32
      %s202 = smul.addr %s201, 8
      %s203 = scalar_lea.vmem %s0, %s202
      %p204 = scmp.lt.s32.totalorder %s16, 1
      %s205 = scalar_select %p204, %s16, 1
      %s206 = smul.addr %s205, 32
      %s207 = smul.addr %s206, 4
      %s208 = scalar_lea.vmem %s2, %s207
      %p209 = scmp.lt.s32.totalorder %s16, 1
      %s210 = scalar_select %p209, %s16, 1
      %s211 = scalar_lea.vmem %s3, %s210
      %p212 = scmp.lt.s32.totalorder %s16, 1
      %s213 = scalar_select %p212, %s16, 1
      %s214 = scalar_lea.vmem %s4, %s213
      %vm216 = vcmask 27648
      %217 = vst.msk [vmem:[#allocation2] sm:$0xf] %vm216, 0
      %218 = vst.msk [vmem:[#allocation2 + $0x4] sm:$0xf] %vm216, 0
      %vm219 = vcmask 24576
      %220 = vst.msk [vmem:[#allocation2 + $0x8] sm:$0x1] %vm219, 0
      %s221 = scalar_lea.vmem [#allocation2], 204
      %222 = vst.msk [vmem:[%s221] sm:$0xf] %vm216, 0
      %223 = vst.msk [vmem:[%s221 + $0x4] sm:$0xf] %vm216, 0
      %224 = vst.msk [vmem:[%s221 + $0x8] sm:$0x1] %vm219, 0
      %vm225 = vcmask 24576
      %vm226 = vsmask.f32 256
      %vm227 = vmand %vm225, %vm226
      %v228 = vld [vmem:[#allocation2] sm:$0x1]
      %v229 = vsel %vm227, 0, %v228
      %230 = vst [vmem:[#allocation2] sm:$0x1] %v229
      %v231 = vld [vmem:[#allocation2 + $0xc] sm:$0x1]
      %v232 = vsel %vm227, 0, %v231
      %233 = vst [vmem:[#allocation2 + $0xc] sm:$0x1] %v232
      %v234 = vld [vmem:[#allocation2 + $0x18] sm:$0x1]
      %v235 = vsel %vm227, 0, %v234
      %236 = vst [vmem:[#allocation2 + $0x18] sm:$0x1] %v235
      %v237 = vld [vmem:[#allocation2 + $0x24] sm:$0x1]
      %v238 = vsel %vm227, 0, %v237
      %239 = vst [vmem:[#allocation2 + $0x24] sm:$0x1] %v238
      %v240 = vld [vmem:[#allocation2 + $0x30] sm:$0x1]
      %v241 = vsel %vm227, 0, %v240
      %242 = vst [vmem:[#allocation2 + $0x30] sm:$0x1] %v241
      %v243 = vld [vmem:[#allocation2 + $0x3c] sm:$0x1]
      %v244 = vsel %vm227, 0, %v243
      %245 = vst [vmem:[#allocation2 + $0x3c] sm:$0x1] %v244
      %v246 = vld [vmem:[#allocation2 + $0x48] sm:$0x1]
      %v247 = vsel %vm227, 0, %v246
      %248 = vst [vmem:[#allocation2 + $0x48] sm:$0x1] %v247
      %v249 = vld [vmem:[#allocation2 + $0x54] sm:$0x1]
      %v250 = vsel %vm227, 0, %v249
      %251 = vst [vmem:[#allocation2 + $0x54] sm:$0x1] %v250
      %v252 = vld [vmem:[#allocation2 + $0x60] sm:$0x1]
      %v253 = vsel %vm227, 0, %v252
      %254 = vst [vmem:[#allocation2 + $0x60] sm:$0x1] %v253
      %v255 = vld [vmem:[#allocation2 + $0x6c] sm:$0x1]
      %v256 = vsel %vm227, 0, %v255
      %257 = vst [vmem:[#allocation2 + $0x6c] sm:$0x1] %v256
      %v258 = vld [vmem:[#allocation2 + $0x78] sm:$0x1]
      %v259 = vsel %vm227, 0, %v258
      %260 = vst [vmem:[#allocation2 + $0x78] sm:$0x1] %v259
      %v261 = vld [vmem:[#allocation2 + $0x84] sm:$0x1]
      %v262 = vsel %vm227, 0, %v261
      %263 = vst [vmem:[#allocation2 + $0x84] sm:$0x1] %v262
      %v264 = vld [vmem:[#allocation2 + $0x90] sm:$0x1]
      %v265 = vsel %vm227, 0, %v264
      %266 = vst [vmem:[#allocation2 + $0x90] sm:$0x1] %v265
      %v267 = vld [vmem:[#allocation2 + $0x9c] sm:$0x1]
      %v268 = vsel %vm227, 0, %v267
      %269 = vst [vmem:[#allocation2 + $0x9c] sm:$0x1] %v268
      %v270 = vld [vmem:[#allocation2 + $0xa8] sm:$0x1]
      %v271 = vsel %vm227, 0, %v270
      %272 = vst [vmem:[#allocation2 + $0xa8] sm:$0x1] %v271
      %v273 = vld [vmem:[#allocation2 + $0xb4] sm:$0x1]
      %v274 = vsel %vm227, 0, %v273
      %275 = vst [vmem:[#allocation2 + $0xb4] sm:$0x1] %v274
      %v276 = vld [vmem:[#allocation2 + $0xc0] sm:$0x1]
      %v277 = vsel %vm227, 0, %v276
      %278 = vst [vmem:[#allocation2 + $0xc0] sm:$0x1] %v277
      %v279 = vld [vmem:[#allocation2 + $0xcc] sm:$0x1]
      %v280 = vsel %vm227, 0, %v279
      %281 = vst [vmem:[#allocation2 + $0xcc] sm:$0x1] %v280
      %vm282 = vsmask.f32 7938
      %vm283 = vmand %vm225, %vm282
      %v284 = vld [vmem:[#allocation2 + $0x8] sm:$0x1]
      %v285 = vsel %vm283, 0, %v284
      %286 = vst [vmem:[#allocation2 + $0x8] sm:$0x1] %v285
      %v287 = vld [vmem:[#allocation2 + $0x14] sm:$0x1]
      %v288 = vsel %vm283, 0, %v287
      %289 = vst [vmem:[#allocation2 + $0x14] sm:$0x1] %v288
      %v290 = vld [vmem:[#allocation2 + $0x20] sm:$0x1]
      %v291 = vsel %vm283, 0, %v290
      %292 = vst [vmem:[#allocation2 + $0x20] sm:$0x1] %v291
      %v293 = vld [vmem:[#allocation2 + $0x2c] sm:$0x1]
      %v294 = vsel %vm283, 0, %v293
      %295 = vst [vmem:[#allocation2 + $0x2c] sm:$0x1] %v294
      %v296 = vld [vmem:[#allocation2 + $0x38] sm:$0x1]
      %v297 = vsel %vm283, 0, %v296
      %298 = vst [vmem:[#allocation2 + $0x38] sm:$0x1] %v297
      %v299 = vld [vmem:[#allocation2 + $0x44] sm:$0x1]
      %v300 = vsel %vm283, 0, %v299
      %301 = vst [vmem:[#allocation2 + $0x44] sm:$0x1] %v300
      %v302 = vld [vmem:[#allocation2 + $0x50] sm:$0x1]
      %v303 = vsel %vm283, 0, %v302
      %304 = vst [vmem:[#allocation2 + $0x50] sm:$0x1] %v303
      %v305 = vld [vmem:[#allocation2 + $0x5c] sm:$0x1]
      %v306 = vsel %vm283, 0, %v305
      %307 = vst [vmem:[#allocation2 + $0x5c] sm:$0x1] %v306
      %v308 = vld [vmem:[#allocation2 + $0x68] sm:$0x1]
      %v309 = vsel %vm283, 0, %v308
      %310 = vst [vmem:[#allocation2 + $0x68] sm:$0x1] %v309
      %v311 = vld [vmem:[#allocation2 + $0x74] sm:$0x1]
      %v312 = vsel %vm283, 0, %v311
      %313 = vst [vmem:[#allocation2 + $0x74] sm:$0x1] %v312
      %v314 = vld [vmem:[#allocation2 + $0x80] sm:$0x1]
      %v315 = vsel %vm283, 0, %v314
      %316 = vst [vmem:[#allocation2 + $0x80] sm:$0x1] %v315
      %v317 = vld [vmem:[#allocation2 + $0x8c] sm:$0x1]
      %v318 = vsel %vm283, 0, %v317
      %319 = vst [vmem:[#allocation2 + $0x8c] sm:$0x1] %v318
      %v320 = vld [vmem:[#allocation2 + $0x98] sm:$0x1]
      %v321 = vsel %vm283, 0, %v320
      %322 = vst [vmem:[#allocation2 + $0x98] sm:$0x1] %v321
      %v323 = vld [vmem:[#allocation2 + $0xa4] sm:$0x1]
      %v324 = vsel %vm283, 0, %v323
      %325 = vst [vmem:[#allocation2 + $0xa4] sm:$0x1] %v324
      %v326 = vld [vmem:[#allocation2 + $0xb0] sm:$0x1]
      %v327 = vsel %vm283, 0, %v326
      %328 = vst [vmem:[#allocation2 + $0xb0] sm:$0x1] %v327
      %v329 = vld [vmem:[#allocation2 + $0xbc] sm:$0x1]
      %v330 = vsel %vm283, 0, %v329
      %331 = vst [vmem:[#allocation2 + $0xbc] sm:$0x1] %v330
      %v332 = vld [vmem:[#allocation2 + $0xc8] sm:$0x1]
      %v333 = vsel %vm283, 0, %v332
      %334 = vst [vmem:[#allocation2 + $0xc8] sm:$0x1] %v333
      %v335 = vld [vmem:[#allocation2 + $0xd4] sm:$0x1]
      %v336 = vsel %vm283, 0, %v335
      %337 = vst [vmem:[#allocation2 + $0xd4] sm:$0x1] %v336
      %v338 = vld [vmem:[%s203] sm:$0xff]
      %v339 = vld [vmem:[%s203 + $0x8] sm:$0xff]
      %v340 = vld [vmem:[%s203 + $0x10] sm:$0xff]
      %v341 = vld [vmem:[%s203 + $0x18] sm:$0xff]
      %v342 = vld [vmem:[%s203 + $0x20] sm:$0xff]
      %v343 = vld [vmem:[%s203 + $0x28] sm:$0xff]
      %v344 = vld [vmem:[%s203 + $0x30] sm:$0xff]
      %v345 = vld [vmem:[%s203 + $0x38] sm:$0xff]
      %v346 = vld [vmem:[%s203 + $0x40] sm:$0xff]
      %v347 = vld [vmem:[%s203 + $0x48] sm:$0xff]
      %v348 = vld [vmem:[%s203 + $0x50] sm:$0xff]
      %v349 = vld [vmem:[%s203 + $0x58] sm:$0xff]
      %v350 = vld [vmem:[%s203 + $0x60] sm:$0xff]
      %v351 = vld [vmem:[%s203 + $0x68] sm:$0xff]
      %v352 = vld [vmem:[%s203 + $0x70] sm:$0xff]
      %v353 = vld [vmem:[%s203 + $0x78] sm:$0xff]
      %v354 = vld [vmem:[%s203 + $0x80] sm:$0xff]
      %v355 = vld [vmem:[%s203 + $0x88] sm:$0xff]
      %v356 = vld [vmem:[%s203 + $0x90] sm:$0xff]
      %v357 = vld [vmem:[%s203 + $0x98] sm:$0xff]
      %v358 = vld [vmem:[%s203 + $0xa0] sm:$0xff]
      %v359 = vld [vmem:[%s203 + $0xa8] sm:$0xff]
      %v360 = vld [vmem:[%s203 + $0xb0] sm:$0xff]
      %v361 = vld [vmem:[%s203 + $0xb8] sm:$0xff]
      %v362 = vld [vmem:[%s203 + $0xc0] sm:$0xff]
      %v363 = vld [vmem:[%s203 + $0xc8] sm:$0xff]
      %v364 = vld [vmem:[%s203 + $0xd0] sm:$0xff]
      %v365 = vld [vmem:[%s203 + $0xd8] sm:$0xff]
      %v366 = vld [vmem:[%s203 + $0xe0] sm:$0xff]
      %v367 = vld [vmem:[%s203 + $0xe8] sm:$0xff]
      %v368 = vld [vmem:[%s203 + $0xf0] sm:$0xff]
      %v369 = vld [vmem:[%s203 + $0xf8] sm:$0xff]
      %v370 = vpack.c.bf16 %v339, %v338
      %v371 = vpack.c.bf16 %v341, %v340
      %v372 = vpack.c.bf16 %v343, %v342
      %v373 = vpack.c.bf16 %v345, %v344
      %v374 = vpack.c.bf16 %v347, %v346
      %v375 = vpack.c.bf16 %v349, %v348
      %v376 = vpack.c.bf16 %v351, %v350
      %v377 = vpack.c.bf16 %v353, %v352
      %v378 = vpack.c.bf16 %v355, %v354
      %v379 = vpack.c.bf16 %v357, %v356
      %v380 = vpack.c.bf16 %v359, %v358
      %v381 = vpack.c.bf16 %v361, %v360
      %v382 = vpack.c.bf16 %v363, %v362
      %v383 = vpack.c.bf16 %v365, %v364
      %v384 = vpack.c.bf16 %v367, %v366
      %v385 = vpack.c.bf16 %v369, %v368
      %v402 = vunpack.c.l.b16 %v370
      %v403 = vunpack.c.h.b16 %v370
      %v404 = vunpack.c.l.b16 %v371
      %v405 = vunpack.c.h.b16 %v371
      %v406 = vunpack.c.l.b16 %v372
      %v407 = vunpack.c.h.b16 %v372
      %v408 = vunpack.c.l.b16 %v373
      %v409 = vunpack.c.h.b16 %v373
      %v410 = vunpack.c.l.b16 %v374
      %v411 = vunpack.c.h.b16 %v374
      %v412 = vunpack.c.l.b16 %v375
      %v413 = vunpack.c.h.b16 %v375
      %v414 = vunpack.c.l.b16 %v376
      %v415 = vunpack.c.h.b16 %v376
      %v416 = vunpack.c.l.b16 %v377
      %v417 = vunpack.c.h.b16 %v377
      %v418 = vunpack.c.l.b16 %v378
      %v419 = vunpack.c.h.b16 %v378
      %v420 = vunpack.c.l.b16 %v379
      %v421 = vunpack.c.h.b16 %v379
      %v422 = vunpack.c.l.b16 %v380
      %v423 = vunpack.c.h.b16 %v380
      %v424 = vunpack.c.l.b16 %v381
      %v425 = vunpack.c.h.b16 %v381
      %v426 = vunpack.c.l.b16 %v382
      %v427 = vunpack.c.h.b16 %v382
      %v428 = vunpack.c.l.b16 %v383
      %v429 = vunpack.c.h.b16 %v383
      %v430 = vunpack.c.l.b16 %v384
      %v431 = vunpack.c.h.b16 %v384
      %v432 = vunpack.c.l.b16 %v385
      %v433 = vunpack.c.h.b16 %v385
      %v434 = vpack.c.b16 %v402, %v402
      %v435 = vpack.c.b16 %v403, %v403
      %v436 = vpack.c.b16 %v404, %v404
      %v437 = vpack.c.b16 %v405, %v405
      %v438 = vpack.c.b16 %v406, %v406
      %v439 = vpack.c.b16 %v407, %v407
      %v440 = vpack.c.b16 %v408, %v408
      %v441 = vpack.c.b16 %v409, %v409
      %v442 = vpack.c.b16 %v410, %v410
      %v443 = vpack.c.b16 %v411, %v411
      %v444 = vpack.c.b16 %v412, %v412
      %v445 = vpack.c.b16 %v413, %v413
      %v446 = vpack.c.b16 %v414, %v414
      %v447 = vpack.c.b16 %v415, %v415
      %v448 = vpack.c.b16 %v416, %v416
      %v449 = vpack.c.b16 %v417, %v417
      %v450 = vpack.c.b16 %v418, %v418
      %v451 = vpack.c.b16 %v419, %v419
      %v452 = vpack.c.b16 %v420, %v420
      %v453 = vpack.c.b16 %v421, %v421
      %v454 = vpack.c.b16 %v422, %v422
      %v455 = vpack.c.b16 %v423, %v423
      %v456 = vpack.c.b16 %v424, %v424
      %v457 = vpack.c.b16 %v425, %v425
      %v458 = vpack.c.b16 %v426, %v426
      %v459 = vpack.c.b16 %v427, %v427
      %v460 = vpack.c.b16 %v428, %v428
      %v461 = vpack.c.b16 %v429, %v429
      %v462 = vpack.c.b16 %v430, %v430
      %v463 = vpack.c.b16 %v431, %v431
      %v464 = vpack.c.b16 %v432, %v432
      %v465 = vpack.c.b16 %v433, %v433
      %vm466 = vsmask.f32 4368
      %vm467 = vmor %vm226, %vm466
      %v469 = vshrl.u32 %v434, 16
      %v471 = vrot.slane %v469, 7
      %v472 = vshll.u32 %v434, 16
      %v474 = vor.u32 %v471, %v472
      %v475 = vrot.slane %v471, 4
      %v477 = vshrl.u32 %v435, 16
      %v479 = vrot.slane %v477, 7
      %v480 = vshll.u32 %v435, 16
      %v482 = vor.u32 %v479, %v480
      %v483 = vsel %vm467, %v475, %v482
      %v484 = vrot.slane %v479, 4
      %v486 = vshrl.u32 %v436, 16
      %v488 = vrot.slane %v486, 7
      %v489 = vshll.u32 %v436, 16
      %v491 = vor.u32 %v488, %v489
      %v492 = vrot.slane %v488, 4
      %v494 = vshrl.u32 %v437, 16
      %v496 = vrot.slane %v494, 7
      %v497 = vshll.u32 %v437, 16
      %v499 = vor.u32 %v496, %v497
      %v500 = vsel %vm467, %v492, %v499
      %v501 = vrot.slane %v496, 4
      %v503 = vshrl.u32 %v438, 16
      %v505 = vrot.slane %v503, 7
      %v506 = vshll.u32 %v438, 16
      %v508 = vor.u32 %v505, %v506
      %v509 = vrot.slane %v505, 4
      %v511 = vshrl.u32 %v439, 16
      %v513 = vrot.slane %v511, 7
      %v514 = vshll.u32 %v439, 16
      %v516 = vor.u32 %v513, %v514
      %v517 = vsel %vm467, %v509, %v516
      %v518 = vrot.slane %v513, 4
      %v520 = vshrl.u32 %v440, 16
      %v522 = vrot.slane %v520, 7
      %v523 = vshll.u32 %v440, 16
      %v525 = vor.u32 %v522, %v523
      %v526 = vrot.slane %v522, 4
      %v528 = vshrl.u32 %v441, 16
      %v530 = vrot.slane %v528, 7
      %v531 = vshll.u32 %v441, 16
      %v533 = vor.u32 %v530, %v531
      %v534 = vsel %vm467, %v526, %v533
      %v535 = vrot.slane %v530, 4
      %v537 = vshrl.u32 %v442, 16
      %v539 = vrot.slane %v537, 7
      %v540 = vshll.u32 %v442, 16
      %v542 = vor.u32 %v539, %v540
      %v543 = vrot.slane %v539, 4
      %v545 = vshrl.u32 %v443, 16
      %v547 = vrot.slane %v545, 7
      %v548 = vshll.u32 %v443, 16
      %v550 = vor.u32 %v547, %v548
      %v551 = vsel %vm467, %v543, %v550
      %v552 = vrot.slane %v547, 4
      %v554 = vshrl.u32 %v444, 16
      %v556 = vrot.slane %v554, 7
      %v557 = vshll.u32 %v444, 16
      %v559 = vor.u32 %v556, %v557
      %v560 = vrot.slane %v556, 4
      %v562 = vshrl.u32 %v445, 16
      %v564 = vrot.slane %v562, 7
      %v565 = vshll.u32 %v445, 16
      %v567 = vor.u32 %v564, %v565
      %v568 = vsel %vm467, %v560, %v567
      %v569 = vrot.slane %v564, 4
      %v571 = vshrl.u32 %v446, 16
      %v573 = vrot.slane %v571, 7
      %v574 = vshll.u32 %v446, 16
      %v576 = vor.u32 %v573, %v574
      %v577 = vrot.slane %v573, 4
      %v579 = vshrl.u32 %v447, 16
      %v581 = vrot.slane %v579, 7
      %v582 = vshll.u32 %v447, 16
      %v584 = vor.u32 %v581, %v582
      %v585 = vsel %vm467, %v577, %v584
      %v586 = vrot.slane %v581, 4
      %v588 = vshrl.u32 %v448, 16
      %v590 = vrot.slane %v588, 7
      %v591 = vshll.u32 %v448, 16
      %v593 = vor.u32 %v590, %v591
      %v594 = vrot.slane %v590, 4
      %v596 = vshrl.u32 %v449, 16
      %v598 = vrot.slane %v596, 7
      %v599 = vshll.u32 %v449, 16
      %v601 = vor.u32 %v598, %v599
      %v602 = vsel %vm467, %v594, %v601
      %v603 = vrot.slane %v598, 4
      %v605 = vshrl.u32 %v450, 16
      %v607 = vrot.slane %v605, 7
      %v608 = vshll.u32 %v450, 16
      %v610 = vor.u32 %v607, %v608
      %v611 = vrot.slane %v607, 4
      %v613 = vshrl.u32 %v451, 16
      %v615 = vrot.slane %v613, 7
      %v616 = vshll.u32 %v451, 16
      %v618 = vor.u32 %v615, %v616
      %v619 = vsel %vm467, %v611, %v618
      %v620 = vrot.slane %v615, 4
      %v622 = vshrl.u32 %v452, 16
      %v624 = vrot.slane %v622, 7
      %v625 = vshll.u32 %v452, 16
      %v627 = vor.u32 %v624, %v625
      %v628 = vrot.slane %v624, 4
      %v630 = vshrl.u32 %v453, 16
      %v632 = vrot.slane %v630, 7
      %v633 = vshll.u32 %v453, 16
      %v635 = vor.u32 %v632, %v633
      %v636 = vsel %vm467, %v628, %v635
      %v637 = vrot.slane %v632, 4
      %v639 = vshrl.u32 %v454, 16
      %v641 = vrot.slane %v639, 7
      %v642 = vshll.u32 %v454, 16
      %v644 = vor.u32 %v641, %v642
      %v645 = vrot.slane %v641, 4
      %v647 = vshrl.u32 %v455, 16
      %v649 = vrot.slane %v647, 7
      %v650 = vshll.u32 %v455, 16
      %v652 = vor.u32 %v649, %v650
      %v653 = vsel %vm467, %v645, %v652
      %v654 = vrot.slane %v649, 4
      %v656 = vshrl.u32 %v456, 16
      %v658 = vrot.slane %v656, 7
      %v659 = vshll.u32 %v456, 16
      %v661 = vor.u32 %v658, %v659
      %v662 = vrot.slane %v658, 4
      %v664 = vshrl.u32 %v457, 16
      %v666 = vrot.slane %v664, 7
      %v667 = vshll.u32 %v457, 16
      %v669 = vor.u32 %v666, %v667
      %v670 = vsel %vm467, %v662, %v669
      %v671 = vrot.slane %v666, 4
      %v673 = vshrl.u32 %v458, 16
      %v675 = vrot.slane %v673, 7
      %v676 = vshll.u32 %v458, 16
      %v678 = vor.u32 %v675, %v676
      %v679 = vrot.slane %v675, 4
      %v681 = vshrl.u32 %v459, 16
      %v683 = vrot.slane %v681, 7
      %v684 = vshll.u32 %v459, 16
      %v686 = vor.u32 %v683, %v684
      %v687 = vsel %vm467, %v679, %v686
      %v688 = vrot.slane %v683, 4
      %v690 = vshrl.u32 %v460, 16
      %v692 = vrot.slane %v690, 7
      %v693 = vshll.u32 %v460, 16
      %v695 = vor.u32 %v692, %v693
      %v696 = vrot.slane %v692, 4
      %v698 = vshrl.u32 %v461, 16
      %v700 = vrot.slane %v698, 7
      %v701 = vshll.u32 %v461, 16
      %v703 = vor.u32 %v700, %v701
      %v704 = vsel %vm467, %v696, %v703
      %v705 = vrot.slane %v700, 4
      %v707 = vshrl.u32 %v462, 16
      %v709 = vrot.slane %v707, 7
      %v710 = vshll.u32 %v462, 16
      %v712 = vor.u32 %v709, %v710
      %v713 = vrot.slane %v709, 4
      %v715 = vshrl.u32 %v463, 16
      %v717 = vrot.slane %v715, 7
      %v718 = vshll.u32 %v463, 16
      %v720 = vor.u32 %v717, %v718
      %v721 = vsel %vm467, %v713, %v720
      %v722 = vrot.slane %v717, 4
      %v724 = vshrl.u32 %v464, 16
      %v726 = vrot.slane %v724, 7
      %v727 = vshll.u32 %v464, 16
      %v729 = vor.u32 %v726, %v727
      %v730 = vrot.slane %v726, 4
      %v732 = vshrl.u32 %v465, 16
      %v734 = vrot.slane %v732, 7
      %v735 = vshll.u32 %v465, 16
      %v737 = vor.u32 %v734, %v735
      %v738 = vsel %vm467, %v730, %v737
      %v739 = vrot.slane %v734, 4
      %s788 = scalar_lea.vmem [#allocation2], 12
      %vm789 = vcmask 27648
      %vm790 = vmand %vm789, %vm282
      %v791 = vld [vmem:[%s788] sm:$0xf]
      %v792 = vsel %vm790, %v474, %v791
      %793 = vst [vmem:[%s788] sm:$0xf] %v792
      %794 = vst.msk [vmem:[%s788 + $0x4] sm:$0xf] %vm216, %v483
      %v795 = vld [vmem:[%s788 + $0x8] sm:$0x1]
      %v796 = vsel %vm227, %v484, %v795
      %797 = vst [vmem:[%s788 + $0x8] sm:$0x1] %v796
      %v798 = vld [vmem:[%s788 + $0xc] sm:$0xf]
      %v799 = vsel %vm790, %v491, %v798
      %800 = vst [vmem:[%s788 + $0xc] sm:$0xf] %v799
      %801 = vst.msk [vmem:[%s788 + $0x10] sm:$0xf] %vm216, %v500
      %v802 = vld [vmem:[%s788 + $0x14] sm:$0x1]
      %v803 = vsel %vm227, %v501, %v802
      %804 = vst [vmem:[%s788 + $0x14] sm:$0x1] %v803
      %v805 = vld [vmem:[%s788 + $0x18] sm:$0xf]
      %v806 = vsel %vm790, %v508, %v805
      %807 = vst [vmem:[%s788 + $0x18] sm:$0xf] %v806
      %808 = vst.msk [vmem:[%s788 + $0x1c] sm:$0xf] %vm216, %v517
      %v809 = vld [vmem:[%s788 + $0x20] sm:$0x1]
      %v810 = vsel %vm227, %v518, %v809
      %811 = vst [vmem:[%s788 + $0x20] sm:$0x1] %v810
      %v812 = vld [vmem:[%s788 + $0x24] sm:$0xf]
      %v813 = vsel %vm790, %v525, %v812
      %814 = vst [vmem:[%s788 + $0x24] sm:$0xf] %v813
      %815 = vst.msk [vmem:[%s788 + $0x28] sm:$0xf] %vm216, %v534
      %v816 = vld [vmem:[%s788 + $0x2c] sm:$0x1]
      %v817 = vsel %vm227, %v535, %v816
      %818 = vst [vmem:[%s788 + $0x2c] sm:$0x1] %v817
      %v819 = vld [vmem:[%s788 + $0x30] sm:$0xf]
      %v820 = vsel %vm790, %v542, %v819
      %821 = vst [vmem:[%s788 + $0x30] sm:$0xf] %v820
      %822 = vst.msk [vmem:[%s788 + $0x34] sm:$0xf] %vm216, %v551
      %v823 = vld [vmem:[%s788 + $0x38] sm:$0x1]
      %v824 = vsel %vm227, %v552, %v823
      %825 = vst [vmem:[%s788 + $0x38] sm:$0x1] %v824
      %v826 = vld [vmem:[%s788 + $0x3c] sm:$0xf]
      %v827 = vsel %vm790, %v559, %v826
      %828 = vst [vmem:[%s788 + $0x3c] sm:$0xf] %v827
      %829 = vst.msk [vmem:[%s788 + $0x40] sm:$0xf] %vm216, %v568
      %v830 = vld [vmem:[%s788 + $0x44] sm:$0x1]
      %v831 = vsel %vm227, %v569, %v830
      %832 = vst [vmem:[%s788 + $0x44] sm:$0x1] %v831
      %v833 = vld [vmem:[%s788 + $0x48] sm:$0xf]
      %v834 = vsel %vm790, %v576, %v833
      %835 = vst [vmem:[%s788 + $0x48] sm:$0xf] %v834
      %836 = vst.msk [vmem:[%s788 + $0x4c] sm:$0xf] %vm216, %v585
      %v837 = vld [vmem:[%s788 + $0x50] sm:$0x1]
      %v838 = vsel %vm227, %v586, %v837
      %839 = vst [vmem:[%s788 + $0x50] sm:$0x1] %v838
      %v840 = vld [vmem:[%s788 + $0x54] sm:$0xf]
      %v841 = vsel %vm790, %v593, %v840
      %842 = vst [vmem:[%s788 + $0x54] sm:$0xf] %v841
      %843 = vst.msk [vmem:[%s788 + $0x58] sm:$0xf] %vm216, %v602
      %v844 = vld [vmem:[%s788 + $0x5c] sm:$0x1]
      %v845 = vsel %vm227, %v603, %v844
      %846 = vst [vmem:[%s788 + $0x5c] sm:$0x1] %v845
      %v847 = vld [vmem:[%s788 + $0x60] sm:$0xf]
      %v848 = vsel %vm790, %v610, %v847
      %849 = vst [vmem:[%s788 + $0x60] sm:$0xf] %v848
      %850 = vst.msk [vmem:[%s788 + $0x64] sm:$0xf] %vm216, %v619
      %v851 = vld [vmem:[%s788 + $0x68] sm:$0x1]
      %v852 = vsel %vm227, %v620, %v851
      %853 = vst [vmem:[%s788 + $0x68] sm:$0x1] %v852
      %v854 = vld [vmem:[%s788 + $0x6c] sm:$0xf]
      %v855 = vsel %vm790, %v627, %v854
      %856 = vst [vmem:[%s788 + $0x6c] sm:$0xf] %v855
      %857 = vst.msk [vmem:[%s788 + $0x70] sm:$0xf] %vm216, %v636
      %v858 = vld [vmem:[%s788 + $0x74] sm:$0x1]
      %v859 = vsel %vm227, %v637, %v858
      %860 = vst [vmem:[%s788 + $0x74] sm:$0x1] %v859
      %v861 = vld [vmem:[%s788 + $0x78] sm:$0xf]
      %v862 = vsel %vm790, %v644, %v861
      %863 = vst [vmem:[%s788 + $0x78] sm:$0xf] %v862
      %864 = vst.msk [vmem:[%s788 + $0x7c] sm:$0xf] %vm216, %v653
      %v865 = vld [vmem:[%s788 + $0x80] sm:$0x1]
      %v866 = vsel %vm227, %v654, %v865
      %867 = vst [vmem:[%s788 + $0x80] sm:$0x1] %v866
      %v868 = vld [vmem:[%s788 + $0x84] sm:$0xf]
      %v869 = vsel %vm790, %v661, %v868
      %870 = vst [vmem:[%s788 + $0x84] sm:$0xf] %v869
      %871 = vst.msk [vmem:[%s788 + $0x88] sm:$0xf] %vm216, %v670
      %v872 = vld [vmem:[%s788 + $0x8c] sm:$0x1]
      %v873 = vsel %vm227, %v671, %v872
      %874 = vst [vmem:[%s788 + $0x8c] sm:$0x1] %v873
      %v875 = vld [vmem:[%s788 + $0x90] sm:$0xf]
      %v876 = vsel %vm790, %v678, %v875
      %877 = vst [vmem:[%s788 + $0x90] sm:$0xf] %v876
      %878 = vst.msk [vmem:[%s788 + $0x94] sm:$0xf] %vm216, %v687
      %v879 = vld [vmem:[%s788 + $0x98] sm:$0x1]
      %v880 = vsel %vm227, %v688, %v879
      %881 = vst [vmem:[%s788 + $0x98] sm:$0x1] %v880
      %v882 = vld [vmem:[%s788 + $0x9c] sm:$0xf]
      %v883 = vsel %vm790, %v695, %v882
      %884 = vst [vmem:[%s788 + $0x9c] sm:$0xf] %v883
      %885 = vst.msk [vmem:[%s788 + $0xa0] sm:$0xf] %vm216, %v704
      %v886 = vld [vmem:[%s788 + $0xa4] sm:$0x1]
      %v887 = vsel %vm227, %v705, %v886
      %888 = vst [vmem:[%s788 + $0xa4] sm:$0x1] %v887
      %v889 = vld [vmem:[%s788 + $0xa8] sm:$0xf]
      %v890 = vsel %vm790, %v712, %v889
      %891 = vst [vmem:[%s788 + $0xa8] sm:$0xf] %v890
      %892 = vst.msk [vmem:[%s788 + $0xac] sm:$0xf] %vm216, %v721
      %v893 = vld [vmem:[%s788 + $0xb0] sm:$0x1]
      %v894 = vsel %vm227, %v722, %v893
      %895 = vst [vmem:[%s788 + $0xb0] sm:$0x1] %v894
      %v896 = vld [vmem:[%s788 + $0xb4] sm:$0xf]
      %v897 = vsel %vm790, %v729, %v896
      %898 = vst [vmem:[%s788 + $0xb4] sm:$0xf] %v897
      %899 = vst.msk [vmem:[%s788 + $0xb8] sm:$0xf] %vm216, %v738
      %v900 = vld [vmem:[%s788 + $0xbc] sm:$0x1]
      %v901 = vsel %vm227, %v739, %v900
      %902 = vst [vmem:[%s788 + $0xbc] sm:$0x1] %v901
      %v903 = vld [vmem:[#allocation2] sm:$0xf]
      %v904 = vld [vmem:[#allocation2 + $0x4] sm:$0xf]
      %v905 = vld [vmem:[#allocation2 + $0xc] sm:$0xf]
      %v906 = vld [vmem:[#allocation2 + $0x10] sm:$0xf]
      %v907 = vld [vmem:[#allocation2 + $0x18] sm:$0xf]
      %v908 = vld [vmem:[#allocation2 + $0x1c] sm:$0xf]
      %v909 = vld [vmem:[#allocation2 + $0x24] sm:$0xf]
      %v910 = vld [vmem:[#allocation2 + $0x28] sm:$0xf]
      %v911 = vld [vmem:[#allocation2 + $0x30] sm:$0xf]
      %v912 = vld [vmem:[#allocation2 + $0x34] sm:$0xf]
      %v913 = vld [vmem:[#allocation2 + $0x3c] sm:$0xf]
      %v914 = vld [vmem:[#allocation2 + $0x40] sm:$0xf]
      %v915 = vld [vmem:[#allocation2 + $0x48] sm:$0xf]
      %v916 = vld [vmem:[#allocation2 + $0x4c] sm:$0xf]
      %v917 = vld [vmem:[#allocation2 + $0x54] sm:$0xf]
      %v918 = vld [vmem:[#allocation2 + $0x58] sm:$0xf]
      %v919 = vld [vmem:[#allocation2 + $0x60] sm:$0xf]
      %v920 = vld [vmem:[#allocation2 + $0x64] sm:$0xf]
      %v921 = vld [vmem:[#allocation2 + $0x6c] sm:$0xf]
      %v922 = vld [vmem:[#allocation2 + $0x70] sm:$0xf]
      %v923 = vld [vmem:[#allocation2 + $0x78] sm:$0xf]
      %v924 = vld [vmem:[#allocation2 + $0x7c] sm:$0xf]
      %v925 = vld [vmem:[#allocation2 + $0x84] sm:$0xf]
      %v926 = vld [vmem:[#allocation2 + $0x88] sm:$0xf]
      %v927 = vld [vmem:[#allocation2 + $0x90] sm:$0xf]
      %v928 = vld [vmem:[#allocation2 + $0x94] sm:$0xf]
      %v929 = vld [vmem:[#allocation2 + $0x9c] sm:$0xf]
      %v930 = vld [vmem:[#allocation2 + $0xa0] sm:$0xf]
      %v931 = vld [vmem:[#allocation2 + $0xa8] sm:$0xf]
      %v932 = vld [vmem:[#allocation2 + $0xac] sm:$0xf]
      %v933 = vld [vmem:[#allocation2 + $0xb4] sm:$0xf]
      %v934 = vld [vmem:[#allocation2 + $0xb8] sm:$0xf]
      %v935 = vld [vmem:[#allocation2 + $0x8] sm:$0x1]
      %v936 = vld [vmem:[#allocation2 + $0x14] sm:$0x1]
      %v937 = vld [vmem:[#allocation2 + $0x20] sm:$0x1]
      %v938 = vld [vmem:[#allocation2 + $0x2c] sm:$0x1]
      %v939 = vld [vmem:[#allocation2 + $0x38] sm:$0x1]
      %v940 = vld [vmem:[#allocation2 + $0x44] sm:$0x1]
      %v941 = vld [vmem:[#allocation2 + $0x50] sm:$0x1]
      %v942 = vld [vmem:[#allocation2 + $0x5c] sm:$0x1]
      %v943 = vld [vmem:[#allocation2 + $0x68] sm:$0x1]
      %v944 = vld [vmem:[#allocation2 + $0x74] sm:$0x1]
      %v945 = vld [vmem:[#allocation2 + $0x80] sm:$0x1]
      %v946 = vld [vmem:[#allocation2 + $0x8c] sm:$0x1]
      %v947 = vld [vmem:[#allocation2 + $0x98] sm:$0x1]
      %v948 = vld [vmem:[#allocation2 + $0xa4] sm:$0x1]
      %v949 = vld [vmem:[#allocation2 + $0xb0] sm:$0x1]
      %v950 = vld [vmem:[#allocation2 + $0xbc] sm:$0x1]
      %vm951 = vsmask.f32 3328
      %vm952 = vsmask.f32 7440
      %vm953 = vmor %vm951, %vm952
      %v955 = vshrl.u32 %v903, 16
      %v957 = vrot.slane %v955, 4
      %v958 = vshll.u32 %v903, 16
      %v960 = vrot.slane %v958, 5
      %v961 = vor.u32 %v957, %v960
      %v962 = vrot.slane %v961, 4
      %v964 = vshll.u32 %v904, 16
      %v966 = vrot.slane %v964, 5
      %v967 = vsel %vm953, %v962, %v966
      %v968 = vshrl.u32 %v904, 16
      %v970 = vrot.slane %v968, 4
      %v971 = vor.u32 %v970, %v966
      %v972 = vrot.slane %v971, 4
      %v974 = vshll.u32 %v935, 16
      %v976 = vrot.slane %v974, 5
      %v977 = vsel %vm953, %v972, %v976
      %v979 = vshrl.u32 %v905, 16
      %v981 = vrot.slane %v979, 4
      %v982 = vshll.u32 %v905, 16
      %v984 = vrot.slane %v982, 5
      %v985 = vor.u32 %v981, %v984
      %v986 = vrot.slane %v985, 4
      %v988 = vshll.u32 %v906, 16
      %v990 = vrot.slane %v988, 5
      %v991 = vsel %vm953, %v986, %v990
      %v992 = vshrl.u32 %v906, 16
      %v994 = vrot.slane %v992, 4
      %v995 = vor.u32 %v994, %v990
      %v996 = vrot.slane %v995, 4
      %v998 = vshll.u32 %v936, 16
      %v1000 = vrot.slane %v998, 5
      %v1001 = vsel %vm953, %v996, %v1000
      %v1003 = vshrl.u32 %v907, 16
      %v1005 = vrot.slane %v1003, 4
      %v1006 = vshll.u32 %v907, 16
      %v1008 = vrot.slane %v1006, 5
      %v1009 = vor.u32 %v1005, %v1008
      %v1010 = vrot.slane %v1009, 4
      %v1012 = vshll.u32 %v908, 16
      %v1014 = vrot.slane %v1012, 5
      %v1015 = vsel %vm953, %v1010, %v1014
      %v1016 = vshrl.u32 %v908, 16
      %v1018 = vrot.slane %v1016, 4
      %v1019 = vor.u32 %v1018, %v1014
      %v1020 = vrot.slane %v1019, 4
      %v1022 = vshll.u32 %v937, 16
      %v1024 = vrot.slane %v1022, 5
      %v1025 = vsel %vm953, %v1020, %v1024
      %v1027 = vshrl.u32 %v909, 16
      %v1029 = vrot.slane %v1027, 4
      %v1030 = vshll.u32 %v909, 16
      %v1032 = vrot.slane %v1030, 5
      %v1033 = vor.u32 %v1029, %v1032
      %v1034 = vrot.slane %v1033, 4
      %v1036 = vshll.u32 %v910, 16
      %v1038 = vrot.slane %v1036, 5
      %v1039 = vsel %vm953, %v1034, %v1038
      %v1040 = vshrl.u32 %v910, 16
      %v1042 = vrot.slane %v1040, 4
      %v1043 = vor.u32 %v1042, %v1038
      %v1044 = vrot.slane %v1043, 4
      %v1046 = vshll.u32 %v938, 16
      %v1048 = vrot.slane %v1046, 5
      %v1049 = vsel %vm953, %v1044, %v1048
      %v1051 = vshrl.u32 %v911, 16
      %v1053 = vrot.slane %v1051, 4
      %v1054 = vshll.u32 %v911, 16
      %v1056 = vrot.slane %v1054, 5
      %v1057 = vor.u32 %v1053, %v1056
      %v1058 = vrot.slane %v1057, 4
      %v1060 = vshll.u32 %v912, 16
      %v1062 = vrot.slane %v1060, 5
      %v1063 = vsel %vm953, %v1058, %v1062
      %v1064 = vshrl.u32 %v912, 16
      %v1066 = vrot.slane %v1064, 4
      %v1067 = vor.u32 %v1066, %v1062
      %v1068 = vrot.slane %v1067, 4
      %v1070 = vshll.u32 %v939, 16
      %v1072 = vrot.slane %v1070, 5
      %v1073 = vsel %vm953, %v1068, %v1072
      %v1075 = vshrl.u32 %v913, 16
      %v1077 = vrot.slane %v1075, 4
      %v1078 = vshll.u32 %v913, 16
      %v1080 = vrot.slane %v1078, 5
      %v1081 = vor.u32 %v1077, %v1080
      %v1082 = vrot.slane %v1081, 4
      %v1084 = vshll.u32 %v914, 16
      %v1086 = vrot.slane %v1084, 5
      %v1087 = vsel %vm953, %v1082, %v1086
      %v1088 = vshrl.u32 %v914, 16
      %v1090 = vrot.slane %v1088, 4
      %v1091 = vor.u32 %v1090, %v1086
      %v1092 = vrot.slane %v1091, 4
      %v1094 = vshll.u32 %v940, 16
      %v1096 = vrot.slane %v1094, 5
      %v1097 = vsel %vm953, %v1092, %v1096
      %v1099 = vshrl.u32 %v915, 16
      %v1101 = vrot.slane %v1099, 4
      %v1102 = vshll.u32 %v915, 16
      %v1104 = vrot.slane %v1102, 5
      %v1105 = vor.u32 %v1101, %v1104
      %v1106 = vrot.slane %v1105, 4
      %v1108 = vshll.u32 %v916, 16
      %v1110 = vrot.slane %v1108, 5
      %v1111 = vsel %vm953, %v1106, %v1110
      %v1112 = vshrl.u32 %v916, 16
      %v1114 = vrot.slane %v1112, 4
      %v1115 = vor.u32 %v1114, %v1110
      %v1116 = vrot.slane %v1115, 4
      %v1118 = vshll.u32 %v941, 16
      %v1120 = vrot.slane %v1118, 5
      %v1121 = vsel %vm953, %v1116, %v1120
      %v1123 = vshrl.u32 %v917, 16
      %v1125 = vrot.slane %v1123, 4
      %v1126 = vshll.u32 %v917, 16
      %v1128 = vrot.slane %v1126, 5
      %v1129 = vor.u32 %v1125, %v1128
      %v1130 = vrot.slane %v1129, 4
      %v1132 = vshll.u32 %v918, 16
      %v1134 = vrot.slane %v1132, 5
      %v1135 = vsel %vm953, %v1130, %v1134
      %v1136 = vshrl.u32 %v918, 16
      %v1138 = vrot.slane %v1136, 4
      %v1139 = vor.u32 %v1138, %v1134
      %v1140 = vrot.slane %v1139, 4
      %v1142 = vshll.u32 %v942, 16
      %v1144 = vrot.slane %v1142, 5
      %v1145 = vsel %vm953, %v1140, %v1144
      %v1147 = vshrl.u32 %v919, 16
      %v1149 = vrot.slane %v1147, 4
      %v1150 = vshll.u32 %v919, 16
      %v1152 = vrot.slane %v1150, 5
      %v1153 = vor.u32 %v1149, %v1152
      %v1154 = vrot.slane %v1153, 4
      %v1156 = vshll.u32 %v920, 16
      %v1158 = vrot.slane %v1156, 5
      %v1159 = vsel %vm953, %v1154, %v1158
      %v1160 = vshrl.u32 %v920, 16
      %v1162 = vrot.slane %v1160, 4
      %v1163 = vor.u32 %v1162, %v1158
      %v1164 = vrot.slane %v1163, 4
      %v1166 = vshll.u32 %v943, 16
      %v1168 = vrot.slane %v1166, 5
      %v1169 = vsel %vm953, %v1164, %v1168
      %v1171 = vshrl.u32 %v921, 16
      %v1173 = vrot.slane %v1171, 4
      %v1174 = vshll.u32 %v921, 16
      %v1176 = vrot.slane %v1174, 5
      %v1177 = vor.u32 %v1173, %v1176
      %v1178 = vrot.slane %v1177, 4
      %v1180 = vshll.u32 %v922, 16
      %v1182 = vrot.slane %v1180, 5
      %v1183 = vsel %vm953, %v1178, %v1182
      %v1184 = vshrl.u32 %v922, 16
      %v1186 = vrot.slane %v1184, 4
      %v1187 = vor.u32 %v1186, %v1182
      %v1188 = vrot.slane %v1187, 4
      %v1190 = vshll.u32 %v944, 16
      %v1192 = vrot.slane %v1190, 5
      %v1193 = vsel %vm953, %v1188, %v1192
      %v1195 = vshrl.u32 %v923, 16
      %v1197 = vrot.slane %v1195, 4
      %v1198 = vshll.u32 %v923, 16
      %v1200 = vrot.slane %v1198, 5
      %v1201 = vor.u32 %v1197, %v1200
      %v1202 = vrot.slane %v1201, 4
      %v1204 = vshll.u32 %v924, 16
      %v1206 = vrot.slane %v1204, 5
      %v1207 = vsel %vm953, %v1202, %v1206
      %v1208 = vshrl.u32 %v924, 16
      %v1210 = vrot.slane %v1208, 4
      %v1211 = vor.u32 %v1210, %v1206
      %v1212 = vrot.slane %v1211, 4
      %v1214 = vshll.u32 %v945, 16
      %v1216 = vrot.slane %v1214, 5
      %v1217 = vsel %vm953, %v1212, %v1216
      %v1219 = vshrl.u32 %v925, 16
      %v1221 = vrot.slane %v1219, 4
      %v1222 = vshll.u32 %v925, 16
      %v1224 = vrot.slane %v1222, 5
      %v1225 = vor.u32 %v1221, %v1224
      %v1226 = vrot.slane %v1225, 4
      %v1228 = vshll.u32 %v926, 16
      %v1230 = vrot.slane %v1228, 5
      %v1231 = vsel %vm953, %v1226, %v1230
      %v1232 = vshrl.u32 %v926, 16
      %v1234 = vrot.slane %v1232, 4
      %v1235 = vor.u32 %v1234, %v1230
      %v1236 = vrot.slane %v1235, 4
      %v1238 = vshll.u32 %v946, 16
      %v1240 = vrot.slane %v1238, 5
      %v1241 = vsel %vm953, %v1236, %v1240
      %v1243 = vshrl.u32 %v927, 16
      %v1245 = vrot.slane %v1243, 4
      %v1246 = vshll.u32 %v927, 16
      %v1248 = vrot.slane %v1246, 5
      %v1249 = vor.u32 %v1245, %v1248
      %v1250 = vrot.slane %v1249, 4
      %v1252 = vshll.u32 %v928, 16
      %v1254 = vrot.slane %v1252, 5
      %v1255 = vsel %vm953, %v1250, %v1254
      %v1256 = vshrl.u32 %v928, 16
      %v1258 = vrot.slane %v1256, 4
      %v1259 = vor.u32 %v1258, %v1254
      %v1260 = vrot.slane %v1259, 4
      %v1262 = vshll.u32 %v947, 16
      %v1264 = vrot.slane %v1262, 5
      %v1265 = vsel %vm953, %v1260, %v1264
      %v1267 = vshrl.u32 %v929, 16
      %v1269 = vrot.slane %v1267, 4
      %v1270 = vshll.u32 %v929, 16
      %v1272 = vrot.slane %v1270, 5
      %v1273 = vor.u32 %v1269, %v1272
      %v1274 = vrot.slane %v1273, 4
      %v1276 = vshll.u32 %v930, 16
      %v1278 = vrot.slane %v1276, 5
      %v1279 = vsel %vm953, %v1274, %v1278
      %v1280 = vshrl.u32 %v930, 16
      %v1282 = vrot.slane %v1280, 4
      %v1283 = vor.u32 %v1282, %v1278
      %v1284 = vrot.slane %v1283, 4
      %v1286 = vshll.u32 %v948, 16
      %v1288 = vrot.slane %v1286, 5
      %v1289 = vsel %vm953, %v1284, %v1288
      %v1291 = vshrl.u32 %v931, 16
      %v1293 = vrot.slane %v1291, 4
      %v1294 = vshll.u32 %v931, 16
      %v1296 = vrot.slane %v1294, 5
      %v1297 = vor.u32 %v1293, %v1296
      %v1298 = vrot.slane %v1297, 4
      %v1300 = vshll.u32 %v932, 16
      %v1302 = vrot.slane %v1300, 5
      %v1303 = vsel %vm953, %v1298, %v1302
      %v1304 = vshrl.u32 %v932, 16
      %v1306 = vrot.slane %v1304, 4
      %v1307 = vor.u32 %v1306, %v1302
      %v1308 = vrot.slane %v1307, 4
      %v1310 = vshll.u32 %v949, 16
      %v1312 = vrot.slane %v1310, 5
      %v1313 = vsel %vm953, %v1308, %v1312
      %v1315 = vshrl.u32 %v933, 16
      %v1317 = vrot.slane %v1315, 4
      %v1318 = vshll.u32 %v933, 16
      %v1320 = vrot.slane %v1318, 5
      %v1321 = vor.u32 %v1317, %v1320
      %v1322 = vrot.slane %v1321, 4
      %v1324 = vshll.u32 %v934, 16
      %v1326 = vrot.slane %v1324, 5
      %v1327 = vsel %vm953, %v1322, %v1326
      %v1328 = vshrl.u32 %v934, 16
      %v1330 = vrot.slane %v1328, 4
      %v1331 = vor.u32 %v1330, %v1326
      %v1332 = vrot.slane %v1331, 4
      %v1334 = vshll.u32 %v950, 16
      %v1336 = vrot.slane %v1334, 5
      %v1337 = vsel %vm953, %v1332, %v1336
      %v1338 = vld [vmem:[#allocation2] sm:$0xe]
      %v1339 = vld [vmem:[#allocation2 + $0xc] sm:$0xe]
      %v1340 = vld [vmem:[#allocation2 + $0x18] sm:$0xe]
      %v1341 = vld [vmem:[#allocation2 + $0x24] sm:$0xe]
      %v1342 = vld [vmem:[#allocation2 + $0x30] sm:$0xe]
      %v1343 = vld [vmem:[#allocation2 + $0x3c] sm:$0xe]
      %v1344 = vld [vmem:[#allocation2 + $0x48] sm:$0xe]
      %v1345 = vld [vmem:[#allocation2 + $0x54] sm:$0xe]
      %v1346 = vld [vmem:[#allocation2 + $0x60] sm:$0xe]
      %v1347 = vld [vmem:[#allocation2 + $0x6c] sm:$0xe]
      %v1348 = vld [vmem:[#allocation2 + $0x78] sm:$0xe]
      %v1349 = vld [vmem:[#allocation2 + $0x84] sm:$0xe]
      %v1350 = vld [vmem:[#allocation2 + $0x90] sm:$0xe]
      %v1351 = vld [vmem:[#allocation2 + $0x9c] sm:$0xe]
      %v1352 = vld [vmem:[#allocation2 + $0xa8] sm:$0xe]
      %v1353 = vld [vmem:[#allocation2 + $0xb4] sm:$0xe]
      %vm1402 = vcmask 1042432
      %vm1403 = vcmask 1046532
      %vm1404 = vmor %vm1402, %vm1403
      %v1405 = vrot.slane %v1338, 5
      %v1406 = vrot.slane %v1405, 4
      %v1407 = vrot.slane %v904, 5
      %v1408 = vsel %vm1404, %v1406, %v1407
      %v1409 = vrot.slane %v1407, 4
      %v1410 = vrot.slane %v935, 5
      %v1411 = vsel %vm1404, %v1409, %v1410
      %v1412 = vrot.slane %v1339, 5
      %v1413 = vrot.slane %v1412, 4
      %v1414 = vrot.slane %v906, 5
      %v1415 = vsel %vm1404, %v1413, %v1414
      %v1416 = vrot.slane %v1414, 4
      %v1417 = vrot.slane %v936, 5
      %v1418 = vsel %vm1404, %v1416, %v1417
      %v1419 = vrot.slane %v1340, 5
      %v1420 = vrot.slane %v1419, 4
      %v1421 = vrot.slane %v908, 5
      %v1422 = vsel %vm1404, %v1420, %v1421
      %v1423 = vrot.slane %v1421, 4
      %v1424 = vrot.slane %v937, 5
      %v1425 = vsel %vm1404, %v1423, %v1424
      %v1426 = vrot.slane %v1341, 5
      %v1427 = vrot.slane %v1426, 4
      %v1428 = vrot.slane %v910, 5
      %v1429 = vsel %vm1404, %v1427, %v1428
      %v1430 = vrot.slane %v1428, 4
      %v1431 = vrot.slane %v938, 5
      %v1432 = vsel %vm1404, %v1430, %v1431
      %v1433 = vrot.slane %v1342, 5
      %v1434 = vrot.slane %v1433, 4
      %v1435 = vrot.slane %v912, 5
      %v1436 = vsel %vm1404, %v1434, %v1435
      %v1437 = vrot.slane %v1435, 4
      %v1438 = vrot.slane %v939, 5
      %v1439 = vsel %vm1404, %v1437, %v1438
      %v1440 = vrot.slane %v1343, 5
      %v1441 = vrot.slane %v1440, 4
      %v1442 = vrot.slane %v914, 5
      %v1443 = vsel %vm1404, %v1441, %v1442
      %v1444 = vrot.slane %v1442, 4
      %v1445 = vrot.slane %v940, 5
      %v1446 = vsel %vm1404, %v1444, %v1445
      %v1447 = vrot.slane %v1344, 5
      %v1448 = vrot.slane %v1447, 4
      %v1449 = vrot.slane %v916, 5
      %v1450 = vsel %vm1404, %v1448, %v1449
      %v1451 = vrot.slane %v1449, 4
      %v1452 = vrot.slane %v941, 5
      %v1453 = vsel %vm1404, %v1451, %v1452
      %v1454 = vrot.slane %v1345, 5
      %v1455 = vrot.slane %v1454, 4
      %v1456 = vrot.slane %v918, 5
      %v1457 = vsel %vm1404, %v1455, %v1456
      %v1458 = vrot.slane %v1456, 4
      %v1459 = vrot.slane %v942, 5
      %v1460 = vsel %vm1404, %v1458, %v1459
      %v1461 = vrot.slane %v1346, 5
      %v1462 = vrot.slane %v1461, 4
      %v1463 = vrot.slane %v920, 5
      %v1464 = vsel %vm1404, %v1462, %v1463
      %v1465 = vrot.slane %v1463, 4
      %v1466 = vrot.slane %v943, 5
      %v1467 = vsel %vm1404, %v1465, %v1466
      %v1468 = vrot.slane %v1347, 5
      %v1469 = vrot.slane %v1468, 4
      %v1470 = vrot.slane %v922, 5
      %v1471 = vsel %vm1404, %v1469, %v1470
      %v1472 = vrot.slane %v1470, 4
      %v1473 = vrot.slane %v944, 5
      %v1474 = vsel %vm1404, %v1472, %v1473
      %v1475 = vrot.slane %v1348, 5
      %v1476 = vrot.slane %v1475, 4
      %v1477 = vrot.slane %v924, 5
      %v1478 = vsel %vm1404, %v1476, %v1477
      %v1479 = vrot.slane %v1477, 4
      %v1480 = vrot.slane %v945, 5
      %v1481 = vsel %vm1404, %v1479, %v1480
      %v1482 = vrot.slane %v1349, 5
      %v1483 = vrot.slane %v1482, 4
      %v1484 = vrot.slane %v926, 5
      %v1485 = vsel %vm1404, %v1483, %v1484
      %v1486 = vrot.slane %v1484, 4
      %v1487 = vrot.slane %v946, 5
      %v1488 = vsel %vm1404, %v1486, %v1487
      %v1489 = vrot.slane %v1350, 5
      %v1490 = vrot.slane %v1489, 4
      %v1491 = vrot.slane %v928, 5
      %v1492 = vsel %vm1404, %v1490, %v1491
      %v1493 = vrot.slane %v1491, 4
      %v1494 = vrot.slane %v947, 5
      %v1495 = vsel %vm1404, %v1493, %v1494
      %v1496 = vrot.slane %v1351, 5
      %v1497 = vrot.slane %v1496, 4
      %v1498 = vrot.slane %v930, 5
      %v1499 = vsel %vm1404, %v1497, %v1498
      %v1500 = vrot.slane %v1498, 4
      %v1501 = vrot.slane %v948, 5
      %v1502 = vsel %vm1404, %v1500, %v1501
      %v1503 = vrot.slane %v1352, 5
      %v1504 = vrot.slane %v1503, 4
      %v1505 = vrot.slane %v932, 5
      %v1506 = vsel %vm1404, %v1504, %v1505
      %v1507 = vrot.slane %v1505, 4
      %v1508 = vrot.slane %v949, 5
      %v1509 = vsel %vm1404, %v1507, %v1508
      %v1510 = vrot.slane %v1353, 5
      %v1511 = vrot.slane %v1510, 4
      %v1512 = vrot.slane %v934, 5
      %v1513 = vsel %vm1404, %v1511, %v1512
      %v1514 = vrot.slane %v1512, 4
      %v1515 = vrot.slane %v950, 5
      %v1516 = vsel %vm1404, %v1514, %v1515
      %v1517 = vld [vmem:[%s788] sm:$0xf]
      %v1518 = vld [vmem:[%s788 + $0x4] sm:$0xf]
      %v1519 = vld [vmem:[%s788 + $0xc] sm:$0xf]
      %v1520 = vld [vmem:[%s788 + $0x10] sm:$0xf]
      %v1521 = vld [vmem:[%s788 + $0x18] sm:$0xf]
      %v1522 = vld [vmem:[%s788 + $0x1c] sm:$0xf]
      %v1523 = vld [vmem:[%s788 + $0x24] sm:$0xf]
      %v1524 = vld [vmem:[%s788 + $0x28] sm:$0xf]
      %v1525 = vld [vmem:[%s788 + $0x30] sm:$0xf]
      %v1526 = vld [vmem:[%s788 + $0x34] sm:$0xf]
      %v1527 = vld [vmem:[%s788 + $0x3c] sm:$0xf]
      %v1528 = vld [vmem:[%s788 + $0x40] sm:$0xf]
      %v1529 = vld [vmem:[%s788 + $0x48] sm:$0xf]
      %v1530 = vld [vmem:[%s788 + $0x4c] sm:$0xf]
      %v1531 = vld [vmem:[%s788 + $0x54] sm:$0xf]
      %v1532 = vld [vmem:[%s788 + $0x58] sm:$0xf]
      %v1533 = vld [vmem:[%s788 + $0x60] sm:$0xf]
      %v1534 = vld [vmem:[%s788 + $0x64] sm:$0xf]
      %v1535 = vld [vmem:[%s788 + $0x6c] sm:$0xf]
      %v1536 = vld [vmem:[%s788 + $0x70] sm:$0xf]
      %v1537 = vld [vmem:[%s788 + $0x78] sm:$0xf]
      %v1538 = vld [vmem:[%s788 + $0x7c] sm:$0xf]
      %v1539 = vld [vmem:[%s788 + $0x84] sm:$0xf]
      %v1540 = vld [vmem:[%s788 + $0x88] sm:$0xf]
      %v1541 = vld [vmem:[%s788 + $0x90] sm:$0xf]
      %v1542 = vld [vmem:[%s788 + $0x94] sm:$0xf]
      %v1543 = vld [vmem:[%s788 + $0x9c] sm:$0xf]
      %v1544 = vld [vmem:[%s788 + $0xa0] sm:$0xf]
      %v1545 = vld [vmem:[%s788 + $0xa8] sm:$0xf]
      %v1546 = vld [vmem:[%s788 + $0xac] sm:$0xf]
      %v1547 = vld [vmem:[%s788 + $0xb4] sm:$0xf]
      %v1548 = vld [vmem:[%s788 + $0xb8] sm:$0xf]
      %v1549 = vld [vmem:[%s788 + $0x8] sm:$0x1]
      %v1550 = vld [vmem:[%s788 + $0x14] sm:$0x1]
      %v1551 = vld [vmem:[%s788 + $0x20] sm:$0x1]
      %v1552 = vld [vmem:[%s788 + $0x2c] sm:$0x1]
      %v1553 = vld [vmem:[%s788 + $0x38] sm:$0x1]
      %v1554 = vld [vmem:[%s788 + $0x44] sm:$0x1]
      %v1555 = vld [vmem:[%s788 + $0x50] sm:$0x1]
      %v1556 = vld [vmem:[%s788 + $0x5c] sm:$0x1]
      %v1557 = vld [vmem:[%s788 + $0x68] sm:$0x1]
      %v1558 = vld [vmem:[%s788 + $0x74] sm:$0x1]
      %v1559 = vld [vmem:[%s788 + $0x80] sm:$0x1]
      %v1560 = vld [vmem:[%s788 + $0x8c] sm:$0x1]
      %v1561 = vld [vmem:[%s788 + $0x98] sm:$0x1]
      %v1562 = vld [vmem:[%s788 + $0xa4] sm:$0x1]
      %v1563 = vld [vmem:[%s788 + $0xb0] sm:$0x1]
      %v1564 = vld [vmem:[%s788 + $0xbc] sm:$0x1]
      %v1566 = vshrl.u32 %v1517, 16
      %v1568 = vrot.slane %v1566, 4
      %v1569 = vshll.u32 %v1517, 16
      %v1571 = vrot.slane %v1569, 5
      %v1572 = vor.u32 %v1568, %v1571
      %v1573 = vrot.slane %v1572, 4
      %v1575 = vshll.u32 %v1518, 16
      %v1577 = vrot.slane %v1575, 5
      %v1578 = vsel %vm953, %v1573, %v1577
      %v1579 = vshrl.u32 %v1518, 16
      %v1581 = vrot.slane %v1579, 4
      %v1582 = vor.u32 %v1581, %v1577
      %v1583 = vrot.slane %v1582, 4
      %v1585 = vshll.u32 %v1549, 16
      %v1587 = vrot.slane %v1585, 5
      %v1588 = vsel %vm953, %v1583, %v1587
      %v1590 = vshrl.u32 %v1519, 16
      %v1592 = vrot.slane %v1590, 4
      %v1593 = vshll.u32 %v1519, 16
      %v1595 = vrot.slane %v1593, 5
      %v1596 = vor.u32 %v1592, %v1595
      %v1597 = vrot.slane %v1596, 4
      %v1599 = vshll.u32 %v1520, 16
      %v1601 = vrot.slane %v1599, 5
      %v1602 = vsel %vm953, %v1597, %v1601
      %v1603 = vshrl.u32 %v1520, 16
      %v1605 = vrot.slane %v1603, 4
      %v1606 = vor.u32 %v1605, %v1601
      %v1607 = vrot.slane %v1606, 4
      %v1609 = vshll.u32 %v1550, 16
      %v1611 = vrot.slane %v1609, 5
      %v1612 = vsel %vm953, %v1607, %v1611
      %v1614 = vshrl.u32 %v1521, 16
      %v1616 = vrot.slane %v1614, 4
      %v1617 = vshll.u32 %v1521, 16
      %v1619 = vrot.slane %v1617, 5
      %v1620 = vor.u32 %v1616, %v1619
      %v1621 = vrot.slane %v1620, 4
      %v1623 = vshll.u32 %v1522, 16
      %v1625 = vrot.slane %v1623, 5
      %v1626 = vsel %vm953, %v1621, %v1625
      %v1627 = vshrl.u32 %v1522, 16
      %v1629 = vrot.slane %v1627, 4
      %v1630 = vor.u32 %v1629, %v1625
      %v1631 = vrot.slane %v1630, 4
      %v1633 = vshll.u32 %v1551, 16
      %v1635 = vrot.slane %v1633, 5
      %v1636 = vsel %vm953, %v1631, %v1635
      %v1638 = vshrl.u32 %v1523, 16
      %v1640 = vrot.slane %v1638, 4
      %v1641 = vshll.u32 %v1523, 16
      %v1643 = vrot.slane %v1641, 5
      %v1644 = vor.u32 %v1640, %v1643
      %v1645 = vrot.slane %v1644, 4
      %v1647 = vshll.u32 %v1524, 16
      %v1649 = vrot.slane %v1647, 5
      %v1650 = vsel %vm953, %v1645, %v1649
      %v1651 = vshrl.u32 %v1524, 16
      %v1653 = vrot.slane %v1651, 4
      %v1654 = vor.u32 %v1653, %v1649
      %v1655 = vrot.slane %v1654, 4
      %v1657 = vshll.u32 %v1552, 16
      %v1659 = vrot.slane %v1657, 5
      %v1660 = vsel %vm953, %v1655, %v1659
      %v1662 = vshrl.u32 %v1525, 16
      %v1664 = vrot.slane %v1662, 4
      %v1665 = vshll.u32 %v1525, 16
      %v1667 = vrot.slane %v1665, 5
      %v1668 = vor.u32 %v1664, %v1667
      %v1669 = vrot.slane %v1668, 4
      %v1671 = vshll.u32 %v1526, 16
      %v1673 = vrot.slane %v1671, 5
      %v1674 = vsel %vm953, %v1669, %v1673
      %v1675 = vshrl.u32 %v1526, 16
      %v1677 = vrot.slane %v1675, 4
      %v1678 = vor.u32 %v1677, %v1673
      %v1679 = vrot.slane %v1678, 4
      %v1681 = vshll.u32 %v1553, 16
      %v1683 = vrot.slane %v1681, 5
      %v1684 = vsel %vm953, %v1679, %v1683
      %v1686 = vshrl.u32 %v1527, 16
      %v1688 = vrot.slane %v1686, 4
      %v1689 = vshll.u32 %v1527, 16
      %v1691 = vrot.slane %v1689, 5
      %v1692 = vor.u32 %v1688, %v1691
      %v1693 = vrot.slane %v1692, 4
      %v1695 = vshll.u32 %v1528, 16
      %v1697 = vrot.slane %v1695, 5
      %v1698 = vsel %vm953, %v1693, %v1697
      %v1699 = vshrl.u32 %v1528, 16
      %v1701 = vrot.slane %v1699, 4
      %v1702 = vor.u32 %v1701, %v1697
      %v1703 = vrot.slane %v1702, 4
      %v1705 = vshll.u32 %v1554, 16
      %v1707 = vrot.slane %v1705, 5
      %v1708 = vsel %vm953, %v1703, %v1707
      %v1710 = vshrl.u32 %v1529, 16
      %v1712 = vrot.slane %v1710, 4
      %v1713 = vshll.u32 %v1529, 16
      %v1715 = vrot.slane %v1713, 5
      %v1716 = vor.u32 %v1712, %v1715
      %v1717 = vrot.slane %v1716, 4
      %v1719 = vshll.u32 %v1530, 16
      %v1721 = vrot.slane %v1719, 5
      %v1722 = vsel %vm953, %v1717, %v1721
      %v1723 = vshrl.u32 %v1530, 16
      %v1725 = vrot.slane %v1723, 4
      %v1726 = vor.u32 %v1725, %v1721
      %v1727 = vrot.slane %v1726, 4
      %v1729 = vshll.u32 %v1555, 16
      %v1731 = vrot.slane %v1729, 5
      %v1732 = vsel %vm953, %v1727, %v1731
      %v1734 = vshrl.u32 %v1531, 16
      %v1736 = vrot.slane %v1734, 4
      %v1737 = vshll.u32 %v1531, 16
      %v1739 = vrot.slane %v1737, 5
      %v1740 = vor.u32 %v1736, %v1739
      %v1741 = vrot.slane %v1740, 4
      %v1743 = vshll.u32 %v1532, 16
      %v1745 = vrot.slane %v1743, 5
      %v1746 = vsel %vm953, %v1741, %v1745
      %v1747 = vshrl.u32 %v1532, 16
      %v1749 = vrot.slane %v1747, 4
      %v1750 = vor.u32 %v1749, %v1745
      %v1751 = vrot.slane %v1750, 4
      %v1753 = vshll.u32 %v1556, 16
      %v1755 = vrot.slane %v1753, 5
      %v1756 = vsel %vm953, %v1751, %v1755
      %v1758 = vshrl.u32 %v1533, 16
      %v1760 = vrot.slane %v1758, 4
      %v1761 = vshll.u32 %v1533, 16
      %v1763 = vrot.slane %v1761, 5
      %v1764 = vor.u32 %v1760, %v1763
      %v1765 = vrot.slane %v1764, 4
      %v1767 = vshll.u32 %v1534, 16
      %v1769 = vrot.slane %v1767, 5
      %v1770 = vsel %vm953, %v1765, %v1769
      %v1771 = vshrl.u32 %v1534, 16
      %v1773 = vrot.slane %v1771, 4
      %v1774 = vor.u32 %v1773, %v1769
      %v1775 = vrot.slane %v1774, 4
      %v1777 = vshll.u32 %v1557, 16
      %v1779 = vrot.slane %v1777, 5
      %v1780 = vsel %vm953, %v1775, %v1779
      %v1782 = vshrl.u32 %v1535, 16
      %v1784 = vrot.slane %v1782, 4
      %v1785 = vshll.u32 %v1535, 16
      %v1787 = vrot.slane %v1785, 5
      %v1788 = vor.u32 %v1784, %v1787
      %v1789 = vrot.slane %v1788, 4
      %v1791 = vshll.u32 %v1536, 16
      %v1793 = vrot.slane %v1791, 5
      %v1794 = vsel %vm953, %v1789, %v1793
      %v1795 = vshrl.u32 %v1536, 16
      %v1797 = vrot.slane %v1795, 4
      %v1798 = vor.u32 %v1797, %v1793
      %v1799 = vrot.slane %v1798, 4
      %v1801 = vshll.u32 %v1558, 16
      %v1803 = vrot.slane %v1801, 5
      %v1804 = vsel %vm953, %v1799, %v1803
      %v1806 = vshrl.u32 %v1537, 16
      %v1808 = vrot.slane %v1806, 4
      %v1809 = vshll.u32 %v1537, 16
      %v1811 = vrot.slane %v1809, 5
      %v1812 = vor.u32 %v1808, %v1811
      %v1813 = vrot.slane %v1812, 4
      %v1815 = vshll.u32 %v1538, 16
      %v1817 = vrot.slane %v1815, 5
      %v1818 = vsel %vm953, %v1813, %v1817
      %v1819 = vshrl.u32 %v1538, 16
      %v1821 = vrot.slane %v1819, 4
      %v1822 = vor.u32 %v1821, %v1817
      %v1823 = vrot.slane %v1822, 4
      %v1825 = vshll.u32 %v1559, 16
      %v1827 = vrot.slane %v1825, 5
      %v1828 = vsel %vm953, %v1823, %v1827
      %v1830 = vshrl.u32 %v1539, 16
      %v1832 = vrot.slane %v1830, 4
      %v1833 = vshll.u32 %v1539, 16
      %v1835 = vrot.slane %v1833, 5
      %v1836 = vor.u32 %v1832, %v1835
      %v1837 = vrot.slane %v1836, 4
      %v1839 = vshll.u32 %v1540, 16
      %v1841 = vrot.slane %v1839, 5
      %v1842 = vsel %vm953, %v1837, %v1841
      %v1843 = vshrl.u32 %v1540, 16
      %v1845 = vrot.slane %v1843, 4
      %v1846 = vor.u32 %v1845, %v1841
      %v1847 = vrot.slane %v1846, 4
      %v1849 = vshll.u32 %v1560, 16
      %v1851 = vrot.slane %v1849, 5
      %v1852 = vsel %vm953, %v1847, %v1851
      %v1854 = vshrl.u32 %v1541, 16
      %v1856 = vrot.slane %v1854, 4
      %v1857 = vshll.u32 %v1541, 16
      %v1859 = vrot.slane %v1857, 5
      %v1860 = vor.u32 %v1856, %v1859
      %v1861 = vrot.slane %v1860, 4
      %v1863 = vshll.u32 %v1542, 16
      %v1865 = vrot.slane %v1863, 5
      %v1866 = vsel %vm953, %v1861, %v1865
      %v1867 = vshrl.u32 %v1542, 16
      %v1869 = vrot.slane %v1867, 4
      %v1870 = vor.u32 %v1869, %v1865
      %v1871 = vrot.slane %v1870, 4
      %v1873 = vshll.u32 %v1561, 16
      %v1875 = vrot.slane %v1873, 5
      %v1876 = vsel %vm953, %v1871, %v1875
      %v1878 = vshrl.u32 %v1543, 16
      %v1880 = vrot.slane %v1878, 4
      %v1881 = vshll.u32 %v1543, 16
      %v1883 = vrot.slane %v1881, 5
      %v1884 = vor.u32 %v1880, %v1883
      %v1885 = vrot.slane %v1884, 4
      %v1887 = vshll.u32 %v1544, 16
      %v1889 = vrot.slane %v1887, 5
      %v1890 = vsel %vm953, %v1885, %v1889
      %v1891 = vshrl.u32 %v1544, 16
      %v1893 = vrot.slane %v1891, 4
      %v1894 = vor.u32 %v1893, %v1889
      %v1895 = vrot.slane %v1894, 4
      %v1897 = vshll.u32 %v1562, 16
      %v1899 = vrot.slane %v1897, 5
      %v1900 = vsel %vm953, %v1895, %v1899
      %v1902 = vshrl.u32 %v1545, 16
      %v1904 = vrot.slane %v1902, 4
      %v1905 = vshll.u32 %v1545, 16
      %v1907 = vrot.slane %v1905, 5
      %v1908 = vor.u32 %v1904, %v1907
      %v1909 = vrot.slane %v1908, 4
      %v1911 = vshll.u32 %v1546, 16
      %v1913 = vrot.slane %v1911, 5
      %v1914 = vsel %vm953, %v1909, %v1913
      %v1915 = vshrl.u32 %v1546, 16
      %v1917 = vrot.slane %v1915, 4
      %v1918 = vor.u32 %v1917, %v1913
      %v1919 = vrot.slane %v1918, 4
      %v1921 = vshll.u32 %v1563, 16
      %v1923 = vrot.slane %v1921, 5
      %v1924 = vsel %vm953, %v1919, %v1923
      %v1926 = vshrl.u32 %v1547, 16
      %v1928 = vrot.slane %v1926, 4
      %v1929 = vshll.u32 %v1547, 16
      %v1931 = vrot.slane %v1929, 5
      %v1932 = vor.u32 %v1928, %v1931
      %v1933 = vrot.slane %v1932, 4
      %v1935 = vshll.u32 %v1548, 16
      %v1937 = vrot.slane %v1935, 5
      %v1938 = vsel %vm953, %v1933, %v1937
      %v1939 = vshrl.u32 %v1548, 16
      %v1941 = vrot.slane %v1939, 4
      %v1942 = vor.u32 %v1941, %v1937
      %v1943 = vrot.slane %v1942, 4
      %v1945 = vshll.u32 %v1564, 16
      %v1947 = vrot.slane %v1945, 5
      %v1948 = vsel %vm953, %v1943, %v1947
      %v1949 = vld [vmem:[%s788] sm:$0xe]
      %v1950 = vld [vmem:[%s788 + $0xc] sm:$0xe]
      %v1951 = vld [vmem:[%s788 + $0x18] sm:$0xe]
      %v1952 = vld [vmem:[%s788 + $0x24] sm:$0xe]
      %v1953 = vld [vmem:[%s788 + $0x30] sm:$0xe]
      %v1954 = vld [vmem:[%s788 + $0x3c] sm:$0xe]
      %v1955 = vld [vmem:[%s788 + $0x48] sm:$0xe]
      %v1956 = vld [vmem:[%s788 + $0x54] sm:$0xe]
      %v1957 = vld [vmem:[%s788 + $0x60] sm:$0xe]
      %v1958 = vld [vmem:[%s788 + $0x6c] sm:$0xe]
      %v1959 = vld [vmem:[%s788 + $0x78] sm:$0xe]
      %v1960 = vld [vmem:[%s788 + $0x84] sm:$0xe]
      %v1961 = vld [vmem:[%s788 + $0x90] sm:$0xe]
      %v1962 = vld [vmem:[%s788 + $0x9c] sm:$0xe]
      %v1963 = vld [vmem:[%s788 + $0xa8] sm:$0xe]
      %v1964 = vld [vmem:[%s788 + $0xb4] sm:$0xe]
      %v2013 = vrot.slane %v1949, 5
      %v2014 = vrot.slane %v2013, 4
      %v2015 = vrot.slane %v1518, 5
      %v2016 = vsel %vm1404, %v2014, %v2015
      %v2017 = vrot.slane %v2015, 4
      %v2018 = vrot.slane %v1549, 5
      %v2019 = vsel %vm1404, %v2017, %v2018
      %v2020 = vrot.slane %v1950, 5
      %v2021 = vrot.slane %v2020, 4
      %v2022 = vrot.slane %v1520, 5
      %v2023 = vsel %vm1404, %v2021, %v2022
      %v2024 = vrot.slane %v2022, 4
      %v2025 = vrot.slane %v1550, 5
      %v2026 = vsel %vm1404, %v2024, %v2025
      %v2027 = vrot.slane %v1951, 5
      %v2028 = vrot.slane %v2027, 4
      %v2029 = vrot.slane %v1522, 5
      %v2030 = vsel %vm1404, %v2028, %v2029
      %v2031 = vrot.slane %v2029, 4
      %v2032 = vrot.slane %v1551, 5
      %v2033 = vsel %vm1404, %v2031, %v2032
      %v2034 = vrot.slane %v1952, 5
      %v2035 = vrot.slane %v2034, 4
      %v2036 = vrot.slane %v1524, 5
      %v2037 = vsel %vm1404, %v2035, %v2036
      %v2038 = vrot.slane %v2036, 4
      %v2039 = vrot.slane %v1552, 5
      %v2040 = vsel %vm1404, %v2038, %v2039
      %v2041 = vrot.slane %v1953, 5
      %v2042 = vrot.slane %v2041, 4
      %v2043 = vrot.slane %v1526, 5
      %v2044 = vsel %vm1404, %v2042, %v2043
      %v2045 = vrot.slane %v2043, 4
      %v2046 = vrot.slane %v1553, 5
      %v2047 = vsel %vm1404, %v2045, %v2046
      %v2048 = vrot.slane %v1954, 5
      %v2049 = vrot.slane %v2048, 4
      %v2050 = vrot.slane %v1528, 5
      %v2051 = vsel %vm1404, %v2049, %v2050
      %v2052 = vrot.slane %v2050, 4
      %v2053 = vrot.slane %v1554, 5
      %v2054 = vsel %vm1404, %v2052, %v2053
      %v2055 = vrot.slane %v1955, 5
      %v2056 = vrot.slane %v2055, 4
      %v2057 = vrot.slane %v1530, 5
      %v2058 = vsel %vm1404, %v2056, %v2057
      %v2059 = vrot.slane %v2057, 4
      %v2060 = vrot.slane %v1555, 5
      %v2061 = vsel %vm1404, %v2059, %v2060
      %v2062 = vrot.slane %v1956, 5
      %v2063 = vrot.slane %v2062, 4
      %v2064 = vrot.slane %v1532, 5
      %v2065 = vsel %vm1404, %v2063, %v2064
      %v2066 = vrot.slane %v2064, 4
      %v2067 = vrot.slane %v1556, 5
      %v2068 = vsel %vm1404, %v2066, %v2067
      %v2069 = vrot.slane %v1957, 5
      %v2070 = vrot.slane %v2069, 4
      %v2071 = vrot.slane %v1534, 5
      %v2072 = vsel %vm1404, %v2070, %v2071
      %v2073 = vrot.slane %v2071, 4
      %v2074 = vrot.slane %v1557, 5
      %v2075 = vsel %vm1404, %v2073, %v2074
      %v2076 = vrot.slane %v1958, 5
      %v2077 = vrot.slane %v2076, 4
      %v2078 = vrot.slane %v1536, 5
      %v2079 = vsel %vm1404, %v2077, %v2078
      %v2080 = vrot.slane %v2078, 4
      %v2081 = vrot.slane %v1558, 5
      %v2082 = vsel %vm1404, %v2080, %v2081
      %v2083 = vrot.slane %v1959, 5
      %v2084 = vrot.slane %v2083, 4
      %v2085 = vrot.slane %v1538, 5
      %v2086 = vsel %vm1404, %v2084, %v2085
      %v2087 = vrot.slane %v2085, 4
      %v2088 = vrot.slane %v1559, 5
      %v2089 = vsel %vm1404, %v2087, %v2088
      %v2090 = vrot.slane %v1960, 5
      %v2091 = vrot.slane %v2090, 4
      %v2092 = vrot.slane %v1540, 5
      %v2093 = vsel %vm1404, %v2091, %v2092
      %v2094 = vrot.slane %v2092, 4
      %v2095 = vrot.slane %v1560, 5
      %v2096 = vsel %vm1404, %v2094, %v2095
      %v2097 = vrot.slane %v1961, 5
      %v2098 = vrot.slane %v2097, 4
      %v2099 = vrot.slane %v1542, 5
      %v2100 = vsel %vm1404, %v2098, %v2099
      %v2101 = vrot.slane %v2099, 4
      %v2102 = vrot.slane %v1561, 5
      %v2103 = vsel %vm1404, %v2101, %v2102
      %v2104 = vrot.slane %v1962, 5
      %v2105 = vrot.slane %v2104, 4
      %v2106 = vrot.slane %v1544, 5
      %v2107 = vsel %vm1404, %v2105, %v2106
      %v2108 = vrot.slane %v2106, 4
      %v2109 = vrot.slane %v1562, 5
      %v2110 = vsel %vm1404, %v2108, %v2109
      %v2111 = vrot.slane %v1963, 5
      %v2112 = vrot.slane %v2111, 4
      %v2113 = vrot.slane %v1546, 5
      %v2114 = vsel %vm1404, %v2112, %v2113
      %v2115 = vrot.slane %v2113, 4
      %v2116 = vrot.slane %v1563, 5
      %v2117 = vsel %vm1404, %v2115, %v2116
      %v2118 = vrot.slane %v1964, 5
      %v2119 = vrot.slane %v2118, 4
      %v2120 = vrot.slane %v1548, 5
      %v2121 = vsel %vm1404, %v2119, %v2120
      %v2122 = vrot.slane %v2120, 4
      %v2123 = vrot.slane %v1564, 5
      %v2124 = vsel %vm1404, %v2122, %v2123
      %s2125 = scalar_lea.vmem [#allocation2], 24
      %v2126 = vld [vmem:[%s2125] sm:$0xf]
      %v2127 = vld [vmem:[%s2125 + $0x4] sm:$0xf]
      %v2128 = vld [vmem:[%s2125 + $0xc] sm:$0xf]
      %v2129 = vld [vmem:[%s2125 + $0x10] sm:$0xf]
      %v2130 = vld [vmem:[%s2125 + $0x18] sm:$0xf]
      %v2131 = vld [vmem:[%s2125 + $0x1c] sm:$0xf]
      %v2132 = vld [vmem:[%s2125 + $0x24] sm:$0xf]
      %v2133 = vld [vmem:[%s2125 + $0x28] sm:$0xf]
      %v2134 = vld [vmem:[%s2125 + $0x30] sm:$0xf]
      %v2135 = vld [vmem:[%s2125 + $0x34] sm:$0xf]
      %v2136 = vld [vmem:[%s2125 + $0x3c] sm:$0xf]
      %v2137 = vld [vmem:[%s2125 + $0x40] sm:$0xf]
      %v2138 = vld [vmem:[%s2125 + $0x48] sm:$0xf]
      %v2139 = vld [vmem:[%s2125 + $0x4c] sm:$0xf]
      %v2140 = vld [vmem:[%s2125 + $0x54] sm:$0xf]
      %v2141 = vld [vmem:[%s2125 + $0x58] sm:$0xf]
      %v2142 = vld [vmem:[%s2125 + $0x60] sm:$0xf]
      %v2143 = vld [vmem:[%s2125 + $0x64] sm:$0xf]
      %v2144 = vld [vmem:[%s2125 + $0x6c] sm:$0xf]
      %v2145 = vld [vmem:[%s2125 + $0x70] sm:$0xf]
      %v2146 = vld [vmem:[%s2125 + $0x78] sm:$0xf]
      %v2147 = vld [vmem:[%s2125 + $0x7c] sm:$0xf]
      %v2148 = vld [vmem:[%s2125 + $0x84] sm:$0xf]
      %v2149 = vld [vmem:[%s2125 + $0x88] sm:$0xf]
      %v2150 = vld [vmem:[%s2125 + $0x90] sm:$0xf]
      %v2151 = vld [vmem:[%s2125 + $0x94] sm:$0xf]
      %v2152 = vld [vmem:[%s2125 + $0x9c] sm:$0xf]
      %v2153 = vld [vmem:[%s2125 + $0xa0] sm:$0xf]
      %v2154 = vld [vmem:[%s2125 + $0xa8] sm:$0xf]
      %v2155 = vld [vmem:[%s2125 + $0xac] sm:$0xf]
      %v2156 = vld [vmem:[%s2125 + $0xb4] sm:$0xf]
      %v2157 = vld [vmem:[%s2125 + $0xb8] sm:$0xf]
      %v2158 = vld [vmem:[%s2125 + $0x8] sm:$0x1]
      %v2159 = vld [vmem:[%s2125 + $0x14] sm:$0x1]
      %v2160 = vld [vmem:[%s2125 + $0x20] sm:$0x1]
      %v2161 = vld [vmem:[%s2125 + $0x2c] sm:$0x1]
      %v2162 = vld [vmem:[%s2125 + $0x38] sm:$0x1]
      %v2163 = vld [vmem:[%s2125 + $0x44] sm:$0x1]
      %v2164 = vld [vmem:[%s2125 + $0x50] sm:$0x1]
      %v2165 = vld [vmem:[%s2125 + $0x5c] sm:$0x1]
      %v2166 = vld [vmem:[%s2125 + $0x68] sm:$0x1]
      %v2167 = vld [vmem:[%s2125 + $0x74] sm:$0x1]
      %v2168 = vld [vmem:[%s2125 + $0x80] sm:$0x1]
      %v2169 = vld [vmem:[%s2125 + $0x8c] sm:$0x1]
      %v2170 = vld [vmem:[%s2125 + $0x98] sm:$0x1]
      %v2171 = vld [vmem:[%s2125 + $0xa4] sm:$0x1]
      %v2172 = vld [vmem:[%s2125 + $0xb0] sm:$0x1]
      %v2173 = vld [vmem:[%s2125 + $0xbc] sm:$0x1]
      %v2175 = vshrl.u32 %v2126, 16
      %v2177 = vrot.slane %v2175, 4
      %v2178 = vshll.u32 %v2126, 16
      %v2180 = vrot.slane %v2178, 5
      %v2181 = vor.u32 %v2177, %v2180
      %v2182 = vrot.slane %v2181, 4
      %v2184 = vshll.u32 %v2127, 16
      %v2186 = vrot.slane %v2184, 5
      %v2187 = vsel %vm953, %v2182, %v2186
      %v2188 = vshrl.u32 %v2127, 16
      %v2190 = vrot.slane %v2188, 4
      %v2191 = vor.u32 %v2190, %v2186
      %v2192 = vrot.slane %v2191, 4
      %v2194 = vshll.u32 %v2158, 16
      %v2196 = vrot.slane %v2194, 5
      %v2197 = vsel %vm953, %v2192, %v2196
      %v2199 = vshrl.u32 %v2128, 16
      %v2201 = vrot.slane %v2199, 4
      %v2202 = vshll.u32 %v2128, 16
      %v2204 = vrot.slane %v2202, 5
      %v2205 = vor.u32 %v2201, %v2204
      %v2206 = vrot.slane %v2205, 4
      %v2208 = vshll.u32 %v2129, 16
      %v2210 = vrot.slane %v2208, 5
      %v2211 = vsel %vm953, %v2206, %v2210
      %v2212 = vshrl.u32 %v2129, 16
      %v2214 = vrot.slane %v2212, 4
      %v2215 = vor.u32 %v2214, %v2210
      %v2216 = vrot.slane %v2215, 4
      %v2218 = vshll.u32 %v2159, 16
      %v2220 = vrot.slane %v2218, 5
      %v2221 = vsel %vm953, %v2216, %v2220
      %v2223 = vshrl.u32 %v2130, 16
      %v2225 = vrot.slane %v2223, 4
      %v2226 = vshll.u32 %v2130, 16
      %v2228 = vrot.slane %v2226, 5
      %v2229 = vor.u32 %v2225, %v2228
      %v2230 = vrot.slane %v2229, 4
      %v2232 = vshll.u32 %v2131, 16
      %v2234 = vrot.slane %v2232, 5
      %v2235 = vsel %vm953, %v2230, %v2234
      %v2236 = vshrl.u32 %v2131, 16
      %v2238 = vrot.slane %v2236, 4
      %v2239 = vor.u32 %v2238, %v2234
      %v2240 = vrot.slane %v2239, 4
      %v2242 = vshll.u32 %v2160, 16
      %v2244 = vrot.slane %v2242, 5
      %v2245 = vsel %vm953, %v2240, %v2244
      %v2247 = vshrl.u32 %v2132, 16
      %v2249 = vrot.slane %v2247, 4
      %v2250 = vshll.u32 %v2132, 16
      %v2252 = vrot.slane %v2250, 5
      %v2253 = vor.u32 %v2249, %v2252
      %v2254 = vrot.slane %v2253, 4
      %v2256 = vshll.u32 %v2133, 16
      %v2258 = vrot.slane %v2256, 5
      %v2259 = vsel %vm953, %v2254, %v2258
      %v2260 = vshrl.u32 %v2133, 16
      %v2262 = vrot.slane %v2260, 4
      %v2263 = vor.u32 %v2262, %v2258
      %v2264 = vrot.slane %v2263, 4
      %v2266 = vshll.u32 %v2161, 16
      %v2268 = vrot.slane %v2266, 5
      %v2269 = vsel %vm953, %v2264, %v2268
      %v2271 = vshrl.u32 %v2134, 16
      %v2273 = vrot.slane %v2271, 4
      %v2274 = vshll.u32 %v2134, 16
      %v2276 = vrot.slane %v2274, 5
      %v2277 = vor.u32 %v2273, %v2276
      %v2278 = vrot.slane %v2277, 4
      %v2280 = vshll.u32 %v2135, 16
      %v2282 = vrot.slane %v2280, 5
      %v2283 = vsel %vm953, %v2278, %v2282
      %v2284 = vshrl.u32 %v2135, 16
      %v2286 = vrot.slane %v2284, 4
      %v2287 = vor.u32 %v2286, %v2282
      %v2288 = vrot.slane %v2287, 4
      %v2290 = vshll.u32 %v2162, 16
      %v2292 = vrot.slane %v2290, 5
      %v2293 = vsel %vm953, %v2288, %v2292
      %v2295 = vshrl.u32 %v2136, 16
      %v2297 = vrot.slane %v2295, 4
      %v2298 = vshll.u32 %v2136, 16
      %v2300 = vrot.slane %v2298, 5
      %v2301 = vor.u32 %v2297, %v2300
      %v2302 = vrot.slane %v2301, 4
      %v2304 = vshll.u32 %v2137, 16
      %v2306 = vrot.slane %v2304, 5
      %v2307 = vsel %vm953, %v2302, %v2306
      %v2308 = vshrl.u32 %v2137, 16
      %v2310 = vrot.slane %v2308, 4
      %v2311 = vor.u32 %v2310, %v2306
      %v2312 = vrot.slane %v2311, 4
      %v2314 = vshll.u32 %v2163, 16
      %v2316 = vrot.slane %v2314, 5
      %v2317 = vsel %vm953, %v2312, %v2316
      %v2319 = vshrl.u32 %v2138, 16
      %v2321 = vrot.slane %v2319, 4
      %v2322 = vshll.u32 %v2138, 16
      %v2324 = vrot.slane %v2322, 5
      %v2325 = vor.u32 %v2321, %v2324
      %v2326 = vrot.slane %v2325, 4
      %v2328 = vshll.u32 %v2139, 16
      %v2330 = vrot.slane %v2328, 5
      %v2331 = vsel %vm953, %v2326, %v2330
      %v2332 = vshrl.u32 %v2139, 16
      %v2334 = vrot.slane %v2332, 4
      %v2335 = vor.u32 %v2334, %v2330
      %v2336 = vrot.slane %v2335, 4
      %v2338 = vshll.u32 %v2164, 16
      %v2340 = vrot.slane %v2338, 5
      %v2341 = vsel %vm953, %v2336, %v2340
      %v2343 = vshrl.u32 %v2140, 16
      %v2345 = vrot.slane %v2343, 4
      %v2346 = vshll.u32 %v2140, 16
      %v2348 = vrot.slane %v2346, 5
      %v2349 = vor.u32 %v2345, %v2348
      %v2350 = vrot.slane %v2349, 4
      %v2352 = vshll.u32 %v2141, 16
      %v2354 = vrot.slane %v2352, 5
      %v2355 = vsel %vm953, %v2350, %v2354
      %v2356 = vshrl.u32 %v2141, 16
      %v2358 = vrot.slane %v2356, 4
      %v2359 = vor.u32 %v2358, %v2354
      %v2360 = vrot.slane %v2359, 4
      %v2362 = vshll.u32 %v2165, 16
      %v2364 = vrot.slane %v2362, 5
      %v2365 = vsel %vm953, %v2360, %v2364
      %v2367 = vshrl.u32 %v2142, 16
      %v2369 = vrot.slane %v2367, 4
      %v2370 = vshll.u32 %v2142, 16
      %v2372 = vrot.slane %v2370, 5
      %v2373 = vor.u32 %v2369, %v2372
      %v2374 = vrot.slane %v2373, 4
      %v2376 = vshll.u32 %v2143, 16
      %v2378 = vrot.slane %v2376, 5
      %v2379 = vsel %vm953, %v2374, %v2378
      %v2380 = vshrl.u32 %v2143, 16
      %v2382 = vrot.slane %v2380, 4
      %v2383 = vor.u32 %v2382, %v2378
      %v2384 = vrot.slane %v2383, 4
      %v2386 = vshll.u32 %v2166, 16
      %v2388 = vrot.slane %v2386, 5
      %v2389 = vsel %vm953, %v2384, %v2388
      %v2391 = vshrl.u32 %v2144, 16
      %v2393 = vrot.slane %v2391, 4
      %v2394 = vshll.u32 %v2144, 16
      %v2396 = vrot.slane %v2394, 5
      %v2397 = vor.u32 %v2393, %v2396
      %v2398 = vrot.slane %v2397, 4
      %v2400 = vshll.u32 %v2145, 16
      %v2402 = vrot.slane %v2400, 5
      %v2403 = vsel %vm953, %v2398, %v2402
      %v2404 = vshrl.u32 %v2145, 16
      %v2406 = vrot.slane %v2404, 4
      %v2407 = vor.u32 %v2406, %v2402
      %v2408 = vrot.slane %v2407, 4
      %v2410 = vshll.u32 %v2167, 16
      %v2412 = vrot.slane %v2410, 5
      %v2413 = vsel %vm953, %v2408, %v2412
      %v2415 = vshrl.u32 %v2146, 16
      %v2417 = vrot.slane %v2415, 4
      %v2418 = vshll.u32 %v2146, 16
      %v2420 = vrot.slane %v2418, 5
      %v2421 = vor.u32 %v2417, %v2420
      %v2422 = vrot.slane %v2421, 4
      %v2424 = vshll.u32 %v2147, 16
      %v2426 = vrot.slane %v2424, 5
      %v2427 = vsel %vm953, %v2422, %v2426
      %v2428 = vshrl.u32 %v2147, 16
      %v2430 = vrot.slane %v2428, 4
      %v2431 = vor.u32 %v2430, %v2426
      %v2432 = vrot.slane %v2431, 4
      %v2434 = vshll.u32 %v2168, 16
      %v2436 = vrot.slane %v2434, 5
      %v2437 = vsel %vm953, %v2432, %v2436
      %v2439 = vshrl.u32 %v2148, 16
      %v2441 = vrot.slane %v2439, 4
      %v2442 = vshll.u32 %v2148, 16
      %v2444 = vrot.slane %v2442, 5
      %v2445 = vor.u32 %v2441, %v2444
      %v2446 = vrot.slane %v2445, 4
      %v2448 = vshll.u32 %v2149, 16
      %v2450 = vrot.slane %v2448, 5
      %v2451 = vsel %vm953, %v2446, %v2450
      %v2452 = vshrl.u32 %v2149, 16
      %v2454 = vrot.slane %v2452, 4
      %v2455 = vor.u32 %v2454, %v2450
      %v2456 = vrot.slane %v2455, 4
      %v2458 = vshll.u32 %v2169, 16
      %v2460 = vrot.slane %v2458, 5
      %v2461 = vsel %vm953, %v2456, %v2460
      %v2463 = vshrl.u32 %v2150, 16
      %v2465 = vrot.slane %v2463, 4
      %v2466 = vshll.u32 %v2150, 16
      %v2468 = vrot.slane %v2466, 5
      %v2469 = vor.u32 %v2465, %v2468
      %v2470 = vrot.slane %v2469, 4
      %v2472 = vshll.u32 %v2151, 16
      %v2474 = vrot.slane %v2472, 5
      %v2475 = vsel %vm953, %v2470, %v2474
      %v2476 = vshrl.u32 %v2151, 16
      %v2478 = vrot.slane %v2476, 4
      %v2479 = vor.u32 %v2478, %v2474
      %v2480 = vrot.slane %v2479, 4
      %v2482 = vshll.u32 %v2170, 16
      %v2484 = vrot.slane %v2482, 5
      %v2485 = vsel %vm953, %v2480, %v2484
      %v2487 = vshrl.u32 %v2152, 16
      %v2489 = vrot.slane %v2487, 4
      %v2490 = vshll.u32 %v2152, 16
      %v2492 = vrot.slane %v2490, 5
      %v2493 = vor.u32 %v2489, %v2492
      %v2494 = vrot.slane %v2493, 4
      %v2496 = vshll.u32 %v2153, 16
      %v2498 = vrot.slane %v2496, 5
      %v2499 = vsel %vm953, %v2494, %v2498
      %v2500 = vshrl.u32 %v2153, 16
      %v2502 = vrot.slane %v2500, 4
      %v2503 = vor.u32 %v2502, %v2498
      %v2504 = vrot.slane %v2503, 4
      %v2506 = vshll.u32 %v2171, 16
      %v2508 = vrot.slane %v2506, 5
      %v2509 = vsel %vm953, %v2504, %v2508
      %v2511 = vshrl.u32 %v2154, 16
      %v2513 = vrot.slane %v2511, 4
      %v2514 = vshll.u32 %v2154, 16
      %v2516 = vrot.slane %v2514, 5
      %v2517 = vor.u32 %v2513, %v2516
      %v2518 = vrot.slane %v2517, 4
      %v2520 = vshll.u32 %v2155, 16
      %v2522 = vrot.slane %v2520, 5
      %v2523 = vsel %vm953, %v2518, %v2522
      %v2524 = vshrl.u32 %v2155, 16
      %v2526 = vrot.slane %v2524, 4
      %v2527 = vor.u32 %v2526, %v2522
      %v2528 = vrot.slane %v2527, 4
      %v2530 = vshll.u32 %v2172, 16
      %v2532 = vrot.slane %v2530, 5
      %v2533 = vsel %vm953, %v2528, %v2532
      %v2535 = vshrl.u32 %v2156, 16
      %v2537 = vrot.slane %v2535, 4
      %v2538 = vshll.u32 %v2156, 16
      %v2540 = vrot.slane %v2538, 5
      %v2541 = vor.u32 %v2537, %v2540
      %v2542 = vrot.slane %v2541, 4
      %v2544 = vshll.u32 %v2157, 16
      %v2546 = vrot.slane %v2544, 5
      %v2547 = vsel %vm953, %v2542, %v2546
      %v2548 = vshrl.u32 %v2157, 16
      %v2550 = vrot.slane %v2548, 4
      %v2551 = vor.u32 %v2550, %v2546
      %v2552 = vrot.slane %v2551, 4
      %v2554 = vshll.u32 %v2173, 16
      %v2556 = vrot.slane %v2554, 5
      %v2557 = vsel %vm953, %v2552, %v2556
      %v2558 = vld [vmem:[%s2125] sm:$0xe]
      %v2559 = vld [vmem:[%s2125 + $0xc] sm:$0xe]
      %v2560 = vld [vmem:[%s2125 + $0x18] sm:$0xe]
      %v2561 = vld [vmem:[%s2125 + $0x24] sm:$0xe]
      %v2562 = vld [vmem:[%s2125 + $0x30] sm:$0xe]
      %v2563 = vld [vmem:[%s2125 + $0x3c] sm:$0xe]
      %v2564 = vld [vmem:[%s2125 + $0x48] sm:$0xe]
      %v2565 = vld [vmem:[%s2125 + $0x54] sm:$0xe]
      %v2566 = vld [vmem:[%s2125 + $0x60] sm:$0xe]
      %v2567 = vld [vmem:[%s2125 + $0x6c] sm:$0xe]
      %v2568 = vld [vmem:[%s2125 + $0x78] sm:$0xe]
      %v2569 = vld [vmem:[%s2125 + $0x84] sm:$0xe]
      %v2570 = vld [vmem:[%s2125 + $0x90] sm:$0xe]
      %v2571 = vld [vmem:[%s2125 + $0x9c] sm:$0xe]
      %v2572 = vld [vmem:[%s2125 + $0xa8] sm:$0xe]
      %v2573 = vld [vmem:[%s2125 + $0xb4] sm:$0xe]
      %v2622 = vrot.slane %v2558, 5
      %v2623 = vrot.slane %v2622, 4
      %v2624 = vrot.slane %v2127, 5
      %v2625 = vsel %vm1404, %v2623, %v2624
      %v2626 = vrot.slane %v2624, 4
      %v2627 = vrot.slane %v2158, 5
      %v2628 = vsel %vm1404, %v2626, %v2627
      %v2629 = vrot.slane %v2559, 5
      %v2630 = vrot.slane %v2629, 4
      %v2631 = vrot.slane %v2129, 5
      %v2632 = vsel %vm1404, %v2630, %v2631
      %v2633 = vrot.slane %v2631, 4
      %v2634 = vrot.slane %v2159, 5
      %v2635 = vsel %vm1404, %v2633, %v2634
      %v2636 = vrot.slane %v2560, 5
      %v2637 = vrot.slane %v2636, 4
      %v2638 = vrot.slane %v2131, 5
      %v2639 = vsel %vm1404, %v2637, %v2638
      %v2640 = vrot.slane %v2638, 4
      %v2641 = vrot.slane %v2160, 5
      %v2642 = vsel %vm1404, %v2640, %v2641
      %v2643 = vrot.slane %v2561, 5
      %v2644 = vrot.slane %v2643, 4
      %v2645 = vrot.slane %v2133, 5
      %v2646 = vsel %vm1404, %v2644, %v2645
      %v2647 = vrot.slane %v2645, 4
      %v2648 = vrot.slane %v2161, 5
      %v2649 = vsel %vm1404, %v2647, %v2648
      %v2650 = vrot.slane %v2562, 5
      %v2651 = vrot.slane %v2650, 4
      %v2652 = vrot.slane %v2135, 5
      %v2653 = vsel %vm1404, %v2651, %v2652
      %v2654 = vrot.slane %v2652, 4
      %v2655 = vrot.slane %v2162, 5
      %v2656 = vsel %vm1404, %v2654, %v2655
      %v2657 = vrot.slane %v2563, 5
      %v2658 = vrot.slane %v2657, 4
      %v2659 = vrot.slane %v2137, 5
      %v2660 = vsel %vm1404, %v2658, %v2659
      %v2661 = vrot.slane %v2659, 4
      %v2662 = vrot.slane %v2163, 5
      %v2663 = vsel %vm1404, %v2661, %v2662
      %v2664 = vrot.slane %v2564, 5
      %v2665 = vrot.slane %v2664, 4
      %v2666 = vrot.slane %v2139, 5
      %v2667 = vsel %vm1404, %v2665, %v2666
      %v2668 = vrot.slane %v2666, 4
      %v2669 = vrot.slane %v2164, 5
      %v2670 = vsel %vm1404, %v2668, %v2669
      %v2671 = vrot.slane %v2565, 5
      %v2672 = vrot.slane %v2671, 4
      %v2673 = vrot.slane %v2141, 5
      %v2674 = vsel %vm1404, %v2672, %v2673
      %v2675 = vrot.slane %v2673, 4
      %v2676 = vrot.slane %v2165, 5
      %v2677 = vsel %vm1404, %v2675, %v2676
      %v2678 = vrot.slane %v2566, 5
      %v2679 = vrot.slane %v2678, 4
      %v2680 = vrot.slane %v2143, 5
      %v2681 = vsel %vm1404, %v2679, %v2680
      %v2682 = vrot.slane %v2680, 4
      %v2683 = vrot.slane %v2166, 5
      %v2684 = vsel %vm1404, %v2682, %v2683
      %v2685 = vrot.slane %v2567, 5
      %v2686 = vrot.slane %v2685, 4
      %v2687 = vrot.slane %v2145, 5
      %v2688 = vsel %vm1404, %v2686, %v2687
      %v2689 = vrot.slane %v2687, 4
      %v2690 = vrot.slane %v2167, 5
      %v2691 = vsel %vm1404, %v2689, %v2690
      %v2692 = vrot.slane %v2568, 5
      %v2693 = vrot.slane %v2692, 4
      %v2694 = vrot.slane %v2147, 5
      %v2695 = vsel %vm1404, %v2693, %v2694
      %v2696 = vrot.slane %v2694, 4
      %v2697 = vrot.slane %v2168, 5
      %v2698 = vsel %vm1404, %v2696, %v2697
      %v2699 = vrot.slane %v2569, 5
      %v2700 = vrot.slane %v2699, 4
      %v2701 = vrot.slane %v2149, 5
      %v2702 = vsel %vm1404, %v2700, %v2701
      %v2703 = vrot.slane %v2701, 4
      %v2704 = vrot.slane %v2169, 5
      %v2705 = vsel %vm1404, %v2703, %v2704
      %v2706 = vrot.slane %v2570, 5
      %v2707 = vrot.slane %v2706, 4
      %v2708 = vrot.slane %v2151, 5
      %v2709 = vsel %vm1404, %v2707, %v2708
      %v2710 = vrot.slane %v2708, 4
      %v2711 = vrot.slane %v2170, 5
      %v2712 = vsel %vm1404, %v2710, %v2711
      %v2713 = vrot.slane %v2571, 5
      %v2714 = vrot.slane %v2713, 4
      %v2715 = vrot.slane %v2153, 5
      %v2716 = vsel %vm1404, %v2714, %v2715
      %v2717 = vrot.slane %v2715, 4
      %v2718 = vrot.slane %v2171, 5
      %v2719 = vsel %vm1404, %v2717, %v2718
      %v2720 = vrot.slane %v2572, 5
      %v2721 = vrot.slane %v2720, 4
      %v2722 = vrot.slane %v2155, 5
      %v2723 = vsel %vm1404, %v2721, %v2722
      %v2724 = vrot.slane %v2722, 4
      %v2725 = vrot.slane %v2172, 5
      %v2726 = vsel %vm1404, %v2724, %v2725
      %v2727 = vrot.slane %v2573, 5
      %v2728 = vrot.slane %v2727, 4
      %v2729 = vrot.slane %v2157, 5
      %v2730 = vsel %vm1404, %v2728, %v2729
      %v2731 = vrot.slane %v2729, 4
      %v2732 = vrot.slane %v2173, 5
      %v2733 = vsel %vm1404, %v2731, %v2732
      %v2750 = vunpack.c.l.b16 %v903
      %v2751 = vunpack.c.l.b16 %v904
      %v2752 = vunpack.c.l.b16 %v905
      %v2753 = vunpack.c.l.b16 %v906
      %v2754 = vunpack.c.l.b16 %v907
      %v2755 = vunpack.c.l.b16 %v908
      %v2756 = vunpack.c.l.b16 %v909
      %v2757 = vunpack.c.l.b16 %v910
      %v2758 = vunpack.c.l.b16 %v911
      %v2759 = vunpack.c.l.b16 %v912
      %v2760 = vunpack.c.l.b16 %v913
      %v2761 = vunpack.c.l.b16 %v914
      %v2762 = vunpack.c.l.b16 %v915
      %v2763 = vunpack.c.l.b16 %v916
      %v2764 = vunpack.c.l.b16 %v917
      %v2765 = vunpack.c.l.b16 %v918
      %v2766 = vunpack.c.l.b16 %v919
      %v2767 = vunpack.c.l.b16 %v920
      %v2768 = vunpack.c.l.b16 %v921
      %v2769 = vunpack.c.l.b16 %v922
      %v2770 = vunpack.c.l.b16 %v923
      %v2771 = vunpack.c.l.b16 %v924
      %v2772 = vunpack.c.l.b16 %v925
      %v2773 = vunpack.c.l.b16 %v926
      %v2774 = vunpack.c.l.b16 %v927
      %v2775 = vunpack.c.l.b16 %v928
      %v2776 = vunpack.c.l.b16 %v929
      %v2777 = vunpack.c.l.b16 %v930
      %v2778 = vunpack.c.l.b16 %v931
      %v2779 = vunpack.c.l.b16 %v932
      %v2780 = vunpack.c.l.b16 %v933
      %v2781 = vunpack.c.l.b16 %v934
      %v2782 = vpack.c.b16 %v2751, %v2750
      %v2783 = vpack.c.b16 %v2753, %v2752
      %v2784 = vpack.c.b16 %v2755, %v2754
      %v2785 = vpack.c.b16 %v2757, %v2756
      %v2786 = vpack.c.b16 %v2759, %v2758
      %v2787 = vpack.c.b16 %v2761, %v2760
      %v2788 = vpack.c.b16 %v2763, %v2762
      %v2789 = vpack.c.b16 %v2765, %v2764
      %v2790 = vpack.c.b16 %v2767, %v2766
      %v2791 = vpack.c.b16 %v2769, %v2768
      %v2792 = vpack.c.b16 %v2771, %v2770
      %v2793 = vpack.c.b16 %v2773, %v2772
      %v2794 = vpack.c.b16 %v2775, %v2774
      %v2795 = vpack.c.b16 %v2777, %v2776
      %v2796 = vpack.c.b16 %v2779, %v2778
      %v2797 = vpack.c.b16 %v2781, %v2780
      %v2798 = vunpack.c.l.b16 %v967
      %v2799 = vunpack.c.l.b16 %v977
      %v2800 = vunpack.c.l.b16 %v991
      %v2801 = vunpack.c.l.b16 %v1001
      %v2802 = vunpack.c.l.b16 %v1015
      %v2803 = vunpack.c.l.b16 %v1025
      %v2804 = vunpack.c.l.b16 %v1039
      %v2805 = vunpack.c.l.b16 %v1049
      %v2806 = vunpack.c.l.b16 %v1063
      %v2807 = vunpack.c.l.b16 %v1073
      %v2808 = vunpack.c.l.b16 %v1087
      %v2809 = vunpack.c.l.b16 %v1097
      %v2810 = vunpack.c.l.b16 %v1111
      %v2811 = vunpack.c.l.b16 %v1121
      %v2812 = vunpack.c.l.b16 %v1135
      %v2813 = vunpack.c.l.b16 %v1145
      %v2814 = vunpack.c.l.b16 %v1159
      %v2815 = vunpack.c.l.b16 %v1169
      %v2816 = vunpack.c.l.b16 %v1183
      %v2817 = vunpack.c.l.b16 %v1193
      %v2818 = vunpack.c.l.b16 %v1207
      %v2819 = vunpack.c.l.b16 %v1217
      %v2820 = vunpack.c.l.b16 %v1231
      %v2821 = vunpack.c.l.b16 %v1241
      %v2822 = vunpack.c.l.b16 %v1255
      %v2823 = vunpack.c.l.b16 %v1265
      %v2824 = vunpack.c.l.b16 %v1279
      %v2825 = vunpack.c.l.b16 %v1289
      %v2826 = vunpack.c.l.b16 %v1303
      %v2827 = vunpack.c.l.b16 %v1313
      %v2828 = vunpack.c.l.b16 %v1327
      %v2829 = vunpack.c.l.b16 %v1337
      %v2830 = vpack.c.b16 %v2799, %v2798
      %v2831 = vpack.c.b16 %v2801, %v2800
      %v2832 = vpack.c.b16 %v2803, %v2802
      %v2833 = vpack.c.b16 %v2805, %v2804
      %v2834 = vpack.c.b16 %v2807, %v2806
      %v2835 = vpack.c.b16 %v2809, %v2808
      %v2836 = vpack.c.b16 %v2811, %v2810
      %v2837 = vpack.c.b16 %v2813, %v2812
      %v2838 = vpack.c.b16 %v2815, %v2814
      %v2839 = vpack.c.b16 %v2817, %v2816
      %v2840 = vpack.c.b16 %v2819, %v2818
      %v2841 = vpack.c.b16 %v2821, %v2820
      %v2842 = vpack.c.b16 %v2823, %v2822
      %v2843 = vpack.c.b16 %v2825, %v2824
      %v2844 = vpack.c.b16 %v2827, %v2826
      %v2845 = vpack.c.b16 %v2829, %v2828
      %2846 = vrot.lane.b32.xlu0 %v2830, 4
      %v2847 = vpop.permute.xlu0 %2846
      %2848 = vrot.lane.b32.xlu0 %v2831, 4
      %v2849 = vpop.permute.xlu0 %2848
      %2850 = vrot.lane.b32.xlu0 %v2832, 4
      %v2851 = vpop.permute.xlu0 %2850
      %2852 = vrot.lane.b32.xlu0 %v2833, 4
      %v2853 = vpop.permute.xlu0 %2852
      %2854 = vrot.lane.b32.xlu0 %v2834, 4
      %v2855 = vpop.permute.xlu0 %2854
      %2856 = vrot.lane.b32.xlu0 %v2835, 4
      %v2857 = vpop.permute.xlu0 %2856
      %2858 = vrot.lane.b32.xlu0 %v2836, 4
      %v2859 = vpop.permute.xlu0 %2858
      %2860 = vrot.lane.b32.xlu0 %v2837, 4
      %v2861 = vpop.permute.xlu0 %2860
      %2862 = vrot.lane.b32.xlu0 %v2838, 4
      %v2863 = vpop.permute.xlu0 %2862
      %2864 = vrot.lane.b32.xlu0 %v2839, 4
      %v2865 = vpop.permute.xlu0 %2864
      %2866 = vrot.lane.b32.xlu0 %v2840, 4
      %v2867 = vpop.permute.xlu0 %2866
      %2868 = vrot.lane.b32.xlu0 %v2841, 4
      %v2869 = vpop.permute.xlu0 %2868
      %2870 = vrot.lane.b32.xlu0 %v2842, 4
      %v2871 = vpop.permute.xlu0 %2870
      %2872 = vrot.lane.b32.xlu0 %v2843, 4
      %v2873 = vpop.permute.xlu0 %2872
      %2874 = vrot.lane.b32.xlu0 %v2844, 4
      %v2875 = vpop.permute.xlu0 %2874
      %2876 = vrot.lane.b32.xlu0 %v2845, 4
      %v2877 = vpop.permute.xlu0 %2876
      %v2878 = vunpack.c.l.b16 %v1408
      %v2879 = vunpack.c.l.b16 %v1411
      %v2880 = vunpack.c.l.b16 %v1415
      %v2881 = vunpack.c.l.b16 %v1418
      %v2882 = vunpack.c.l.b16 %v1422
      %v2883 = vunpack.c.l.b16 %v1425
      %v2884 = vunpack.c.l.b16 %v1429
      %v2885 = vunpack.c.l.b16 %v1432
      %v2886 = vunpack.c.l.b16 %v1436
      %v2887 = vunpack.c.l.b16 %v1439
      %v2888 = vunpack.c.l.b16 %v1443
      %v2889 = vunpack.c.l.b16 %v1446
      %v2890 = vunpack.c.l.b16 %v1450
      %v2891 = vunpack.c.l.b16 %v1453
      %v2892 = vunpack.c.l.b16 %v1457
      %v2893 = vunpack.c.l.b16 %v1460
      %v2894 = vunpack.c.l.b16 %v1464
      %v2895 = vunpack.c.l.b16 %v1467
      %v2896 = vunpack.c.l.b16 %v1471
      %v2897 = vunpack.c.l.b16 %v1474
      %v2898 = vunpack.c.l.b16 %v1478
      %v2899 = vunpack.c.l.b16 %v1481
      %v2900 = vunpack.c.l.b16 %v1485
      %v2901 = vunpack.c.l.b16 %v1488
      %v2902 = vunpack.c.l.b16 %v1492
      %v2903 = vunpack.c.l.b16 %v1495
      %v2904 = vunpack.c.l.b16 %v1499
      %v2905 = vunpack.c.l.b16 %v1502
      %v2906 = vunpack.c.l.b16 %v1506
      %v2907 = vunpack.c.l.b16 %v1509
      %v2908 = vunpack.c.l.b16 %v1513
      %v2909 = vunpack.c.l.b16 %v1516
      %v2910 = vpack.c.b16 %v2879, %v2878
      %v2911 = vpack.c.b16 %v2881, %v2880
      %v2912 = vpack.c.b16 %v2883, %v2882
      %v2913 = vpack.c.b16 %v2885, %v2884
      %v2914 = vpack.c.b16 %v2887, %v2886
      %v2915 = vpack.c.b16 %v2889, %v2888
      %v2916 = vpack.c.b16 %v2891, %v2890
      %v2917 = vpack.c.b16 %v2893, %v2892
      %v2918 = vpack.c.b16 %v2895, %v2894
      %v2919 = vpack.c.b16 %v2897, %v2896
      %v2920 = vpack.c.b16 %v2899, %v2898
      %v2921 = vpack.c.b16 %v2901, %v2900
      %v2922 = vpack.c.b16 %v2903, %v2902
      %v2923 = vpack.c.b16 %v2905, %v2904
      %v2924 = vpack.c.b16 %v2907, %v2906
      %v2925 = vpack.c.b16 %v2909, %v2908
      %2926 = vrot.lane.b32.xlu0 %v2910, 8
      %v2927 = vpop.permute.xlu0 %2926
      %2928 = vrot.lane.b32.xlu0 %v2911, 8
      %v2929 = vpop.permute.xlu0 %2928
      %2930 = vrot.lane.b32.xlu0 %v2912, 8
      %v2931 = vpop.permute.xlu0 %2930
      %2932 = vrot.lane.b32.xlu0 %v2913, 8
      %v2933 = vpop.permute.xlu0 %2932
      %2934 = vrot.lane.b32.xlu0 %v2914, 8
      %v2935 = vpop.permute.xlu0 %2934
      %2936 = vrot.lane.b32.xlu0 %v2915, 8
      %v2937 = vpop.permute.xlu0 %2936
      %2938 = vrot.lane.b32.xlu0 %v2916, 8
      %v2939 = vpop.permute.xlu0 %2938
      %2940 = vrot.lane.b32.xlu0 %v2917, 8
      %v2941 = vpop.permute.xlu0 %2940
      %2942 = vrot.lane.b32.xlu0 %v2918, 8
      %v2943 = vpop.permute.xlu0 %2942
      %2944 = vrot.lane.b32.xlu0 %v2919, 8
      %v2945 = vpop.permute.xlu0 %2944
      %2946 = vrot.lane.b32.xlu0 %v2920, 8
      %v2947 = vpop.permute.xlu0 %2946
      %2948 = vrot.lane.b32.xlu0 %v2921, 8
      %v2949 = vpop.permute.xlu0 %2948
      %2950 = vrot.lane.b32.xlu0 %v2922, 8
      %v2951 = vpop.permute.xlu0 %2950
      %2952 = vrot.lane.b32.xlu0 %v2923, 8
      %v2953 = vpop.permute.xlu0 %2952
      %2954 = vrot.lane.b32.xlu0 %v2924, 8
      %v2955 = vpop.permute.xlu0 %2954
      %2956 = vrot.lane.b32.xlu0 %v2925, 8
      %v2957 = vpop.permute.xlu0 %2956
      %v2974 = vunpack.c.l.b16 %v1517
      %v2975 = vunpack.c.l.b16 %v1518
      %v2976 = vunpack.c.l.b16 %v1519
      %v2977 = vunpack.c.l.b16 %v1520
      %v2978 = vunpack.c.l.b16 %v1521
      %v2979 = vunpack.c.l.b16 %v1522
      %v2980 = vunpack.c.l.b16 %v1523
      %v2981 = vunpack.c.l.b16 %v1524
      %v2982 = vunpack.c.l.b16 %v1525
      %v2983 = vunpack.c.l.b16 %v1526
      %v2984 = vunpack.c.l.b16 %v1527
      %v2985 = vunpack.c.l.b16 %v1528
      %v2986 = vunpack.c.l.b16 %v1529
      %v2987 = vunpack.c.l.b16 %v1530
      %v2988 = vunpack.c.l.b16 %v1531
      %v2989 = vunpack.c.l.b16 %v1532
      %v2990 = vunpack.c.l.b16 %v1533
      %v2991 = vunpack.c.l.b16 %v1534
      %v2992 = vunpack.c.l.b16 %v1535
      %v2993 = vunpack.c.l.b16 %v1536
      %v2994 = vunpack.c.l.b16 %v1537
      %v2995 = vunpack.c.l.b16 %v1538
      %v2996 = vunpack.c.l.b16 %v1539
      %v2997 = vunpack.c.l.b16 %v1540
      %v2998 = vunpack.c.l.b16 %v1541
      %v2999 = vunpack.c.l.b16 %v1542
      %v3000 = vunpack.c.l.b16 %v1543
      %v3001 = vunpack.c.l.b16 %v1544
      %v3002 = vunpack.c.l.b16 %v1545
      %v3003 = vunpack.c.l.b16 %v1546
      %v3004 = vunpack.c.l.b16 %v1547
      %v3005 = vunpack.c.l.b16 %v1548
      %v3006 = vpack.c.b16 %v2975, %v2974
      %v3007 = vpack.c.b16 %v2977, %v2976
      %v3008 = vpack.c.b16 %v2979, %v2978
      %v3009 = vpack.c.b16 %v2981, %v2980
      %v3010 = vpack.c.b16 %v2983, %v2982
      %v3011 = vpack.c.b16 %v2985, %v2984
      %v3012 = vpack.c.b16 %v2987, %v2986
      %v3013 = vpack.c.b16 %v2989, %v2988
      %v3014 = vpack.c.b16 %v2991, %v2990
      %v3015 = vpack.c.b16 %v2993, %v2992
      %v3016 = vpack.c.b16 %v2995, %v2994
      %v3017 = vpack.c.b16 %v2997, %v2996
      %v3018 = vpack.c.b16 %v2999, %v2998
      %v3019 = vpack.c.b16 %v3001, %v3000
      %v3020 = vpack.c.b16 %v3003, %v3002
      %v3021 = vpack.c.b16 %v3005, %v3004
      %3022 = vrot.lane.b32.xlu0 %v3006, 12
      %v3023 = vpop.permute.xlu0 %3022
      %3024 = vrot.lane.b32.xlu0 %v3007, 12
      %v3025 = vpop.permute.xlu0 %3024
      %3026 = vrot.lane.b32.xlu0 %v3008, 12
      %v3027 = vpop.permute.xlu0 %3026
      %3028 = vrot.lane.b32.xlu0 %v3009, 12
      %v3029 = vpop.permute.xlu0 %3028
      %3030 = vrot.lane.b32.xlu0 %v3010, 12
      %v3031 = vpop.permute.xlu0 %3030
      %3032 = vrot.lane.b32.xlu0 %v3011, 12
      %v3033 = vpop.permute.xlu0 %3032
      %3034 = vrot.lane.b32.xlu0 %v3012, 12
      %v3035 = vpop.permute.xlu0 %3034
      %3036 = vrot.lane.b32.xlu0 %v3013, 12
      %v3037 = vpop.permute.xlu0 %3036
      %3038 = vrot.lane.b32.xlu0 %v3014, 12
      %v3039 = vpop.permute.xlu0 %3038
      %3040 = vrot.lane.b32.xlu0 %v3015, 12
      %v3041 = vpop.permute.xlu0 %3040
      %3042 = vrot.lane.b32.xlu0 %v3016, 12
      %v3043 = vpop.permute.xlu0 %3042
      %3044 = vrot.lane.b32.xlu0 %v3017, 12
      %v3045 = vpop.permute.xlu0 %3044
      %3046 = vrot.lane.b32.xlu0 %v3018, 12
      %v3047 = vpop.permute.xlu0 %3046
      %3048 = vrot.lane.b32.xlu0 %v3019, 12
      %v3049 = vpop.permute.xlu0 %3048
      %3050 = vrot.lane.b32.xlu0 %v3020, 12
      %v3051 = vpop.permute.xlu0 %3050
      %3052 = vrot.lane.b32.xlu0 %v3021, 12
      %v3053 = vpop.permute.xlu0 %3052
      %v3054 = vunpack.c.l.b16 %v1578
      %v3055 = vunpack.c.l.b16 %v1588
      %v3056 = vunpack.c.l.b16 %v1602
      %v3057 = vunpack.c.l.b16 %v1612
      %v3058 = vunpack.c.l.b16 %v1626
      %v3059 = vunpack.c.l.b16 %v1636
      %v3060 = vunpack.c.l.b16 %v1650
      %v3061 = vunpack.c.l.b16 %v1660
      %v3062 = vunpack.c.l.b16 %v1674
      %v3063 = vunpack.c.l.b16 %v1684
      %v3064 = vunpack.c.l.b16 %v1698
      %v3065 = vunpack.c.l.b16 %v1708
      %v3066 = vunpack.c.l.b16 %v1722
      %v3067 = vunpack.c.l.b16 %v1732
      %v3068 = vunpack.c.l.b16 %v1746
      %v3069 = vunpack.c.l.b16 %v1756
      %v3070 = vunpack.c.l.b16 %v1770
      %v3071 = vunpack.c.l.b16 %v1780
      %v3072 = vunpack.c.l.b16 %v1794
      %v3073 = vunpack.c.l.b16 %v1804
      %v3074 = vunpack.c.l.b16 %v1818
      %v3075 = vunpack.c.l.b16 %v1828
      %v3076 = vunpack.c.l.b16 %v1842
      %v3077 = vunpack.c.l.b16 %v1852
      %v3078 = vunpack.c.l.b16 %v1866
      %v3079 = vunpack.c.l.b16 %v1876
      %v3080 = vunpack.c.l.b16 %v1890
      %v3081 = vunpack.c.l.b16 %v1900
      %v3082 = vunpack.c.l.b16 %v1914
      %v3083 = vunpack.c.l.b16 %v1924
      %v3084 = vunpack.c.l.b16 %v1938
      %v3085 = vunpack.c.l.b16 %v1948
      %v3086 = vpack.c.b16 %v3055, %v3054
      %v3087 = vpack.c.b16 %v3057, %v3056
      %v3088 = vpack.c.b16 %v3059, %v3058
      %v3089 = vpack.c.b16 %v3061, %v3060
      %v3090 = vpack.c.b16 %v3063, %v3062
      %v3091 = vpack.c.b16 %v3065, %v3064
      %v3092 = vpack.c.b16 %v3067, %v3066
      %v3093 = vpack.c.b16 %v3069, %v3068
      %v3094 = vpack.c.b16 %v3071, %v3070
      %v3095 = vpack.c.b16 %v3073, %v3072
      %v3096 = vpack.c.b16 %v3075, %v3074
      %v3097 = vpack.c.b16 %v3077, %v3076
      %v3098 = vpack.c.b16 %v3079, %v3078
      %v3099 = vpack.c.b16 %v3081, %v3080
      %v3100 = vpack.c.b16 %v3083, %v3082
      %v3101 = vpack.c.b16 %v3085, %v3084
      %3102 = vrot.lane.b32.xlu0 %v3086, 16
      %v3103 = vpop.permute.xlu0 %3102
      %3104 = vrot.lane.b32.xlu0 %v3087, 16
      %v3105 = vpop.permute.xlu0 %3104
      %3106 = vrot.lane.b32.xlu0 %v3088, 16
      %v3107 = vpop.permute.xlu0 %3106
      %3108 = vrot.lane.b32.xlu0 %v3089, 16
      %v3109 = vpop.permute.xlu0 %3108
      %3110 = vrot.lane.b32.xlu0 %v3090, 16
      %v3111 = vpop.permute.xlu0 %3110
      %3112 = vrot.lane.b32.xlu0 %v3091, 16
      %v3113 = vpop.permute.xlu0 %3112
      %3114 = vrot.lane.b32.xlu0 %v3092, 16
      %v3115 = vpop.permute.xlu0 %3114
      %3116 = vrot.lane.b32.xlu0 %v3093, 16
      %v3117 = vpop.permute.xlu0 %3116
      %3118 = vrot.lane.b32.xlu0 %v3094, 16
      %v3119 = vpop.permute.xlu0 %3118
      %3120 = vrot.lane.b32.xlu0 %v3095, 16
      %v3121 = vpop.permute.xlu0 %3120
      %3122 = vrot.lane.b32.xlu0 %v3096, 16
      %v3123 = vpop.permute.xlu0 %3122
      %3124 = vrot.lane.b32.xlu0 %v3097, 16
      %v3125 = vpop.permute.xlu0 %3124
      %3126 = vrot.lane.b32.xlu0 %v3098, 16
      %v3127 = vpop.permute.xlu0 %3126
      %3128 = vrot.lane.b32.xlu0 %v3099, 16
      %v3129 = vpop.permute.xlu0 %3128
      %3130 = vrot.lane.b32.xlu0 %v3100, 16
      %v3131 = vpop.permute.xlu0 %3130
      %3132 = vrot.lane.b32.xlu0 %v3101, 16
      %v3133 = vpop.permute.xlu0 %3132
      %v3134 = vunpack.c.l.b16 %v2016
      %v3135 = vunpack.c.l.b16 %v2019
      %v3136 = vunpack.c.l.b16 %v2023
      %v3137 = vunpack.c.l.b16 %v2026
      %v3138 = vunpack.c.l.b16 %v2030
      %v3139 = vunpack.c.l.b16 %v2033
      %v3140 = vunpack.c.l.b16 %v2037
      %v3141 = vunpack.c.l.b16 %v2040
      %v3142 = vunpack.c.l.b16 %v2044
      %v3143 = vunpack.c.l.b16 %v2047
      %v3144 = vunpack.c.l.b16 %v2051
      %v3145 = vunpack.c.l.b16 %v2054
      %v3146 = vunpack.c.l.b16 %v2058
      %v3147 = vunpack.c.l.b16 %v2061
      %v3148 = vunpack.c.l.b16 %v2065
      %v3149 = vunpack.c.l.b16 %v2068
      %v3150 = vunpack.c.l.b16 %v2072
      %v3151 = vunpack.c.l.b16 %v2075
      %v3152 = vunpack.c.l.b16 %v2079
      %v3153 = vunpack.c.l.b16 %v2082
      %v3154 = vunpack.c.l.b16 %v2086
      %v3155 = vunpack.c.l.b16 %v2089
      %v3156 = vunpack.c.l.b16 %v2093
      %v3157 = vunpack.c.l.b16 %v2096
      %v3158 = vunpack.c.l.b16 %v2100
      %v3159 = vunpack.c.l.b16 %v2103
      %v3160 = vunpack.c.l.b16 %v2107
      %v3161 = vunpack.c.l.b16 %v2110
      %v3162 = vunpack.c.l.b16 %v2114
      %v3163 = vunpack.c.l.b16 %v2117
      %v3164 = vunpack.c.l.b16 %v2121
      %v3165 = vunpack.c.l.b16 %v2124
      %v3166 = vpack.c.b16 %v3135, %v3134
      %v3167 = vpack.c.b16 %v3137, %v3136
      %v3168 = vpack.c.b16 %v3139, %v3138
      %v3169 = vpack.c.b16 %v3141, %v3140
      %v3170 = vpack.c.b16 %v3143, %v3142
      %v3171 = vpack.c.b16 %v3145, %v3144
      %v3172 = vpack.c.b16 %v3147, %v3146
      %v3173 = vpack.c.b16 %v3149, %v3148
      %v3174 = vpack.c.b16 %v3151, %v3150
      %v3175 = vpack.c.b16 %v3153, %v3152
      %v3176 = vpack.c.b16 %v3155, %v3154
      %v3177 = vpack.c.b16 %v3157, %v3156
      %v3178 = vpack.c.b16 %v3159, %v3158
      %v3179 = vpack.c.b16 %v3161, %v3160
      %v3180 = vpack.c.b16 %v3163, %v3162
      %v3181 = vpack.c.b16 %v3165, %v3164
      %3182 = vrot.lane.b32.xlu0 %v3166, 20
      %v3183 = vpop.permute.xlu0 %3182
      %3184 = vrot.lane.b32.xlu0 %v3167, 20
      %v3185 = vpop.permute.xlu0 %3184
      %3186 = vrot.lane.b32.xlu0 %v3168, 20
      %v3187 = vpop.permute.xlu0 %3186
      %3188 = vrot.lane.b32.xlu0 %v3169, 20
      %v3189 = vpop.permute.xlu0 %3188
      %3190 = vrot.lane.b32.xlu0 %v3170, 20
      %v3191 = vpop.permute.xlu0 %3190
      %3192 = vrot.lane.b32.xlu0 %v3171, 20
      %v3193 = vpop.permute.xlu0 %3192
      %3194 = vrot.lane.b32.xlu0 %v3172, 20
      %v3195 = vpop.permute.xlu0 %3194
      %3196 = vrot.lane.b32.xlu0 %v3173, 20
      %v3197 = vpop.permute.xlu0 %3196
      %3198 = vrot.lane.b32.xlu0 %v3174, 20
      %v3199 = vpop.permute.xlu0 %3198
      %3200 = vrot.lane.b32.xlu0 %v3175, 20
      %v3201 = vpop.permute.xlu0 %3200
      %3202 = vrot.lane.b32.xlu0 %v3176, 20
      %v3203 = vpop.permute.xlu0 %3202
      %3204 = vrot.lane.b32.xlu0 %v3177, 20
      %v3205 = vpop.permute.xlu0 %3204
      %3206 = vrot.lane.b32.xlu0 %v3178, 20
      %v3207 = vpop.permute.xlu0 %3206
      %3208 = vrot.lane.b32.xlu0 %v3179, 20
      %v3209 = vpop.permute.xlu0 %3208
      %3210 = vrot.lane.b32.xlu0 %v3180, 20
      %v3211 = vpop.permute.xlu0 %3210
      %3212 = vrot.lane.b32.xlu0 %v3181, 20
      %v3213 = vpop.permute.xlu0 %3212
      %v3230 = vunpack.c.l.b16 %v2126
      %v3231 = vunpack.c.l.b16 %v2127
      %v3232 = vunpack.c.l.b16 %v2128
      %v3233 = vunpack.c.l.b16 %v2129
      %v3234 = vunpack.c.l.b16 %v2130
      %v3235 = vunpack.c.l.b16 %v2131
      %v3236 = vunpack.c.l.b16 %v2132
      %v3237 = vunpack.c.l.b16 %v2133
      %v3238 = vunpack.c.l.b16 %v2134
      %v3239 = vunpack.c.l.b16 %v2135
      %v3240 = vunpack.c.l.b16 %v2136
      %v3241 = vunpack.c.l.b16 %v2137
      %v3242 = vunpack.c.l.b16 %v2138
      %v3243 = vunpack.c.l.b16 %v2139
      %v3244 = vunpack.c.l.b16 %v2140
      %v3245 = vunpack.c.l.b16 %v2141
      %v3246 = vunpack.c.l.b16 %v2142
      %v3247 = vunpack.c.l.b16 %v2143
      %v3248 = vunpack.c.l.b16 %v2144
      %v3249 = vunpack.c.l.b16 %v2145
      %v3250 = vunpack.c.l.b16 %v2146
      %v3251 = vunpack.c.l.b16 %v2147
      %v3252 = vunpack.c.l.b16 %v2148
      %v3253 = vunpack.c.l.b16 %v2149
      %v3254 = vunpack.c.l.b16 %v2150
      %v3255 = vunpack.c.l.b16 %v2151
      %v3256 = vunpack.c.l.b16 %v2152
      %v3257 = vunpack.c.l.b16 %v2153
      %v3258 = vunpack.c.l.b16 %v2154
      %v3259 = vunpack.c.l.b16 %v2155
      %v3260 = vunpack.c.l.b16 %v2156
      %v3261 = vunpack.c.l.b16 %v2157
      %v3262 = vpack.c.b16 %v3231, %v3230
      %v3263 = vpack.c.b16 %v3233, %v3232
      %v3264 = vpack.c.b16 %v3235, %v3234
      %v3265 = vpack.c.b16 %v3237, %v3236
      %v3266 = vpack.c.b16 %v3239, %v3238
      %v3267 = vpack.c.b16 %v3241, %v3240
      %v3268 = vpack.c.b16 %v3243, %v3242
      %v3269 = vpack.c.b16 %v3245, %v3244
      %v3270 = vpack.c.b16 %v3247, %v3246
      %v3271 = vpack.c.b16 %v3249, %v3248
      %v3272 = vpack.c.b16 %v3251, %v3250
      %v3273 = vpack.c.b16 %v3253, %v3252
      %v3274 = vpack.c.b16 %v3255, %v3254
      %v3275 = vpack.c.b16 %v3257, %v3256
      %v3276 = vpack.c.b16 %v3259, %v3258
      %v3277 = vpack.c.b16 %v3261, %v3260
      %3278 = vrot.lane.b32.xlu0 %v3262, 24
      %v3279 = vpop.permute.xlu0 %3278
      %3280 = vrot.lane.b32.xlu0 %v3263, 24
      %v3281 = vpop.permute.xlu0 %3280
      %3282 = vrot.lane.b32.xlu0 %v3264, 24
      %v3283 = vpop.permute.xlu0 %3282
      %3284 = vrot.lane.b32.xlu0 %v3265, 24
      %v3285 = vpop.permute.xlu0 %3284
      %3286 = vrot.lane.b32.xlu0 %v3266, 24
      %v3287 = vpop.permute.xlu0 %3286
      %3288 = vrot.lane.b32.xlu0 %v3267, 24
      %v3289 = vpop.permute.xlu0 %3288
      %3290 = vrot.lane.b32.xlu0 %v3268, 24
      %v3291 = vpop.permute.xlu0 %3290
      %3292 = vrot.lane.b32.xlu0 %v3269, 24
      %v3293 = vpop.permute.xlu0 %3292
      %3294 = vrot.lane.b32.xlu0 %v3270, 24
      %v3295 = vpop.permute.xlu0 %3294
      %3296 = vrot.lane.b32.xlu0 %v3271, 24
      %v3297 = vpop.permute.xlu0 %3296
      %3298 = vrot.lane.b32.xlu0 %v3272, 24
      %v3299 = vpop.permute.xlu0 %3298
      %3300 = vrot.lane.b32.xlu0 %v3273, 24
      %v3301 = vpop.permute.xlu0 %3300
      %3302 = vrot.lane.b32.xlu0 %v3274, 24
      %v3303 = vpop.permute.xlu0 %3302
      %3304 = vrot.lane.b32.xlu0 %v3275, 24
      %v3305 = vpop.permute.xlu0 %3304
      %3306 = vrot.lane.b32.xlu0 %v3276, 24
      %v3307 = vpop.permute.xlu0 %3306
      %3308 = vrot.lane.b32.xlu0 %v3277, 24
      %v3309 = vpop.permute.xlu0 %3308
      %v3310 = vunpack.c.l.b16 %v2187
      %v3311 = vunpack.c.l.b16 %v2197
      %v3312 = vunpack.c.l.b16 %v2211
      %v3313 = vunpack.c.l.b16 %v2221
      %v3314 = vunpack.c.l.b16 %v2235
      %v3315 = vunpack.c.l.b16 %v2245
      %v3316 = vunpack.c.l.b16 %v2259
      %v3317 = vunpack.c.l.b16 %v2269
      %v3318 = vunpack.c.l.b16 %v2283
      %v3319 = vunpack.c.l.b16 %v2293
      %v3320 = vunpack.c.l.b16 %v2307
      %v3321 = vunpack.c.l.b16 %v2317
      %v3322 = vunpack.c.l.b16 %v2331
      %v3323 = vunpack.c.l.b16 %v2341
      %v3324 = vunpack.c.l.b16 %v2355
      %v3325 = vunpack.c.l.b16 %v2365
      %v3326 = vunpack.c.l.b16 %v2379
      %v3327 = vunpack.c.l.b16 %v2389
      %v3328 = vunpack.c.l.b16 %v2403
      %v3329 = vunpack.c.l.b16 %v2413
      %v3330 = vunpack.c.l.b16 %v2427
      %v3331 = vunpack.c.l.b16 %v2437
      %v3332 = vunpack.c.l.b16 %v2451
      %v3333 = vunpack.c.l.b16 %v2461
      %v3334 = vunpack.c.l.b16 %v2475
      %v3335 = vunpack.c.l.b16 %v2485
      %v3336 = vunpack.c.l.b16 %v2499
      %v3337 = vunpack.c.l.b16 %v2509
      %v3338 = vunpack.c.l.b16 %v2523
      %v3339 = vunpack.c.l.b16 %v2533
      %v3340 = vunpack.c.l.b16 %v2547
      %v3341 = vunpack.c.l.b16 %v2557
      %v3342 = vpack.c.b16 %v3311, %v3310
      %v3343 = vpack.c.b16 %v3313, %v3312
      %v3344 = vpack.c.b16 %v3315, %v3314
      %v3345 = vpack.c.b16 %v3317, %v3316
      %v3346 = vpack.c.b16 %v3319, %v3318
      %v3347 = vpack.c.b16 %v3321, %v3320
      %v3348 = vpack.c.b16 %v3323, %v3322
      %v3349 = vpack.c.b16 %v3325, %v3324
      %v3350 = vpack.c.b16 %v3327, %v3326
      %v3351 = vpack.c.b16 %v3329, %v3328
      %v3352 = vpack.c.b16 %v3331, %v3330
      %v3353 = vpack.c.b16 %v3333, %v3332
      %v3354 = vpack.c.b16 %v3335, %v3334
      %v3355 = vpack.c.b16 %v3337, %v3336
      %v3356 = vpack.c.b16 %v3339, %v3338
      %v3357 = vpack.c.b16 %v3341, %v3340
      %3358 = vrot.lane.b32.xlu0 %v3342, 28
      %v3359 = vpop.permute.xlu0 %3358
      %3360 = vrot.lane.b32.xlu0 %v3343, 28
      %v3361 = vpop.permute.xlu0 %3360
      %3362 = vrot.lane.b32.xlu0 %v3344, 28
      %v3363 = vpop.permute.xlu0 %3362
      %3364 = vrot.lane.b32.xlu0 %v3345, 28
      %v3365 = vpop.permute.xlu0 %3364
      %3366 = vrot.lane.b32.xlu0 %v3346, 28
      %v3367 = vpop.permute.xlu0 %3366
      %3368 = vrot.lane.b32.xlu0 %v3347, 28
      %v3369 = vpop.permute.xlu0 %3368
      %3370 = vrot.lane.b32.xlu0 %v3348, 28
      %v3371 = vpop.permute.xlu0 %3370
      %3372 = vrot.lane.b32.xlu0 %v3349, 28
      %v3373 = vpop.permute.xlu0 %3372
      %3374 = vrot.lane.b32.xlu0 %v3350, 28
      %v3375 = vpop.permute.xlu0 %3374
      %3376 = vrot.lane.b32.xlu0 %v3351, 28
      %v3377 = vpop.permute.xlu0 %3376
      %3378 = vrot.lane.b32.xlu0 %v3352, 28
      %v3379 = vpop.permute.xlu0 %3378
      %3380 = vrot.lane.b32.xlu0 %v3353, 28
      %v3381 = vpop.permute.xlu0 %3380
      %3382 = vrot.lane.b32.xlu0 %v3354, 28
      %v3383 = vpop.permute.xlu0 %3382
      %3384 = vrot.lane.b32.xlu0 %v3355, 28
      %v3385 = vpop.permute.xlu0 %3384
      %3386 = vrot.lane.b32.xlu0 %v3356, 28
      %v3387 = vpop.permute.xlu0 %3386
      %3388 = vrot.lane.b32.xlu0 %v3357, 28
      %v3389 = vpop.permute.xlu0 %3388
      %v3390 = vunpack.c.l.b16 %v2625
      %v3391 = vunpack.c.l.b16 %v2628
      %v3392 = vunpack.c.l.b16 %v2632
      %v3393 = vunpack.c.l.b16 %v2635
      %v3394 = vunpack.c.l.b16 %v2639
      %v3395 = vunpack.c.l.b16 %v2642
      %v3396 = vunpack.c.l.b16 %v2646
      %v3397 = vunpack.c.l.b16 %v2649
      %v3398 = vunpack.c.l.b16 %v2653
      %v3399 = vunpack.c.l.b16 %v2656
      %v3400 = vunpack.c.l.b16 %v2660
      %v3401 = vunpack.c.l.b16 %v2663
      %v3402 = vunpack.c.l.b16 %v2667
      %v3403 = vunpack.c.l.b16 %v2670
      %v3404 = vunpack.c.l.b16 %v2674
      %v3405 = vunpack.c.l.b16 %v2677
      %v3406 = vunpack.c.l.b16 %v2681
      %v3407 = vunpack.c.l.b16 %v2684
      %v3408 = vunpack.c.l.b16 %v2688
      %v3409 = vunpack.c.l.b16 %v2691
      %v3410 = vunpack.c.l.b16 %v2695
      %v3411 = vunpack.c.l.b16 %v2698
      %v3412 = vunpack.c.l.b16 %v2702
      %v3413 = vunpack.c.l.b16 %v2705
      %v3414 = vunpack.c.l.b16 %v2709
      %v3415 = vunpack.c.l.b16 %v2712
      %v3416 = vunpack.c.l.b16 %v2716
      %v3417 = vunpack.c.l.b16 %v2719
      %v3418 = vunpack.c.l.b16 %v2723
      %v3419 = vunpack.c.l.b16 %v2726
      %v3420 = vunpack.c.l.b16 %v2730
      %v3421 = vunpack.c.l.b16 %v2733
      %v3422 = vpack.c.b16 %v3391, %v3390
      %v3423 = vpack.c.b16 %v3393, %v3392
      %v3424 = vpack.c.b16 %v3395, %v3394
      %v3425 = vpack.c.b16 %v3397, %v3396
      %v3426 = vpack.c.b16 %v3399, %v3398
      %v3427 = vpack.c.b16 %v3401, %v3400
      %v3428 = vpack.c.b16 %v3403, %v3402
      %v3429 = vpack.c.b16 %v3405, %v3404
      %v3430 = vpack.c.b16 %v3407, %v3406
      %v3431 = vpack.c.b16 %v3409, %v3408
      %v3432 = vpack.c.b16 %v3411, %v3410
      %v3433 = vpack.c.b16 %v3413, %v3412
      %v3434 = vpack.c.b16 %v3415, %v3414
      %v3435 = vpack.c.b16 %v3417, %v3416
      %v3436 = vpack.c.b16 %v3419, %v3418
      %v3437 = vpack.c.b16 %v3421, %v3420
      %3438 = vrot.lane.b32.xlu0 %v3422, 32
      %v3439 = vpop.permute.xlu0 %3438
      %3440 = vrot.lane.b32.xlu0 %v3423, 32
      %v3441 = vpop.permute.xlu0 %3440
      %3442 = vrot.lane.b32.xlu0 %v3424, 32
      %v3443 = vpop.permute.xlu0 %3442
      %3444 = vrot.lane.b32.xlu0 %v3425, 32
      %v3445 = vpop.permute.xlu0 %3444
      %3446 = vrot.lane.b32.xlu0 %v3426, 32
      %v3447 = vpop.permute.xlu0 %3446
      %3448 = vrot.lane.b32.xlu0 %v3427, 32
      %v3449 = vpop.permute.xlu0 %3448
      %3450 = vrot.lane.b32.xlu0 %v3428, 32
      %v3451 = vpop.permute.xlu0 %3450
      %3452 = vrot.lane.b32.xlu0 %v3429, 32
      %v3453 = vpop.permute.xlu0 %3452
      %3454 = vrot.lane.b32.xlu0 %v3430, 32
      %v3455 = vpop.permute.xlu0 %3454
      %3456 = vrot.lane.b32.xlu0 %v3431, 32
      %v3457 = vpop.permute.xlu0 %3456
      %3458 = vrot.lane.b32.xlu0 %v3432, 32
      %v3459 = vpop.permute.xlu0 %3458
      %3460 = vrot.lane.b32.xlu0 %v3433, 32
      %v3461 = vpop.permute.xlu0 %3460
      %3462 = vrot.lane.b32.xlu0 %v3434, 32
      %v3463 = vpop.permute.xlu0 %3462
      %3464 = vrot.lane.b32.xlu0 %v3435, 32
      %v3465 = vpop.permute.xlu0 %3464
      %3466 = vrot.lane.b32.xlu0 %v3436, 32
      %v3467 = vpop.permute.xlu0 %3466
      %3468 = vrot.lane.b32.xlu0 %v3437, 32
      %v3469 = vpop.permute.xlu0 %3468
      %vm3470 = vcmask 31744
      %v3473 = vsel %vm3470, %v2782, %v2847
      %v3476 = vsel %vm3470, %v2783, %v2849
      %v3479 = vsel %vm3470, %v2784, %v2851
      %v3482 = vsel %vm3470, %v2785, %v2853
      %v3485 = vsel %vm3470, %v2786, %v2855
      %v3488 = vsel %vm3470, %v2787, %v2857
      %v3491 = vsel %vm3470, %v2788, %v2859
      %v3494 = vsel %vm3470, %v2789, %v2861
      %v3497 = vsel %vm3470, %v2790, %v2863
      %v3500 = vsel %vm3470, %v2791, %v2865
      %v3503 = vsel %vm3470, %v2792, %v2867
      %v3506 = vsel %vm3470, %v2793, %v2869
      %v3509 = vsel %vm3470, %v2794, %v2871
      %v3512 = vsel %vm3470, %v2795, %v2873
      %v3515 = vsel %vm3470, %v2796, %v2875
      %v3518 = vsel %vm3470, %v2797, %v2877
      %vm3519 = vcmask 64512
      %v3521 = vsel %vm3519, %v3473, %v2927
      %v3523 = vsel %vm3519, %v3476, %v2929
      %v3525 = vsel %vm3519, %v3479, %v2931
      %v3527 = vsel %vm3519, %v3482, %v2933
      %v3529 = vsel %vm3519, %v3485, %v2935
      %v3531 = vsel %vm3519, %v3488, %v2937
      %v3533 = vsel %vm3519, %v3491, %v2939
      %v3535 = vsel %vm3519, %v3494, %v2941
      %v3537 = vsel %vm3519, %v3497, %v2943
      %v3539 = vsel %vm3519, %v3500, %v2945
      %v3541 = vsel %vm3519, %v3503, %v2947
      %v3543 = vsel %vm3519, %v3506, %v2949
      %v3545 = vsel %vm3519, %v3509, %v2951
      %v3547 = vsel %vm3519, %v3512, %v2953
      %v3549 = vsel %vm3519, %v3515, %v2955
      %v3551 = vsel %vm3519, %v3518, %v2957
      %vm3552 = vcmask 97280
      %v3554 = vsel %vm3552, %v3521, %v3023
      %v3556 = vsel %vm3552, %v3523, %v3025
      %v3558 = vsel %vm3552, %v3525, %v3027
      %v3560 = vsel %vm3552, %v3527, %v3029
      %v3562 = vsel %vm3552, %v3529, %v3031
      %v3564 = vsel %vm3552, %v3531, %v3033
      %v3566 = vsel %vm3552, %v3533, %v3035
      %v3568 = vsel %vm3552, %v3535, %v3037
      %v3570 = vsel %vm3552, %v3537, %v3039
      %v3572 = vsel %vm3552, %v3539, %v3041
      %v3574 = vsel %vm3552, %v3541, %v3043
      %v3576 = vsel %vm3552, %v3543, %v3045
      %v3578 = vsel %vm3552, %v3545, %v3047
      %v3580 = vsel %vm3552, %v3547, %v3049
      %v3582 = vsel %vm3552, %v3549, %v3051
      %v3584 = vsel %vm3552, %v3551, %v3053
      %vm3585 = vcmask 130048
      %v3587 = vsel %vm3585, %v3554, %v3103
      %v3589 = vsel %vm3585, %v3556, %v3105
      %v3591 = vsel %vm3585, %v3558, %v3107
      %v3593 = vsel %vm3585, %v3560, %v3109
      %v3595 = vsel %vm3585, %v3562, %v3111
      %v3597 = vsel %vm3585, %v3564, %v3113
      %v3599 = vsel %vm3585, %v3566, %v3115
      %v3601 = vsel %vm3585, %v3568, %v3117
      %v3603 = vsel %vm3585, %v3570, %v3119
      %v3605 = vsel %vm3585, %v3572, %v3121
      %v3607 = vsel %vm3585, %v3574, %v3123
      %v3609 = vsel %vm3585, %v3576, %v3125
      %v3611 = vsel %vm3585, %v3578, %v3127
      %v3613 = vsel %vm3585, %v3580, %v3129
      %v3615 = vsel %vm3585, %v3582, %v3131
      %v3617 = vsel %vm3585, %v3584, %v3133
      %vm3618 = vcmask 162816
      %v3620 = vsel %vm3618, %v3587, %v3183
      %v3622 = vsel %vm3618, %v3589, %v3185
      %v3624 = vsel %vm3618, %v3591, %v3187
      %v3626 = vsel %vm3618, %v3593, %v3189
      %v3628 = vsel %vm3618, %v3595, %v3191
      %v3630 = vsel %vm3618, %v3597, %v3193
      %v3632 = vsel %vm3618, %v3599, %v3195
      %v3634 = vsel %vm3618, %v3601, %v3197
      %v3636 = vsel %vm3618, %v3603, %v3199
      %v3638 = vsel %vm3618, %v3605, %v3201
      %v3640 = vsel %vm3618, %v3607, %v3203
      %v3642 = vsel %vm3618, %v3609, %v3205
      %v3644 = vsel %vm3618, %v3611, %v3207
      %v3646 = vsel %vm3618, %v3613, %v3209
      %v3648 = vsel %vm3618, %v3615, %v3211
      %v3650 = vsel %vm3618, %v3617, %v3213
      %vm3651 = vcmask 195584
      %v3653 = vsel %vm3651, %v3620, %v3279
      %v3655 = vsel %vm3651, %v3622, %v3281
      %v3657 = vsel %vm3651, %v3624, %v3283
      %v3659 = vsel %vm3651, %v3626, %v3285
      %v3661 = vsel %vm3651, %v3628, %v3287
      %v3663 = vsel %vm3651, %v3630, %v3289
      %v3665 = vsel %vm3651, %v3632, %v3291
      %v3667 = vsel %vm3651, %v3634, %v3293
      %v3669 = vsel %vm3651, %v3636, %v3295
      %v3671 = vsel %vm3651, %v3638, %v3297
      %v3673 = vsel %vm3651, %v3640, %v3299
      %v3675 = vsel %vm3651, %v3642, %v3301
      %v3677 = vsel %vm3651, %v3644, %v3303
      %v3679 = vsel %vm3651, %v3646, %v3305
      %v3681 = vsel %vm3651, %v3648, %v3307
      %v3683 = vsel %vm3651, %v3650, %v3309
      %vm3684 = vcmask 228352
      %v3686 = vsel %vm3684, %v3653, %v3359
      %v3688 = vsel %vm3684, %v3655, %v3361
      %v3690 = vsel %vm3684, %v3657, %v3363
      %v3692 = vsel %vm3684, %v3659, %v3365
      %v3694 = vsel %vm3684, %v3661, %v3367
      %v3696 = vsel %vm3684, %v3663, %v3369
      %v3698 = vsel %vm3684, %v3665, %v3371
      %v3700 = vsel %vm3684, %v3667, %v3373
      %v3702 = vsel %vm3684, %v3669, %v3375
      %v3704 = vsel %vm3684, %v3671, %v3377
      %v3706 = vsel %vm3684, %v3673, %v3379
      %v3708 = vsel %vm3684, %v3675, %v3381
      %v3710 = vsel %vm3684, %v3677, %v3383
      %v3712 = vsel %vm3684, %v3679, %v3385
      %v3714 = vsel %vm3684, %v3681, %v3387
      %v3716 = vsel %vm3684, %v3683, %v3389
      %vm3717 = vcmask 261120
      %v3719 = vsel %vm3717, %v3686, %v3439
      %v3721 = vsel %vm3717, %v3688, %v3441
      %v3723 = vsel %vm3717, %v3690, %v3443
      %v3725 = vsel %vm3717, %v3692, %v3445
      %v3727 = vsel %vm3717, %v3694, %v3447
      %v3729 = vsel %vm3717, %v3696, %v3449
      %v3731 = vsel %vm3717, %v3698, %v3451
      %v3733 = vsel %vm3717, %v3700, %v3453
      %v3735 = vsel %vm3717, %v3702, %v3455
      %v3737 = vsel %vm3717, %v3704, %v3457
      %v3739 = vsel %vm3717, %v3706, %v3459
      %v3741 = vsel %vm3717, %v3708, %v3461
      %v3743 = vsel %vm3717, %v3710, %v3463
      %v3745 = vsel %vm3717, %v3712, %v3465
      %v3747 = vsel %vm3717, %v3714, %v3467
      %v3749 = vsel %vm3717, %v3716, %v3469
      %v3750 = vld [vmem:[%s1] sm:$0xf]
      %v3751 = vld [vmem:[%s1 + $0x4] sm:$0xf]
      %v3752 = vld [vmem:[%s1 + $0x8] sm:$0xf]
      %v3753 = vld [vmem:[%s1 + $0xc] sm:$0xf]
      %v3754 = vld [vmem:[%s1 + $0x10] sm:$0x3]
      %v3760 = vunpack.c.l.b16 %v3750
      %v3761 = vunpack.c.l.b16 %v3751
      %v3762 = vunpack.c.l.b16 %v3752
      %v3763 = vunpack.c.l.b16 %v3753
      %v3764 = vunpack.c.l.b16 %v3754
      %v3765 = vpack.c.b16 %v3761, %v3760
      %v3766 = vpack.c.b16 %v3763, %v3762
      %v3767 = vpack.c.b16 %v3764, %v3764
      %vm3770 = vcmask 293888
      %v3771 = vsel %vm3770, %v3719, 0
      %v3773 = vsel %vm3770, %v3721, 0
      %v3775 = vsel %vm3770, %v3723, 0
      %v3777 = vsel %vm3770, %v3725, 0
      %v3779 = vsel %vm3770, %v3727, 0
      %v3781 = vsel %vm3770, %v3729, 0
      %v3783 = vsel %vm3770, %v3731, 0
      %v3785 = vsel %vm3770, %v3733, 0
      %v3787 = vsel %vm3770, %v3735, 0
      %v3789 = vsel %vm3770, %v3737, 0
      %v3791 = vsel %vm3770, %v3739, 0
      %v3793 = vsel %vm3770, %v3741, 0
      %v3795 = vsel %vm3770, %v3743, 0
      %v3797 = vsel %vm3770, %v3745, 0
      %v3799 = vsel %vm3770, %v3747, 0
      %v3801 = vsel %vm3770, %v3749, 0
      %vm3803 = vcmask 1041408
      %v3805 = vsel %vm3803, %v3767, 0
      %3807 = vmatprep.subr.bf16.mxu0 0
      %3808 = vmatpush1.bf16.msra.mxu0 0
      %3809 = vmatprep.subr.bf16.mxu0 0
      %3810 = vmatpush1.bf16.msra.mxu0 0
      %3811 = vmatprep.subr.bf16.mxu0 0
      %3812 = vmatpush1.bf16.msra.mxu0 0
      %3813 = vmatprep.subr.bf16.mxu0 0
      %3814 = vmatpush1.bf16.msra.mxu0 0
      %3815 = vmatprep.subr.bf16.mxu0 0
      %3816 = vmatpush1.bf16.msra.mxu0 0
      %3817 = vmatprep.subr.bf16.mxu0 0
      %3818 = vmatpush1.bf16.msra.mxu0 %v3805
      %3819 = vmatprep.subr.bf16.mxu0 0
      %3820 = vmatpush1.bf16.msra.mxu0 %v3766
      %3821 = vmatprep.subr.bf16.mxu0 0
      %3822 = vmatpush1.bf16.msra.mxu0 %v3765
      %3823 = vmatprep.subr.bf16.mxu0 0
      %3824 = vmatpush2.bf16.msra.mxu0 0
      %3825 = vmatprep.subr.bf16.mxu0 0
      %3826 = vmatpush2.bf16.msra.mxu0 0
      %3827 = vmatprep.subr.bf16.mxu0 0
      %3828 = vmatpush2.bf16.msra.mxu0 0
      %3829 = vmatprep.subr.bf16.mxu0 0
      %3830 = vmatpush2.bf16.msra.mxu0 0
      %3831 = vmatprep.subr.bf16.mxu0 0
      %3832 = vmatpush2.bf16.msra.mxu0 0
      %3833 = vmatprep.subr.bf16.mxu0 0
      %3834 = vmatpush2.bf16.msra.mxu0 0
      %3835 = vmatprep.subr.bf16.mxu0 0
      %3836 = vmatpush2.bf16.msra.mxu0 0
      %3837 = vmatprep.subr.bf16.mxu0 0
      %3838 = vmatpush2.bf16.msra.mxu0 0
      %3839 = vmatprep.mubr.bf16.mxu0 0
      %3840 = vmatmul.mubr.bf16.gmra.mxu0 %v3771
      %v3841 = vpop.f32.mrf.mxu0
      %v3842 = vadd.f32 0.0, %v3841
      %v3843 = vpop.f32.mrf.mxu0
      %v3844 = vpop.f32.mrf.mxu0
      %v3845 = vadd.f32 0.0, %v3844
      %v3846 = vpop.f32.mrf.mxu0
      %3847 = vmatprep.mubr.bf16.mxu0 0
      %3848 = vmatmul.mubr.bf16.gmra.mxu0 %v3773
      %v3849 = vpop.f32.mrf.mxu0
      %v3850 = vadd.f32 0.0, %v3849
      %v3851 = vpop.f32.mrf.mxu0
      %v3852 = vpop.f32.mrf.mxu0
      %v3853 = vadd.f32 0.0, %v3852
      %v3854 = vpop.f32.mrf.mxu0
      %3855 = vmatprep.mubr.bf16.mxu0 0
      %3856 = vmatmul.mubr.bf16.gmra.mxu0 %v3775
      %v3857 = vpop.f32.mrf.mxu0
      %v3858 = vadd.f32 0.0, %v3857
      %v3859 = vpop.f32.mrf.mxu0
      %v3860 = vpop.f32.mrf.mxu0
      %v3861 = vadd.f32 0.0, %v3860
      %v3862 = vpop.f32.mrf.mxu0
      %3863 = vmatprep.mubr.bf16.mxu0 0
      %3864 = vmatmul.mubr.bf16.gmra.mxu0 %v3777
      %v3865 = vpop.f32.mrf.mxu0
      %v3866 = vadd.f32 0.0, %v3865
      %v3867 = vpop.f32.mrf.mxu0
      %v3868 = vpop.f32.mrf.mxu0
      %v3869 = vadd.f32 0.0, %v3868
      %v3870 = vpop.f32.mrf.mxu0
      %3871 = vmatprep.mubr.bf16.mxu0 0
      %3872 = vmatmul.mubr.bf16.gmra.mxu0 %v3779
      %v3873 = vpop.f32.mrf.mxu0
      %v3874 = vadd.f32 0.0, %v3873
      %v3875 = vpop.f32.mrf.mxu0
      %v3876 = vpop.f32.mrf.mxu0
      %v3877 = vadd.f32 0.0, %v3876
      %v3878 = vpop.f32.mrf.mxu0
      %3879 = vmatprep.mubr.bf16.mxu0 0
      %3880 = vmatmul.mubr.bf16.gmra.mxu0 %v3781
      %v3881 = vpop.f32.mrf.mxu0
      %v3882 = vadd.f32 0.0, %v3881
      %v3883 = vpop.f32.mrf.mxu0
      %v3884 = vpop.f32.mrf.mxu0
      %v3885 = vadd.f32 0.0, %v3884
      %v3886 = vpop.f32.mrf.mxu0
      %3887 = vmatprep.mubr.bf16.mxu0 0
      %3888 = vmatmul.mubr.bf16.gmra.mxu0 %v3783
      %v3889 = vpop.f32.mrf.mxu0
      %v3890 = vadd.f32 0.0, %v3889
      %v3891 = vpop.f32.mrf.mxu0
      %v3892 = vpop.f32.mrf.mxu0
      %v3893 = vadd.f32 0.0, %v3892
      %v3894 = vpop.f32.mrf.mxu0
      %3895 = vmatprep.mubr.bf16.mxu0 0
      %3896 = vmatmul.mubr.bf16.gmra.mxu0 %v3785
      %v3897 = vpop.f32.mrf.mxu0
      %v3898 = vadd.f32 0.0, %v3897
      %v3899 = vpop.f32.mrf.mxu0
      %v3900 = vpop.f32.mrf.mxu0
      %v3901 = vadd.f32 0.0, %v3900
      %v3902 = vpop.f32.mrf.mxu0
      %3903 = vmatprep.mubr.bf16.mxu0 0
      %3904 = vmatmul.mubr.bf16.gmra.mxu0 %v3787
      %v3905 = vpop.f32.mrf.mxu0
      %v3906 = vadd.f32 0.0, %v3905
      %v3907 = vpop.f32.mrf.mxu0
      %v3908 = vpop.f32.mrf.mxu0
      %v3909 = vadd.f32 0.0, %v3908
      %v3910 = vpop.f32.mrf.mxu0
      %3911 = vmatprep.mubr.bf16.mxu0 0
      %3912 = vmatmul.mubr.bf16.gmra.mxu0 %v3789
      %v3913 = vpop.f32.mrf.mxu0
      %v3914 = vadd.f32 0.0, %v3913
      %v3915 = vpop.f32.mrf.mxu0
      %v3916 = vpop.f32.mrf.mxu0
      %v3917 = vadd.f32 0.0, %v3916
      %v3918 = vpop.f32.mrf.mxu0
      %3919 = vmatprep.mubr.bf16.mxu0 0
      %3920 = vmatmul.mubr.bf16.gmra.mxu0 %v3791
      %v3921 = vpop.f32.mrf.mxu0
      %v3922 = vadd.f32 0.0, %v3921
      %v3923 = vpop.f32.mrf.mxu0
      %v3924 = vpop.f32.mrf.mxu0
      %v3925 = vadd.f32 0.0, %v3924
      %v3926 = vpop.f32.mrf.mxu0
      %3927 = vmatprep.mubr.bf16.mxu0 0
      %3928 = vmatmul.mubr.bf16.gmra.mxu0 %v3793
      %v3929 = vpop.f32.mrf.mxu0
      %v3930 = vadd.f32 0.0, %v3929
      %v3931 = vpop.f32.mrf.mxu0
      %v3932 = vpop.f32.mrf.mxu0
      %v3933 = vadd.f32 0.0, %v3932
      %v3934 = vpop.f32.mrf.mxu0
      %3935 = vmatprep.mubr.bf16.mxu0 0
      %3936 = vmatmul.mubr.bf16.gmra.mxu0 %v3795
      %v3937 = vpop.f32.mrf.mxu0
      %v3938 = vadd.f32 0.0, %v3937
      %v3939 = vpop.f32.mrf.mxu0
      %v3940 = vpop.f32.mrf.mxu0
      %v3941 = vadd.f32 0.0, %v3940
      %v3942 = vpop.f32.mrf.mxu0
      %3943 = vmatprep.mubr.bf16.mxu0 0
      %3944 = vmatmul.mubr.bf16.gmra.mxu0 %v3797
      %v3945 = vpop.f32.mrf.mxu0
      %v3946 = vadd.f32 0.0, %v3945
      %v3947 = vpop.f32.mrf.mxu0
      %v3948 = vpop.f32.mrf.mxu0
      %v3949 = vadd.f32 0.0, %v3948
      %v3950 = vpop.f32.mrf.mxu0
      %3951 = vmatprep.mubr.bf16.mxu0 0
      %3952 = vmatmul.mubr.bf16.gmra.mxu0 %v3799
      %v3953 = vpop.f32.mrf.mxu0
      %v3954 = vadd.f32 0.0, %v3953
      %v3955 = vpop.f32.mrf.mxu0
      %v3956 = vpop.f32.mrf.mxu0
      %v3957 = vadd.f32 0.0, %v3956
      %v3958 = vpop.f32.mrf.mxu0
      %3959 = vmatprep.mubr.bf16.mxu0 0
      %3960 = vmatmul.mubr.bf16.gmra.mxu0 %v3801
      %v3961 = vpop.f32.mrf.mxu0
      %v3962 = vadd.f32 0.0, %v3961
      %v3963 = vpop.f32.mrf.mxu0
      %v3964 = vpop.f32.mrf.mxu0
      %v3965 = vadd.f32 0.0, %v3964
      %v3966 = vpop.f32.mrf.mxu0
      %3967 = vdwg.mxu0
      %v3968 = vsel %vm3519, %v3842, 0.0
      %v3969 = vsel %vm3519, %v3845, 0.0
      %v3970 = vadd.f32 %v3968, %v3969
      %v3971 = vsel %vm3519, %v3850, 0.0
      %v3972 = vadd.f32 %v3970, %v3971
      %v3973 = vsel %vm3519, %v3853, 0.0
      %v3974 = vadd.f32 %v3972, %v3973
      %v3975 = vsel %vm3519, %v3858, 0.0
      %v3976 = vadd.f32 %v3974, %v3975
      %v3977 = vsel %vm3519, %v3861, 0.0
      %v3978 = vadd.f32 %v3976, %v3977
      %v3979 = vsel %vm3519, %v3866, 0.0
      %v3980 = vadd.f32 %v3978, %v3979
      %v3981 = vsel %vm3519, %v3869, 0.0
      %v3982 = vadd.f32 %v3980, %v3981
      %v3983 = vsel %vm3519, %v3874, 0.0
      %v3984 = vadd.f32 %v3982, %v3983
      %v3985 = vsel %vm3519, %v3877, 0.0
      %v3986 = vadd.f32 %v3984, %v3985
      %v3987 = vsel %vm3519, %v3882, 0.0
      %v3988 = vadd.f32 %v3986, %v3987
      %v3989 = vsel %vm3519, %v3885, 0.0
      %v3990 = vadd.f32 %v3988, %v3989
      %v3991 = vsel %vm3519, %v3890, 0.0
      %v3992 = vadd.f32 %v3990, %v3991
      %v3993 = vsel %vm3519, %v3893, 0.0
      %v3994 = vadd.f32 %v3992, %v3993
      %v3995 = vsel %vm3519, %v3898, 0.0
      %v3996 = vadd.f32 %v3994, %v3995
      %v3997 = vsel %vm3519, %v3901, 0.0
      %v3998 = vadd.f32 %v3996, %v3997
      %v3999 = vsel %vm3519, %v3906, 0.0
      %v4000 = vadd.f32 %v3998, %v3999
      %v4001 = vsel %vm3519, %v3909, 0.0
      %v4002 = vadd.f32 %v4000, %v4001
      %v4003 = vsel %vm3519, %v3914, 0.0
      %v4004 = vadd.f32 %v4002, %v4003
      %v4005 = vsel %vm3519, %v3917, 0.0
      %v4006 = vadd.f32 %v4004, %v4005
      %v4007 = vsel %vm3519, %v3922, 0.0
      %v4008 = vadd.f32 %v4006, %v4007
      %v4009 = vsel %vm3519, %v3925, 0.0
      %v4010 = vadd.f32 %v4008, %v4009
      %v4011 = vsel %vm3519, %v3930, 0.0
      %v4012 = vadd.f32 %v4010, %v4011
      %v4013 = vsel %vm3519, %v3933, 0.0
      %v4014 = vadd.f32 %v4012, %v4013
      %v4015 = vsel %vm3519, %v3938, 0.0
      %v4016 = vadd.f32 %v4014, %v4015
      %v4017 = vsel %vm3519, %v3941, 0.0
      %v4018 = vadd.f32 %v4016, %v4017
      %v4019 = vsel %vm3519, %v3946, 0.0
      %v4020 = vadd.f32 %v4018, %v4019
      %v4021 = vsel %vm3519, %v3949, 0.0
      %v4022 = vadd.f32 %v4020, %v4021
      %v4023 = vsel %vm3519, %v3954, 0.0
      %v4024 = vadd.f32 %v4022, %v4023
      %v4025 = vsel %vm3519, %v3957, 0.0
      %v4026 = vadd.f32 %v4024, %v4025
      %v4027 = vsel %vm3519, %v3962, 0.0
      %v4028 = vadd.f32 %v4026, %v4027
      %v4029 = vsel %vm3519, %v3965, 0.0
      %v4030 = vadd.f32 %v4028, %v4029
      %v4031 = vrot.slane %v4030, 4
      %v4032 = vadd.f32 %v4030, %v4031
      %v4033 = vrot.slane %v4032, 2
      %v4034 = vadd.f32 %v4032, %v4033
      %v4035 = vrot.slane %v4034, 1
      %v4036 = vadd.f32 %v4034, %v4035
      %vm4037 = vcmask 57344
      %4038 = vst.msk [vmem:[%s211] sm:$0x1] %vm4037, %v4036
      %v4039 = vmul.f32 %v3842, %v3842
      %v4040 = vmul.f32 %v3845, %v3845
      %v4041 = vmul.f32 %v3850, %v3850
      %v4042 = vmul.f32 %v3853, %v3853
      %v4043 = vmul.f32 %v3858, %v3858
      %v4044 = vmul.f32 %v3861, %v3861
      %v4045 = vmul.f32 %v3866, %v3866
      %v4046 = vmul.f32 %v3869, %v3869
      %v4047 = vmul.f32 %v3874, %v3874
      %v4048 = vmul.f32 %v3877, %v3877
      %v4049 = vmul.f32 %v3882, %v3882
      %v4050 = vmul.f32 %v3885, %v3885
      %v4051 = vmul.f32 %v3890, %v3890
      %v4052 = vmul.f32 %v3893, %v3893
      %v4053 = vmul.f32 %v3898, %v3898
      %v4054 = vmul.f32 %v3901, %v3901
      %v4055 = vmul.f32 %v3906, %v3906
      %v4056 = vmul.f32 %v3909, %v3909
      %v4057 = vmul.f32 %v3914, %v3914
      %v4058 = vmul.f32 %v3917, %v3917
      %v4059 = vmul.f32 %v3922, %v3922
      %v4060 = vmul.f32 %v3925, %v3925
      %v4061 = vmul.f32 %v3930, %v3930
      %v4062 = vmul.f32 %v3933, %v3933
      %v4063 = vmul.f32 %v3938, %v3938
      %v4064 = vmul.f32 %v3941, %v3941
      %v4065 = vmul.f32 %v3946, %v3946
      %v4066 = vmul.f32 %v3949, %v3949
      %v4067 = vmul.f32 %v3954, %v3954
      %v4068 = vmul.f32 %v3957, %v3957
      %v4069 = vmul.f32 %v3962, %v3962
      %v4070 = vmul.f32 %v3965, %v3965
      %v4071 = vsel %vm3519, %v4039, 0.0
      %v4072 = vsel %vm3519, %v4040, 0.0
      %v4073 = vadd.f32 %v4071, %v4072
      %v4074 = vsel %vm3519, %v4041, 0.0
      %v4075 = vadd.f32 %v4073, %v4074
      %v4076 = vsel %vm3519, %v4042, 0.0
      %v4077 = vadd.f32 %v4075, %v4076
      %v4078 = vsel %vm3519, %v4043, 0.0
      %v4079 = vadd.f32 %v4077, %v4078
      %v4080 = vsel %vm3519, %v4044, 0.0
      %v4081 = vadd.f32 %v4079, %v4080
      %v4082 = vsel %vm3519, %v4045, 0.0
      %v4083 = vadd.f32 %v4081, %v4082
      %v4084 = vsel %vm3519, %v4046, 0.0
      %v4085 = vadd.f32 %v4083, %v4084
      %v4086 = vsel %vm3519, %v4047, 0.0
      %v4087 = vadd.f32 %v4085, %v4086
      %v4088 = vsel %vm3519, %v4048, 0.0
      %v4089 = vadd.f32 %v4087, %v4088
      %v4090 = vsel %vm3519, %v4049, 0.0
      %v4091 = vadd.f32 %v4089, %v4090
      %v4092 = vsel %vm3519, %v4050, 0.0
      %v4093 = vadd.f32 %v4091, %v4092
      %v4094 = vsel %vm3519, %v4051, 0.0
      %v4095 = vadd.f32 %v4093, %v4094
      %v4096 = vsel %vm3519, %v4052, 0.0
      %v4097 = vadd.f32 %v4095, %v4096
      %v4098 = vsel %vm3519, %v4053, 0.0
      %v4099 = vadd.f32 %v4097, %v4098
      %v4100 = vsel %vm3519, %v4054, 0.0
      %v4101 = vadd.f32 %v4099, %v4100
      %v4102 = vsel %vm3519, %v4055, 0.0
      %v4103 = vadd.f32 %v4101, %v4102
      %v4104 = vsel %vm3519, %v4056, 0.0
      %v4105 = vadd.f32 %v4103, %v4104
      %v4106 = vsel %vm3519, %v4057, 0.0
      %v4107 = vadd.f32 %v4105, %v4106
      %v4108 = vsel %vm3519, %v4058, 0.0
      %v4109 = vadd.f32 %v4107, %v4108
      %v4110 = vsel %vm3519, %v4059, 0.0
      %v4111 = vadd.f32 %v4109, %v4110
      %v4112 = vsel %vm3519, %v4060, 0.0
      %v4113 = vadd.f32 %v4111, %v4112
      %v4114 = vsel %vm3519, %v4061, 0.0
      %v4115 = vadd.f32 %v4113, %v4114
      %v4116 = vsel %vm3519, %v4062, 0.0
      %v4117 = vadd.f32 %v4115, %v4116
      %v4118 = vsel %vm3519, %v4063, 0.0
      %v4119 = vadd.f32 %v4117, %v4118
      %v4120 = vsel %vm3519, %v4064, 0.0
      %v4121 = vadd.f32 %v4119, %v4120
      %v4122 = vsel %vm3519, %v4065, 0.0
      %v4123 = vadd.f32 %v4121, %v4122
      %v4124 = vsel %vm3519, %v4066, 0.0
      %v4125 = vadd.f32 %v4123, %v4124
      %v4126 = vsel %vm3519, %v4067, 0.0
      %v4127 = vadd.f32 %v4125, %v4126
      %v4128 = vsel %vm3519, %v4068, 0.0
      %v4129 = vadd.f32 %v4127, %v4128
      %v4130 = vsel %vm3519, %v4069, 0.0
      %v4131 = vadd.f32 %v4129, %v4130
      %v4132 = vsel %vm3519, %v4070, 0.0
      %v4133 = vadd.f32 %v4131, %v4132
      %v4134 = vrot.slane %v4133, 4
      %v4135 = vadd.f32 %v4133, %v4134
      %v4136 = vrot.slane %v4135, 2
      %v4137 = vadd.f32 %v4135, %v4136
      %v4138 = vrot.slane %v4137, 1
      %v4139 = vadd.f32 %v4137, %v4138
      %4140 = vst.msk [vmem:[%s214] sm:$0x1] %vm4037, %v4139
      %v4141 = vpack.c.bf16 %v3845, %v3842
      %v4142 = vpack.c.bf16 %v3853, %v3850
      %v4143 = vpack.c.bf16 %v3861, %v3858
      %v4144 = vpack.c.bf16 %v3869, %v3866
      %v4145 = vpack.c.bf16 %v3877, %v3874
      %v4146 = vpack.c.bf16 %v3885, %v3882
      %v4147 = vpack.c.bf16 %v3893, %v3890
      %v4148 = vpack.c.bf16 %v3901, %v3898
      %v4149 = vpack.c.bf16 %v3909, %v3906
      %v4150 = vpack.c.bf16 %v3917, %v3914
      %v4151 = vpack.c.bf16 %v3925, %v3922
      %v4152 = vpack.c.bf16 %v3933, %v3930
      %v4153 = vpack.c.bf16 %v3941, %v3938
      %v4154 = vpack.c.bf16 %v3949, %v3946
      %v4155 = vpack.c.bf16 %v3957, %v3954
      %v4156 = vpack.c.bf16 %v3965, %v3962
      %v4173 = vunpack.c.l.b16 %v4141
      %v4174 = vunpack.c.h.b16 %v4141
      %v4175 = vunpack.c.l.b16 %v4142
      %v4176 = vunpack.c.h.b16 %v4142
      %v4177 = vunpack.c.l.b16 %v4143
      %v4178 = vunpack.c.h.b16 %v4143
      %v4179 = vunpack.c.l.b16 %v4144
      %v4180 = vunpack.c.h.b16 %v4144
      %v4181 = vunpack.c.l.b16 %v4145
      %v4182 = vunpack.c.h.b16 %v4145
      %v4183 = vunpack.c.l.b16 %v4146
      %v4184 = vunpack.c.h.b16 %v4146
      %v4185 = vunpack.c.l.b16 %v4147
      %v4186 = vunpack.c.h.b16 %v4147
      %v4187 = vunpack.c.l.b16 %v4148
      %v4188 = vunpack.c.h.b16 %v4148
      %v4189 = vunpack.c.l.b16 %v4149
      %v4190 = vunpack.c.h.b16 %v4149
      %v4191 = vunpack.c.l.b16 %v4150
      %v4192 = vunpack.c.h.b16 %v4150
      %v4193 = vunpack.c.l.b16 %v4151
      %v4194 = vunpack.c.h.b16 %v4151
      %v4195 = vunpack.c.l.b16 %v4152
      %v4196 = vunpack.c.h.b16 %v4152
      %v4197 = vunpack.c.l.b16 %v4153
      %v4198 = vunpack.c.h.b16 %v4153
      %v4199 = vunpack.c.l.b16 %v4154
      %v4200 = vunpack.c.h.b16 %v4154
      %v4201 = vunpack.c.l.b16 %v4155
      %v4202 = vunpack.c.h.b16 %v4155
      %v4203 = vunpack.c.l.b16 %v4156
      %v4204 = vunpack.c.h.b16 %v4156
      %v4205 = vpack.c.b16 %v4173, %v4173
      %v4206 = vpack.c.b16 %v4174, %v4174
      %v4207 = vpack.c.b16 %v4175, %v4175
      %v4208 = vpack.c.b16 %v4176, %v4176
      %v4209 = vpack.c.b16 %v4177, %v4177
      %v4210 = vpack.c.b16 %v4178, %v4178
      %v4211 = vpack.c.b16 %v4179, %v4179
      %v4212 = vpack.c.b16 %v4180, %v4180
      %v4213 = vpack.c.b16 %v4181, %v4181
      %v4214 = vpack.c.b16 %v4182, %v4182
      %v4215 = vpack.c.b16 %v4183, %v4183
      %v4216 = vpack.c.b16 %v4184, %v4184
      %v4217 = vpack.c.b16 %v4185, %v4185
      %v4218 = vpack.c.b16 %v4186, %v4186
      %v4219 = vpack.c.b16 %v4187, %v4187
      %v4220 = vpack.c.b16 %v4188, %v4188
      %v4221 = vpack.c.b16 %v4189, %v4189
      %v4222 = vpack.c.b16 %v4190, %v4190
      %v4223 = vpack.c.b16 %v4191, %v4191
      %v4224 = vpack.c.b16 %v4192, %v4192
      %v4225 = vpack.c.b16 %v4193, %v4193
      %v4226 = vpack.c.b16 %v4194, %v4194
      %v4227 = vpack.c.b16 %v4195, %v4195
      %v4228 = vpack.c.b16 %v4196, %v4196
      %v4229 = vpack.c.b16 %v4197, %v4197
      %v4230 = vpack.c.b16 %v4198, %v4198
      %v4231 = vpack.c.b16 %v4199, %v4199
      %v4232 = vpack.c.b16 %v4200, %v4200
      %v4233 = vpack.c.b16 %v4201, %v4201
      %v4234 = vpack.c.b16 %v4202, %v4202
      %v4235 = vpack.c.b16 %v4203, %v4203
      %v4236 = vpack.c.b16 %v4204, %v4204
      %vm4269 = vcmask 60416
      %4270 = vst.msk [vmem:[%s208] sm:$0xf] %vm4269, %v4205
      %4271 = vst.msk [vmem:[%s208 + $0x4] sm:$0xf] %vm4269, %v4206
      %4272 = vst.msk [vmem:[%s208 + $0x8] sm:$0xf] %vm4269, %v4207
      %4273 = vst.msk [vmem:[%s208 + $0xc] sm:$0xf] %vm4269, %v4208
      %4274 = vst.msk [vmem:[%s208 + $0x10] sm:$0xf] %vm4269, %v4209
      %4275 = vst.msk [vmem:[%s208 + $0x14] sm:$0xf] %vm4269, %v4210
      %4276 = vst.msk [vmem:[%s208 + $0x18] sm:$0xf] %vm4269, %v4211
      %4277 = vst.msk [vmem:[%s208 + $0x1c] sm:$0xf] %vm4269, %v4212
      %4278 = vst.msk [vmem:[%s208 + $0x20] sm:$0xf] %vm4269, %v4213
      %4279 = vst.msk [vmem:[%s208 + $0x24] sm:$0xf] %vm4269, %v4214
      %4280 = vst.msk [vmem:[%s208 + $0x28] sm:$0xf] %vm4269, %v4215
      %4281 = vst.msk [vmem:[%s208 + $0x2c] sm:$0xf] %vm4269, %v4216
      %4282 = vst.msk [vmem:[%s208 + $0x30] sm:$0xf] %vm4269, %v4217
      %4283 = vst.msk [vmem:[%s208 + $0x34] sm:$0xf] %vm4269, %v4218
      %4284 = vst.msk [vmem:[%s208 + $0x38] sm:$0xf] %vm4269, %v4219
      %4285 = vst.msk [vmem:[%s208 + $0x3c] sm:$0xf] %vm4269, %v4220
      %4286 = vst.msk [vmem:[%s208 + $0x40] sm:$0xf] %vm4269, %v4221
      %4287 = vst.msk [vmem:[%s208 + $0x44] sm:$0xf] %vm4269, %v4222
      %4288 = vst.msk [vmem:[%s208 + $0x48] sm:$0xf] %vm4269, %v4223
      %4289 = vst.msk [vmem:[%s208 + $0x4c] sm:$0xf] %vm4269, %v4224
      %4290 = vst.msk [vmem:[%s208 + $0x50] sm:$0xf] %vm4269, %v4225
      %4291 = vst.msk [vmem:[%s208 + $0x54] sm:$0xf] %vm4269, %v4226
      %4292 = vst.msk [vmem:[%s208 + $0x58] sm:$0xf] %vm4269, %v4227
      %4293 = vst.msk [vmem:[%s208 + $0x5c] sm:$0xf] %vm4269, %v4228
      %4294 = vst.msk [vmem:[%s208 + $0x60] sm:$0xf] %vm4269, %v4229
      %4295 = vst.msk [vmem:[%s208 + $0x64] sm:$0xf] %vm4269, %v4230
      %4296 = vst.msk [vmem:[%s208 + $0x68] sm:$0xf] %vm4269, %v4231
      %4297 = vst.msk [vmem:[%s208 + $0x6c] sm:$0xf] %vm4269, %v4232
      %4298 = vst.msk [vmem:[%s208 + $0x70] sm:$0xf] %vm4269, %v4233
      %4299 = vst.msk [vmem:[%s208 + $0x74] sm:$0xf] %vm4269, %v4234
      %4300 = vst.msk [vmem:[%s208 + $0x78] sm:$0xf] %vm4269, %v4235
      %4301 = vst.msk [vmem:[%s208 + $0x7c] sm:$0xf] %vm4269, %v4236
      %p4302 = scmp.lt.s32.totalorder %s16, 1
      %s4303 = scalar_select %p4302, %s16, 1
      %s4304 = smul.addr %s4303, 32
      %s4305 = smul.addr %s4304, 4
      %s4306 = scalar_lea.vmem %s2, %s4305
      %p4307 = scmp.lt.s32.totalorder %s16, 1
      %s4308 = scalar_select %p4307, %s16, 1
      %s4309 = scalar_lea.vmem %s3, %s4308
      %p4310 = scmp.lt.s32.totalorder %s16, 1
      %s4311 = scalar_select %p4310, %s16, 1
      %s4312 = scalar_lea.vmem %s4, %s4311
      // Predicated region
      $region29: #{doubleconv_forward.3} parent=27 // pred_check
        %p4313 = pneg %p81
      $region30: #{doubleconv_forward.3} parent=27 // pred_check_branch
        %4315 = sbr.rel (%p4313) target = $region32
      $region31: #{doubleconv_forward.3} parent=27 // pred_region
        _
      $region32: #{doubleconv_forward.3} parent=27 // pred_fallthru
        _
      // Predicated region
      $region33: #{doubleconv_forward.3} parent=27 // pred_check
        %p4316 = pneg %p107
      $region34: #{doubleconv_forward.3} parent=27 // pred_check_branch
        %4318 = sbr.rel (%p4316) target = $region36
      $region35: #{doubleconv_forward.3} parent=27 // pred_region
        _
      $region36: #{doubleconv_forward.3} parent=27 // pred_fallthru
        _
      // Predicated region
      $region37: #{doubleconv_forward.3} parent=27 // pred_check
        %p4319 = pneg %p133
      $region38: #{doubleconv_forward.3} parent=27 // pred_check_branch
        %4321 = sbr.rel (%p4319) target = $region40
      $region39: #{doubleconv_forward.3} parent=27 // pred_region
        _
      $region40: #{doubleconv_forward.3} parent=27 // pred_fallthru
        _
    $region28: #{doubleconv_forward.3} parent=5 // pred_fallthru
      _
    %p4322 = scmp.le.s32.totalorder 2, %s11
    // Predicated region
    $region41: #{doubleconv_forward.3} parent=5 // pred_check
      %p4323 = pneg %p4322
    $region42: #{doubleconv_forward.3} parent=5 // pred_check_branch
      %4325 = sbr.rel (%p4323) target = $region44
    $region43: #{doubleconv_forward.3} parent=5 // pred_region
      %s4326 = ssub.s32 %s11, 2
      // Predicated region
      $region45: #{doubleconv_forward.3} parent=43 // pred_check
        %p4327 = pneg %p87
      $region46: #{doubleconv_forward.3} parent=43 // pred_check_branch
        %4329 = sbr.rel (%p4327) target = $region48
      $region47: #{doubleconv_forward.3} parent=43 // pred_region
        %p4330 = scmp.lt.s32.totalorder %s17, 1
        %s4331 = scalar_select %p4330, %s17, 1
        %s4332 = smul.addr %s4331, 32
        %s4333 = smul.addr %s4332, 4
        %s4334 = scalar_lea.vmem %s2, %s4333
      $region48: #{doubleconv_forward.3} parent=43 // pred_fallthru
        _
      // Predicated region
      $region49: #{doubleconv_forward.3} parent=43 // pred_check
        %p4335 = pneg %p113
      $region50: #{doubleconv_forward.3} parent=43 // pred_check_branch
        %4337 = sbr.rel (%p4335) target = $region52
      $region51: #{doubleconv_forward.3} parent=43 // pred_region
        %p4338 = scmp.lt.s32.totalorder %s17, 1
        %s4339 = scalar_select %p4338, %s17, 1
        %s4340 = scalar_lea.vmem %s3, %s4339
      $region52: #{doubleconv_forward.3} parent=43 // pred_fallthru
        _
      // Predicated region
      $region53: #{doubleconv_forward.3} parent=43 // pred_check
        %p4341 = pneg %p139
      $region54: #{doubleconv_forward.3} parent=43 // pred_check_branch
        %4343 = sbr.rel (%p4341) target = $region56
      $region55: #{doubleconv_forward.3} parent=43 // pred_region
        %p4344 = scmp.lt.s32.totalorder %s17, 1
        %s4345 = scalar_select %p4344, %s17, 1
        %s4346 = scalar_lea.vmem %s4, %s4345
      $region56: #{doubleconv_forward.3} parent=43 // pred_fallthru
        _
    $region44: #{doubleconv_forward.3} parent=5 // pred_fallthru
      _
  $region6: #{doubleconv_forward.3} parent=0 // loop_footer
    %s15 = sadd.s32 1, %s11
  $region7: #{doubleconv_forward.3} parent=0 // loop_footer_branch
    %10 = sbr.rel target = $region3
  $region8: #{doubleconv_forward.3} parent=0 // loop_exit
    _

// kernel: doubleconv_forward.4
$region0: #{doubleconv_forward.4}
  #allocation0 [shape = 'u32[]', space=smem, size = 0x4, offset = 0x4, fixed_abs, tag = 'smem constant byte address 0x4 - core index']
  #allocation1 [shape = 'u32[144,128]{1,0:T(1,128)}', space=vmem, size = 0x12000, scoped, tag = 'internal scratch']
  #allocation2 [shape = 'bf16[18,18,8]{2,1,0:T(8,128)(2,1)}', space=vmem, size = 0x1b000, scoped, tag = 'scratch operand']
  %s0 = inlined_call_operand.vmem [shape: bf16[2,256,8], index: 0, kind: input, shape index: {}]
  %s1 = inlined_call_operand.vmem [shape: f32[1,8], index: 1, kind: input, shape index: {}]
  %s2 = inlined_call_operand.vmem [shape: f32[1,8], index: 2, kind: input, shape index: {}]
  %s3 = inlined_call_operand.vmem [shape: bf16[72,8], index: 3, kind: input, shape index: {}]
  %s4 = inlined_call_operand.vmem [shape: bf16[2,256,8], index: 4, kind: output, shape index: {0}]
  %s5 = inlined_call_operand.vmem [shape: f32[2,1,8], index: 5, kind: output, shape index: {1}]
  %s6 = inlined_call_operand.vmem [shape: f32[2,1,8], index: 6, kind: output, shape index: {2}]
  %7 = xla_tuple %s4, %s5, %s6
  %s8 = sld [smem:[#allocation0]]
  $region65: #{doubleconv_forward.4} parent=0
    _
  %s10 = ssub.s32 1, %s8
  %s11 = scalar_select 0, %s10, %s8
  loop: start=0, step=1, limit=4
  $region2: #{doubleconv_forward.4} parent=0 // loop_pre_header
    _
  $region3: #{doubleconv_forward.4} parent=0 // loop_header
    %s13 = sphi 0, %s17
    %p14 = scmp.ge.s32.totalorder %s13, 4
    %s23 = sphi 0, %s25
    %s26 = sphi 0, %s23
    %s27 = sphi 0, %s26
    %s43 = sphi 0, %s27
    %s47 = sphi 0, %s47
    %s49 = sphi 0, %s47
    %s50 = sphi 0, %s49
    %s64 = sphi 0, %s50
    %s68 = sphi 0, %s68
    %s70 = sphi 0, %s68
    %s71 = sphi 0, %s70
    %s85 = sphi 0, %s71
    %s89 = sphi 0, %s89
    %s91 = sphi 0, %s89
    %s92 = sphi 0, %s91
    %s106 = sphi 0, %s92
    %s112 = sphi 0, %s114
    %s115 = sphi 0, %s112
    %s116 = sphi 0, %s115
    %s132 = sphi 0, %s116
    %s138 = sphi 0, %s140
    %s141 = sphi 0, %s138
    %s142 = sphi 0, %s141
    %s158 = sphi 0, %s142
    %s164 = sphi 0, %s166
    %s167 = sphi 0, %s164
    %s168 = sphi 0, %s167
    %s184 = sphi 0, %s168
  $region4: #{doubleconv_forward.4} parent=0 // loop_header_branch
    %16 = sbr.rel (%p14) target = $region8
  $region5: #{doubleconv_forward.4} parent=0 // loop_body
    %s18 = ssub.s32 %s13, 1
    %s19 = ssub.s32 %s13, 2
    %s20 = sadd.s32 %s13, 1
    %s21 = ssub.s32 %s13, %s20
    %p22 = scmp.eq.s32.totalorder %s21, 0
    %s24 = sadd.s32 %s23, 1
    %s25 = scalar_select %p22, %s23, %s24
    %p28 = pneg %p22
    %p29 = scmp.eq.s32.totalorder %s13, 1
    %p30 = por %p28, %p29
    %p31 = scmp.ne.s32.totalorder %s23, %s26
    %p32 = scmp.eq.s32.totalorder %s13, 0
    %p33 = por %p31, %p32
    %p34 = scmp.ne.s32.totalorder %s23, %s26
    %p35 = scmp.eq.s32.totalorder %s18, 1
    %p36 = por %p34, %p35
    %p37 = scmp.ne.s32.totalorder %s26, %s27
    %p38 = scmp.eq.s32.totalorder %s18, 0
    %p39 = por %p37, %p38
    %p40 = scmp.ne.s32.totalorder %s26, %s27
    %p41 = scmp.eq.s32.totalorder %s19, 1
    %p42 = por %p40, %p41
    %p44 = scmp.ne.s32.totalorder %s27, %s43
    %p45 = scmp.eq.s32.totalorder %s19, 0
    %p46 = por %p44, %p45
    %s48 = sadd.s32 %s47, 1
    %p51 = scmp.eq.s32.totalorder %s13, 1
    %p52 = scmp.ne.s32.totalorder %s47, %s49
    %p53 = scmp.eq.s32.totalorder %s13, 0
    %p54 = por %p52, %p53
    %p55 = scmp.ne.s32.totalorder %s47, %s49
    %p56 = scmp.eq.s32.totalorder %s18, 1
    %p57 = por %p55, %p56
    %p58 = scmp.ne.s32.totalorder %s49, %s50
    %p59 = scmp.eq.s32.totalorder %s18, 0
    %p60 = por %p58, %p59
    %p61 = scmp.ne.s32.totalorder %s49, %s50
    %p62 = scmp.eq.s32.totalorder %s19, 1
    %p63 = por %p61, %p62
    %p65 = scmp.ne.s32.totalorder %s50, %s64
    %p66 = scmp.eq.s32.totalorder %s19, 0
    %p67 = por %p65, %p66
    %s69 = sadd.s32 %s68, 1
    %p72 = scmp.eq.s32.totalorder %s13, 1
    %p73 = scmp.ne.s32.totalorder %s68, %s70
    %p74 = scmp.eq.s32.totalorder %s13, 0
    %p75 = por %p73, %p74
    %p76 = scmp.ne.s32.totalorder %s68, %s70
    %p77 = scmp.eq.s32.totalorder %s18, 1
    %p78 = por %p76, %p77
    %p79 = scmp.ne.s32.totalorder %s70, %s71
    %p80 = scmp.eq.s32.totalorder %s18, 0
    %p81 = por %p79, %p80
    %p82 = scmp.ne.s32.totalorder %s70, %s71
    %p83 = scmp.eq.s32.totalorder %s19, 1
    %p84 = por %p82, %p83
    %p86 = scmp.ne.s32.totalorder %s71, %s85
    %p87 = scmp.eq.s32.totalorder %s19, 0
    %p88 = por %p86, %p87
    %s90 = sadd.s32 %s89, 1
    %p93 = scmp.eq.s32.totalorder %s13, 1
    %p94 = scmp.ne.s32.totalorder %s89, %s91
    %p95 = scmp.eq.s32.totalorder %s13, 0
    %p96 = por %p94, %p95
    %p97 = scmp.ne.s32.totalorder %s89, %s91
    %p98 = scmp.eq.s32.totalorder %s18, 1
    %p99 = por %p97, %p98
    %p100 = scmp.ne.s32.totalorder %s91, %s92
    %p101 = scmp.eq.s32.totalorder %s18, 0
    %p102 = por %p100, %p101
    %p103 = scmp.ne.s32.totalorder %s91, %s92
    %p104 = scmp.eq.s32.totalorder %s19, 1
    %p105 = por %p103, %p104
    %p107 = scmp.ne.s32.totalorder %s92, %s106
    %p108 = scmp.eq.s32.totalorder %s19, 0
    %p109 = por %p107, %p108
    %s110 = ssub.s32 %s13, %s20
    %p111 = scmp.eq.s32.totalorder %s110, 0
    %s113 = sadd.s32 %s112, 1
    %s114 = scalar_select %p111, %s112, %s113
    %p117 = pneg %p111
    %p118 = scmp.eq.s32.totalorder %s13, 1
    %p119 = por %p117, %p118
    %p120 = scmp.ne.s32.totalorder %s112, %s115
    %p121 = scmp.eq.s32.totalorder %s13, 0
    %p122 = por %p120, %p121
    %p123 = scmp.ne.s32.totalorder %s112, %s115
    %p124 = scmp.eq.s32.totalorder %s18, 1
    %p125 = por %p123, %p124
    %p126 = scmp.ne.s32.totalorder %s115, %s116
    %p127 = scmp.eq.s32.totalorder %s18, 0
    %p128 = por %p126, %p127
    %p129 = scmp.ne.s32.totalorder %s115, %s116
    %p130 = scmp.eq.s32.totalorder %s19, 1
    %p131 = por %p129, %p130
    %p133 = scmp.ne.s32.totalorder %s116, %s132
    %p134 = scmp.eq.s32.totalorder %s19, 0
    %p135 = por %p133, %p134
    %s136 = ssub.s32 %s13, %s20
    %p137 = scmp.eq.s32.totalorder %s136, 0
    %s139 = sadd.s32 %s138, 1
    %s140 = scalar_select %p137, %s138, %s139
    %p143 = pneg %p137
    %p144 = scmp.eq.s32.totalorder %s13, 1
    %p145 = por %p143, %p144
    %p146 = scmp.ne.s32.totalorder %s138, %s141
    %p147 = scmp.eq.s32.totalorder %s13, 0
    %p148 = por %p146, %p147
    %p149 = scmp.ne.s32.totalorder %s138, %s141
    %p150 = scmp.eq.s32.totalorder %s18, 1
    %p151 = por %p149, %p150
    %p152 = scmp.ne.s32.totalorder %s141, %s142
    %p153 = scmp.eq.s32.totalorder %s18, 0
    %p154 = por %p152, %p153
    %p155 = scmp.ne.s32.totalorder %s141, %s142
    %p156 = scmp.eq.s32.totalorder %s19, 1
    %p157 = por %p155, %p156
    %p159 = scmp.ne.s32.totalorder %s142, %s158
    %p160 = scmp.eq.s32.totalorder %s19, 0
    %p161 = por %p159, %p160
    %s162 = ssub.s32 %s13, %s20
    %p163 = scmp.eq.s32.totalorder %s162, 0
    %s165 = sadd.s32 %s164, 1
    %s166 = scalar_select %p163, %s164, %s165
    %p169 = pneg %p163
    %p170 = scmp.eq.s32.totalorder %s13, 1
    %p171 = por %p169, %p170
    %p172 = scmp.ne.s32.totalorder %s164, %s167
    %p173 = scmp.eq.s32.totalorder %s13, 0
    %p174 = por %p172, %p173
    %p175 = scmp.ne.s32.totalorder %s164, %s167
    %p176 = scmp.eq.s32.totalorder %s18, 1
    %p177 = por %p175, %p176
    %p178 = scmp.ne.s32.totalorder %s167, %s168
    %p179 = scmp.eq.s32.totalorder %s18, 0
    %p180 = por %p178, %p179
    %p181 = scmp.ne.s32.totalorder %s167, %s168
    %p182 = scmp.eq.s32.totalorder %s19, 1
    %p183 = por %p181, %p182
    %p185 = scmp.ne.s32.totalorder %s168, %s184
    %p186 = scmp.eq.s32.totalorder %s19, 0
    %p187 = por %p185, %p186
    %p188 = scmp.le.s32.totalorder 1, %s13
    %p189 = scmp.lt.s32.totalorder %s13, 3
    %p190 = pnand %p188, %p189
    %p191 = pneg %p190
    // Predicated region
    $region9: #{doubleconv_forward.4} parent=5 // pred_check
      _
    $region10: #{doubleconv_forward.4} parent=5 // pred_check_branch
      %193 = sbr.rel (%p190) target = $region12
    $region11: #{doubleconv_forward.4} parent=5 // pred_region
      %s194 = ssub.s32 %s13, 1
      // Predicated region
      $region13: #{doubleconv_forward.4} parent=11 // pred_check
        %p195 = pneg %p60
      $region14: #{doubleconv_forward.4} parent=11 // pred_check_branch
        %197 = sbr.rel (%p195) target = $region16
      $region15: #{doubleconv_forward.4} parent=11 // pred_region
        _
      $region16: #{doubleconv_forward.4} parent=11 // pred_fallthru
        _
      // Predicated region
      $region17: #{doubleconv_forward.4} parent=11 // pred_check
        %p198 = pneg %p81
      $region18: #{doubleconv_forward.4} parent=11 // pred_check_branch
        %200 = sbr.rel (%p198) target = $region20
      $region19: #{doubleconv_forward.4} parent=11 // pred_region
        _
      $region20: #{doubleconv_forward.4} parent=11 // pred_fallthru
        _
      // Predicated region
      $region21: #{doubleconv_forward.4} parent=11 // pred_check
        %p201 = pneg %p102
      $region22: #{doubleconv_forward.4} parent=11 // pred_check_branch
        %203 = sbr.rel (%p201) target = $region24
      $region23: #{doubleconv_forward.4} parent=11 // pred_region
        _
      $region24: #{doubleconv_forward.4} parent=11 // pred_fallthru
        _
    $region12: #{doubleconv_forward.4} parent=5 // pred_fallthru
      _
    %p204 = scmp.lt.s32.totalorder %s13, 2
    // Predicated region
    $region25: #{doubleconv_forward.4} parent=5 // pred_check
      %p205 = pneg %p204
    $region26: #{doubleconv_forward.4} parent=5 // pred_check_branch
      %207 = sbr.rel (%p205) target = $region28
    $region27: #{doubleconv_forward.4} parent=5 // pred_region
      // Predicated region
      $region29: #{doubleconv_forward.4} parent=27 // pred_check
        %p208 = pneg %p33
      $region30: #{doubleconv_forward.4} parent=27 // pred_check_branch
        %210 = sbr.rel (%p208) target = $region32
      $region31: #{doubleconv_forward.4} parent=27 // pred_region
        %p211 = scmp.lt.s32.totalorder %s13, 1
        %s212 = scalar_select %p211, %s13, 1
        %s213 = smul.addr %s212, 32
        %s214 = smul.addr %s213, 4
        %s215 = scalar_lea.vmem %s0, %s214
      $region32: #{doubleconv_forward.4} parent=27 // pred_fallthru
        _
    $region28: #{doubleconv_forward.4} parent=5 // pred_fallthru
      _
    %p216 = scmp.le.s32.totalorder 1, %s13
    %p217 = scmp.lt.s32.totalorder %s13, 3
    %p218 = pnand %p216, %p217
    %p219 = pneg %p218
    // Predicated region
    $region33: #{doubleconv_forward.4} parent=5 // pred_check
      _
    $region34: #{doubleconv_forward.4} parent=5 // pred_check_branch
      %221 = sbr.rel (%p218) target = $region36
    $region35: #{doubleconv_forward.4} parent=5 // pred_region
      %s222 = ssub.s32 %s13, 1
      %p223 = scmp.lt.s32.totalorder %s18, 1
      %s224 = scalar_select %p223, %s18, 1
      %s225 = smul.addr %s224, 32
      %s226 = smul.addr %s225, 4
      %s227 = scalar_lea.vmem %s0, %s226
      %p228 = pneg %p39
      %p229 = pneg %p36
      %p230 = pneg %p60
      %p231 = pneg %p57
      %p232 = pneg %p81
      %p233 = pneg %p78
      %p234 = pneg %p102
      %p235 = pneg %p99
      %p236 = pneg %p128
      %p237 = pneg %p125
      %p238 = scmp.lt.s32.totalorder %s18, 1
      %s239 = scalar_select %p238, %s18, 1
      %s240 = smul.addr %s239, 32
      %s241 = smul.addr %s240, 4
      %s242 = scalar_lea.vmem %s4, %s241
      %p243 = pneg %p154
      %p244 = pneg %p151
      %p245 = scmp.lt.s32.totalorder %s18, 1
      %s246 = scalar_select %p245, %s18, 1
      %s247 = scalar_lea.vmem %s5, %s246
      %p248 = pneg %p180
      %p249 = pneg %p177
      %p250 = scmp.lt.s32.totalorder %s18, 1
      %s251 = scalar_select %p250, %s18, 1
      %s252 = scalar_lea.vmem %s6, %s251
      %p253 = scmp.lt.s32.totalorder %s18, 1
      %s254 = scalar_select %p253, %s18, 1
      %s255 = smul.addr %s254, 32
      %s256 = smul.addr %s255, 4
      %s257 = scalar_lea.vmem %s0, %s256
      %p258 = scmp.lt.s32.totalorder %s18, 1
      %s259 = scalar_select %p258, %s18, 1
      %s260 = smul.addr %s259, 32
      %s261 = smul.addr %s260, 4
      %s262 = scalar_lea.vmem %s4, %s261
      %p263 = scmp.lt.s32.totalorder %s18, 1
      %s264 = scalar_select %p263, %s18, 1
      %s265 = scalar_lea.vmem %s5, %s264
      %p266 = scmp.lt.s32.totalorder %s18, 1
      %s267 = scalar_select %p266, %s18, 1
      %s268 = scalar_lea.vmem %s6, %s267
      %v270 = vld [vmem:[%s257] sm:$0xf]
      %v271 = vld [vmem:[%s257 + $0x4] sm:$0xf]
      %v272 = vld [vmem:[%s257 + $0x8] sm:$0xf]
      %v273 = vld [vmem:[%s257 + $0xc] sm:$0xf]
      %v274 = vld [vmem:[%s257 + $0x10] sm:$0xf]
      %v275 = vld [vmem:[%s257 + $0x14] sm:$0xf]
      %v276 = vld [vmem:[%s257 + $0x18] sm:$0xf]
      %v277 = vld [vmem:[%s257 + $0x1c] sm:$0xf]
      %v278 = vld [vmem:[%s257 + $0x20] sm:$0xf]
      %v279 = vld [vmem:[%s257 + $0x24] sm:$0xf]
      %v280 = vld [vmem:[%s257 + $0x28] sm:$0xf]
      %v281 = vld [vmem:[%s257 + $0x2c] sm:$0xf]
      %v282 = vld [vmem:[%s257 + $0x30] sm:$0xf]
      %v283 = vld [vmem:[%s257 + $0x34] sm:$0xf]
      %v284 = vld [vmem:[%s257 + $0x38] sm:$0xf]
      %v285 = vld [vmem:[%s257 + $0x3c] sm:$0xf]
      %v286 = vld [vmem:[%s257 + $0x40] sm:$0xf]
      %v287 = vld [vmem:[%s257 + $0x44] sm:$0xf]
      %v288 = vld [vmem:[%s257 + $0x48] sm:$0xf]
      %v289 = vld [vmem:[%s257 + $0x4c] sm:$0xf]
      %v290 = vld [vmem:[%s257 + $0x50] sm:$0xf]
      %v291 = vld [vmem:[%s257 + $0x54] sm:$0xf]
      %v292 = vld [vmem:[%s257 + $0x58] sm:$0xf]
      %v293 = vld [vmem:[%s257 + $0x5c] sm:$0xf]
      %v294 = vld [vmem:[%s257 + $0x60] sm:$0xf]
      %v295 = vld [vmem:[%s257 + $0x64] sm:$0xf]
      %v296 = vld [vmem:[%s257 + $0x68] sm:$0xf]
      %v297 = vld [vmem:[%s257 + $0x6c] sm:$0xf]
      %v298 = vld [vmem:[%s257 + $0x70] sm:$0xf]
      %v299 = vld [vmem:[%s257 + $0x74] sm:$0xf]
      %v300 = vld [vmem:[%s257 + $0x78] sm:$0xf]
      %v301 = vld [vmem:[%s257 + $0x7c] sm:$0xf]
      %v302 = vunpack.c.l.bf16 %v270
      %v303 = vunpack.c.l.bf16 %v271
      %v304 = vunpack.c.l.bf16 %v272
      %v305 = vunpack.c.l.bf16 %v273
      %v306 = vunpack.c.l.bf16 %v274
      %v307 = vunpack.c.l.bf16 %v275
      %v308 = vunpack.c.l.bf16 %v276
      %v309 = vunpack.c.l.bf16 %v277
      %v310 = vunpack.c.l.bf16 %v278
      %v311 = vunpack.c.l.bf16 %v279
      %v312 = vunpack.c.l.bf16 %v280
      %v313 = vunpack.c.l.bf16 %v281
      %v314 = vunpack.c.l.bf16 %v282
      %v315 = vunpack.c.l.bf16 %v283
      %v316 = vunpack.c.l.bf16 %v284
      %v317 = vunpack.c.l.bf16 %v285
      %v318 = vunpack.c.l.bf16 %v286
      %v319 = vunpack.c.l.bf16 %v287
      %v320 = vunpack.c.l.bf16 %v288
      %v321 = vunpack.c.l.bf16 %v289
      %v322 = vunpack.c.l.bf16 %v290
      %v323 = vunpack.c.l.bf16 %v291
      %v324 = vunpack.c.l.bf16 %v292
      %v325 = vunpack.c.l.bf16 %v293
      %v326 = vunpack.c.l.bf16 %v294
      %v327 = vunpack.c.l.bf16 %v295
      %v328 = vunpack.c.l.bf16 %v296
      %v329 = vunpack.c.l.bf16 %v297
      %v330 = vunpack.c.l.bf16 %v298
      %v331 = vunpack.c.l.bf16 %v299
      %v332 = vunpack.c.l.bf16 %v300
      %v333 = vunpack.c.l.bf16 %v301
      %v334 = vld [vmem:[%s1] sm:$0x1]
      %v336 = vlaneseq
      %v337 = vshrl.u32 %v336, 7
      %v338 = vsub.s32 0, %v337
      %v339 = vrot.slane %v334, %v338
      %v341 = vmul.f32 %v302, %v339
      %v342 = vmul.f32 %v303, %v339
      %v343 = vmul.f32 %v304, %v339
      %v344 = vmul.f32 %v305, %v339
      %v345 = vmul.f32 %v306, %v339
      %v346 = vmul.f32 %v307, %v339
      %v347 = vmul.f32 %v308, %v339
      %v348 = vmul.f32 %v309, %v339
      %v349 = vmul.f32 %v310, %v339
      %v350 = vmul.f32 %v311, %v339
      %v351 = vmul.f32 %v312, %v339
      %v352 = vmul.f32 %v313, %v339
      %v353 = vmul.f32 %v314, %v339
      %v354 = vmul.f32 %v315, %v339
      %v355 = vmul.f32 %v316, %v339
      %v356 = vmul.f32 %v317, %v339
      %v357 = vmul.f32 %v318, %v339
      %v358 = vmul.f32 %v319, %v339
      %v359 = vmul.f32 %v320, %v339
      %v360 = vmul.f32 %v321, %v339
      %v361 = vmul.f32 %v322, %v339
      %v362 = vmul.f32 %v323, %v339
      %v363 = vmul.f32 %v324, %v339
      %v364 = vmul.f32 %v325, %v339
      %v365 = vmul.f32 %v326, %v339
      %v366 = vmul.f32 %v327, %v339
      %v367 = vmul.f32 %v328, %v339
      %v368 = vmul.f32 %v329, %v339
      %v369 = vmul.f32 %v330, %v339
      %v370 = vmul.f32 %v331, %v339
      %v371 = vmul.f32 %v332, %v339
      %v372 = vmul.f32 %v333, %v339
      %v373 = vld [vmem:[%s2] sm:$0x1]
      %v375 = vlaneseq
      %v376 = vshrl.u32 %v375, 7
      %v377 = vsub.s32 0, %v376
      %v378 = vrot.slane %v373, %v377
      %v380 = vadd.f32 %v341, %v378
      %v381 = vadd.f32 %v342, %v378
      %v382 = vadd.f32 %v343, %v378
      %v383 = vadd.f32 %v344, %v378
      %v384 = vadd.f32 %v345, %v378
      %v385 = vadd.f32 %v346, %v378
      %v386 = vadd.f32 %v347, %v378
      %v387 = vadd.f32 %v348, %v378
      %v388 = vadd.f32 %v349, %v378
      %v389 = vadd.f32 %v350, %v378
      %v390 = vadd.f32 %v351, %v378
      %v391 = vadd.f32 %v352, %v378
      %v392 = vadd.f32 %v353, %v378
      %v393 = vadd.f32 %v354, %v378
      %v394 = vadd.f32 %v355, %v378
      %v395 = vadd.f32 %v356, %v378
      %v396 = vadd.f32 %v357, %v378
      %v397 = vadd.f32 %v358, %v378
      %v398 = vadd.f32 %v359, %v378
      %v399 = vadd.f32 %v360, %v378
      %v400 = vadd.f32 %v361, %v378
      %v401 = vadd.f32 %v362, %v378
      %v402 = vadd.f32 %v363, %v378
      %v403 = vadd.f32 %v364, %v378
      %v404 = vadd.f32 %v365, %v378
      %v405 = vadd.f32 %v366, %v378
      %v406 = vadd.f32 %v367, %v378
      %v407 = vadd.f32 %v368, %v378
      %v408 = vadd.f32 %v369, %v378
      %v409 = vadd.f32 %v370, %v378
      %v410 = vadd.f32 %v371, %v378
      %v411 = vadd.f32 %v372, %v378
      %vm412 = vcmp.gt.f32.partialorder %v380, 0.0
      %vm413 = vcmp.gt.f32.partialorder %v381, 0.0
      %vm414 = vcmp.gt.f32.partialorder %v382, 0.0
      %vm415 = vcmp.gt.f32.partialorder %v383, 0.0
      %vm416 = vcmp.gt.f32.partialorder %v384, 0.0
      %vm417 = vcmp.gt.f32.partialorder %v385, 0.0
      %vm418 = vcmp.gt.f32.partialorder %v386, 0.0
      %vm419 = vcmp.gt.f32.partialorder %v387, 0.0
      %vm420 = vcmp.gt.f32.partialorder %v388, 0.0
      %vm421 = vcmp.gt.f32.partialorder %v389, 0.0
      %vm422 = vcmp.gt.f32.partialorder %v390, 0.0
      %vm423 = vcmp.gt.f32.partialorder %v391, 0.0
      %vm424 = vcmp.gt.f32.partialorder %v392, 0.0
      %vm425 = vcmp.gt.f32.partialorder %v393, 0.0
      %vm426 = vcmp.gt.f32.partialorder %v394, 0.0
      %vm427 = vcmp.gt.f32.partialorder %v395, 0.0
      %vm428 = vcmp.gt.f32.partialorder %v396, 0.0
      %vm429 = vcmp.gt.f32.partialorder %v397, 0.0
      %vm430 = vcmp.gt.f32.partialorder %v398, 0.0
      %vm431 = vcmp.gt.f32.partialorder %v399, 0.0
      %vm432 = vcmp.gt.f32.partialorder %v400, 0.0
      %vm433 = vcmp.gt.f32.partialorder %v401, 0.0
      %vm434 = vcmp.gt.f32.partialorder %v402, 0.0
      %vm435 = vcmp.gt.f32.partialorder %v403, 0.0
      %vm436 = vcmp.gt.f32.partialorder %v404, 0.0
      %vm437 = vcmp.gt.f32.partialorder %v405, 0.0
      %vm438 = vcmp.gt.f32.partialorder %v406, 0.0
      %vm439 = vcmp.gt.f32.partialorder %v407, 0.0
      %vm440 = vcmp.gt.f32.partialorder %v408, 0.0
      %vm441 = vcmp.gt.f32.partialorder %v409, 0.0
      %vm442 = vcmp.gt.f32.partialorder %v410, 0.0
      %vm443 = vcmp.gt.f32.partialorder %v411, 0.0
      %v444 = vmul.f32 %v380, 0.2
      %v445 = vmul.f32 %v381, 0.2
      %v446 = vmul.f32 %v382, 0.2
      %v447 = vmul.f32 %v383, 0.2
      %v448 = vmul.f32 %v384, 0.2
      %v449 = vmul.f32 %v385, 0.2
      %v450 = vmul.f32 %v386, 0.2
      %v451 = vmul.f32 %v387, 0.2
      %v452 = vmul.f32 %v388, 0.2
      %v453 = vmul.f32 %v389, 0.2
      %v454 = vmul.f32 %v390, 0.2
      %v455 = vmul.f32 %v391, 0.2
      %v456 = vmul.f32 %v392, 0.2
      %v457 = vmul.f32 %v393, 0.2
      %v458 = vmul.f32 %v394, 0.2
      %v459 = vmul.f32 %v395, 0.2
      %v460 = vmul.f32 %v396, 0.2
      %v461 = vmul.f32 %v397, 0.2
      %v462 = vmul.f32 %v398, 0.2
      %v463 = vmul.f32 %v399, 0.2
      %v464 = vmul.f32 %v400, 0.2
      %v465 = vmul.f32 %v401, 0.2
      %v466 = vmul.f32 %v402, 0.2
      %v467 = vmul.f32 %v403, 0.2
      %v468 = vmul.f32 %v404, 0.2
      %v469 = vmul.f32 %v405, 0.2
      %v470 = vmul.f32 %v406, 0.2
      %v471 = vmul.f32 %v407, 0.2
      %v472 = vmul.f32 %v408, 0.2
      %v473 = vmul.f32 %v409, 0.2
      %v474 = vmul.f32 %v410, 0.2
      %v475 = vmul.f32 %v411, 0.2
      %v476 = vsel %vm412, %v380, %v444
      %v477 = vsel %vm413, %v381, %v445
      %v478 = vsel %vm414, %v382, %v446
      %v479 = vsel %vm415, %v383, %v447
      %v480 = vsel %vm416, %v384, %v448
      %v481 = vsel %vm417, %v385, %v449
      %v482 = vsel %vm418, %v386, %v450
      %v483 = vsel %vm419, %v387, %v451
      %v484 = vsel %vm420, %v388, %v452
      %v485 = vsel %vm421, %v389, %v453
      %v486 = vsel %vm422, %v390, %v454
      %v487 = vsel %vm423, %v391, %v455
      %v488 = vsel %vm424, %v392, %v456
      %v489 = vsel %vm425, %v393, %v457
      %v490 = vsel %vm426, %v394, %v458
      %v491 = vsel %vm427, %v395, %v459
      %v492 = vsel %vm428, %v396, %v460
      %v493 = vsel %vm429, %v397, %v461
      %v494 = vsel %vm430, %v398, %v462
      %v495 = vsel %vm431, %v399, %v463
      %v496 = vsel %vm432, %v400, %v464
      %v497 = vsel %vm433, %v401, %v465
      %v498 = vsel %vm434, %v402, %v466
      %v499 = vsel %vm435, %v403, %v467
      %v500 = vsel %vm436, %v404, %v468
      %v501 = vsel %vm437, %v405, %v469
      %v502 = vsel %vm438, %v406, %v470
      %v503 = vsel %vm439, %v407, %v471
      %v504 = vsel %vm440, %v408, %v472
      %v505 = vsel %vm441, %v409, %v473
      %v506 = vsel %vm442, %v410, %v474
      %v507 = vsel %vm443, %v411, %v475
      %vm508 = vcmask 60416
      %509 = vst.msk [vmem:[#allocation2] sm:$0xf] %vm508, 0
      %510 = vst.msk [vmem:[#allocation2 + $0x4] sm:$0xf] %vm508, 0
      %vm511 = vcmask 57344
      %512 = vst.msk [vmem:[#allocation2 + $0x8] sm:$0x1] %vm511, 0
      %s513 = scalar_lea.vmem [#allocation2], 204
      %514 = vst.msk [vmem:[%s513] sm:$0xf] %vm508, 0
      %515 = vst.msk [vmem:[%s513 + $0x4] sm:$0xf] %vm508, 0
      %516 = vst.msk [vmem:[%s513 + $0x8] sm:$0x1] %vm511, 0
      %vm517 = vcmask 57344
      %vm518 = vsmask.f32 256
      %vm519 = vmand %vm517, %vm518
      %v520 = vld [vmem:[#allocation2] sm:$0x1]
      %v521 = vsel %vm519, 0, %v520
      %522 = vst [vmem:[#allocation2] sm:$0x1] %v521
      %v523 = vld [vmem:[#allocation2 + $0xc] sm:$0x1]
      %v524 = vsel %vm519, 0, %v523
      %525 = vst [vmem:[#allocation2 + $0xc] sm:$0x1] %v524
      %v526 = vld [vmem:[#allocation2 + $0x18] sm:$0x1]
      %v527 = vsel %vm519, 0, %v526
      %528 = vst [vmem:[#allocation2 + $0x18] sm:$0x1] %v527
      %v529 = vld [vmem:[#allocation2 + $0x24] sm:$0x1]
      %v530 = vsel %vm519, 0, %v529
      %531 = vst [vmem:[#allocation2 + $0x24] sm:$0x1] %v530
      %v532 = vld [vmem:[#allocation2 + $0x30] sm:$0x1]
      %v533 = vsel %vm519, 0, %v532
      %534 = vst [vmem:[#allocation2 + $0x30] sm:$0x1] %v533
      %v535 = vld [vmem:[#allocation2 + $0x3c] sm:$0x1]
      %v536 = vsel %vm519, 0, %v535
      %537 = vst [vmem:[#allocation2 + $0x3c] sm:$0x1] %v536
      %v538 = vld [vmem:[#allocation2 + $0x48] sm:$0x1]
      %v539 = vsel %vm519, 0, %v538
      %540 = vst [vmem:[#allocation2 + $0x48] sm:$0x1] %v539
      %v541 = vld [vmem:[#allocation2 + $0x54] sm:$0x1]
      %v542 = vsel %vm519, 0, %v541
      %543 = vst [vmem:[#allocation2 + $0x54] sm:$0x1] %v542
      %v544 = vld [vmem:[#allocation2 + $0x60] sm:$0x1]
      %v545 = vsel %vm519, 0, %v544
      %546 = vst [vmem:[#allocation2 + $0x60] sm:$0x1] %v545
      %v547 = vld [vmem:[#allocation2 + $0x6c] sm:$0x1]
      %v548 = vsel %vm519, 0, %v547
      %549 = vst [vmem:[#allocation2 + $0x6c] sm:$0x1] %v548
      %v550 = vld [vmem:[#allocation2 + $0x78] sm:$0x1]
      %v551 = vsel %vm519, 0, %v550
      %552 = vst [vmem:[#allocation2 + $0x78] sm:$0x1] %v551
      %v553 = vld [vmem:[#allocation2 + $0x84] sm:$0x1]
      %v554 = vsel %vm519, 0, %v553
      %555 = vst [vmem:[#allocation2 + $0x84] sm:$0x1] %v554
      %v556 = vld [vmem:[#allocation2 + $0x90] sm:$0x1]
      %v557 = vsel %vm519, 0, %v556
      %558 = vst [vmem:[#allocation2 + $0x90] sm:$0x1] %v557
      %v559 = vld [vmem:[#allocation2 + $0x9c] sm:$0x1]
      %v560 = vsel %vm519, 0, %v559
      %561 = vst [vmem:[#allocation2 + $0x9c] sm:$0x1] %v560
      %v562 = vld [vmem:[#allocation2 + $0xa8] sm:$0x1]
      %v563 = vsel %vm519, 0, %v562
      %564 = vst [vmem:[#allocation2 + $0xa8] sm:$0x1] %v563
      %v565 = vld [vmem:[#allocation2 + $0xb4] sm:$0x1]
      %v566 = vsel %vm519, 0, %v565
      %567 = vst [vmem:[#allocation2 + $0xb4] sm:$0x1] %v566
      %v568 = vld [vmem:[#allocation2 + $0xc0] sm:$0x1]
      %v569 = vsel %vm519, 0, %v568
      %570 = vst [vmem:[#allocation2 + $0xc0] sm:$0x1] %v569
      %v571 = vld [vmem:[#allocation2 + $0xcc] sm:$0x1]
      %v572 = vsel %vm519, 0, %v571
      %573 = vst [vmem:[#allocation2 + $0xcc] sm:$0x1] %v572
      %vm574 = vsmask.f32 7938
      %vm575 = vmand %vm517, %vm574
      %v576 = vld [vmem:[#allocation2 + $0x8] sm:$0x1]
      %v577 = vsel %vm575, 0, %v576
      %578 = vst [vmem:[#allocation2 + $0x8] sm:$0x1] %v577
      %v579 = vld [vmem:[#allocation2 + $0x14] sm:$0x1]
      %v580 = vsel %vm575, 0, %v579
      %581 = vst [vmem:[#allocation2 + $0x14] sm:$0x1] %v580
      %v582 = vld [vmem:[#allocation2 + $0x20] sm:$0x1]
      %v583 = vsel %vm575, 0, %v582
      %584 = vst [vmem:[#allocation2 + $0x20] sm:$0x1] %v583
      %v585 = vld [vmem:[#allocation2 + $0x2c] sm:$0x1]
      %v586 = vsel %vm575, 0, %v585
      %587 = vst [vmem:[#allocation2 + $0x2c] sm:$0x1] %v586
      %v588 = vld [vmem:[#allocation2 + $0x38] sm:$0x1]
      %v589 = vsel %vm575, 0, %v588
      %590 = vst [vmem:[#allocation2 + $0x38] sm:$0x1] %v589
      %v591 = vld [vmem:[#allocation2 + $0x44] sm:$0x1]
      %v592 = vsel %vm575, 0, %v591
      %593 = vst [vmem:[#allocation2 + $0x44] sm:$0x1] %v592
      %v594 = vld [vmem:[#allocation2 + $0x50] sm:$0x1]
      %v595 = vsel %vm575, 0, %v594
      %596 = vst [vmem:[#allocation2 + $0x50] sm:$0x1] %v595
      %v597 = vld [vmem:[#allocation2 + $0x5c] sm:$0x1]
      %v598 = vsel %vm575, 0, %v597
      %599 = vst [vmem:[#allocation2 + $0x5c] sm:$0x1] %v598
      %v600 = vld [vmem:[#allocation2 + $0x68] sm:$0x1]
      %v601 = vsel %vm575, 0, %v600
      %602 = vst [vmem:[#allocation2 + $0x68] sm:$0x1] %v601
      %v603 = vld [vmem:[#allocation2 + $0x74] sm:$0x1]
      %v604 = vsel %vm575, 0, %v603
      %605 = vst [vmem:[#allocation2 + $0x74] sm:$0x1] %v604
      %v606 = vld [vmem:[#allocation2 + $0x80] sm:$0x1]
      %v607 = vsel %vm575, 0, %v606
      %608 = vst [vmem:[#allocation2 + $0x80] sm:$0x1] %v607
      %v609 = vld [vmem:[#allocation2 + $0x8c] sm:$0x1]
      %v610 = vsel %vm575, 0, %v609
      %611 = vst [vmem:[#allocation2 + $0x8c] sm:$0x1] %v610
      %v612 = vld [vmem:[#allocation2 + $0x98] sm:$0x1]
      %v613 = vsel %vm575, 0, %v612
      %614 = vst [vmem:[#allocation2 + $0x98] sm:$0x1] %v613
      %v615 = vld [vmem:[#allocation2 + $0xa4] sm:$0x1]
      %v616 = vsel %vm575, 0, %v615
      %617 = vst [vmem:[#allocation2 + $0xa4] sm:$0x1] %v616
      %v618 = vld [vmem:[#allocation2 + $0xb0] sm:$0x1]
      %v619 = vsel %vm575, 0, %v618
      %620 = vst [vmem:[#allocation2 + $0xb0] sm:$0x1] %v619
      %v621 = vld [vmem:[#allocation2 + $0xbc] sm:$0x1]
      %v622 = vsel %vm575, 0, %v621
      %623 = vst [vmem:[#allocation2 + $0xbc] sm:$0x1] %v622
      %v624 = vld [vmem:[#allocation2 + $0xc8] sm:$0x1]
      %v625 = vsel %vm575, 0, %v624
      %626 = vst [vmem:[#allocation2 + $0xc8] sm:$0x1] %v625
      %v627 = vld [vmem:[#allocation2 + $0xd4] sm:$0x1]
      %v628 = vsel %vm575, 0, %v627
      %629 = vst [vmem:[#allocation2 + $0xd4] sm:$0x1] %v628
      %v630 = vpack.c.bf16 %v477, %v476
      %v631 = vpack.c.bf16 %v479, %v478
      %v632 = vpack.c.bf16 %v481, %v480
      %v633 = vpack.c.bf16 %v483, %v482
      %v634 = vpack.c.bf16 %v485, %v484
      %v635 = vpack.c.bf16 %v487, %v486
      %v636 = vpack.c.bf16 %v489, %v488
      %v637 = vpack.c.bf16 %v491, %v490
      %v638 = vpack.c.bf16 %v493, %v492
      %v639 = vpack.c.bf16 %v495, %v494
      %v640 = vpack.c.bf16 %v497, %v496
      %v641 = vpack.c.bf16 %v499, %v498
      %v642 = vpack.c.bf16 %v501, %v500
      %v643 = vpack.c.bf16 %v503, %v502
      %v644 = vpack.c.bf16 %v505, %v504
      %v645 = vpack.c.bf16 %v507, %v506
      %v662 = vunpack.c.l.b16 %v630
      %v663 = vunpack.c.h.b16 %v630
      %v664 = vunpack.c.l.b16 %v631
      %v665 = vunpack.c.h.b16 %v631
      %v666 = vunpack.c.l.b16 %v632
      %v667 = vunpack.c.h.b16 %v632
      %v668 = vunpack.c.l.b16 %v633
      %v669 = vunpack.c.h.b16 %v633
      %v670 = vunpack.c.l.b16 %v634
      %v671 = vunpack.c.h.b16 %v634
      %v672 = vunpack.c.l.b16 %v635
      %v673 = vunpack.c.h.b16 %v635
      %v674 = vunpack.c.l.b16 %v636
      %v675 = vunpack.c.h.b16 %v636
      %v676 = vunpack.c.l.b16 %v637
      %v677 = vunpack.c.h.b16 %v637
      %v678 = vunpack.c.l.b16 %v638
      %v679 = vunpack.c.h.b16 %v638
      %v680 = vunpack.c.l.b16 %v639
      %v681 = vunpack.c.h.b16 %v639
      %v682 = vunpack.c.l.b16 %v640
      %v683 = vunpack.c.h.b16 %v640
      %v684 = vunpack.c.l.b16 %v641
      %v685 = vunpack.c.h.b16 %v641
      %v686 = vunpack.c.l.b16 %v642
      %v687 = vunpack.c.h.b16 %v642
      %v688 = vunpack.c.l.b16 %v643
      %v689 = vunpack.c.h.b16 %v643
      %v690 = vunpack.c.l.b16 %v644
      %v691 = vunpack.c.h.b16 %v644
      %v692 = vunpack.c.l.b16 %v645
      %v693 = vunpack.c.h.b16 %v645
      %v694 = vpack.c.b16 %v662, %v662
      %v695 = vpack.c.b16 %v663, %v663
      %v696 = vpack.c.b16 %v664, %v664
      %v697 = vpack.c.b16 %v665, %v665
      %v698 = vpack.c.b16 %v666, %v666
      %v699 = vpack.c.b16 %v667, %v667
      %v700 = vpack.c.b16 %v668, %v668
      %v701 = vpack.c.b16 %v669, %v669
      %v702 = vpack.c.b16 %v670, %v670
      %v703 = vpack.c.b16 %v671, %v671
      %v704 = vpack.c.b16 %v672, %v672
      %v705 = vpack.c.b16 %v673, %v673
      %v706 = vpack.c.b16 %v674, %v674
      %v707 = vpack.c.b16 %v675, %v675
      %v708 = vpack.c.b16 %v676, %v676
      %v709 = vpack.c.b16 %v677, %v677
      %v710 = vpack.c.b16 %v678, %v678
      %v711 = vpack.c.b16 %v679, %v679
      %v712 = vpack.c.b16 %v680, %v680
      %v713 = vpack.c.b16 %v681, %v681
      %v714 = vpack.c.b16 %v682, %v682
      %v715 = vpack.c.b16 %v683, %v683
      %v716 = vpack.c.b16 %v684, %v684
      %v717 = vpack.c.b16 %v685, %v685
      %v718 = vpack.c.b16 %v686, %v686
      %v719 = vpack.c.b16 %v687, %v687
      %v720 = vpack.c.b16 %v688, %v688
      %v721 = vpack.c.b16 %v689, %v689
      %v722 = vpack.c.b16 %v690, %v690
      %v723 = vpack.c.b16 %v691, %v691
      %v724 = vpack.c.b16 %v692, %v692
      %v725 = vpack.c.b16 %v693, %v693
      %vm726 = vsmask.f32 4368
      %vm727 = vmor %vm518, %vm726
      %v729 = vshrl.u32 %v694, 16
      %v731 = vrot.slane %v729, 7
      %v732 = vshll.u32 %v694, 16
      %v734 = vor.u32 %v731, %v732
      %v735 = vrot.slane %v731, 4
      %v737 = vshrl.u32 %v695, 16
      %v739 = vrot.slane %v737, 7
      %v740 = vshll.u32 %v695, 16
      %v742 = vor.u32 %v739, %v740
      %v743 = vsel %vm727, %v735, %v742
      %v744 = vrot.slane %v739, 4
      %v746 = vshrl.u32 %v696, 16
      %v748 = vrot.slane %v746, 7
      %v749 = vshll.u32 %v696, 16
      %v751 = vor.u32 %v748, %v749
      %v752 = vrot.slane %v748, 4
      %v754 = vshrl.u32 %v697, 16
      %v756 = vrot.slane %v754, 7
      %v757 = vshll.u32 %v697, 16
      %v759 = vor.u32 %v756, %v757
      %v760 = vsel %vm727, %v752, %v759
      %v761 = vrot.slane %v756, 4
      %v763 = vshrl.u32 %v698, 16
      %v765 = vrot.slane %v763, 7
      %v766 = vshll.u32 %v698, 16
      %v768 = vor.u32 %v765, %v766
      %v769 = vrot.slane %v765, 4
      %v771 = vshrl.u32 %v699, 16
      %v773 = vrot.slane %v771, 7
      %v774 = vshll.u32 %v699, 16
      %v776 = vor.u32 %v773, %v774
      %v777 = vsel %vm727, %v769, %v776
      %v778 = vrot.slane %v773, 4
      %v780 = vshrl.u32 %v700, 16
      %v782 = vrot.slane %v780, 7
      %v783 = vshll.u32 %v700, 16
      %v785 = vor.u32 %v782, %v783
      %v786 = vrot.slane %v782, 4
      %v788 = vshrl.u32 %v701, 16
      %v790 = vrot.slane %v788, 7
      %v791 = vshll.u32 %v701, 16
      %v793 = vor.u32 %v790, %v791
      %v794 = vsel %vm727, %v786, %v793
      %v795 = vrot.slane %v790, 4
      %v797 = vshrl.u32 %v702, 16
      %v799 = vrot.slane %v797, 7
      %v800 = vshll.u32 %v702, 16
      %v802 = vor.u32 %v799, %v800
      %v803 = vrot.slane %v799, 4
      %v805 = vshrl.u32 %v703, 16
      %v807 = vrot.slane %v805, 7
      %v808 = vshll.u32 %v703, 16
      %v810 = vor.u32 %v807, %v808
      %v811 = vsel %vm727, %v803, %v810
      %v812 = vrot.slane %v807, 4
      %v814 = vshrl.u32 %v704, 16
      %v816 = vrot.slane %v814, 7
      %v817 = vshll.u32 %v704, 16
      %v819 = vor.u32 %v816, %v817
      %v820 = vrot.slane %v816, 4
      %v822 = vshrl.u32 %v705, 16
      %v824 = vrot.slane %v822, 7
      %v825 = vshll.u32 %v705, 16
      %v827 = vor.u32 %v824, %v825
      %v828 = vsel %vm727, %v820, %v827
      %v829 = vrot.slane %v824, 4
      %v831 = vshrl.u32 %v706, 16
      %v833 = vrot.slane %v831, 7
      %v834 = vshll.u32 %v706, 16
      %v836 = vor.u32 %v833, %v834
      %v837 = vrot.slane %v833, 4
      %v839 = vshrl.u32 %v707, 16
      %v841 = vrot.slane %v839, 7
      %v842 = vshll.u32 %v707, 16
      %v844 = vor.u32 %v841, %v842
      %v845 = vsel %vm727, %v837, %v844
      %v846 = vrot.slane %v841, 4
      %v848 = vshrl.u32 %v708, 16
      %v850 = vrot.slane %v848, 7
      %v851 = vshll.u32 %v708, 16
      %v853 = vor.u32 %v850, %v851
      %v854 = vrot.slane %v850, 4
      %v856 = vshrl.u32 %v709, 16
      %v858 = vrot.slane %v856, 7
      %v859 = vshll.u32 %v709, 16
      %v861 = vor.u32 %v858, %v859
      %v862 = vsel %vm727, %v854, %v861
      %v863 = vrot.slane %v858, 4
      %v865 = vshrl.u32 %v710, 16
      %v867 = vrot.slane %v865, 7
      %v868 = vshll.u32 %v710, 16
      %v870 = vor.u32 %v867, %v868
      %v871 = vrot.slane %v867, 4
      %v873 = vshrl.u32 %v711, 16
      %v875 = vrot.slane %v873, 7
      %v876 = vshll.u32 %v711, 16
      %v878 = vor.u32 %v875, %v876
      %v879 = vsel %vm727, %v871, %v878
      %v880 = vrot.slane %v875, 4
      %v882 = vshrl.u32 %v712, 16
      %v884 = vrot.slane %v882, 7
      %v885 = vshll.u32 %v712, 16
      %v887 = vor.u32 %v884, %v885
      %v888 = vrot.slane %v884, 4
      %v890 = vshrl.u32 %v713, 16
      %v892 = vrot.slane %v890, 7
      %v893 = vshll.u32 %v713, 16
      %v895 = vor.u32 %v892, %v893
      %v896 = vsel %vm727, %v888, %v895
      %v897 = vrot.slane %v892, 4
      %v899 = vshrl.u32 %v714, 16
      %v901 = vrot.slane %v899, 7
      %v902 = vshll.u32 %v714, 16
      %v904 = vor.u32 %v901, %v902
      %v905 = vrot.slane %v901, 4
      %v907 = vshrl.u32 %v715, 16
      %v909 = vrot.slane %v907, 7
      %v910 = vshll.u32 %v715, 16
      %v912 = vor.u32 %v909, %v910
      %v913 = vsel %vm727, %v905, %v912
      %v914 = vrot.slane %v909, 4
      %v916 = vshrl.u32 %v716, 16
      %v918 = vrot.slane %v916, 7
      %v919 = vshll.u32 %v716, 16
      %v921 = vor.u32 %v918, %v919
      %v922 = vrot.slane %v918, 4
      %v924 = vshrl.u32 %v717, 16
      %v926 = vrot.slane %v924, 7
      %v927 = vshll.u32 %v717, 16
      %v929 = vor.u32 %v926, %v927
      %v930 = vsel %vm727, %v922, %v929
      %v931 = vrot.slane %v926, 4
      %v933 = vshrl.u32 %v718, 16
      %v935 = vrot.slane %v933, 7
      %v936 = vshll.u32 %v718, 16
      %v938 = vor.u32 %v935, %v936
      %v939 = vrot.slane %v935, 4
      %v941 = vshrl.u32 %v719, 16
      %v943 = vrot.slane %v941, 7
      %v944 = vshll.u32 %v719, 16
      %v946 = vor.u32 %v943, %v944
      %v947 = vsel %vm727, %v939, %v946
      %v948 = vrot.slane %v943, 4
      %v950 = vshrl.u32 %v720, 16
      %v952 = vrot.slane %v950, 7
      %v953 = vshll.u32 %v720, 16
      %v955 = vor.u32 %v952, %v953
      %v956 = vrot.slane %v952, 4
      %v958 = vshrl.u32 %v721, 16
      %v960 = vrot.slane %v958, 7
      %v961 = vshll.u32 %v721, 16
      %v963 = vor.u32 %v960, %v961
      %v964 = vsel %vm727, %v956, %v963
      %v965 = vrot.slane %v960, 4
      %v967 = vshrl.u32 %v722, 16
      %v969 = vrot.slane %v967, 7
      %v970 = vshll.u32 %v722, 16
      %v972 = vor.u32 %v969, %v970
      %v973 = vrot.slane %v969, 4
      %v975 = vshrl.u32 %v723, 16
      %v977 = vrot.slane %v975, 7
      %v978 = vshll.u32 %v723, 16
      %v980 = vor.u32 %v977, %v978
      %v981 = vsel %vm727, %v973, %v980
      %v982 = vrot.slane %v977, 4
      %v984 = vshrl.u32 %v724, 16
      %v986 = vrot.slane %v984, 7
      %v987 = vshll.u32 %v724, 16
      %v989 = vor.u32 %v986, %v987
      %v990 = vrot.slane %v986, 4
      %v992 = vshrl.u32 %v725, 16
      %v994 = vrot.slane %v992, 7
      %v995 = vshll.u32 %v725, 16
      %v997 = vor.u32 %v994, %v995
      %v998 = vsel %vm727, %v990, %v997
      %v999 = vrot.slane %v994, 4
      %s1048 = scalar_lea.vmem [#allocation2], 12
      %vm1049 = vcmask 60416
      %vm1050 = vmand %vm1049, %vm574
      %v1051 = vld [vmem:[%s1048] sm:$0xf]
      %v1052 = vsel %vm1050, %v734, %v1051
      %1053 = vst [vmem:[%s1048] sm:$0xf] %v1052
      %1054 = vst.msk [vmem:[%s1048 + $0x4] sm:$0xf] %vm508, %v743
      %v1055 = vld [vmem:[%s1048 + $0x8] sm:$0x1]
      %v1056 = vsel %vm519, %v744, %v1055
      %1057 = vst [vmem:[%s1048 + $0x8] sm:$0x1] %v1056
      %v1058 = vld [vmem:[%s1048 + $0xc] sm:$0xf]
      %v1059 = vsel %vm1050, %v751, %v1058
      %1060 = vst [vmem:[%s1048 + $0xc] sm:$0xf] %v1059
      %1061 = vst.msk [vmem:[%s1048 + $0x10] sm:$0xf] %vm508, %v760
      %v1062 = vld [vmem:[%s1048 + $0x14] sm:$0x1]
      %v1063 = vsel %vm519, %v761, %v1062
      %1064 = vst [vmem:[%s1048 + $0x14] sm:$0x1] %v1063
      %v1065 = vld [vmem:[%s1048 + $0x18] sm:$0xf]
      %v1066 = vsel %vm1050, %v768, %v1065
      %1067 = vst [vmem:[%s1048 + $0x18] sm:$0xf] %v1066
      %1068 = vst.msk [vmem:[%s1048 + $0x1c] sm:$0xf] %vm508, %v777
      %v1069 = vld [vmem:[%s1048 + $0x20] sm:$0x1]
      %v1070 = vsel %vm519, %v778, %v1069
      %1071 = vst [vmem:[%s1048 + $0x20] sm:$0x1] %v1070
      %v1072 = vld [vmem:[%s1048 + $0x24] sm:$0xf]
      %v1073 = vsel %vm1050, %v785, %v1072
      %1074 = vst [vmem:[%s1048 + $0x24] sm:$0xf] %v1073
      %1075 = vst.msk [vmem:[%s1048 + $0x28] sm:$0xf] %vm508, %v794
      %v1076 = vld [vmem:[%s1048 + $0x2c] sm:$0x1]
      %v1077 = vsel %vm519, %v795, %v1076
      %1078 = vst [vmem:[%s1048 + $0x2c] sm:$0x1] %v1077
      %v1079 = vld [vmem:[%s1048 + $0x30] sm:$0xf]
      %v1080 = vsel %vm1050, %v802, %v1079
      %1081 = vst [vmem:[%s1048 + $0x30] sm:$0xf] %v1080
      %1082 = vst.msk [vmem:[%s1048 + $0x34] sm:$0xf] %vm508, %v811
      %v1083 = vld [vmem:[%s1048 + $0x38] sm:$0x1]
      %v1084 = vsel %vm519, %v812, %v1083
      %1085 = vst [vmem:[%s1048 + $0x38] sm:$0x1] %v1084
      %v1086 = vld [vmem:[%s1048 + $0x3c] sm:$0xf]
      %v1087 = vsel %vm1050, %v819, %v1086
      %1088 = vst [vmem:[%s1048 + $0x3c] sm:$0xf] %v1087
      %1089 = vst.msk [vmem:[%s1048 + $0x40] sm:$0xf] %vm508, %v828
      %v1090 = vld [vmem:[%s1048 + $0x44] sm:$0x1]
      %v1091 = vsel %vm519, %v829, %v1090
      %1092 = vst [vmem:[%s1048 + $0x44] sm:$0x1] %v1091
      %v1093 = vld [vmem:[%s1048 + $0x48] sm:$0xf]
      %v1094 = vsel %vm1050, %v836, %v1093
      %1095 = vst [vmem:[%s1048 + $0x48] sm:$0xf] %v1094
      %1096 = vst.msk [vmem:[%s1048 + $0x4c] sm:$0xf] %vm508, %v845
      %v1097 = vld [vmem:[%s1048 + $0x50] sm:$0x1]
      %v1098 = vsel %vm519, %v846, %v1097
      %1099 = vst [vmem:[%s1048 + $0x50] sm:$0x1] %v1098
      %v1100 = vld [vmem:[%s1048 + $0x54] sm:$0xf]
      %v1101 = vsel %vm1050, %v853, %v1100
      %1102 = vst [vmem:[%s1048 + $0x54] sm:$0xf] %v1101
      %1103 = vst.msk [vmem:[%s1048 + $0x58] sm:$0xf] %vm508, %v862
      %v1104 = vld [vmem:[%s1048 + $0x5c] sm:$0x1]
      %v1105 = vsel %vm519, %v863, %v1104
      %1106 = vst [vmem:[%s1048 + $0x5c] sm:$0x1] %v1105
      %v1107 = vld [vmem:[%s1048 + $0x60] sm:$0xf]
      %v1108 = vsel %vm1050, %v870, %v1107
      %1109 = vst [vmem:[%s1048 + $0x60] sm:$0xf] %v1108
      %1110 = vst.msk [vmem:[%s1048 + $0x64] sm:$0xf] %vm508, %v879
      %v1111 = vld [vmem:[%s1048 + $0x68] sm:$0x1]
      %v1112 = vsel %vm519, %v880, %v1111
      %1113 = vst [vmem:[%s1048 + $0x68] sm:$0x1] %v1112
      %v1114 = vld [vmem:[%s1048 + $0x6c] sm:$0xf]
      %v1115 = vsel %vm1050, %v887, %v1114
      %1116 = vst [vmem:[%s1048 + $0x6c] sm:$0xf] %v1115
      %1117 = vst.msk [vmem:[%s1048 + $0x70] sm:$0xf] %vm508, %v896
      %v1118 = vld [vmem:[%s1048 + $0x74] sm:$0x1]
      %v1119 = vsel %vm519, %v897, %v1118
      %1120 = vst [vmem:[%s1048 + $0x74] sm:$0x1] %v1119
      %v1121 = vld [vmem:[%s1048 + $0x78] sm:$0xf]
      %v1122 = vsel %vm1050, %v904, %v1121
      %1123 = vst [vmem:[%s1048 + $0x78] sm:$0xf] %v1122
      %1124 = vst.msk [vmem:[%s1048 + $0x7c] sm:$0xf] %vm508, %v913
      %v1125 = vld [vmem:[%s1048 + $0x80] sm:$0x1]
      %v1126 = vsel %vm519, %v914, %v1125
      %1127 = vst [vmem:[%s1048 + $0x80] sm:$0x1] %v1126
      %v1128 = vld [vmem:[%s1048 + $0x84] sm:$0xf]
      %v1129 = vsel %vm1050, %v921, %v1128
      %1130 = vst [vmem:[%s1048 + $0x84] sm:$0xf] %v1129
      %1131 = vst.msk [vmem:[%s1048 + $0x88] sm:$0xf] %vm508, %v930
      %v1132 = vld [vmem:[%s1048 + $0x8c] sm:$0x1]
      %v1133 = vsel %vm519, %v931, %v1132
      %1134 = vst [vmem:[%s1048 + $0x8c] sm:$0x1] %v1133
      %v1135 = vld [vmem:[%s1048 + $0x90] sm:$0xf]
      %v1136 = vsel %vm1050, %v938, %v1135
      %1137 = vst [vmem:[%s1048 + $0x90] sm:$0xf] %v1136
      %1138 = vst.msk [vmem:[%s1048 + $0x94] sm:$0xf] %vm508, %v947
      %v1139 = vld [vmem:[%s1048 + $0x98] sm:$0x1]
      %v1140 = vsel %vm519, %v948, %v1139
      %1141 = vst [vmem:[%s1048 + $0x98] sm:$0x1] %v1140
      %v1142 = vld [vmem:[%s1048 + $0x9c] sm:$0xf]
      %v1143 = vsel %vm1050, %v955, %v1142
      %1144 = vst [vmem:[%s1048 + $0x9c] sm:$0xf] %v1143
      %1145 = vst.msk [vmem:[%s1048 + $0xa0] sm:$0xf] %vm508, %v964
      %v1146 = vld [vmem:[%s1048 + $0xa4] sm:$0x1]
      %v1147 = vsel %vm519, %v965, %v1146
      %1148 = vst [vmem:[%s1048 + $0xa4] sm:$0x1] %v1147
      %v1149 = vld [vmem:[%s1048 + $0xa8] sm:$0xf]
      %v1150 = vsel %vm1050, %v972, %v1149
      %1151 = vst [vmem:[%s1048 + $0xa8] sm:$0xf] %v1150
      %1152 = vst.msk [vmem:[%s1048 + $0xac] sm:$0xf] %vm508, %v981
      %v1153 = vld [vmem:[%s1048 + $0xb0] sm:$0x1]
      %v1154 = vsel %vm519, %v982, %v1153
      %1155 = vst [vmem:[%s1048 + $0xb0] sm:$0x1] %v1154
      %v1156 = vld [vmem:[%s1048 + $0xb4] sm:$0xf]
      %v1157 = vsel %vm1050, %v989, %v1156
      %1158 = vst [vmem:[%s1048 + $0xb4] sm:$0xf] %v1157
      %1159 = vst.msk [vmem:[%s1048 + $0xb8] sm:$0xf] %vm508, %v998
      %v1160 = vld [vmem:[%s1048 + $0xbc] sm:$0x1]
      %v1161 = vsel %vm519, %v999, %v1160
      %1162 = vst [vmem:[%s1048 + $0xbc] sm:$0x1] %v1161
      %v1163 = vld [vmem:[#allocation2] sm:$0xf]
      %v1164 = vld [vmem:[#allocation2 + $0x4] sm:$0xf]
      %v1165 = vld [vmem:[#allocation2 + $0xc] sm:$0xf]
      %v1166 = vld [vmem:[#allocation2 + $0x10] sm:$0xf]
      %v1167 = vld [vmem:[#allocation2 + $0x18] sm:$0xf]
      %v1168 = vld [vmem:[#allocation2 + $0x1c] sm:$0xf]
      %v1169 = vld [vmem:[#allocation2 + $0x24] sm:$0xf]
      %v1170 = vld [vmem:[#allocation2 + $0x28] sm:$0xf]
      %v1171 = vld [vmem:[#allocation2 + $0x30] sm:$0xf]
      %v1172 = vld [vmem:[#allocation2 + $0x34] sm:$0xf]
      %v1173 = vld [vmem:[#allocation2 + $0x3c] sm:$0xf]
      %v1174 = vld [vmem:[#allocation2 + $0x40] sm:$0xf]
      %v1175 = vld [vmem:[#allocation2 + $0x48] sm:$0xf]
      %v1176 = vld [vmem:[#allocation2 + $0x4c] sm:$0xf]
      %v1177 = vld [vmem:[#allocation2 + $0x54] sm:$0xf]
      %v1178 = vld [vmem:[#allocation2 + $0x58] sm:$0xf]
      %v1179 = vld [vmem:[#allocation2 + $0x60] sm:$0xf]
      %v1180 = vld [vmem:[#allocation2 + $0x64] sm:$0xf]
      %v1181 = vld [vmem:[#allocation2 + $0x6c] sm:$0xf]
      %v1182 = vld [vmem:[#allocation2 + $0x70] sm:$0xf]
      %v1183 = vld [vmem:[#allocation2 + $0x78] sm:$0xf]
      %v1184 = vld [vmem:[#allocation2 + $0x7c] sm:$0xf]
      %v1185 = vld [vmem:[#allocation2 + $0x84] sm:$0xf]
      %v1186 = vld [vmem:[#allocation2 + $0x88] sm:$0xf]
      %v1187 = vld [vmem:[#allocation2 + $0x90] sm:$0xf]
      %v1188 = vld [vmem:[#allocation2 + $0x94] sm:$0xf]
      %v1189 = vld [vmem:[#allocation2 + $0x9c] sm:$0xf]
      %v1190 = vld [vmem:[#allocation2 + $0xa0] sm:$0xf]
      %v1191 = vld [vmem:[#allocation2 + $0xa8] sm:$0xf]
      %v1192 = vld [vmem:[#allocation2 + $0xac] sm:$0xf]
      %v1193 = vld [vmem:[#allocation2 + $0xb4] sm:$0xf]
      %v1194 = vld [vmem:[#allocation2 + $0xb8] sm:$0xf]
      %v1195 = vld [vmem:[#allocation2 + $0x8] sm:$0x1]
      %v1196 = vld [vmem:[#allocation2 + $0x14] sm:$0x1]
      %v1197 = vld [vmem:[#allocation2 + $0x20] sm:$0x1]
      %v1198 = vld [vmem:[#allocation2 + $0x2c] sm:$0x1]
      %v1199 = vld [vmem:[#allocation2 + $0x38] sm:$0x1]
      %v1200 = vld [vmem:[#allocation2 + $0x44] sm:$0x1]
      %v1201 = vld [vmem:[#allocation2 + $0x50] sm:$0x1]
      %v1202 = vld [vmem:[#allocation2 + $0x5c] sm:$0x1]
      %v1203 = vld [vmem:[#allocation2 + $0x68] sm:$0x1]
      %v1204 = vld [vmem:[#allocation2 + $0x74] sm:$0x1]
      %v1205 = vld [vmem:[#allocation2 + $0x80] sm:$0x1]
      %v1206 = vld [vmem:[#allocation2 + $0x8c] sm:$0x1]
      %v1207 = vld [vmem:[#allocation2 + $0x98] sm:$0x1]
      %v1208 = vld [vmem:[#allocation2 + $0xa4] sm:$0x1]
      %v1209 = vld [vmem:[#allocation2 + $0xb0] sm:$0x1]
      %v1210 = vld [vmem:[#allocation2 + $0xbc] sm:$0x1]
      %vm1211 = vsmask.f32 3328
      %vm1212 = vsmask.f32 7440
      %vm1213 = vmor %vm1211, %vm1212
      %v1215 = vshrl.u32 %v1163, 16
      %v1217 = vrot.slane %v1215, 4
      %v1218 = vshll.u32 %v1163, 16
      %v1220 = vrot.slane %v1218, 5
      %v1221 = vor.u32 %v1217, %v1220
      %v1222 = vrot.slane %v1221, 4
      %v1224 = vshll.u32 %v1164, 16
      %v1226 = vrot.slane %v1224, 5
      %v1227 = vsel %vm1213, %v1222, %v1226
      %v1228 = vshrl.u32 %v1164, 16
      %v1230 = vrot.slane %v1228, 4
      %v1231 = vor.u32 %v1230, %v1226
      %v1232 = vrot.slane %v1231, 4
      %v1234 = vshll.u32 %v1195, 16
      %v1236 = vrot.slane %v1234, 5
      %v1237 = vsel %vm1213, %v1232, %v1236
      %v1239 = vshrl.u32 %v1165, 16
      %v1241 = vrot.slane %v1239, 4
      %v1242 = vshll.u32 %v1165, 16
      %v1244 = vrot.slane %v1242, 5
      %v1245 = vor.u32 %v1241, %v1244
      %v1246 = vrot.slane %v1245, 4
      %v1248 = vshll.u32 %v1166, 16
      %v1250 = vrot.slane %v1248, 5
      %v1251 = vsel %vm1213, %v1246, %v1250
      %v1252 = vshrl.u32 %v1166, 16
      %v1254 = vrot.slane %v1252, 4
      %v1255 = vor.u32 %v1254, %v1250
      %v1256 = vrot.slane %v1255, 4
      %v1258 = vshll.u32 %v1196, 16
      %v1260 = vrot.slane %v1258, 5
      %v1261 = vsel %vm1213, %v1256, %v1260
      %v1263 = vshrl.u32 %v1167, 16
      %v1265 = vrot.slane %v1263, 4
      %v1266 = vshll.u32 %v1167, 16
      %v1268 = vrot.slane %v1266, 5
      %v1269 = vor.u32 %v1265, %v1268
      %v1270 = vrot.slane %v1269, 4
      %v1272 = vshll.u32 %v1168, 16
      %v1274 = vrot.slane %v1272, 5
      %v1275 = vsel %vm1213, %v1270, %v1274
      %v1276 = vshrl.u32 %v1168, 16
      %v1278 = vrot.slane %v1276, 4
      %v1279 = vor.u32 %v1278, %v1274
      %v1280 = vrot.slane %v1279, 4
      %v1282 = vshll.u32 %v1197, 16
      %v1284 = vrot.slane %v1282, 5
      %v1285 = vsel %vm1213, %v1280, %v1284
      %v1287 = vshrl.u32 %v1169, 16
      %v1289 = vrot.slane %v1287, 4
      %v1290 = vshll.u32 %v1169, 16
      %v1292 = vrot.slane %v1290, 5
      %v1293 = vor.u32 %v1289, %v1292
      %v1294 = vrot.slane %v1293, 4
      %v1296 = vshll.u32 %v1170, 16
      %v1298 = vrot.slane %v1296, 5
      %v1299 = vsel %vm1213, %v1294, %v1298
      %v1300 = vshrl.u32 %v1170, 16
      %v1302 = vrot.slane %v1300, 4
      %v1303 = vor.u32 %v1302, %v1298
      %v1304 = vrot.slane %v1303, 4
      %v1306 = vshll.u32 %v1198, 16
      %v1308 = vrot.slane %v1306, 5
      %v1309 = vsel %vm1213, %v1304, %v1308
      %v1311 = vshrl.u32 %v1171, 16
      %v1313 = vrot.slane %v1311, 4
      %v1314 = vshll.u32 %v1171, 16
      %v1316 = vrot.slane %v1314, 5
      %v1317 = vor.u32 %v1313, %v1316
      %v1318 = vrot.slane %v1317, 4
      %v1320 = vshll.u32 %v1172, 16
      %v1322 = vrot.slane %v1320, 5
      %v1323 = vsel %vm1213, %v1318, %v1322
      %v1324 = vshrl.u32 %v1172, 16
      %v1326 = vrot.slane %v1324, 4
      %v1327 = vor.u32 %v1326, %v1322
      %v1328 = vrot.slane %v1327, 4
      %v1330 = vshll.u32 %v1199, 16
      %v1332 = vrot.slane %v1330, 5
      %v1333 = vsel %vm1213, %v1328, %v1332
      %v1335 = vshrl.u32 %v1173, 16
      %v1337 = vrot.slane %v1335, 4
      %v1338 = vshll.u32 %v1173, 16
      %v1340 = vrot.slane %v1338, 5
      %v1341 = vor.u32 %v1337, %v1340
      %v1342 = vrot.slane %v1341, 4
      %v1344 = vshll.u32 %v1174, 16
      %v1346 = vrot.slane %v1344, 5
      %v1347 = vsel %vm1213, %v1342, %v1346
      %v1348 = vshrl.u32 %v1174, 16
      %v1350 = vrot.slane %v1348, 4
      %v1351 = vor.u32 %v1350, %v1346
      %v1352 = vrot.slane %v1351, 4
      %v1354 = vshll.u32 %v1200, 16
      %v1356 = vrot.slane %v1354, 5
      %v1357 = vsel %vm1213, %v1352, %v1356
      %v1359 = vshrl.u32 %v1175, 16
      %v1361 = vrot.slane %v1359, 4
      %v1362 = vshll.u32 %v1175, 16
      %v1364 = vrot.slane %v1362, 5
      %v1365 = vor.u32 %v1361, %v1364
      %v1366 = vrot.slane %v1365, 4
      %v1368 = vshll.u32 %v1176, 16
      %v1370 = vrot.slane %v1368, 5
      %v1371 = vsel %vm1213, %v1366, %v1370
      %v1372 = vshrl.u32 %v1176, 16
      %v1374 = vrot.slane %v1372, 4
      %v1375 = vor.u32 %v1374, %v1370
      %v1376 = vrot.slane %v1375, 4
      %v1378 = vshll.u32 %v1201, 16
      %v1380 = vrot.slane %v1378, 5
      %v1381 = vsel %vm1213, %v1376, %v1380
      %v1383 = vshrl.u32 %v1177, 16
      %v1385 = vrot.slane %v1383, 4
      %v1386 = vshll.u32 %v1177, 16
      %v1388 = vrot.slane %v1386, 5
      %v1389 = vor.u32 %v1385, %v1388
      %v1390 = vrot.slane %v1389, 4
      %v1392 = vshll.u32 %v1178, 16
      %v1394 = vrot.slane %v1392, 5
      %v1395 = vsel %vm1213, %v1390, %v1394
      %v1396 = vshrl.u32 %v1178, 16
      %v1398 = vrot.slane %v1396, 4
      %v1399 = vor.u32 %v1398, %v1394
      %v1400 = vrot.slane %v1399, 4
      %v1402 = vshll.u32 %v1202, 16
      %v1404 = vrot.slane %v1402, 5
      %v1405 = vsel %vm1213, %v1400, %v1404
      %v1407 = vshrl.u32 %v1179, 16
      %v1409 = vrot.slane %v1407, 4
      %v1410 = vshll.u32 %v1179, 16
      %v1412 = vrot.slane %v1410, 5
      %v1413 = vor.u32 %v1409, %v1412
      %v1414 = vrot.slane %v1413, 4
      %v1416 = vshll.u32 %v1180, 16
      %v1418 = vrot.slane %v1416, 5
      %v1419 = vsel %vm1213, %v1414, %v1418
      %v1420 = vshrl.u32 %v1180, 16
      %v1422 = vrot.slane %v1420, 4
      %v1423 = vor.u32 %v1422, %v1418
      %v1424 = vrot.slane %v1423, 4
      %v1426 = vshll.u32 %v1203, 16
      %v1428 = vrot.slane %v1426, 5
      %v1429 = vsel %vm1213, %v1424, %v1428
      %v1431 = vshrl.u32 %v1181, 16
      %v1433 = vrot.slane %v1431, 4
      %v1434 = vshll.u32 %v1181, 16
      %v1436 = vrot.slane %v1434, 5
      %v1437 = vor.u32 %v1433, %v1436
      %v1438 = vrot.slane %v1437, 4
      %v1440 = vshll.u32 %v1182, 16
      %v1442 = vrot.slane %v1440, 5
      %v1443 = vsel %vm1213, %v1438, %v1442
      %v1444 = vshrl.u32 %v1182, 16
      %v1446 = vrot.slane %v1444, 4
      %v1447 = vor.u32 %v1446, %v1442
      %v1448 = vrot.slane %v1447, 4
      %v1450 = vshll.u32 %v1204, 16
      %v1452 = vrot.slane %v1450, 5
      %v1453 = vsel %vm1213, %v1448, %v1452
      %v1455 = vshrl.u32 %v1183, 16
      %v1457 = vrot.slane %v1455, 4
      %v1458 = vshll.u32 %v1183, 16
      %v1460 = vrot.slane %v1458, 5
      %v1461 = vor.u32 %v1457, %v1460
      %v1462 = vrot.slane %v1461, 4
      %v1464 = vshll.u32 %v1184, 16
      %v1466 = vrot.slane %v1464, 5
      %v1467 = vsel %vm1213, %v1462, %v1466
      %v1468 = vshrl.u32 %v1184, 16
      %v1470 = vrot.slane %v1468, 4
      %v1471 = vor.u32 %v1470, %v1466
      %v1472 = vrot.slane %v1471, 4
      %v1474 = vshll.u32 %v1205, 16
      %v1476 = vrot.slane %v1474, 5
      %v1477 = vsel %vm1213, %v1472, %v1476
      %v1479 = vshrl.u32 %v1185, 16
      %v1481 = vrot.slane %v1479, 4
      %v1482 = vshll.u32 %v1185, 16
      %v1484 = vrot.slane %v1482, 5
      %v1485 = vor.u32 %v1481, %v1484
      %v1486 = vrot.slane %v1485, 4
      %v1488 = vshll.u32 %v1186, 16
      %v1490 = vrot.slane %v1488, 5
      %v1491 = vsel %vm1213, %v1486, %v1490
      %v1492 = vshrl.u32 %v1186, 16
      %v1494 = vrot.slane %v1492, 4
      %v1495 = vor.u32 %v1494, %v1490
      %v1496 = vrot.slane %v1495, 4
      %v1498 = vshll.u32 %v1206, 16
      %v1500 = vrot.slane %v1498, 5
      %v1501 = vsel %vm1213, %v1496, %v1500
      %v1503 = vshrl.u32 %v1187, 16
      %v1505 = vrot.slane %v1503, 4
      %v1506 = vshll.u32 %v1187, 16
      %v1508 = vrot.slane %v1506, 5
      %v1509 = vor.u32 %v1505, %v1508
      %v1510 = vrot.slane %v1509, 4
      %v1512 = vshll.u32 %v1188, 16
      %v1514 = vrot.slane %v1512, 5
      %v1515 = vsel %vm1213, %v1510, %v1514
      %v1516 = vshrl.u32 %v1188, 16
      %v1518 = vrot.slane %v1516, 4
      %v1519 = vor.u32 %v1518, %v1514
      %v1520 = vrot.slane %v1519, 4
      %v1522 = vshll.u32 %v1207, 16
      %v1524 = vrot.slane %v1522, 5
      %v1525 = vsel %vm1213, %v1520, %v1524
      %v1527 = vshrl.u32 %v1189, 16
      %v1529 = vrot.slane %v1527, 4
      %v1530 = vshll.u32 %v1189, 16
      %v1532 = vrot.slane %v1530, 5
      %v1533 = vor.u32 %v1529, %v1532
      %v1534 = vrot.slane %v1533, 4
      %v1536 = vshll.u32 %v1190, 16
      %v1538 = vrot.slane %v1536, 5
      %v1539 = vsel %vm1213, %v1534, %v1538
      %v1540 = vshrl.u32 %v1190, 16
      %v1542 = vrot.slane %v1540, 4
      %v1543 = vor.u32 %v1542, %v1538
      %v1544 = vrot.slane %v1543, 4
      %v1546 = vshll.u32 %v1208, 16
      %v1548 = vrot.slane %v1546, 5
      %v1549 = vsel %vm1213, %v1544, %v1548
      %v1551 = vshrl.u32 %v1191, 16
      %v1553 = vrot.slane %v1551, 4
      %v1554 = vshll.u32 %v1191, 16
      %v1556 = vrot.slane %v1554, 5
      %v1557 = vor.u32 %v1553, %v1556
      %v1558 = vrot.slane %v1557, 4
      %v1560 = vshll.u32 %v1192, 16
      %v1562 = vrot.slane %v1560, 5
      %v1563 = vsel %vm1213, %v1558, %v1562
      %v1564 = vshrl.u32 %v1192, 16
      %v1566 = vrot.slane %v1564, 4
      %v1567 = vor.u32 %v1566, %v1562
      %v1568 = vrot.slane %v1567, 4
      %v1570 = vshll.u32 %v1209, 16
      %v1572 = vrot.slane %v1570, 5
      %v1573 = vsel %vm1213, %v1568, %v1572
      %v1575 = vshrl.u32 %v1193, 16
      %v1577 = vrot.slane %v1575, 4
      %v1578 = vshll.u32 %v1193, 16
      %v1580 = vrot.slane %v1578, 5
      %v1581 = vor.u32 %v1577, %v1580
      %v1582 = vrot.slane %v1581, 4
      %v1584 = vshll.u32 %v1194, 16
      %v1586 = vrot.slane %v1584, 5
      %v1587 = vsel %vm1213, %v1582, %v1586
      %v1588 = vshrl.u32 %v1194, 16
      %v1590 = vrot.slane %v1588, 4
      %v1591 = vor.u32 %v1590, %v1586
      %v1592 = vrot.slane %v1591, 4
      %v1594 = vshll.u32 %v1210, 16
      %v1596 = vrot.slane %v1594, 5
      %v1597 = vsel %vm1213, %v1592, %v1596
      %v1598 = vld [vmem:[#allocation2] sm:$0xe]
      %v1599 = vld [vmem:[#allocation2 + $0xc] sm:$0xe]
      %v1600 = vld [vmem:[#allocation2 + $0x18] sm:$0xe]
      %v1601 = vld [vmem:[#allocation2 + $0x24] sm:$0xe]
      %v1602 = vld [vmem:[#allocation2 + $0x30] sm:$0xe]
      %v1603 = vld [vmem:[#allocation2 + $0x3c] sm:$0xe]
      %v1604 = vld [vmem:[#allocation2 + $0x48] sm:$0xe]
      %v1605 = vld [vmem:[#allocation2 + $0x54] sm:$0xe]
      %v1606 = vld [vmem:[#allocation2 + $0x60] sm:$0xe]
      %v1607 = vld [vmem:[#allocation2 + $0x6c] sm:$0xe]
      %v1608 = vld [vmem:[#allocation2 + $0x78] sm:$0xe]
      %v1609 = vld [vmem:[#allocation2 + $0x84] sm:$0xe]
      %v1610 = vld [vmem:[#allocation2 + $0x90] sm:$0xe]
      %v1611 = vld [vmem:[#allocation2 + $0x9c] sm:$0xe]
      %v1612 = vld [vmem:[#allocation2 + $0xa8] sm:$0xe]
      %v1613 = vld [vmem:[#allocation2 + $0xb4] sm:$0xe]
      %vm1662 = vcmask 1042432
      %vm1663 = vcmask 1046532
      %vm1664 = vmor %vm1662, %vm1663
      %v1665 = vrot.slane %v1598, 5
      %v1666 = vrot.slane %v1665, 4
      %v1667 = vrot.slane %v1164, 5
      %v1668 = vsel %vm1664, %v1666, %v1667
      %v1669 = vrot.slane %v1667, 4
      %v1670 = vrot.slane %v1195, 5
      %v1671 = vsel %vm1664, %v1669, %v1670
      %v1672 = vrot.slane %v1599, 5
      %v1673 = vrot.slane %v1672, 4
      %v1674 = vrot.slane %v1166, 5
      %v1675 = vsel %vm1664, %v1673, %v1674
      %v1676 = vrot.slane %v1674, 4
      %v1677 = vrot.slane %v1196, 5
      %v1678 = vsel %vm1664, %v1676, %v1677
      %v1679 = vrot.slane %v1600, 5
      %v1680 = vrot.slane %v1679, 4
      %v1681 = vrot.slane %v1168, 5
      %v1682 = vsel %vm1664, %v1680, %v1681
      %v1683 = vrot.slane %v1681, 4
      %v1684 = vrot.slane %v1197, 5
      %v1685 = vsel %vm1664, %v1683, %v1684
      %v1686 = vrot.slane %v1601, 5
      %v1687 = vrot.slane %v1686, 4
      %v1688 = vrot.slane %v1170, 5
      %v1689 = vsel %vm1664, %v1687, %v1688
      %v1690 = vrot.slane %v1688, 4
      %v1691 = vrot.slane %v1198, 5
      %v1692 = vsel %vm1664, %v1690, %v1691
      %v1693 = vrot.slane %v1602, 5
      %v1694 = vrot.slane %v1693, 4
      %v1695 = vrot.slane %v1172, 5
      %v1696 = vsel %vm1664, %v1694, %v1695
      %v1697 = vrot.slane %v1695, 4
      %v1698 = vrot.slane %v1199, 5
      %v1699 = vsel %vm1664, %v1697, %v1698
      %v1700 = vrot.slane %v1603, 5
      %v1701 = vrot.slane %v1700, 4
      %v1702 = vrot.slane %v1174, 5
      %v1703 = vsel %vm1664, %v1701, %v1702
      %v1704 = vrot.slane %v1702, 4
      %v1705 = vrot.slane %v1200, 5
      %v1706 = vsel %vm1664, %v1704, %v1705
      %v1707 = vrot.slane %v1604, 5
      %v1708 = vrot.slane %v1707, 4
      %v1709 = vrot.slane %v1176, 5
      %v1710 = vsel %vm1664, %v1708, %v1709
      %v1711 = vrot.slane %v1709, 4
      %v1712 = vrot.slane %v1201, 5
      %v1713 = vsel %vm1664, %v1711, %v1712
      %v1714 = vrot.slane %v1605, 5
      %v1715 = vrot.slane %v1714, 4
      %v1716 = vrot.slane %v1178, 5
      %v1717 = vsel %vm1664, %v1715, %v1716
      %v1718 = vrot.slane %v1716, 4
      %v1719 = vrot.slane %v1202, 5
      %v1720 = vsel %vm1664, %v1718, %v1719
      %v1721 = vrot.slane %v1606, 5
      %v1722 = vrot.slane %v1721, 4
      %v1723 = vrot.slane %v1180, 5
      %v1724 = vsel %vm1664, %v1722, %v1723
      %v1725 = vrot.slane %v1723, 4
      %v1726 = vrot.slane %v1203, 5
      %v1727 = vsel %vm1664, %v1725, %v1726
      %v1728 = vrot.slane %v1607, 5
      %v1729 = vrot.slane %v1728, 4
      %v1730 = vrot.slane %v1182, 5
      %v1731 = vsel %vm1664, %v1729, %v1730
      %v1732 = vrot.slane %v1730, 4
      %v1733 = vrot.slane %v1204, 5
      %v1734 = vsel %vm1664, %v1732, %v1733
      %v1735 = vrot.slane %v1608, 5
      %v1736 = vrot.slane %v1735, 4
      %v1737 = vrot.slane %v1184, 5
      %v1738 = vsel %vm1664, %v1736, %v1737
      %v1739 = vrot.slane %v1737, 4
      %v1740 = vrot.slane %v1205, 5
      %v1741 = vsel %vm1664, %v1739, %v1740
      %v1742 = vrot.slane %v1609, 5
      %v1743 = vrot.slane %v1742, 4
      %v1744 = vrot.slane %v1186, 5
      %v1745 = vsel %vm1664, %v1743, %v1744
      %v1746 = vrot.slane %v1744, 4
      %v1747 = vrot.slane %v1206, 5
      %v1748 = vsel %vm1664, %v1746, %v1747
      %v1749 = vrot.slane %v1610, 5
      %v1750 = vrot.slane %v1749, 4
      %v1751 = vrot.slane %v1188, 5
      %v1752 = vsel %vm1664, %v1750, %v1751
      %v1753 = vrot.slane %v1751, 4
      %v1754 = vrot.slane %v1207, 5
      %v1755 = vsel %vm1664, %v1753, %v1754
      %v1756 = vrot.slane %v1611, 5
      %v1757 = vrot.slane %v1756, 4
      %v1758 = vrot.slane %v1190, 5
      %v1759 = vsel %vm1664, %v1757, %v1758
      %v1760 = vrot.slane %v1758, 4
      %v1761 = vrot.slane %v1208, 5
      %v1762 = vsel %vm1664, %v1760, %v1761
      %v1763 = vrot.slane %v1612, 5
      %v1764 = vrot.slane %v1763, 4
      %v1765 = vrot.slane %v1192, 5
      %v1766 = vsel %vm1664, %v1764, %v1765
      %v1767 = vrot.slane %v1765, 4
      %v1768 = vrot.slane %v1209, 5
      %v1769 = vsel %vm1664, %v1767, %v1768
      %v1770 = vrot.slane %v1613, 5
      %v1771 = vrot.slane %v1770, 4
      %v1772 = vrot.slane %v1194, 5
      %v1773 = vsel %vm1664, %v1771, %v1772
      %v1774 = vrot.slane %v1772, 4
      %v1775 = vrot.slane %v1210, 5
      %v1776 = vsel %vm1664, %v1774, %v1775
      %v1777 = vld [vmem:[%s1048] sm:$0xf]
      %v1778 = vld [vmem:[%s1048 + $0x4] sm:$0xf]
      %v1779 = vld [vmem:[%s1048 + $0xc] sm:$0xf]
      %v1780 = vld [vmem:[%s1048 + $0x10] sm:$0xf]
      %v1781 = vld [vmem:[%s1048 + $0x18] sm:$0xf]
      %v1782 = vld [vmem:[%s1048 + $0x1c] sm:$0xf]
      %v1783 = vld [vmem:[%s1048 + $0x24] sm:$0xf]
      %v1784 = vld [vmem:[%s1048 + $0x28] sm:$0xf]
      %v1785 = vld [vmem:[%s1048 + $0x30] sm:$0xf]
      %v1786 = vld [vmem:[%s1048 + $0x34] sm:$0xf]
      %v1787 = vld [vmem:[%s1048 + $0x3c] sm:$0xf]
      %v1788 = vld [vmem:[%s1048 + $0x40] sm:$0xf]
      %v1789 = vld [vmem:[%s1048 + $0x48] sm:$0xf]
      %v1790 = vld [vmem:[%s1048 + $0x4c] sm:$0xf]
      %v1791 = vld [vmem:[%s1048 + $0x54] sm:$0xf]
      %v1792 = vld [vmem:[%s1048 + $0x58] sm:$0xf]
      %v1793 = vld [vmem:[%s1048 + $0x60] sm:$0xf]
      %v1794 = vld [vmem:[%s1048 + $0x64] sm:$0xf]
      %v1795 = vld [vmem:[%s1048 + $0x6c] sm:$0xf]
      %v1796 = vld [vmem:[%s1048 + $0x70] sm:$0xf]
      %v1797 = vld [vmem:[%s1048 + $0x78] sm:$0xf]
      %v1798 = vld [vmem:[%s1048 + $0x7c] sm:$0xf]
      %v1799 = vld [vmem:[%s1048 + $0x84] sm:$0xf]
      %v1800 = vld [vmem:[%s1048 + $0x88] sm:$0xf]
      %v1801 = vld [vmem:[%s1048 + $0x90] sm:$0xf]
      %v1802 = vld [vmem:[%s1048 + $0x94] sm:$0xf]
      %v1803 = vld [vmem:[%s1048 + $0x9c] sm:$0xf]
      %v1804 = vld [vmem:[%s1048 + $0xa0] sm:$0xf]
      %v1805 = vld [vmem:[%s1048 + $0xa8] sm:$0xf]
      %v1806 = vld [vmem:[%s1048 + $0xac] sm:$0xf]
      %v1807 = vld [vmem:[%s1048 + $0xb4] sm:$0xf]
      %v1808 = vld [vmem:[%s1048 + $0xb8] sm:$0xf]
      %v1809 = vld [vmem:[%s1048 + $0x8] sm:$0x1]
      %v1810 = vld [vmem:[%s1048 + $0x14] sm:$0x1]
      %v1811 = vld [vmem:[%s1048 + $0x20] sm:$0x1]
      %v1812 = vld [vmem:[%s1048 + $0x2c] sm:$0x1]
      %v1813 = vld [vmem:[%s1048 + $0x38] sm:$0x1]
      %v1814 = vld [vmem:[%s1048 + $0x44] sm:$0x1]
      %v1815 = vld [vmem:[%s1048 + $0x50] sm:$0x1]
      %v1816 = vld [vmem:[%s1048 + $0x5c] sm:$0x1]
      %v1817 = vld [vmem:[%s1048 + $0x68] sm:$0x1]
      %v1818 = vld [vmem:[%s1048 + $0x74] sm:$0x1]
      %v1819 = vld [vmem:[%s1048 + $0x80] sm:$0x1]
      %v1820 = vld [vmem:[%s1048 + $0x8c] sm:$0x1]
      %v1821 = vld [vmem:[%s1048 + $0x98] sm:$0x1]
      %v1822 = vld [vmem:[%s1048 + $0xa4] sm:$0x1]
      %v1823 = vld [vmem:[%s1048 + $0xb0] sm:$0x1]
      %v1824 = vld [vmem:[%s1048 + $0xbc] sm:$0x1]
      %v1826 = vshrl.u32 %v1777, 16
      %v1828 = vrot.slane %v1826, 4
      %v1829 = vshll.u32 %v1777, 16
      %v1831 = vrot.slane %v1829, 5
      %v1832 = vor.u32 %v1828, %v1831
      %v1833 = vrot.slane %v1832, 4
      %v1835 = vshll.u32 %v1778, 16
      %v1837 = vrot.slane %v1835, 5
      %v1838 = vsel %vm1213, %v1833, %v1837
      %v1839 = vshrl.u32 %v1778, 16
      %v1841 = vrot.slane %v1839, 4
      %v1842 = vor.u32 %v1841, %v1837
      %v1843 = vrot.slane %v1842, 4
      %v1845 = vshll.u32 %v1809, 16
      %v1847 = vrot.slane %v1845, 5
      %v1848 = vsel %vm1213, %v1843, %v1847
      %v1850 = vshrl.u32 %v1779, 16
      %v1852 = vrot.slane %v1850, 4
      %v1853 = vshll.u32 %v1779, 16
      %v1855 = vrot.slane %v1853, 5
      %v1856 = vor.u32 %v1852, %v1855
      %v1857 = vrot.slane %v1856, 4
      %v1859 = vshll.u32 %v1780, 16
      %v1861 = vrot.slane %v1859, 5
      %v1862 = vsel %vm1213, %v1857, %v1861
      %v1863 = vshrl.u32 %v1780, 16
      %v1865 = vrot.slane %v1863, 4
      %v1866 = vor.u32 %v1865, %v1861
      %v1867 = vrot.slane %v1866, 4
      %v1869 = vshll.u32 %v1810, 16
      %v1871 = vrot.slane %v1869, 5
      %v1872 = vsel %vm1213, %v1867, %v1871
      %v1874 = vshrl.u32 %v1781, 16
      %v1876 = vrot.slane %v1874, 4
      %v1877 = vshll.u32 %v1781, 16
      %v1879 = vrot.slane %v1877, 5
      %v1880 = vor.u32 %v1876, %v1879
      %v1881 = vrot.slane %v1880, 4
      %v1883 = vshll.u32 %v1782, 16
      %v1885 = vrot.slane %v1883, 5
      %v1886 = vsel %vm1213, %v1881, %v1885
      %v1887 = vshrl.u32 %v1782, 16
      %v1889 = vrot.slane %v1887, 4
      %v1890 = vor.u32 %v1889, %v1885
      %v1891 = vrot.slane %v1890, 4
      %v1893 = vshll.u32 %v1811, 16
      %v1895 = vrot.slane %v1893, 5
      %v1896 = vsel %vm1213, %v1891, %v1895
      %v1898 = vshrl.u32 %v1783, 16
      %v1900 = vrot.slane %v1898, 4
      %v1901 = vshll.u32 %v1783, 16
      %v1903 = vrot.slane %v1901, 5
      %v1904 = vor.u32 %v1900, %v1903
      %v1905 = vrot.slane %v1904, 4
      %v1907 = vshll.u32 %v1784, 16
      %v1909 = vrot.slane %v1907, 5
      %v1910 = vsel %vm1213, %v1905, %v1909
      %v1911 = vshrl.u32 %v1784, 16
      %v1913 = vrot.slane %v1911, 4
      %v1914 = vor.u32 %v1913, %v1909
      %v1915 = vrot.slane %v1914, 4
      %v1917 = vshll.u32 %v1812, 16
      %v1919 = vrot.slane %v1917, 5
      %v1920 = vsel %vm1213, %v1915, %v1919
      %v1922 = vshrl.u32 %v1785, 16
      %v1924 = vrot.slane %v1922, 4
      %v1925 = vshll.u32 %v1785, 16
      %v1927 = vrot.slane %v1925, 5
      %v1928 = vor.u32 %v1924, %v1927
      %v1929 = vrot.slane %v1928, 4
      %v1931 = vshll.u32 %v1786, 16
      %v1933 = vrot.slane %v1931, 5
      %v1934 = vsel %vm1213, %v1929, %v1933
      %v1935 = vshrl.u32 %v1786, 16
      %v1937 = vrot.slane %v1935, 4
      %v1938 = vor.u32 %v1937, %v1933
      %v1939 = vrot.slane %v1938, 4
      %v1941 = vshll.u32 %v1813, 16
      %v1943 = vrot.slane %v1941, 5
      %v1944 = vsel %vm1213, %v1939, %v1943
      %v1946 = vshrl.u32 %v1787, 16
      %v1948 = vrot.slane %v1946, 4
      %v1949 = vshll.u32 %v1787, 16
      %v1951 = vrot.slane %v1949, 5
      %v1952 = vor.u32 %v1948, %v1951
      %v1953 = vrot.slane %v1952, 4
      %v1955 = vshll.u32 %v1788, 16
      %v1957 = vrot.slane %v1955, 5
      %v1958 = vsel %vm1213, %v1953, %v1957
      %v1959 = vshrl.u32 %v1788, 16
      %v1961 = vrot.slane %v1959, 4
      %v1962 = vor.u32 %v1961, %v1957
      %v1963 = vrot.slane %v1962, 4
      %v1965 = vshll.u32 %v1814, 16
      %v1967 = vrot.slane %v1965, 5
      %v1968 = vsel %vm1213, %v1963, %v1967
      %v1970 = vshrl.u32 %v1789, 16
      %v1972 = vrot.slane %v1970, 4
      %v1973 = vshll.u32 %v1789, 16
      %v1975 = vrot.slane %v1973, 5
      %v1976 = vor.u32 %v1972, %v1975
      %v1977 = vrot.slane %v1976, 4
      %v1979 = vshll.u32 %v1790, 16
      %v1981 = vrot.slane %v1979, 5
      %v1982 = vsel %vm1213, %v1977, %v1981
      %v1983 = vshrl.u32 %v1790, 16
      %v1985 = vrot.slane %v1983, 4
      %v1986 = vor.u32 %v1985, %v1981
      %v1987 = vrot.slane %v1986, 4
      %v1989 = vshll.u32 %v1815, 16
      %v1991 = vrot.slane %v1989, 5
      %v1992 = vsel %vm1213, %v1987, %v1991
      %v1994 = vshrl.u32 %v1791, 16
      %v1996 = vrot.slane %v1994, 4
      %v1997 = vshll.u32 %v1791, 16
      %v1999 = vrot.slane %v1997, 5
      %v2000 = vor.u32 %v1996, %v1999
      %v2001 = vrot.slane %v2000, 4
      %v2003 = vshll.u32 %v1792, 16
      %v2005 = vrot.slane %v2003, 5
      %v2006 = vsel %vm1213, %v2001, %v2005
      %v2007 = vshrl.u32 %v1792, 16
      %v2009 = vrot.slane %v2007, 4
      %v2010 = vor.u32 %v2009, %v2005
      %v2011 = vrot.slane %v2010, 4
      %v2013 = vshll.u32 %v1816, 16
      %v2015 = vrot.slane %v2013, 5
      %v2016 = vsel %vm1213, %v2011, %v2015
      %v2018 = vshrl.u32 %v1793, 16
      %v2020 = vrot.slane %v2018, 4
      %v2021 = vshll.u32 %v1793, 16
      %v2023 = vrot.slane %v2021, 5
      %v2024 = vor.u32 %v2020, %v2023
      %v2025 = vrot.slane %v2024, 4
      %v2027 = vshll.u32 %v1794, 16
      %v2029 = vrot.slane %v2027, 5
      %v2030 = vsel %vm1213, %v2025, %v2029
      %v2031 = vshrl.u32 %v1794, 16
      %v2033 = vrot.slane %v2031, 4
      %v2034 = vor.u32 %v2033, %v2029
      %v2035 = vrot.slane %v2034, 4
      %v2037 = vshll.u32 %v1817, 16
      %v2039 = vrot.slane %v2037, 5
      %v2040 = vsel %vm1213, %v2035, %v2039
      %v2042 = vshrl.u32 %v1795, 16
      %v2044 = vrot.slane %v2042, 4
      %v2045 = vshll.u32 %v1795, 16
      %v2047 = vrot.slane %v2045, 5
      %v2048 = vor.u32 %v2044, %v2047
      %v2049 = vrot.slane %v2048, 4
      %v2051 = vshll.u32 %v1796, 16
      %v2053 = vrot.slane %v2051, 5
      %v2054 = vsel %vm1213, %v2049, %v2053
      %v2055 = vshrl.u32 %v1796, 16
      %v2057 = vrot.slane %v2055, 4
      %v2058 = vor.u32 %v2057, %v2053
      %v2059 = vrot.slane %v2058, 4
      %v2061 = vshll.u32 %v1818, 16
      %v2063 = vrot.slane %v2061, 5
      %v2064 = vsel %vm1213, %v2059, %v2063
      %v2066 = vshrl.u32 %v1797, 16
      %v2068 = vrot.slane %v2066, 4
      %v2069 = vshll.u32 %v1797, 16
      %v2071 = vrot.slane %v2069, 5
      %v2072 = vor.u32 %v2068, %v2071
      %v2073 = vrot.slane %v2072, 4
      %v2075 = vshll.u32 %v1798, 16
      %v2077 = vrot.slane %v2075, 5
      %v2078 = vsel %vm1213, %v2073, %v2077
      %v2079 = vshrl.u32 %v1798, 16
      %v2081 = vrot.slane %v2079, 4
      %v2082 = vor.u32 %v2081, %v2077
      %v2083 = vrot.slane %v2082, 4
      %v2085 = vshll.u32 %v1819, 16
      %v2087 = vrot.slane %v2085, 5
      %v2088 = vsel %vm1213, %v2083, %v2087
      %v2090 = vshrl.u32 %v1799, 16
      %v2092 = vrot.slane %v2090, 4
      %v2093 = vshll.u32 %v1799, 16
      %v2095 = vrot.slane %v2093, 5
      %v2096 = vor.u32 %v2092, %v2095
      %v2097 = vrot.slane %v2096, 4
      %v2099 = vshll.u32 %v1800, 16
      %v2101 = vrot.slane %v2099, 5
      %v2102 = vsel %vm1213, %v2097, %v2101
      %v2103 = vshrl.u32 %v1800, 16
      %v2105 = vrot.slane %v2103, 4
      %v2106 = vor.u32 %v2105, %v2101
      %v2107 = vrot.slane %v2106, 4
      %v2109 = vshll.u32 %v1820, 16
      %v2111 = vrot.slane %v2109, 5
      %v2112 = vsel %vm1213, %v2107, %v2111
      %v2114 = vshrl.u32 %v1801, 16
      %v2116 = vrot.slane %v2114, 4
      %v2117 = vshll.u32 %v1801, 16
      %v2119 = vrot.slane %v2117, 5
      %v2120 = vor.u32 %v2116, %v2119
      %v2121 = vrot.slane %v2120, 4
      %v2123 = vshll.u32 %v1802, 16
      %v2125 = vrot.slane %v2123, 5
      %v2126 = vsel %vm1213, %v2121, %v2125
      %v2127 = vshrl.u32 %v1802, 16
      %v2129 = vrot.slane %v2127, 4
      %v2130 = vor.u32 %v2129, %v2125
      %v2131 = vrot.slane %v2130, 4
      %v2133 = vshll.u32 %v1821, 16
      %v2135 = vrot.slane %v2133, 5
      %v2136 = vsel %vm1213, %v2131, %v2135
      %v2138 = vshrl.u32 %v1803, 16
      %v2140 = vrot.slane %v2138, 4
      %v2141 = vshll.u32 %v1803, 16
      %v2143 = vrot.slane %v2141, 5
      %v2144 = vor.u32 %v2140, %v2143
      %v2145 = vrot.slane %v2144, 4
      %v2147 = vshll.u32 %v1804, 16
      %v2149 = vrot.slane %v2147, 5
      %v2150 = vsel %vm1213, %v2145, %v2149
      %v2151 = vshrl.u32 %v1804, 16
      %v2153 = vrot.slane %v2151, 4
      %v2154 = vor.u32 %v2153, %v2149
      %v2155 = vrot.slane %v2154, 4
      %v2157 = vshll.u32 %v1822, 16
      %v2159 = vrot.slane %v2157, 5
      %v2160 = vsel %vm1213, %v2155, %v2159
      %v2162 = vshrl.u32 %v1805, 16
      %v2164 = vrot.slane %v2162, 4
      %v2165 = vshll.u32 %v1805, 16
      %v2167 = vrot.slane %v2165, 5
      %v2168 = vor.u32 %v2164, %v2167
      %v2169 = vrot.slane %v2168, 4
      %v2171 = vshll.u32 %v1806, 16
      %v2173 = vrot.slane %v2171, 5
      %v2174 = vsel %vm1213, %v2169, %v2173
      %v2175 = vshrl.u32 %v1806, 16
      %v2177 = vrot.slane %v2175, 4
      %v2178 = vor.u32 %v2177, %v2173
      %v2179 = vrot.slane %v2178, 4
      %v2181 = vshll.u32 %v1823, 16
      %v2183 = vrot.slane %v2181, 5
      %v2184 = vsel %vm1213, %v2179, %v2183
      %v2186 = vshrl.u32 %v1807, 16
      %v2188 = vrot.slane %v2186, 4
      %v2189 = vshll.u32 %v1807, 16
      %v2191 = vrot.slane %v2189, 5
      %v2192 = vor.u32 %v2188, %v2191
      %v2193 = vrot.slane %v2192, 4
      %v2195 = vshll.u32 %v1808, 16
      %v2197 = vrot.slane %v2195, 5
      %v2198 = vsel %vm1213, %v2193, %v2197
      %v2199 = vshrl.u32 %v1808, 16
      %v2201 = vrot.slane %v2199, 4
      %v2202 = vor.u32 %v2201, %v2197
      %v2203 = vrot.slane %v2202, 4
      %v2205 = vshll.u32 %v1824, 16
      %v2207 = vrot.slane %v2205, 5
      %v2208 = vsel %vm1213, %v2203, %v2207
      %v2209 = vld [vmem:[%s1048] sm:$0xe]
      %v2210 = vld [vmem:[%s1048 + $0xc] sm:$0xe]
      %v2211 = vld [vmem:[%s1048 + $0x18] sm:$0xe]
      %v2212 = vld [vmem:[%s1048 + $0x24] sm:$0xe]
      %v2213 = vld [vmem:[%s1048 + $0x30] sm:$0xe]
      %v2214 = vld [vmem:[%s1048 + $0x3c] sm:$0xe]
      %v2215 = vld [vmem:[%s1048 + $0x48] sm:$0xe]
      %v2216 = vld [vmem:[%s1048 + $0x54] sm:$0xe]
      %v2217 = vld [vmem:[%s1048 + $0x60] sm:$0xe]
      %v2218 = vld [vmem:[%s1048 + $0x6c] sm:$0xe]
      %v2219 = vld [vmem:[%s1048 + $0x78] sm:$0xe]
      %v2220 = vld [vmem:[%s1048 + $0x84] sm:$0xe]
      %v2221 = vld [vmem:[%s1048 + $0x90] sm:$0xe]
      %v2222 = vld [vmem:[%s1048 + $0x9c] sm:$0xe]
      %v2223 = vld [vmem:[%s1048 + $0xa8] sm:$0xe]
      %v2224 = vld [vmem:[%s1048 + $0xb4] sm:$0xe]
      %v2273 = vrot.slane %v2209, 5
      %v2274 = vrot.slane %v2273, 4
      %v2275 = vrot.slane %v1778, 5
      %v2276 = vsel %vm1664, %v2274, %v2275
      %v2277 = vrot.slane %v2275, 4
      %v2278 = vrot.slane %v1809, 5
      %v2279 = vsel %vm1664, %v2277, %v2278
      %v2280 = vrot.slane %v2210, 5
      %v2281 = vrot.slane %v2280, 4
      %v2282 = vrot.slane %v1780, 5
      %v2283 = vsel %vm1664, %v2281, %v2282
      %v2284 = vrot.slane %v2282, 4
      %v2285 = vrot.slane %v1810, 5
      %v2286 = vsel %vm1664, %v2284, %v2285
      %v2287 = vrot.slane %v2211, 5
      %v2288 = vrot.slane %v2287, 4
      %v2289 = vrot.slane %v1782, 5
      %v2290 = vsel %vm1664, %v2288, %v2289
      %v2291 = vrot.slane %v2289, 4
      %v2292 = vrot.slane %v1811, 5
      %v2293 = vsel %vm1664, %v2291, %v2292
      %v2294 = vrot.slane %v2212, 5
      %v2295 = vrot.slane %v2294, 4
      %v2296 = vrot.slane %v1784, 5
      %v2297 = vsel %vm1664, %v2295, %v2296
      %v2298 = vrot.slane %v2296, 4
      %v2299 = vrot.slane %v1812, 5
      %v2300 = vsel %vm1664, %v2298, %v2299
      %v2301 = vrot.slane %v2213, 5
      %v2302 = vrot.slane %v2301, 4
      %v2303 = vrot.slane %v1786, 5
      %v2304 = vsel %vm1664, %v2302, %v2303
      %v2305 = vrot.slane %v2303, 4
      %v2306 = vrot.slane %v1813, 5
      %v2307 = vsel %vm1664, %v2305, %v2306
      %v2308 = vrot.slane %v2214, 5
      %v2309 = vrot.slane %v2308, 4
      %v2310 = vrot.slane %v1788, 5
      %v2311 = vsel %vm1664, %v2309, %v2310
      %v2312 = vrot.slane %v2310, 4
      %v2313 = vrot.slane %v1814, 5
      %v2314 = vsel %vm1664, %v2312, %v2313
      %v2315 = vrot.slane %v2215, 5
      %v2316 = vrot.slane %v2315, 4
      %v2317 = vrot.slane %v1790, 5
      %v2318 = vsel %vm1664, %v2316, %v2317
      %v2319 = vrot.slane %v2317, 4
      %v2320 = vrot.slane %v1815, 5
      %v2321 = vsel %vm1664, %v2319, %v2320
      %v2322 = vrot.slane %v2216, 5
      %v2323 = vrot.slane %v2322, 4
      %v2324 = vrot.slane %v1792, 5
      %v2325 = vsel %vm1664, %v2323, %v2324
      %v2326 = vrot.slane %v2324, 4
      %v2327 = vrot.slane %v1816, 5
      %v2328 = vsel %vm1664, %v2326, %v2327
      %v2329 = vrot.slane %v2217, 5
      %v2330 = vrot.slane %v2329, 4
      %v2331 = vrot.slane %v1794, 5
      %v2332 = vsel %vm1664, %v2330, %v2331
      %v2333 = vrot.slane %v2331, 4
      %v2334 = vrot.slane %v1817, 5
      %v2335 = vsel %vm1664, %v2333, %v2334
      %v2336 = vrot.slane %v2218, 5
      %v2337 = vrot.slane %v2336, 4
      %v2338 = vrot.slane %v1796, 5
      %v2339 = vsel %vm1664, %v2337, %v2338
      %v2340 = vrot.slane %v2338, 4
      %v2341 = vrot.slane %v1818, 5
      %v2342 = vsel %vm1664, %v2340, %v2341
      %v2343 = vrot.slane %v2219, 5
      %v2344 = vrot.slane %v2343, 4
      %v2345 = vrot.slane %v1798, 5
      %v2346 = vsel %vm1664, %v2344, %v2345
      %v2347 = vrot.slane %v2345, 4
      %v2348 = vrot.slane %v1819, 5
      %v2349 = vsel %vm1664, %v2347, %v2348
      %v2350 = vrot.slane %v2220, 5
      %v2351 = vrot.slane %v2350, 4
      %v2352 = vrot.slane %v1800, 5
      %v2353 = vsel %vm1664, %v2351, %v2352
      %v2354 = vrot.slane %v2352, 4
      %v2355 = vrot.slane %v1820, 5
      %v2356 = vsel %vm1664, %v2354, %v2355
      %v2357 = vrot.slane %v2221, 5
      %v2358 = vrot.slane %v2357, 4
      %v2359 = vrot.slane %v1802, 5
      %v2360 = vsel %vm1664, %v2358, %v2359
      %v2361 = vrot.slane %v2359, 4
      %v2362 = vrot.slane %v1821, 5
      %v2363 = vsel %vm1664, %v2361, %v2362
      %v2364 = vrot.slane %v2222, 5
      %v2365 = vrot.slane %v2364, 4
      %v2366 = vrot.slane %v1804, 5
      %v2367 = vsel %vm1664, %v2365, %v2366
      %v2368 = vrot.slane %v2366, 4
      %v2369 = vrot.slane %v1822, 5
      %v2370 = vsel %vm1664, %v2368, %v2369
      %v2371 = vrot.slane %v2223, 5
      %v2372 = vrot.slane %v2371, 4
      %v2373 = vrot.slane %v1806, 5
      %v2374 = vsel %vm1664, %v2372, %v2373
      %v2375 = vrot.slane %v2373, 4
      %v2376 = vrot.slane %v1823, 5
      %v2377 = vsel %vm1664, %v2375, %v2376
      %v2378 = vrot.slane %v2224, 5
      %v2379 = vrot.slane %v2378, 4
      %v2380 = vrot.slane %v1808, 5
      %v2381 = vsel %vm1664, %v2379, %v2380
      %v2382 = vrot.slane %v2380, 4
      %v2383 = vrot.slane %v1824, 5
      %v2384 = vsel %vm1664, %v2382, %v2383
      %s2385 = scalar_lea.vmem [#allocation2], 24
      %v2386 = vld [vmem:[%s2385] sm:$0xf]
      %v2387 = vld [vmem:[%s2385 + $0x4] sm:$0xf]
      %v2388 = vld [vmem:[%s2385 + $0xc] sm:$0xf]
      %v2389 = vld [vmem:[%s2385 + $0x10] sm:$0xf]
      %v2390 = vld [vmem:[%s2385 + $0x18] sm:$0xf]
      %v2391 = vld [vmem:[%s2385 + $0x1c] sm:$0xf]
      %v2392 = vld [vmem:[%s2385 + $0x24] sm:$0xf]
      %v2393 = vld [vmem:[%s2385 + $0x28] sm:$0xf]
      %v2394 = vld [vmem:[%s2385 + $0x30] sm:$0xf]
      %v2395 = vld [vmem:[%s2385 + $0x34] sm:$0xf]
      %v2396 = vld [vmem:[%s2385 + $0x3c] sm:$0xf]
      %v2397 = vld [vmem:[%s2385 + $0x40] sm:$0xf]
      %v2398 = vld [vmem:[%s2385 + $0x48] sm:$0xf]
      %v2399 = vld [vmem:[%s2385 + $0x4c] sm:$0xf]
      %v2400 = vld [vmem:[%s2385 + $0x54] sm:$0xf]
      %v2401 = vld [vmem:[%s2385 + $0x58] sm:$0xf]
      %v2402 = vld [vmem:[%s2385 + $0x60] sm:$0xf]
      %v2403 = vld [vmem:[%s2385 + $0x64] sm:$0xf]
      %v2404 = vld [vmem:[%s2385 + $0x6c] sm:$0xf]
      %v2405 = vld [vmem:[%s2385 + $0x70] sm:$0xf]
      %v2406 = vld [vmem:[%s2385 + $0x78] sm:$0xf]
      %v2407 = vld [vmem:[%s2385 + $0x7c] sm:$0xf]
      %v2408 = vld [vmem:[%s2385 + $0x84] sm:$0xf]
      %v2409 = vld [vmem:[%s2385 + $0x88] sm:$0xf]
      %v2410 = vld [vmem:[%s2385 + $0x90] sm:$0xf]
      %v2411 = vld [vmem:[%s2385 + $0x94] sm:$0xf]
      %v2412 = vld [vmem:[%s2385 + $0x9c] sm:$0xf]
      %v2413 = vld [vmem:[%s2385 + $0xa0] sm:$0xf]
      %v2414 = vld [vmem:[%s2385 + $0xa8] sm:$0xf]
      %v2415 = vld [vmem:[%s2385 + $0xac] sm:$0xf]
      %v2416 = vld [vmem:[%s2385 + $0xb4] sm:$0xf]
      %v2417 = vld [vmem:[%s2385 + $0xb8] sm:$0xf]
      %v2418 = vld [vmem:[%s2385 + $0x8] sm:$0x1]
      %v2419 = vld [vmem:[%s2385 + $0x14] sm:$0x1]
      %v2420 = vld [vmem:[%s2385 + $0x20] sm:$0x1]
      %v2421 = vld [vmem:[%s2385 + $0x2c] sm:$0x1]
      %v2422 = vld [vmem:[%s2385 + $0x38] sm:$0x1]
      %v2423 = vld [vmem:[%s2385 + $0x44] sm:$0x1]
      %v2424 = vld [vmem:[%s2385 + $0x50] sm:$0x1]
      %v2425 = vld [vmem:[%s2385 + $0x5c] sm:$0x1]
      %v2426 = vld [vmem:[%s2385 + $0x68] sm:$0x1]
      %v2427 = vld [vmem:[%s2385 + $0x74] sm:$0x1]
      %v2428 = vld [vmem:[%s2385 + $0x80] sm:$0x1]
      %v2429 = vld [vmem:[%s2385 + $0x8c] sm:$0x1]
      %v2430 = vld [vmem:[%s2385 + $0x98] sm:$0x1]
      %v2431 = vld [vmem:[%s2385 + $0xa4] sm:$0x1]
      %v2432 = vld [vmem:[%s2385 + $0xb0] sm:$0x1]
      %v2433 = vld [vmem:[%s2385 + $0xbc] sm:$0x1]
      %v2435 = vshrl.u32 %v2386, 16
      %v2437 = vrot.slane %v2435, 4
      %v2438 = vshll.u32 %v2386, 16
      %v2440 = vrot.slane %v2438, 5
      %v2441 = vor.u32 %v2437, %v2440
      %v2442 = vrot.slane %v2441, 4
      %v2444 = vshll.u32 %v2387, 16
      %v2446 = vrot.slane %v2444, 5
      %v2447 = vsel %vm1213, %v2442, %v2446
      %v2448 = vshrl.u32 %v2387, 16
      %v2450 = vrot.slane %v2448, 4
      %v2451 = vor.u32 %v2450, %v2446
      %v2452 = vrot.slane %v2451, 4
      %v2454 = vshll.u32 %v2418, 16
      %v2456 = vrot.slane %v2454, 5
      %v2457 = vsel %vm1213, %v2452, %v2456
      %v2459 = vshrl.u32 %v2388, 16
      %v2461 = vrot.slane %v2459, 4
      %v2462 = vshll.u32 %v2388, 16
      %v2464 = vrot.slane %v2462, 5
      %v2465 = vor.u32 %v2461, %v2464
      %v2466 = vrot.slane %v2465, 4
      %v2468 = vshll.u32 %v2389, 16
      %v2470 = vrot.slane %v2468, 5
      %v2471 = vsel %vm1213, %v2466, %v2470
      %v2472 = vshrl.u32 %v2389, 16
      %v2474 = vrot.slane %v2472, 4
      %v2475 = vor.u32 %v2474, %v2470
      %v2476 = vrot.slane %v2475, 4
      %v2478 = vshll.u32 %v2419, 16
      %v2480 = vrot.slane %v2478, 5
      %v2481 = vsel %vm1213, %v2476, %v2480
      %v2483 = vshrl.u32 %v2390, 16
      %v2485 = vrot.slane %v2483, 4
      %v2486 = vshll.u32 %v2390, 16
      %v2488 = vrot.slane %v2486, 5
      %v2489 = vor.u32 %v2485, %v2488
      %v2490 = vrot.slane %v2489, 4
      %v2492 = vshll.u32 %v2391, 16
      %v2494 = vrot.slane %v2492, 5
      %v2495 = vsel %vm1213, %v2490, %v2494
      %v2496 = vshrl.u32 %v2391, 16
      %v2498 = vrot.slane %v2496, 4
      %v2499 = vor.u32 %v2498, %v2494
      %v2500 = vrot.slane %v2499, 4
      %v2502 = vshll.u32 %v2420, 16
      %v2504 = vrot.slane %v2502, 5
      %v2505 = vsel %vm1213, %v2500, %v2504
      %v2507 = vshrl.u32 %v2392, 16
      %v2509 = vrot.slane %v2507, 4
      %v2510 = vshll.u32 %v2392, 16
      %v2512 = vrot.slane %v2510, 5
      %v2513 = vor.u32 %v2509, %v2512
      %v2514 = vrot.slane %v2513, 4
      %v2516 = vshll.u32 %v2393, 16
      %v2518 = vrot.slane %v2516, 5
      %v2519 = vsel %vm1213, %v2514, %v2518
      %v2520 = vshrl.u32 %v2393, 16
      %v2522 = vrot.slane %v2520, 4
      %v2523 = vor.u32 %v2522, %v2518
      %v2524 = vrot.slane %v2523, 4
      %v2526 = vshll.u32 %v2421, 16
      %v2528 = vrot.slane %v2526, 5
      %v2529 = vsel %vm1213, %v2524, %v2528
      %v2531 = vshrl.u32 %v2394, 16
      %v2533 = vrot.slane %v2531, 4
      %v2534 = vshll.u32 %v2394, 16
      %v2536 = vrot.slane %v2534, 5
      %v2537 = vor.u32 %v2533, %v2536
      %v2538 = vrot.slane %v2537, 4
      %v2540 = vshll.u32 %v2395, 16
      %v2542 = vrot.slane %v2540, 5
      %v2543 = vsel %vm1213, %v2538, %v2542
      %v2544 = vshrl.u32 %v2395, 16
      %v2546 = vrot.slane %v2544, 4
      %v2547 = vor.u32 %v2546, %v2542
      %v2548 = vrot.slane %v2547, 4
      %v2550 = vshll.u32 %v2422, 16
      %v2552 = vrot.slane %v2550, 5
      %v2553 = vsel %vm1213, %v2548, %v2552
      %v2555 = vshrl.u32 %v2396, 16
      %v2557 = vrot.slane %v2555, 4
      %v2558 = vshll.u32 %v2396, 16
      %v2560 = vrot.slane %v2558, 5
      %v2561 = vor.u32 %v2557, %v2560
      %v2562 = vrot.slane %v2561, 4
      %v2564 = vshll.u32 %v2397, 16
      %v2566 = vrot.slane %v2564, 5
      %v2567 = vsel %vm1213, %v2562, %v2566
      %v2568 = vshrl.u32 %v2397, 16
      %v2570 = vrot.slane %v2568, 4
      %v2571 = vor.u32 %v2570, %v2566
      %v2572 = vrot.slane %v2571, 4
      %v2574 = vshll.u32 %v2423, 16
      %v2576 = vrot.slane %v2574, 5
      %v2577 = vsel %vm1213, %v2572, %v2576
      %v2579 = vshrl.u32 %v2398, 16
      %v2581 = vrot.slane %v2579, 4
      %v2582 = vshll.u32 %v2398, 16
      %v2584 = vrot.slane %v2582, 5
      %v2585 = vor.u32 %v2581, %v2584
      %v2586 = vrot.slane %v2585, 4
      %v2588 = vshll.u32 %v2399, 16
      %v2590 = vrot.slane %v2588, 5
      %v2591 = vsel %vm1213, %v2586, %v2590
      %v2592 = vshrl.u32 %v2399, 16
      %v2594 = vrot.slane %v2592, 4
      %v2595 = vor.u32 %v2594, %v2590
      %v2596 = vrot.slane %v2595, 4
      %v2598 = vshll.u32 %v2424, 16
      %v2600 = vrot.slane %v2598, 5
      %v2601 = vsel %vm1213, %v2596, %v2600
      %v2603 = vshrl.u32 %v2400, 16
      %v2605 = vrot.slane %v2603, 4
      %v2606 = vshll.u32 %v2400, 16
      %v2608 = vrot.slane %v2606, 5
      %v2609 = vor.u32 %v2605, %v2608
      %v2610 = vrot.slane %v2609, 4
      %v2612 = vshll.u32 %v2401, 16
      %v2614 = vrot.slane %v2612, 5
      %v2615 = vsel %vm1213, %v2610, %v2614
      %v2616 = vshrl.u32 %v2401, 16
      %v2618 = vrot.slane %v2616, 4
      %v2619 = vor.u32 %v2618, %v2614
      %v2620 = vrot.slane %v2619, 4
      %v2622 = vshll.u32 %v2425, 16
      %v2624 = vrot.slane %v2622, 5
      %v2625 = vsel %vm1213, %v2620, %v2624
      %v2627 = vshrl.u32 %v2402, 16
      %v2629 = vrot.slane %v2627, 4
      %v2630 = vshll.u32 %v2402, 16
      %v2632 = vrot.slane %v2630, 5
      %v2633 = vor.u32 %v2629, %v2632
      %v2634 = vrot.slane %v2633, 4
      %v2636 = vshll.u32 %v2403, 16
      %v2638 = vrot.slane %v2636, 5
      %v2639 = vsel %vm1213, %v2634, %v2638
      %v2640 = vshrl.u32 %v2403, 16
      %v2642 = vrot.slane %v2640, 4
      %v2643 = vor.u32 %v2642, %v2638
      %v2644 = vrot.slane %v2643, 4
      %v2646 = vshll.u32 %v2426, 16
      %v2648 = vrot.slane %v2646, 5
      %v2649 = vsel %vm1213, %v2644, %v2648
      %v2651 = vshrl.u32 %v2404, 16
      %v2653 = vrot.slane %v2651, 4
      %v2654 = vshll.u32 %v2404, 16
      %v2656 = vrot.slane %v2654, 5
      %v2657 = vor.u32 %v2653, %v2656
      %v2658 = vrot.slane %v2657, 4
      %v2660 = vshll.u32 %v2405, 16
      %v2662 = vrot.slane %v2660, 5
      %v2663 = vsel %vm1213, %v2658, %v2662
      %v2664 = vshrl.u32 %v2405, 16
      %v2666 = vrot.slane %v2664, 4
      %v2667 = vor.u32 %v2666, %v2662
      %v2668 = vrot.slane %v2667, 4
      %v2670 = vshll.u32 %v2427, 16
      %v2672 = vrot.slane %v2670, 5
      %v2673 = vsel %vm1213, %v2668, %v2672
      %v2675 = vshrl.u32 %v2406, 16
      %v2677 = vrot.slane %v2675, 4
      %v2678 = vshll.u32 %v2406, 16
      %v2680 = vrot.slane %v2678, 5
      %v2681 = vor.u32 %v2677, %v2680
      %v2682 = vrot.slane %v2681, 4
      %v2684 = vshll.u32 %v2407, 16
      %v2686 = vrot.slane %v2684, 5
      %v2687 = vsel %vm1213, %v2682, %v2686
      %v2688 = vshrl.u32 %v2407, 16
      %v2690 = vrot.slane %v2688, 4
      %v2691 = vor.u32 %v2690, %v2686
      %v2692 = vrot.slane %v2691, 4
      %v2694 = vshll.u32 %v2428, 16
      %v2696 = vrot.slane %v2694, 5
      %v2697 = vsel %vm1213, %v2692, %v2696
      %v2699 = vshrl.u32 %v2408, 16
      %v2701 = vrot.slane %v2699, 4
      %v2702 = vshll.u32 %v2408, 16
      %v2704 = vrot.slane %v2702, 5
      %v2705 = vor.u32 %v2701, %v2704
      %v2706 = vrot.slane %v2705, 4
      %v2708 = vshll.u32 %v2409, 16
      %v2710 = vrot.slane %v2708, 5
      %v2711 = vsel %vm1213, %v2706, %v2710
      %v2712 = vshrl.u32 %v2409, 16
      %v2714 = vrot.slane %v2712, 4
      %v2715 = vor.u32 %v2714, %v2710
      %v2716 = vrot.slane %v2715, 4
      %v2718 = vshll.u32 %v2429, 16
      %v2720 = vrot.slane %v2718, 5
      %v2721 = vsel %vm1213, %v2716, %v2720
      %v2723 = vshrl.u32 %v2410, 16
      %v2725 = vrot.slane %v2723, 4
      %v2726 = vshll.u32 %v2410, 16
      %v2728 = vrot.slane %v2726, 5
      %v2729 = vor.u32 %v2725, %v2728
      %v2730 = vrot.slane %v2729, 4
      %v2732 = vshll.u32 %v2411, 16
      %v2734 = vrot.slane %v2732, 5
      %v2735 = vsel %vm1213, %v2730, %v2734
      %v2736 = vshrl.u32 %v2411, 16
      %v2738 = vrot.slane %v2736, 4
      %v2739 = vor.u32 %v2738, %v2734
      %v2740 = vrot.slane %v2739, 4
      %v2742 = vshll.u32 %v2430, 16
      %v2744 = vrot.slane %v2742, 5
      %v2745 = vsel %vm1213, %v2740, %v2744
      %v2747 = vshrl.u32 %v2412, 16
      %v2749 = vrot.slane %v2747, 4
      %v2750 = vshll.u32 %v2412, 16
      %v2752 = vrot.slane %v2750, 5
      %v2753 = vor.u32 %v2749, %v2752
      %v2754 = vrot.slane %v2753, 4
      %v2756 = vshll.u32 %v2413, 16
      %v2758 = vrot.slane %v2756, 5
      %v2759 = vsel %vm1213, %v2754, %v2758
      %v2760 = vshrl.u32 %v2413, 16
      %v2762 = vrot.slane %v2760, 4
      %v2763 = vor.u32 %v2762, %v2758
      %v2764 = vrot.slane %v2763, 4
      %v2766 = vshll.u32 %v2431, 16
      %v2768 = vrot.slane %v2766, 5
      %v2769 = vsel %vm1213, %v2764, %v2768
      %v2771 = vshrl.u32 %v2414, 16
      %v2773 = vrot.slane %v2771, 4
      %v2774 = vshll.u32 %v2414, 16
      %v2776 = vrot.slane %v2774, 5
      %v2777 = vor.u32 %v2773, %v2776
      %v2778 = vrot.slane %v2777, 4
      %v2780 = vshll.u32 %v2415, 16
      %v2782 = vrot.slane %v2780, 5
      %v2783 = vsel %vm1213, %v2778, %v2782
      %v2784 = vshrl.u32 %v2415, 16
      %v2786 = vrot.slane %v2784, 4
      %v2787 = vor.u32 %v2786, %v2782
      %v2788 = vrot.slane %v2787, 4
      %v2790 = vshll.u32 %v2432, 16
      %v2792 = vrot.slane %v2790, 5
      %v2793 = vsel %vm1213, %v2788, %v2792
      %v2795 = vshrl.u32 %v2416, 16
      %v2797 = vrot.slane %v2795, 4
      %v2798 = vshll.u32 %v2416, 16
      %v2800 = vrot.slane %v2798, 5
      %v2801 = vor.u32 %v2797, %v2800
      %v2802 = vrot.slane %v2801, 4
      %v2804 = vshll.u32 %v2417, 16
      %v2806 = vrot.slane %v2804, 5
      %v2807 = vsel %vm1213, %v2802, %v2806
      %v2808 = vshrl.u32 %v2417, 16
      %v2810 = vrot.slane %v2808, 4
      %v2811 = vor.u32 %v2810, %v2806
      %v2812 = vrot.slane %v2811, 4
      %v2814 = vshll.u32 %v2433, 16
      %v2816 = vrot.slane %v2814, 5
      %v2817 = vsel %vm1213, %v2812, %v2816
      %v2818 = vld [vmem:[%s2385] sm:$0xe]
      %v2819 = vld [vmem:[%s2385 + $0xc] sm:$0xe]
      %v2820 = vld [vmem:[%s2385 + $0x18] sm:$0xe]
      %v2821 = vld [vmem:[%s2385 + $0x24] sm:$0xe]
      %v2822 = vld [vmem:[%s2385 + $0x30] sm:$0xe]
      %v2823 = vld [vmem:[%s2385 + $0x3c] sm:$0xe]
      %v2824 = vld [vmem:[%s2385 + $0x48] sm:$0xe]
      %v2825 = vld [vmem:[%s2385 + $0x54] sm:$0xe]
      %v2826 = vld [vmem:[%s2385 + $0x60] sm:$0xe]
      %v2827 = vld [vmem:[%s2385 + $0x6c] sm:$0xe]
      %v2828 = vld [vmem:[%s2385 + $0x78] sm:$0xe]
      %v2829 = vld [vmem:[%s2385 + $0x84] sm:$0xe]
      %v2830 = vld [vmem:[%s2385 + $0x90] sm:$0xe]
      %v2831 = vld [vmem:[%s2385 + $0x9c] sm:$0xe]
      %v2832 = vld [vmem:[%s2385 + $0xa8] sm:$0xe]
      %v2833 = vld [vmem:[%s2385 + $0xb4] sm:$0xe]
      %v2882 = vrot.slane %v2818, 5
      %v2883 = vrot.slane %v2882, 4
      %v2884 = vrot.slane %v2387, 5
      %v2885 = vsel %vm1664, %v2883, %v2884
      %v2886 = vrot.slane %v2884, 4
      %v2887 = vrot.slane %v2418, 5
      %v2888 = vsel %vm1664, %v2886, %v2887
      %v2889 = vrot.slane %v2819, 5
      %v2890 = vrot.slane %v2889, 4
      %v2891 = vrot.slane %v2389, 5
      %v2892 = vsel %vm1664, %v2890, %v2891
      %v2893 = vrot.slane %v2891, 4
      %v2894 = vrot.slane %v2419, 5
      %v2895 = vsel %vm1664, %v2893, %v2894
      %v2896 = vrot.slane %v2820, 5
      %v2897 = vrot.slane %v2896, 4
      %v2898 = vrot.slane %v2391, 5
      %v2899 = vsel %vm1664, %v2897, %v2898
      %v2900 = vrot.slane %v2898, 4
      %v2901 = vrot.slane %v2420, 5
      %v2902 = vsel %vm1664, %v2900, %v2901
      %v2903 = vrot.slane %v2821, 5
      %v2904 = vrot.slane %v2903, 4
      %v2905 = vrot.slane %v2393, 5
      %v2906 = vsel %vm1664, %v2904, %v2905
      %v2907 = vrot.slane %v2905, 4
      %v2908 = vrot.slane %v2421, 5
      %v2909 = vsel %vm1664, %v2907, %v2908
      %v2910 = vrot.slane %v2822, 5
      %v2911 = vrot.slane %v2910, 4
      %v2912 = vrot.slane %v2395, 5
      %v2913 = vsel %vm1664, %v2911, %v2912
      %v2914 = vrot.slane %v2912, 4
      %v2915 = vrot.slane %v2422, 5
      %v2916 = vsel %vm1664, %v2914, %v2915
      %v2917 = vrot.slane %v2823, 5
      %v2918 = vrot.slane %v2917, 4
      %v2919 = vrot.slane %v2397, 5
      %v2920 = vsel %vm1664, %v2918, %v2919
      %v2921 = vrot.slane %v2919, 4
      %v2922 = vrot.slane %v2423, 5
      %v2923 = vsel %vm1664, %v2921, %v2922
      %v2924 = vrot.slane %v2824, 5
      %v2925 = vrot.slane %v2924, 4
      %v2926 = vrot.slane %v2399, 5
      %v2927 = vsel %vm1664, %v2925, %v2926
      %v2928 = vrot.slane %v2926, 4
      %v2929 = vrot.slane %v2424, 5
      %v2930 = vsel %vm1664, %v2928, %v2929
      %v2931 = vrot.slane %v2825, 5
      %v2932 = vrot.slane %v2931, 4
      %v2933 = vrot.slane %v2401, 5
      %v2934 = vsel %vm1664, %v2932, %v2933
      %v2935 = vrot.slane %v2933, 4
      %v2936 = vrot.slane %v2425, 5
      %v2937 = vsel %vm1664, %v2935, %v2936
      %v2938 = vrot.slane %v2826, 5
      %v2939 = vrot.slane %v2938, 4
      %v2940 = vrot.slane %v2403, 5
      %v2941 = vsel %vm1664, %v2939, %v2940
      %v2942 = vrot.slane %v2940, 4
      %v2943 = vrot.slane %v2426, 5
      %v2944 = vsel %vm1664, %v2942, %v2943
      %v2945 = vrot.slane %v2827, 5
      %v2946 = vrot.slane %v2945, 4
      %v2947 = vrot.slane %v2405, 5
      %v2948 = vsel %vm1664, %v2946, %v2947
      %v2949 = vrot.slane %v2947, 4
      %v2950 = vrot.slane %v2427, 5
      %v2951 = vsel %vm1664, %v2949, %v2950
      %v2952 = vrot.slane %v2828, 5
      %v2953 = vrot.slane %v2952, 4
      %v2954 = vrot.slane %v2407, 5
      %v2955 = vsel %vm1664, %v2953, %v2954
      %v2956 = vrot.slane %v2954, 4
      %v2957 = vrot.slane %v2428, 5
      %v2958 = vsel %vm1664, %v2956, %v2957
      %v2959 = vrot.slane %v2829, 5
      %v2960 = vrot.slane %v2959, 4
      %v2961 = vrot.slane %v2409, 5
      %v2962 = vsel %vm1664, %v2960, %v2961
      %v2963 = vrot.slane %v2961, 4
      %v2964 = vrot.slane %v2429, 5
      %v2965 = vsel %vm1664, %v2963, %v2964
      %v2966 = vrot.slane %v2830, 5
      %v2967 = vrot.slane %v2966, 4
      %v2968 = vrot.slane %v2411, 5
      %v2969 = vsel %vm1664, %v2967, %v2968
      %v2970 = vrot.slane %v2968, 4
      %v2971 = vrot.slane %v2430, 5
      %v2972 = vsel %vm1664, %v2970, %v2971
      %v2973 = vrot.slane %v2831, 5
      %v2974 = vrot.slane %v2973, 4
      %v2975 = vrot.slane %v2413, 5
      %v2976 = vsel %vm1664, %v2974, %v2975
      %v2977 = vrot.slane %v2975, 4
      %v2978 = vrot.slane %v2431, 5
      %v2979 = vsel %vm1664, %v2977, %v2978
      %v2980 = vrot.slane %v2832, 5
      %v2981 = vrot.slane %v2980, 4
      %v2982 = vrot.slane %v2415, 5
      %v2983 = vsel %vm1664, %v2981, %v2982
      %v2984 = vrot.slane %v2982, 4
      %v2985 = vrot.slane %v2432, 5
      %v2986 = vsel %vm1664, %v2984, %v2985
      %v2987 = vrot.slane %v2833, 5
      %v2988 = vrot.slane %v2987, 4
      %v2989 = vrot.slane %v2417, 5
      %v2990 = vsel %vm1664, %v2988, %v2989
      %v2991 = vrot.slane %v2989, 4
      %v2992 = vrot.slane %v2433, 5
      %v2993 = vsel %vm1664, %v2991, %v2992
      %v3010 = vunpack.c.l.b16 %v1163
      %v3011 = vunpack.c.l.b16 %v1164
      %v3012 = vunpack.c.l.b16 %v1165
      %v3013 = vunpack.c.l.b16 %v1166
      %v3014 = vunpack.c.l.b16 %v1167
      %v3015 = vunpack.c.l.b16 %v1168
      %v3016 = vunpack.c.l.b16 %v1169
      %v3017 = vunpack.c.l.b16 %v1170
      %v3018 = vunpack.c.l.b16 %v1171
      %v3019 = vunpack.c.l.b16 %v1172
      %v3020 = vunpack.c.l.b16 %v1173
      %v3021 = vunpack.c.l.b16 %v1174
      %v3022 = vunpack.c.l.b16 %v1175
      %v3023 = vunpack.c.l.b16 %v1176
      %v3024 = vunpack.c.l.b16 %v1177
      %v3025 = vunpack.c.l.b16 %v1178
      %v3026 = vunpack.c.l.b16 %v1179
      %v3027 = vunpack.c.l.b16 %v1180
      %v3028 = vunpack.c.l.b16 %v1181
      %v3029 = vunpack.c.l.b16 %v1182
      %v3030 = vunpack.c.l.b16 %v1183
      %v3031 = vunpack.c.l.b16 %v1184
      %v3032 = vunpack.c.l.b16 %v1185
      %v3033 = vunpack.c.l.b16 %v1186
      %v3034 = vunpack.c.l.b16 %v1187
      %v3035 = vunpack.c.l.b16 %v1188
      %v3036 = vunpack.c.l.b16 %v1189
      %v3037 = vunpack.c.l.b16 %v1190
      %v3038 = vunpack.c.l.b16 %v1191
      %v3039 = vunpack.c.l.b16 %v1192
      %v3040 = vunpack.c.l.b16 %v1193
      %v3041 = vunpack.c.l.b16 %v1194
      %v3042 = vpack.c.b16 %v3011, %v3010
      %v3043 = vpack.c.b16 %v3013, %v3012
      %v3044 = vpack.c.b16 %v3015, %v3014
      %v3045 = vpack.c.b16 %v3017, %v3016
      %v3046 = vpack.c.b16 %v3019, %v3018
      %v3047 = vpack.c.b16 %v3021, %v3020
      %v3048 = vpack.c.b16 %v3023, %v3022
      %v3049 = vpack.c.b16 %v3025, %v3024
      %v3050 = vpack.c.b16 %v3027, %v3026
      %v3051 = vpack.c.b16 %v3029, %v3028
      %v3052 = vpack.c.b16 %v3031, %v3030
      %v3053 = vpack.c.b16 %v3033, %v3032
      %v3054 = vpack.c.b16 %v3035, %v3034
      %v3055 = vpack.c.b16 %v3037, %v3036
      %v3056 = vpack.c.b16 %v3039, %v3038
      %v3057 = vpack.c.b16 %v3041, %v3040
      %v3058 = vunpack.c.l.b16 %v1227
      %v3059 = vunpack.c.l.b16 %v1237
      %v3060 = vunpack.c.l.b16 %v1251
      %v3061 = vunpack.c.l.b16 %v1261
      %v3062 = vunpack.c.l.b16 %v1275
      %v3063 = vunpack.c.l.b16 %v1285
      %v3064 = vunpack.c.l.b16 %v1299
      %v3065 = vunpack.c.l.b16 %v1309
      %v3066 = vunpack.c.l.b16 %v1323
      %v3067 = vunpack.c.l.b16 %v1333
      %v3068 = vunpack.c.l.b16 %v1347
      %v3069 = vunpack.c.l.b16 %v1357
      %v3070 = vunpack.c.l.b16 %v1371
      %v3071 = vunpack.c.l.b16 %v1381
      %v3072 = vunpack.c.l.b16 %v1395
      %v3073 = vunpack.c.l.b16 %v1405
      %v3074 = vunpack.c.l.b16 %v1419
      %v3075 = vunpack.c.l.b16 %v1429
      %v3076 = vunpack.c.l.b16 %v1443
      %v3077 = vunpack.c.l.b16 %v1453
      %v3078 = vunpack.c.l.b16 %v1467
      %v3079 = vunpack.c.l.b16 %v1477
      %v3080 = vunpack.c.l.b16 %v1491
      %v3081 = vunpack.c.l.b16 %v1501
      %v3082 = vunpack.c.l.b16 %v1515
      %v3083 = vunpack.c.l.b16 %v1525
      %v3084 = vunpack.c.l.b16 %v1539
      %v3085 = vunpack.c.l.b16 %v1549
      %v3086 = vunpack.c.l.b16 %v1563
      %v3087 = vunpack.c.l.b16 %v1573
      %v3088 = vunpack.c.l.b16 %v1587
      %v3089 = vunpack.c.l.b16 %v1597
      %v3090 = vpack.c.b16 %v3059, %v3058
      %v3091 = vpack.c.b16 %v3061, %v3060
      %v3092 = vpack.c.b16 %v3063, %v3062
      %v3093 = vpack.c.b16 %v3065, %v3064
      %v3094 = vpack.c.b16 %v3067, %v3066
      %v3095 = vpack.c.b16 %v3069, %v3068
      %v3096 = vpack.c.b16 %v3071, %v3070
      %v3097 = vpack.c.b16 %v3073, %v3072
      %v3098 = vpack.c.b16 %v3075, %v3074
      %v3099 = vpack.c.b16 %v3077, %v3076
      %v3100 = vpack.c.b16 %v3079, %v3078
      %v3101 = vpack.c.b16 %v3081, %v3080
      %v3102 = vpack.c.b16 %v3083, %v3082
      %v3103 = vpack.c.b16 %v3085, %v3084
      %v3104 = vpack.c.b16 %v3087, %v3086
      %v3105 = vpack.c.b16 %v3089, %v3088
      %3106 = vrot.lane.b32.xlu0 %v3090, 8
      %v3107 = vpop.permute.xlu0 %3106
      %3108 = vrot.lane.b32.xlu0 %v3091, 8
      %v3109 = vpop.permute.xlu0 %3108
      %3110 = vrot.lane.b32.xlu0 %v3092, 8
      %v3111 = vpop.permute.xlu0 %3110
      %3112 = vrot.lane.b32.xlu0 %v3093, 8
      %v3113 = vpop.permute.xlu0 %3112
      %3114 = vrot.lane.b32.xlu0 %v3094, 8
      %v3115 = vpop.permute.xlu0 %3114
      %3116 = vrot.lane.b32.xlu0 %v3095, 8
      %v3117 = vpop.permute.xlu0 %3116
      %3118 = vrot.lane.b32.xlu0 %v3096, 8
      %v3119 = vpop.permute.xlu0 %3118
      %3120 = vrot.lane.b32.xlu0 %v3097, 8
      %v3121 = vpop.permute.xlu0 %3120
      %3122 = vrot.lane.b32.xlu0 %v3098, 8
      %v3123 = vpop.permute.xlu0 %3122
      %3124 = vrot.lane.b32.xlu0 %v3099, 8
      %v3125 = vpop.permute.xlu0 %3124
      %3126 = vrot.lane.b32.xlu0 %v3100, 8
      %v3127 = vpop.permute.xlu0 %3126
      %3128 = vrot.lane.b32.xlu0 %v3101, 8
      %v3129 = vpop.permute.xlu0 %3128
      %3130 = vrot.lane.b32.xlu0 %v3102, 8
      %v3131 = vpop.permute.xlu0 %3130
      %3132 = vrot.lane.b32.xlu0 %v3103, 8
      %v3133 = vpop.permute.xlu0 %3132
      %3134 = vrot.lane.b32.xlu0 %v3104, 8
      %v3135 = vpop.permute.xlu0 %3134
      %3136 = vrot.lane.b32.xlu0 %v3105, 8
      %v3137 = vpop.permute.xlu0 %3136
      %v3138 = vunpack.c.l.b16 %v1668
      %v3139 = vunpack.c.l.b16 %v1671
      %v3140 = vunpack.c.l.b16 %v1675
      %v3141 = vunpack.c.l.b16 %v1678
      %v3142 = vunpack.c.l.b16 %v1682
      %v3143 = vunpack.c.l.b16 %v1685
      %v3144 = vunpack.c.l.b16 %v1689
      %v3145 = vunpack.c.l.b16 %v1692
      %v3146 = vunpack.c.l.b16 %v1696
      %v3147 = vunpack.c.l.b16 %v1699
      %v3148 = vunpack.c.l.b16 %v1703
      %v3149 = vunpack.c.l.b16 %v1706
      %v3150 = vunpack.c.l.b16 %v1710
      %v3151 = vunpack.c.l.b16 %v1713
      %v3152 = vunpack.c.l.b16 %v1717
      %v3153 = vunpack.c.l.b16 %v1720
      %v3154 = vunpack.c.l.b16 %v1724
      %v3155 = vunpack.c.l.b16 %v1727
      %v3156 = vunpack.c.l.b16 %v1731
      %v3157 = vunpack.c.l.b16 %v1734
      %v3158 = vunpack.c.l.b16 %v1738
      %v3159 = vunpack.c.l.b16 %v1741
      %v3160 = vunpack.c.l.b16 %v1745
      %v3161 = vunpack.c.l.b16 %v1748
      %v3162 = vunpack.c.l.b16 %v1752
      %v3163 = vunpack.c.l.b16 %v1755
      %v3164 = vunpack.c.l.b16 %v1759
      %v3165 = vunpack.c.l.b16 %v1762
      %v3166 = vunpack.c.l.b16 %v1766
      %v3167 = vunpack.c.l.b16 %v1769
      %v3168 = vunpack.c.l.b16 %v1773
      %v3169 = vunpack.c.l.b16 %v1776
      %v3170 = vpack.c.b16 %v3139, %v3138
      %v3171 = vpack.c.b16 %v3141, %v3140
      %v3172 = vpack.c.b16 %v3143, %v3142
      %v3173 = vpack.c.b16 %v3145, %v3144
      %v3174 = vpack.c.b16 %v3147, %v3146
      %v3175 = vpack.c.b16 %v3149, %v3148
      %v3176 = vpack.c.b16 %v3151, %v3150
      %v3177 = vpack.c.b16 %v3153, %v3152
      %v3178 = vpack.c.b16 %v3155, %v3154
      %v3179 = vpack.c.b16 %v3157, %v3156
      %v3180 = vpack.c.b16 %v3159, %v3158
      %v3181 = vpack.c.b16 %v3161, %v3160
      %v3182 = vpack.c.b16 %v3163, %v3162
      %v3183 = vpack.c.b16 %v3165, %v3164
      %v3184 = vpack.c.b16 %v3167, %v3166
      %v3185 = vpack.c.b16 %v3169, %v3168
      %3186 = vrot.lane.b32.xlu0 %v3170, 16
      %v3187 = vpop.permute.xlu0 %3186
      %3188 = vrot.lane.b32.xlu0 %v3171, 16
      %v3189 = vpop.permute.xlu0 %3188
      %3190 = vrot.lane.b32.xlu0 %v3172, 16
      %v3191 = vpop.permute.xlu0 %3190
      %3192 = vrot.lane.b32.xlu0 %v3173, 16
      %v3193 = vpop.permute.xlu0 %3192
      %3194 = vrot.lane.b32.xlu0 %v3174, 16
      %v3195 = vpop.permute.xlu0 %3194
      %3196 = vrot.lane.b32.xlu0 %v3175, 16
      %v3197 = vpop.permute.xlu0 %3196
      %3198 = vrot.lane.b32.xlu0 %v3176, 16
      %v3199 = vpop.permute.xlu0 %3198
      %3200 = vrot.lane.b32.xlu0 %v3177, 16
      %v3201 = vpop.permute.xlu0 %3200
      %3202 = vrot.lane.b32.xlu0 %v3178, 16
      %v3203 = vpop.permute.xlu0 %3202
      %3204 = vrot.lane.b32.xlu0 %v3179, 16
      %v3205 = vpop.permute.xlu0 %3204
      %3206 = vrot.lane.b32.xlu0 %v3180, 16
      %v3207 = vpop.permute.xlu0 %3206
      %3208 = vrot.lane.b32.xlu0 %v3181, 16
      %v3209 = vpop.permute.xlu0 %3208
      %3210 = vrot.lane.b32.xlu0 %v3182, 16
      %v3211 = vpop.permute.xlu0 %3210
      %3212 = vrot.lane.b32.xlu0 %v3183, 16
      %v3213 = vpop.permute.xlu0 %3212
      %3214 = vrot.lane.b32.xlu0 %v3184, 16
      %v3215 = vpop.permute.xlu0 %3214
      %3216 = vrot.lane.b32.xlu0 %v3185, 16
      %v3217 = vpop.permute.xlu0 %3216
      %v3234 = vunpack.c.l.b16 %v1777
      %v3235 = vunpack.c.l.b16 %v1778
      %v3236 = vunpack.c.l.b16 %v1779
      %v3237 = vunpack.c.l.b16 %v1780
      %v3238 = vunpack.c.l.b16 %v1781
      %v3239 = vunpack.c.l.b16 %v1782
      %v3240 = vunpack.c.l.b16 %v1783
      %v3241 = vunpack.c.l.b16 %v1784
      %v3242 = vunpack.c.l.b16 %v1785
      %v3243 = vunpack.c.l.b16 %v1786
      %v3244 = vunpack.c.l.b16 %v1787
      %v3245 = vunpack.c.l.b16 %v1788
      %v3246 = vunpack.c.l.b16 %v1789
      %v3247 = vunpack.c.l.b16 %v1790
      %v3248 = vunpack.c.l.b16 %v1791
      %v3249 = vunpack.c.l.b16 %v1792
      %v3250 = vunpack.c.l.b16 %v1793
      %v3251 = vunpack.c.l.b16 %v1794
      %v3252 = vunpack.c.l.b16 %v1795
      %v3253 = vunpack.c.l.b16 %v1796
      %v3254 = vunpack.c.l.b16 %v1797
      %v3255 = vunpack.c.l.b16 %v1798
      %v3256 = vunpack.c.l.b16 %v1799
      %v3257 = vunpack.c.l.b16 %v1800
      %v3258 = vunpack.c.l.b16 %v1801
      %v3259 = vunpack.c.l.b16 %v1802
      %v3260 = vunpack.c.l.b16 %v1803
      %v3261 = vunpack.c.l.b16 %v1804
      %v3262 = vunpack.c.l.b16 %v1805
      %v3263 = vunpack.c.l.b16 %v1806
      %v3264 = vunpack.c.l.b16 %v1807
      %v3265 = vunpack.c.l.b16 %v1808
      %v3266 = vpack.c.b16 %v3235, %v3234
      %v3267 = vpack.c.b16 %v3237, %v3236
      %v3268 = vpack.c.b16 %v3239, %v3238
      %v3269 = vpack.c.b16 %v3241, %v3240
      %v3270 = vpack.c.b16 %v3243, %v3242
      %v3271 = vpack.c.b16 %v3245, %v3244
      %v3272 = vpack.c.b16 %v3247, %v3246
      %v3273 = vpack.c.b16 %v3249, %v3248
      %v3274 = vpack.c.b16 %v3251, %v3250
      %v3275 = vpack.c.b16 %v3253, %v3252
      %v3276 = vpack.c.b16 %v3255, %v3254
      %v3277 = vpack.c.b16 %v3257, %v3256
      %v3278 = vpack.c.b16 %v3259, %v3258
      %v3279 = vpack.c.b16 %v3261, %v3260
      %v3280 = vpack.c.b16 %v3263, %v3262
      %v3281 = vpack.c.b16 %v3265, %v3264
      %3282 = vrot.lane.b32.xlu0 %v3266, 24
      %v3283 = vpop.permute.xlu0 %3282
      %3284 = vrot.lane.b32.xlu0 %v3267, 24
      %v3285 = vpop.permute.xlu0 %3284
      %3286 = vrot.lane.b32.xlu0 %v3268, 24
      %v3287 = vpop.permute.xlu0 %3286
      %3288 = vrot.lane.b32.xlu0 %v3269, 24
      %v3289 = vpop.permute.xlu0 %3288
      %3290 = vrot.lane.b32.xlu0 %v3270, 24
      %v3291 = vpop.permute.xlu0 %3290
      %3292 = vrot.lane.b32.xlu0 %v3271, 24
      %v3293 = vpop.permute.xlu0 %3292
      %3294 = vrot.lane.b32.xlu0 %v3272, 24
      %v3295 = vpop.permute.xlu0 %3294
      %3296 = vrot.lane.b32.xlu0 %v3273, 24
      %v3297 = vpop.permute.xlu0 %3296
      %3298 = vrot.lane.b32.xlu0 %v3274, 24
      %v3299 = vpop.permute.xlu0 %3298
      %3300 = vrot.lane.b32.xlu0 %v3275, 24
      %v3301 = vpop.permute.xlu0 %3300
      %3302 = vrot.lane.b32.xlu0 %v3276, 24
      %v3303 = vpop.permute.xlu0 %3302
      %3304 = vrot.lane.b32.xlu0 %v3277, 24
      %v3305 = vpop.permute.xlu0 %3304
      %3306 = vrot.lane.b32.xlu0 %v3278, 24
      %v3307 = vpop.permute.xlu0 %3306
      %3308 = vrot.lane.b32.xlu0 %v3279, 24
      %v3309 = vpop.permute.xlu0 %3308
      %3310 = vrot.lane.b32.xlu0 %v3280, 24
      %v3311 = vpop.permute.xlu0 %3310
      %3312 = vrot.lane.b32.xlu0 %v3281, 24
      %v3313 = vpop.permute.xlu0 %3312
      %v3314 = vunpack.c.l.b16 %v1838
      %v3315 = vunpack.c.l.b16 %v1848
      %v3316 = vunpack.c.l.b16 %v1862
      %v3317 = vunpack.c.l.b16 %v1872
      %v3318 = vunpack.c.l.b16 %v1886
      %v3319 = vunpack.c.l.b16 %v1896
      %v3320 = vunpack.c.l.b16 %v1910
      %v3321 = vunpack.c.l.b16 %v1920
      %v3322 = vunpack.c.l.b16 %v1934
      %v3323 = vunpack.c.l.b16 %v1944
      %v3324 = vunpack.c.l.b16 %v1958
      %v3325 = vunpack.c.l.b16 %v1968
      %v3326 = vunpack.c.l.b16 %v1982
      %v3327 = vunpack.c.l.b16 %v1992
      %v3328 = vunpack.c.l.b16 %v2006
      %v3329 = vunpack.c.l.b16 %v2016
      %v3330 = vunpack.c.l.b16 %v2030
      %v3331 = vunpack.c.l.b16 %v2040
      %v3332 = vunpack.c.l.b16 %v2054
      %v3333 = vunpack.c.l.b16 %v2064
      %v3334 = vunpack.c.l.b16 %v2078
      %v3335 = vunpack.c.l.b16 %v2088
      %v3336 = vunpack.c.l.b16 %v2102
      %v3337 = vunpack.c.l.b16 %v2112
      %v3338 = vunpack.c.l.b16 %v2126
      %v3339 = vunpack.c.l.b16 %v2136
      %v3340 = vunpack.c.l.b16 %v2150
      %v3341 = vunpack.c.l.b16 %v2160
      %v3342 = vunpack.c.l.b16 %v2174
      %v3343 = vunpack.c.l.b16 %v2184
      %v3344 = vunpack.c.l.b16 %v2198
      %v3345 = vunpack.c.l.b16 %v2208
      %v3346 = vpack.c.b16 %v3315, %v3314
      %v3347 = vpack.c.b16 %v3317, %v3316
      %v3348 = vpack.c.b16 %v3319, %v3318
      %v3349 = vpack.c.b16 %v3321, %v3320
      %v3350 = vpack.c.b16 %v3323, %v3322
      %v3351 = vpack.c.b16 %v3325, %v3324
      %v3352 = vpack.c.b16 %v3327, %v3326
      %v3353 = vpack.c.b16 %v3329, %v3328
      %v3354 = vpack.c.b16 %v3331, %v3330
      %v3355 = vpack.c.b16 %v3333, %v3332
      %v3356 = vpack.c.b16 %v3335, %v3334
      %v3357 = vpack.c.b16 %v3337, %v3336
      %v3358 = vpack.c.b16 %v3339, %v3338
      %v3359 = vpack.c.b16 %v3341, %v3340
      %v3360 = vpack.c.b16 %v3343, %v3342
      %v3361 = vpack.c.b16 %v3345, %v3344
      %3362 = vrot.lane.b32.xlu0 %v3346, 32
      %v3363 = vpop.permute.xlu0 %3362
      %3364 = vrot.lane.b32.xlu0 %v3347, 32
      %v3365 = vpop.permute.xlu0 %3364
      %3366 = vrot.lane.b32.xlu0 %v3348, 32
      %v3367 = vpop.permute.xlu0 %3366
      %3368 = vrot.lane.b32.xlu0 %v3349, 32
      %v3369 = vpop.permute.xlu0 %3368
      %3370 = vrot.lane.b32.xlu0 %v3350, 32
      %v3371 = vpop.permute.xlu0 %3370
      %3372 = vrot.lane.b32.xlu0 %v3351, 32
      %v3373 = vpop.permute.xlu0 %3372
      %3374 = vrot.lane.b32.xlu0 %v3352, 32
      %v3375 = vpop.permute.xlu0 %3374
      %3376 = vrot.lane.b32.xlu0 %v3353, 32
      %v3377 = vpop.permute.xlu0 %3376
      %3378 = vrot.lane.b32.xlu0 %v3354, 32
      %v3379 = vpop.permute.xlu0 %3378
      %3380 = vrot.lane.b32.xlu0 %v3355, 32
      %v3381 = vpop.permute.xlu0 %3380
      %3382 = vrot.lane.b32.xlu0 %v3356, 32
      %v3383 = vpop.permute.xlu0 %3382
      %3384 = vrot.lane.b32.xlu0 %v3357, 32
      %v3385 = vpop.permute.xlu0 %3384
      %3386 = vrot.lane.b32.xlu0 %v3358, 32
      %v3387 = vpop.permute.xlu0 %3386
      %3388 = vrot.lane.b32.xlu0 %v3359, 32
      %v3389 = vpop.permute.xlu0 %3388
      %3390 = vrot.lane.b32.xlu0 %v3360, 32
      %v3391 = vpop.permute.xlu0 %3390
      %3392 = vrot.lane.b32.xlu0 %v3361, 32
      %v3393 = vpop.permute.xlu0 %3392
      %v3394 = vunpack.c.l.b16 %v2276
      %v3395 = vunpack.c.l.b16 %v2279
      %v3396 = vunpack.c.l.b16 %v2283
      %v3397 = vunpack.c.l.b16 %v2286
      %v3398 = vunpack.c.l.b16 %v2290
      %v3399 = vunpack.c.l.b16 %v2293
      %v3400 = vunpack.c.l.b16 %v2297
      %v3401 = vunpack.c.l.b16 %v2300
      %v3402 = vunpack.c.l.b16 %v2304
      %v3403 = vunpack.c.l.b16 %v2307
      %v3404 = vunpack.c.l.b16 %v2311
      %v3405 = vunpack.c.l.b16 %v2314
      %v3406 = vunpack.c.l.b16 %v2318
      %v3407 = vunpack.c.l.b16 %v2321
      %v3408 = vunpack.c.l.b16 %v2325
      %v3409 = vunpack.c.l.b16 %v2328
      %v3410 = vunpack.c.l.b16 %v2332
      %v3411 = vunpack.c.l.b16 %v2335
      %v3412 = vunpack.c.l.b16 %v2339
      %v3413 = vunpack.c.l.b16 %v2342
      %v3414 = vunpack.c.l.b16 %v2346
      %v3415 = vunpack.c.l.b16 %v2349
      %v3416 = vunpack.c.l.b16 %v2353
      %v3417 = vunpack.c.l.b16 %v2356
      %v3418 = vunpack.c.l.b16 %v2360
      %v3419 = vunpack.c.l.b16 %v2363
      %v3420 = vunpack.c.l.b16 %v2367
      %v3421 = vunpack.c.l.b16 %v2370
      %v3422 = vunpack.c.l.b16 %v2374
      %v3423 = vunpack.c.l.b16 %v2377
      %v3424 = vunpack.c.l.b16 %v2381
      %v3425 = vunpack.c.l.b16 %v2384
      %v3426 = vpack.c.b16 %v3395, %v3394
      %v3427 = vpack.c.b16 %v3397, %v3396
      %v3428 = vpack.c.b16 %v3399, %v3398
      %v3429 = vpack.c.b16 %v3401, %v3400
      %v3430 = vpack.c.b16 %v3403, %v3402
      %v3431 = vpack.c.b16 %v3405, %v3404
      %v3432 = vpack.c.b16 %v3407, %v3406
      %v3433 = vpack.c.b16 %v3409, %v3408
      %v3434 = vpack.c.b16 %v3411, %v3410
      %v3435 = vpack.c.b16 %v3413, %v3412
      %v3436 = vpack.c.b16 %v3415, %v3414
      %v3437 = vpack.c.b16 %v3417, %v3416
      %v3438 = vpack.c.b16 %v3419, %v3418
      %v3439 = vpack.c.b16 %v3421, %v3420
      %v3440 = vpack.c.b16 %v3423, %v3422
      %v3441 = vpack.c.b16 %v3425, %v3424
      %3442 = vrot.lane.b32.xlu0 %v3426, 40
      %v3443 = vpop.permute.xlu0 %3442
      %3444 = vrot.lane.b32.xlu0 %v3427, 40
      %v3445 = vpop.permute.xlu0 %3444
      %3446 = vrot.lane.b32.xlu0 %v3428, 40
      %v3447 = vpop.permute.xlu0 %3446
      %3448 = vrot.lane.b32.xlu0 %v3429, 40
      %v3449 = vpop.permute.xlu0 %3448
      %3450 = vrot.lane.b32.xlu0 %v3430, 40
      %v3451 = vpop.permute.xlu0 %3450
      %3452 = vrot.lane.b32.xlu0 %v3431, 40
      %v3453 = vpop.permute.xlu0 %3452
      %3454 = vrot.lane.b32.xlu0 %v3432, 40
      %v3455 = vpop.permute.xlu0 %3454
      %3456 = vrot.lane.b32.xlu0 %v3433, 40
      %v3457 = vpop.permute.xlu0 %3456
      %3458 = vrot.lane.b32.xlu0 %v3434, 40
      %v3459 = vpop.permute.xlu0 %3458
      %3460 = vrot.lane.b32.xlu0 %v3435, 40
      %v3461 = vpop.permute.xlu0 %3460
      %3462 = vrot.lane.b32.xlu0 %v3436, 40
      %v3463 = vpop.permute.xlu0 %3462
      %3464 = vrot.lane.b32.xlu0 %v3437, 40
      %v3465 = vpop.permute.xlu0 %3464
      %3466 = vrot.lane.b32.xlu0 %v3438, 40
      %v3467 = vpop.permute.xlu0 %3466
      %3468 = vrot.lane.b32.xlu0 %v3439, 40
      %v3469 = vpop.permute.xlu0 %3468
      %3470 = vrot.lane.b32.xlu0 %v3440, 40
      %v3471 = vpop.permute.xlu0 %3470
      %3472 = vrot.lane.b32.xlu0 %v3441, 40
      %v3473 = vpop.permute.xlu0 %3472
      %v3490 = vunpack.c.l.b16 %v2386
      %v3491 = vunpack.c.l.b16 %v2387
      %v3492 = vunpack.c.l.b16 %v2388
      %v3493 = vunpack.c.l.b16 %v2389
      %v3494 = vunpack.c.l.b16 %v2390
      %v3495 = vunpack.c.l.b16 %v2391
      %v3496 = vunpack.c.l.b16 %v2392
      %v3497 = vunpack.c.l.b16 %v2393
      %v3498 = vunpack.c.l.b16 %v2394
      %v3499 = vunpack.c.l.b16 %v2395
      %v3500 = vunpack.c.l.b16 %v2396
      %v3501 = vunpack.c.l.b16 %v2397
      %v3502 = vunpack.c.l.b16 %v2398
      %v3503 = vunpack.c.l.b16 %v2399
      %v3504 = vunpack.c.l.b16 %v2400
      %v3505 = vunpack.c.l.b16 %v2401
      %v3506 = vunpack.c.l.b16 %v2402
      %v3507 = vunpack.c.l.b16 %v2403
      %v3508 = vunpack.c.l.b16 %v2404
      %v3509 = vunpack.c.l.b16 %v2405
      %v3510 = vunpack.c.l.b16 %v2406
      %v3511 = vunpack.c.l.b16 %v2407
      %v3512 = vunpack.c.l.b16 %v2408
      %v3513 = vunpack.c.l.b16 %v2409
      %v3514 = vunpack.c.l.b16 %v2410
      %v3515 = vunpack.c.l.b16 %v2411
      %v3516 = vunpack.c.l.b16 %v2412
      %v3517 = vunpack.c.l.b16 %v2413
      %v3518 = vunpack.c.l.b16 %v2414
      %v3519 = vunpack.c.l.b16 %v2415
      %v3520 = vunpack.c.l.b16 %v2416
      %v3521 = vunpack.c.l.b16 %v2417
      %v3522 = vpack.c.b16 %v3491, %v3490
      %v3523 = vpack.c.b16 %v3493, %v3492
      %v3524 = vpack.c.b16 %v3495, %v3494
      %v3525 = vpack.c.b16 %v3497, %v3496
      %v3526 = vpack.c.b16 %v3499, %v3498
      %v3527 = vpack.c.b16 %v3501, %v3500
      %v3528 = vpack.c.b16 %v3503, %v3502
      %v3529 = vpack.c.b16 %v3505, %v3504
      %v3530 = vpack.c.b16 %v3507, %v3506
      %v3531 = vpack.c.b16 %v3509, %v3508
      %v3532 = vpack.c.b16 %v3511, %v3510
      %v3533 = vpack.c.b16 %v3513, %v3512
      %v3534 = vpack.c.b16 %v3515, %v3514
      %v3535 = vpack.c.b16 %v3517, %v3516
      %v3536 = vpack.c.b16 %v3519, %v3518
      %v3537 = vpack.c.b16 %v3521, %v3520
      %3538 = vrot.lane.b32.xlu0 %v3522, 48
      %v3539 = vpop.permute.xlu0 %3538
      %3540 = vrot.lane.b32.xlu0 %v3523, 48
      %v3541 = vpop.permute.xlu0 %3540
      %3542 = vrot.lane.b32.xlu0 %v3524, 48
      %v3543 = vpop.permute.xlu0 %3542
      %3544 = vrot.lane.b32.xlu0 %v3525, 48
      %v3545 = vpop.permute.xlu0 %3544
      %3546 = vrot.lane.b32.xlu0 %v3526, 48
      %v3547 = vpop.permute.xlu0 %3546
      %3548 = vrot.lane.b32.xlu0 %v3527, 48
      %v3549 = vpop.permute.xlu0 %3548
      %3550 = vrot.lane.b32.xlu0 %v3528, 48
      %v3551 = vpop.permute.xlu0 %3550
      %3552 = vrot.lane.b32.xlu0 %v3529, 48
      %v3553 = vpop.permute.xlu0 %3552
      %3554 = vrot.lane.b32.xlu0 %v3530, 48
      %v3555 = vpop.permute.xlu0 %3554
      %3556 = vrot.lane.b32.xlu0 %v3531, 48
      %v3557 = vpop.permute.xlu0 %3556
      %3558 = vrot.lane.b32.xlu0 %v3532, 48
      %v3559 = vpop.permute.xlu0 %3558
      %3560 = vrot.lane.b32.xlu0 %v3533, 48
      %v3561 = vpop.permute.xlu0 %3560
      %3562 = vrot.lane.b32.xlu0 %v3534, 48
      %v3563 = vpop.permute.xlu0 %3562
      %3564 = vrot.lane.b32.xlu0 %v3535, 48
      %v3565 = vpop.permute.xlu0 %3564
      %3566 = vrot.lane.b32.xlu0 %v3536, 48
      %v3567 = vpop.permute.xlu0 %3566
      %3568 = vrot.lane.b32.xlu0 %v3537, 48
      %v3569 = vpop.permute.xlu0 %3568
      %v3570 = vunpack.c.l.b16 %v2447
      %v3571 = vunpack.c.l.b16 %v2457
      %v3572 = vunpack.c.l.b16 %v2471
      %v3573 = vunpack.c.l.b16 %v2481
      %v3574 = vunpack.c.l.b16 %v2495
      %v3575 = vunpack.c.l.b16 %v2505
      %v3576 = vunpack.c.l.b16 %v2519
      %v3577 = vunpack.c.l.b16 %v2529
      %v3578 = vunpack.c.l.b16 %v2543
      %v3579 = vunpack.c.l.b16 %v2553
      %v3580 = vunpack.c.l.b16 %v2567
      %v3581 = vunpack.c.l.b16 %v2577
      %v3582 = vunpack.c.l.b16 %v2591
      %v3583 = vunpack.c.l.b16 %v2601
      %v3584 = vunpack.c.l.b16 %v2615
      %v3585 = vunpack.c.l.b16 %v2625
      %v3586 = vunpack.c.l.b16 %v2639
      %v3587 = vunpack.c.l.b16 %v2649
      %v3588 = vunpack.c.l.b16 %v2663
      %v3589 = vunpack.c.l.b16 %v2673
      %v3590 = vunpack.c.l.b16 %v2687
      %v3591 = vunpack.c.l.b16 %v2697
      %v3592 = vunpack.c.l.b16 %v2711
      %v3593 = vunpack.c.l.b16 %v2721
      %v3594 = vunpack.c.l.b16 %v2735
      %v3595 = vunpack.c.l.b16 %v2745
      %v3596 = vunpack.c.l.b16 %v2759
      %v3597 = vunpack.c.l.b16 %v2769
      %v3598 = vunpack.c.l.b16 %v2783
      %v3599 = vunpack.c.l.b16 %v2793
      %v3600 = vunpack.c.l.b16 %v2807
      %v3601 = vunpack.c.l.b16 %v2817
      %v3602 = vpack.c.b16 %v3571, %v3570
      %v3603 = vpack.c.b16 %v3573, %v3572
      %v3604 = vpack.c.b16 %v3575, %v3574
      %v3605 = vpack.c.b16 %v3577, %v3576
      %v3606 = vpack.c.b16 %v3579, %v3578
      %v3607 = vpack.c.b16 %v3581, %v3580
      %v3608 = vpack.c.b16 %v3583, %v3582
      %v3609 = vpack.c.b16 %v3585, %v3584
      %v3610 = vpack.c.b16 %v3587, %v3586
      %v3611 = vpack.c.b16 %v3589, %v3588
      %v3612 = vpack.c.b16 %v3591, %v3590
      %v3613 = vpack.c.b16 %v3593, %v3592
      %v3614 = vpack.c.b16 %v3595, %v3594
      %v3615 = vpack.c.b16 %v3597, %v3596
      %v3616 = vpack.c.b16 %v3599, %v3598
      %v3617 = vpack.c.b16 %v3601, %v3600
      %3618 = vrot.lane.b32.xlu0 %v3602, 56
      %v3619 = vpop.permute.xlu0 %3618
      %3620 = vrot.lane.b32.xlu0 %v3603, 56
      %v3621 = vpop.permute.xlu0 %3620
      %3622 = vrot.lane.b32.xlu0 %v3604, 56
      %v3623 = vpop.permute.xlu0 %3622
      %3624 = vrot.lane.b32.xlu0 %v3605, 56
      %v3625 = vpop.permute.xlu0 %3624
      %3626 = vrot.lane.b32.xlu0 %v3606, 56
      %v3627 = vpop.permute.xlu0 %3626
      %3628 = vrot.lane.b32.xlu0 %v3607, 56
      %v3629 = vpop.permute.xlu0 %3628
      %3630 = vrot.lane.b32.xlu0 %v3608, 56
      %v3631 = vpop.permute.xlu0 %3630
      %3632 = vrot.lane.b32.xlu0 %v3609, 56
      %v3633 = vpop.permute.xlu0 %3632
      %3634 = vrot.lane.b32.xlu0 %v3610, 56
      %v3635 = vpop.permute.xlu0 %3634
      %3636 = vrot.lane.b32.xlu0 %v3611, 56
      %v3637 = vpop.permute.xlu0 %3636
      %3638 = vrot.lane.b32.xlu0 %v3612, 56
      %v3639 = vpop.permute.xlu0 %3638
      %3640 = vrot.lane.b32.xlu0 %v3613, 56
      %v3641 = vpop.permute.xlu0 %3640
      %3642 = vrot.lane.b32.xlu0 %v3614, 56
      %v3643 = vpop.permute.xlu0 %3642
      %3644 = vrot.lane.b32.xlu0 %v3615, 56
      %v3645 = vpop.permute.xlu0 %3644
      %3646 = vrot.lane.b32.xlu0 %v3616, 56
      %v3647 = vpop.permute.xlu0 %3646
      %3648 = vrot.lane.b32.xlu0 %v3617, 56
      %v3649 = vpop.permute.xlu0 %3648
      %v3650 = vunpack.c.l.b16 %v2885
      %v3651 = vunpack.c.l.b16 %v2888
      %v3652 = vunpack.c.l.b16 %v2892
      %v3653 = vunpack.c.l.b16 %v2895
      %v3654 = vunpack.c.l.b16 %v2899
      %v3655 = vunpack.c.l.b16 %v2902
      %v3656 = vunpack.c.l.b16 %v2906
      %v3657 = vunpack.c.l.b16 %v2909
      %v3658 = vunpack.c.l.b16 %v2913
      %v3659 = vunpack.c.l.b16 %v2916
      %v3660 = vunpack.c.l.b16 %v2920
      %v3661 = vunpack.c.l.b16 %v2923
      %v3662 = vunpack.c.l.b16 %v2927
      %v3663 = vunpack.c.l.b16 %v2930
      %v3664 = vunpack.c.l.b16 %v2934
      %v3665 = vunpack.c.l.b16 %v2937
      %v3666 = vunpack.c.l.b16 %v2941
      %v3667 = vunpack.c.l.b16 %v2944
      %v3668 = vunpack.c.l.b16 %v2948
      %v3669 = vunpack.c.l.b16 %v2951
      %v3670 = vunpack.c.l.b16 %v2955
      %v3671 = vunpack.c.l.b16 %v2958
      %v3672 = vunpack.c.l.b16 %v2962
      %v3673 = vunpack.c.l.b16 %v2965
      %v3674 = vunpack.c.l.b16 %v2969
      %v3675 = vunpack.c.l.b16 %v2972
      %v3676 = vunpack.c.l.b16 %v2976
      %v3677 = vunpack.c.l.b16 %v2979
      %v3678 = vunpack.c.l.b16 %v2983
      %v3679 = vunpack.c.l.b16 %v2986
      %v3680 = vunpack.c.l.b16 %v2990
      %v3681 = vunpack.c.l.b16 %v2993
      %v3682 = vpack.c.b16 %v3651, %v3650
      %v3683 = vpack.c.b16 %v3653, %v3652
      %v3684 = vpack.c.b16 %v3655, %v3654
      %v3685 = vpack.c.b16 %v3657, %v3656
      %v3686 = vpack.c.b16 %v3659, %v3658
      %v3687 = vpack.c.b16 %v3661, %v3660
      %v3688 = vpack.c.b16 %v3663, %v3662
      %v3689 = vpack.c.b16 %v3665, %v3664
      %v3690 = vpack.c.b16 %v3667, %v3666
      %v3691 = vpack.c.b16 %v3669, %v3668
      %v3692 = vpack.c.b16 %v3671, %v3670
      %v3693 = vpack.c.b16 %v3673, %v3672
      %v3694 = vpack.c.b16 %v3675, %v3674
      %v3695 = vpack.c.b16 %v3677, %v3676
      %v3696 = vpack.c.b16 %v3679, %v3678
      %v3697 = vpack.c.b16 %v3681, %v3680
      %3698 = vrot.lane.b32.xlu0 %v3682, 64
      %v3699 = vpop.permute.xlu0 %3698
      %3700 = vrot.lane.b32.xlu0 %v3683, 64
      %v3701 = vpop.permute.xlu0 %3700
      %3702 = vrot.lane.b32.xlu0 %v3684, 64
      %v3703 = vpop.permute.xlu0 %3702
      %3704 = vrot.lane.b32.xlu0 %v3685, 64
      %v3705 = vpop.permute.xlu0 %3704
      %3706 = vrot.lane.b32.xlu0 %v3686, 64
      %v3707 = vpop.permute.xlu0 %3706
      %3708 = vrot.lane.b32.xlu0 %v3687, 64
      %v3709 = vpop.permute.xlu0 %3708
      %3710 = vrot.lane.b32.xlu0 %v3688, 64
      %v3711 = vpop.permute.xlu0 %3710
      %3712 = vrot.lane.b32.xlu0 %v3689, 64
      %v3713 = vpop.permute.xlu0 %3712
      %3714 = vrot.lane.b32.xlu0 %v3690, 64
      %v3715 = vpop.permute.xlu0 %3714
      %3716 = vrot.lane.b32.xlu0 %v3691, 64
      %v3717 = vpop.permute.xlu0 %3716
      %3718 = vrot.lane.b32.xlu0 %v3692, 64
      %v3719 = vpop.permute.xlu0 %3718
      %3720 = vrot.lane.b32.xlu0 %v3693, 64
      %v3721 = vpop.permute.xlu0 %3720
      %3722 = vrot.lane.b32.xlu0 %v3694, 64
      %v3723 = vpop.permute.xlu0 %3722
      %3724 = vrot.lane.b32.xlu0 %v3695, 64
      %v3725 = vpop.permute.xlu0 %3724
      %3726 = vrot.lane.b32.xlu0 %v3696, 64
      %v3727 = vpop.permute.xlu0 %3726
      %3728 = vrot.lane.b32.xlu0 %v3697, 64
      %v3729 = vpop.permute.xlu0 %3728
      %vm3730 = vcmask 64512
      %v3733 = vsel %vm3730, %v3042, %v3107
      %v3736 = vsel %vm3730, %v3043, %v3109
      %v3739 = vsel %vm3730, %v3044, %v3111
      %v3742 = vsel %vm3730, %v3045, %v3113
      %v3745 = vsel %vm3730, %v3046, %v3115
      %v3748 = vsel %vm3730, %v3047, %v3117
      %v3751 = vsel %vm3730, %v3048, %v3119
      %v3754 = vsel %vm3730, %v3049, %v3121
      %v3757 = vsel %vm3730, %v3050, %v3123
      %v3760 = vsel %vm3730, %v3051, %v3125
      %v3763 = vsel %vm3730, %v3052, %v3127
      %v3766 = vsel %vm3730, %v3053, %v3129
      %v3769 = vsel %vm3730, %v3054, %v3131
      %v3772 = vsel %vm3730, %v3055, %v3133
      %v3775 = vsel %vm3730, %v3056, %v3135
      %v3778 = vsel %vm3730, %v3057, %v3137
      %vm3779 = vcmask 130048
      %v3781 = vsel %vm3779, %v3733, %v3187
      %v3783 = vsel %vm3779, %v3736, %v3189
      %v3785 = vsel %vm3779, %v3739, %v3191
      %v3787 = vsel %vm3779, %v3742, %v3193
      %v3789 = vsel %vm3779, %v3745, %v3195
      %v3791 = vsel %vm3779, %v3748, %v3197
      %v3793 = vsel %vm3779, %v3751, %v3199
      %v3795 = vsel %vm3779, %v3754, %v3201
      %v3797 = vsel %vm3779, %v3757, %v3203
      %v3799 = vsel %vm3779, %v3760, %v3205
      %v3801 = vsel %vm3779, %v3763, %v3207
      %v3803 = vsel %vm3779, %v3766, %v3209
      %v3805 = vsel %vm3779, %v3769, %v3211
      %v3807 = vsel %vm3779, %v3772, %v3213
      %v3809 = vsel %vm3779, %v3775, %v3215
      %v3811 = vsel %vm3779, %v3778, %v3217
      %vm3812 = vcmask 195584
      %v3814 = vsel %vm3812, %v3781, %v3283
      %v3816 = vsel %vm3812, %v3783, %v3285
      %v3818 = vsel %vm3812, %v3785, %v3287
      %v3820 = vsel %vm3812, %v3787, %v3289
      %v3822 = vsel %vm3812, %v3789, %v3291
      %v3824 = vsel %vm3812, %v3791, %v3293
      %v3826 = vsel %vm3812, %v3793, %v3295
      %v3828 = vsel %vm3812, %v3795, %v3297
      %v3830 = vsel %vm3812, %v3797, %v3299
      %v3832 = vsel %vm3812, %v3799, %v3301
      %v3834 = vsel %vm3812, %v3801, %v3303
      %v3836 = vsel %vm3812, %v3803, %v3305
      %v3838 = vsel %vm3812, %v3805, %v3307
      %v3840 = vsel %vm3812, %v3807, %v3309
      %v3842 = vsel %vm3812, %v3809, %v3311
      %v3844 = vsel %vm3812, %v3811, %v3313
      %vm3845 = vcmask 261120
      %v3847 = vsel %vm3845, %v3814, %v3363
      %v3849 = vsel %vm3845, %v3816, %v3365
      %v3851 = vsel %vm3845, %v3818, %v3367
      %v3853 = vsel %vm3845, %v3820, %v3369
      %v3855 = vsel %vm3845, %v3822, %v3371
      %v3857 = vsel %vm3845, %v3824, %v3373
      %v3859 = vsel %vm3845, %v3826, %v3375
      %v3861 = vsel %vm3845, %v3828, %v3377
      %v3863 = vsel %vm3845, %v3830, %v3379
      %v3865 = vsel %vm3845, %v3832, %v3381
      %v3867 = vsel %vm3845, %v3834, %v3383
      %v3869 = vsel %vm3845, %v3836, %v3385
      %v3871 = vsel %vm3845, %v3838, %v3387
      %v3873 = vsel %vm3845, %v3840, %v3389
      %v3875 = vsel %vm3845, %v3842, %v3391
      %v3877 = vsel %vm3845, %v3844, %v3393
      %vm3878 = vcmask 326656
      %v3880 = vsel %vm3878, %v3847, %v3443
      %v3882 = vsel %vm3878, %v3849, %v3445
      %v3884 = vsel %vm3878, %v3851, %v3447
      %v3886 = vsel %vm3878, %v3853, %v3449
      %v3888 = vsel %vm3878, %v3855, %v3451
      %v3890 = vsel %vm3878, %v3857, %v3453
      %v3892 = vsel %vm3878, %v3859, %v3455
      %v3894 = vsel %vm3878, %v3861, %v3457
      %v3896 = vsel %vm3878, %v3863, %v3459
      %v3898 = vsel %vm3878, %v3865, %v3461
      %v3900 = vsel %vm3878, %v3867, %v3463
      %v3902 = vsel %vm3878, %v3869, %v3465
      %v3904 = vsel %vm3878, %v3871, %v3467
      %v3906 = vsel %vm3878, %v3873, %v3469
      %v3908 = vsel %vm3878, %v3875, %v3471
      %v3910 = vsel %vm3878, %v3877, %v3473
      %vm3911 = vcmask 392192
      %v3913 = vsel %vm3911, %v3880, %v3539
      %v3915 = vsel %vm3911, %v3882, %v3541
      %v3917 = vsel %vm3911, %v3884, %v3543
      %v3919 = vsel %vm3911, %v3886, %v3545
      %v3921 = vsel %vm3911, %v3888, %v3547
      %v3923 = vsel %vm3911, %v3890, %v3549
      %v3925 = vsel %vm3911, %v3892, %v3551
      %v3927 = vsel %vm3911, %v3894, %v3553
      %v3929 = vsel %vm3911, %v3896, %v3555
      %v3931 = vsel %vm3911, %v3898, %v3557
      %v3933 = vsel %vm3911, %v3900, %v3559
      %v3935 = vsel %vm3911, %v3902, %v3561
      %v3937 = vsel %vm3911, %v3904, %v3563
      %v3939 = vsel %vm3911, %v3906, %v3565
      %v3941 = vsel %vm3911, %v3908, %v3567
      %v3943 = vsel %vm3911, %v3910, %v3569
      %vm3944 = vcmask 457728
      %v3946 = vsel %vm3944, %v3913, %v3619
      %v3948 = vsel %vm3944, %v3915, %v3621
      %v3950 = vsel %vm3944, %v3917, %v3623
      %v3952 = vsel %vm3944, %v3919, %v3625
      %v3954 = vsel %vm3944, %v3921, %v3627
      %v3956 = vsel %vm3944, %v3923, %v3629
      %v3958 = vsel %vm3944, %v3925, %v3631
      %v3960 = vsel %vm3944, %v3927, %v3633
      %v3962 = vsel %vm3944, %v3929, %v3635
      %v3964 = vsel %vm3944, %v3931, %v3637
      %v3966 = vsel %vm3944, %v3933, %v3639
      %v3968 = vsel %vm3944, %v3935, %v3641
      %v3970 = vsel %vm3944, %v3937, %v3643
      %v3972 = vsel %vm3944, %v3939, %v3645
      %v3974 = vsel %vm3944, %v3941, %v3647
      %v3976 = vsel %vm3944, %v3943, %v3649
      %vm3977 = vcmask 523264
      %v3979 = vsel %vm3977, %v3946, %v3699
      %v3981 = vsel %vm3977, %v3948, %v3701
      %v3983 = vsel %vm3977, %v3950, %v3703
      %v3985 = vsel %vm3977, %v3952, %v3705
      %v3987 = vsel %vm3977, %v3954, %v3707
      %v3989 = vsel %vm3977, %v3956, %v3709
      %v3991 = vsel %vm3977, %v3958, %v3711
      %v3993 = vsel %vm3977, %v3960, %v3713
      %v3995 = vsel %vm3977, %v3962, %v3715
      %v3997 = vsel %vm3977, %v3964, %v3717
      %v3999 = vsel %vm3977, %v3966, %v3719
      %v4001 = vsel %vm3977, %v3968, %v3721
      %v4003 = vsel %vm3977, %v3970, %v3723
      %v4005 = vsel %vm3977, %v3972, %v3725
      %v4007 = vsel %vm3977, %v3974, %v3727
      %v4009 = vsel %vm3977, %v3976, %v3729
      %v4010 = vld [vmem:[%s3] sm:$0xf]
      %v4011 = vld [vmem:[%s3 + $0x4] sm:$0xf]
      %v4012 = vld [vmem:[%s3 + $0x8] sm:$0xf]
      %v4013 = vld [vmem:[%s3 + $0xc] sm:$0xf]
      %v4014 = vld [vmem:[%s3 + $0x10] sm:$0xf]
      %v4015 = vld [vmem:[%s3 + $0x14] sm:$0xf]
      %v4016 = vld [vmem:[%s3 + $0x18] sm:$0xf]
      %v4017 = vld [vmem:[%s3 + $0x1c] sm:$0xf]
      %v4018 = vld [vmem:[%s3 + $0x20] sm:$0xf]
      %v4028 = vunpack.c.l.b16 %v4010
      %v4029 = vunpack.c.l.b16 %v4011
      %v4030 = vunpack.c.l.b16 %v4012
      %v4031 = vunpack.c.l.b16 %v4013
      %v4032 = vunpack.c.l.b16 %v4014
      %v4033 = vunpack.c.l.b16 %v4015
      %v4034 = vunpack.c.l.b16 %v4016
      %v4035 = vunpack.c.l.b16 %v4017
      %v4036 = vunpack.c.l.b16 %v4018
      %v4037 = vpack.c.b16 %v4029, %v4028
      %v4038 = vpack.c.b16 %v4031, %v4030
      %v4039 = vpack.c.b16 %v4033, %v4032
      %v4040 = vpack.c.b16 %v4035, %v4034
      %v4041 = vpack.c.b16 %v4036, %v4036
      %vm4046 = vcmask 588800
      %v4047 = vsel %vm4046, %v3979, 0
      %v4049 = vsel %vm4046, %v3981, 0
      %v4051 = vsel %vm4046, %v3983, 0
      %v4053 = vsel %vm4046, %v3985, 0
      %v4055 = vsel %vm4046, %v3987, 0
      %v4057 = vsel %vm4046, %v3989, 0
      %v4059 = vsel %vm4046, %v3991, 0
      %v4061 = vsel %vm4046, %v3993, 0
      %v4063 = vsel %vm4046, %v3995, 0
      %v4065 = vsel %vm4046, %v3997, 0
      %v4067 = vsel %vm4046, %v3999, 0
      %v4069 = vsel %vm4046, %v4001, 0
      %v4071 = vsel %vm4046, %v4003, 0
      %v4073 = vsel %vm4046, %v4005, 0
      %v4075 = vsel %vm4046, %v4007, 0
      %v4077 = vsel %vm4046, %v4009, 0
      %vm4079 = vcmask 1043456
      %v4081 = vsel %vm4079, %v4041, 0
      %4083 = vmatprep.subr.bf16.mxu0 0
      %4084 = vmatpush1.bf16.msra.mxu0 0
      %4085 = vmatprep.subr.bf16.mxu0 0
      %4086 = vmatpush1.bf16.msra.mxu0 0
      %4087 = vmatprep.subr.bf16.mxu0 0
      %4088 = vmatpush1.bf16.msra.mxu0 0
      %4089 = vmatprep.subr.bf16.mxu0 0
      %4090 = vmatpush1.bf16.msra.mxu0 %v4081
      %4091 = vmatprep.subr.bf16.mxu0 0
      %4092 = vmatpush1.bf16.msra.mxu0 %v4040
      %4093 = vmatprep.subr.bf16.mxu0 0
      %4094 = vmatpush1.bf16.msra.mxu0 %v4039
      %4095 = vmatprep.subr.bf16.mxu0 0
      %4096 = vmatpush1.bf16.msra.mxu0 %v4038
      %4097 = vmatprep.subr.bf16.mxu0 0
      %4098 = vmatpush1.bf16.msra.mxu0 %v4037
      %4099 = vmatprep.subr.bf16.mxu0 0
      %4100 = vmatpush2.bf16.msra.mxu0 0
      %4101 = vmatprep.subr.bf16.mxu0 0
      %4102 = vmatpush2.bf16.msra.mxu0 0
      %4103 = vmatprep.subr.bf16.mxu0 0
      %4104 = vmatpush2.bf16.msra.mxu0 0
      %4105 = vmatprep.subr.bf16.mxu0 0
      %4106 = vmatpush2.bf16.msra.mxu0 0
      %4107 = vmatprep.subr.bf16.mxu0 0
      %4108 = vmatpush2.bf16.msra.mxu0 0
      %4109 = vmatprep.subr.bf16.mxu0 0
      %4110 = vmatpush2.bf16.msra.mxu0 0
      %4111 = vmatprep.subr.bf16.mxu0 0
      %4112 = vmatpush2.bf16.msra.mxu0 0
      %4113 = vmatprep.subr.bf16.mxu0 0
      %4114 = vmatpush2.bf16.msra.mxu0 0
      %4115 = vmatprep.mubr.bf16.mxu0 0
      %4116 = vmatmul.mubr.bf16.gmra.mxu0 %v4047
      %v4117 = vpop.f32.mrf.mxu0
      %v4118 = vadd.f32 0.0, %v4117
      %v4119 = vpop.f32.mrf.mxu0
      %v4120 = vpop.f32.mrf.mxu0
      %v4121 = vadd.f32 0.0, %v4120
      %v4122 = vpop.f32.mrf.mxu0
      %4123 = vmatprep.mubr.bf16.mxu0 0
      %4124 = vmatmul.mubr.bf16.gmra.mxu0 %v4049
      %v4125 = vpop.f32.mrf.mxu0
      %v4126 = vadd.f32 0.0, %v4125
      %v4127 = vpop.f32.mrf.mxu0
      %v4128 = vpop.f32.mrf.mxu0
      %v4129 = vadd.f32 0.0, %v4128
      %v4130 = vpop.f32.mrf.mxu0
      %4131 = vmatprep.mubr.bf16.mxu0 0
      %4132 = vmatmul.mubr.bf16.gmra.mxu0 %v4051
      %v4133 = vpop.f32.mrf.mxu0
      %v4134 = vadd.f32 0.0, %v4133
      %v4135 = vpop.f32.mrf.mxu0
      %v4136 = vpop.f32.mrf.mxu0
      %v4137 = vadd.f32 0.0, %v4136
      %v4138 = vpop.f32.mrf.mxu0
      %4139 = vmatprep.mubr.bf16.mxu0 0
      %4140 = vmatmul.mubr.bf16.gmra.mxu0 %v4053
      %v4141 = vpop.f32.mrf.mxu0
      %v4142 = vadd.f32 0.0, %v4141
      %v4143 = vpop.f32.mrf.mxu0
      %v4144 = vpop.f32.mrf.mxu0
      %v4145 = vadd.f32 0.0, %v4144
      %v4146 = vpop.f32.mrf.mxu0
      %4147 = vmatprep.mubr.bf16.mxu0 0
      %4148 = vmatmul.mubr.bf16.gmra.mxu0 %v4055
      %v4149 = vpop.f32.mrf.mxu0
      %v4150 = vadd.f32 0.0, %v4149
      %v4151 = vpop.f32.mrf.mxu0
      %v4152 = vpop.f32.mrf.mxu0
      %v4153 = vadd.f32 0.0, %v4152
      %v4154 = vpop.f32.mrf.mxu0
      %4155 = vmatprep.mubr.bf16.mxu0 0
      %4156 = vmatmul.mubr.bf16.gmra.mxu0 %v4057
      %v4157 = vpop.f32.mrf.mxu0
      %v4158 = vadd.f32 0.0, %v4157
      %v4159 = vpop.f32.mrf.mxu0
      %v4160 = vpop.f32.mrf.mxu0
      %v4161 = vadd.f32 0.0, %v4160
      %v4162 = vpop.f32.mrf.mxu0
      %4163 = vmatprep.mubr.bf16.mxu0 0
      %4164 = vmatmul.mubr.bf16.gmra.mxu0 %v4059
      %v4165 = vpop.f32.mrf.mxu0
      %v4166 = vadd.f32 0.0, %v4165
      %v4167 = vpop.f32.mrf.mxu0
      %v4168 = vpop.f32.mrf.mxu0
      %v4169 = vadd.f32 0.0, %v4168
      %v4170 = vpop.f32.mrf.mxu0
      %4171 = vmatprep.mubr.bf16.mxu0 0
      %4172 = vmatmul.mubr.bf16.gmra.mxu0 %v4061
      %v4173 = vpop.f32.mrf.mxu0
      %v4174 = vadd.f32 0.0, %v4173
      %v4175 = vpop.f32.mrf.mxu0
      %v4176 = vpop.f32.mrf.mxu0
      %v4177 = vadd.f32 0.0, %v4176
      %v4178 = vpop.f32.mrf.mxu0
      %4179 = vmatprep.mubr.bf16.mxu0 0
      %4180 = vmatmul.mubr.bf16.gmra.mxu0 %v4063
      %v4181 = vpop.f32.mrf.mxu0
      %v4182 = vadd.f32 0.0, %v4181
      %v4183 = vpop.f32.mrf.mxu0
      %v4184 = vpop.f32.mrf.mxu0
      %v4185 = vadd.f32 0.0, %v4184
      %v4186 = vpop.f32.mrf.mxu0
      %4187 = vmatprep.mubr.bf16.mxu0 0
      %4188 = vmatmul.mubr.bf16.gmra.mxu0 %v4065
      %v4189 = vpop.f32.mrf.mxu0
      %v4190 = vadd.f32 0.0, %v4189
      %v4191 = vpop.f32.mrf.mxu0
      %v4192 = vpop.f32.mrf.mxu0
      %v4193 = vadd.f32 0.0, %v4192
      %v4194 = vpop.f32.mrf.mxu0
      %4195 = vmatprep.mubr.bf16.mxu0 0
      %4196 = vmatmul.mubr.bf16.gmra.mxu0 %v4067
      %v4197 = vpop.f32.mrf.mxu0
      %v4198 = vadd.f32 0.0, %v4197
      %v4199 = vpop.f32.mrf.mxu0
      %v4200 = vpop.f32.mrf.mxu0
      %v4201 = vadd.f32 0.0, %v4200
      %v4202 = vpop.f32.mrf.mxu0
      %4203 = vmatprep.mubr.bf16.mxu0 0
      %4204 = vmatmul.mubr.bf16.gmra.mxu0 %v4069
      %v4205 = vpop.f32.mrf.mxu0
      %v4206 = vadd.f32 0.0, %v4205
      %v4207 = vpop.f32.mrf.mxu0
      %v4208 = vpop.f32.mrf.mxu0
      %v4209 = vadd.f32 0.0, %v4208
      %v4210 = vpop.f32.mrf.mxu0
      %4211 = vmatprep.mubr.bf16.mxu0 0
      %4212 = vmatmul.mubr.bf16.gmra.mxu0 %v4071
      %v4213 = vpop.f32.mrf.mxu0
      %v4214 = vadd.f32 0.0, %v4213
      %v4215 = vpop.f32.mrf.mxu0
      %v4216 = vpop.f32.mrf.mxu0
      %v4217 = vadd.f32 0.0, %v4216
      %v4218 = vpop.f32.mrf.mxu0
      %4219 = vmatprep.mubr.bf16.mxu0 0
      %4220 = vmatmul.mubr.bf16.gmra.mxu0 %v4073
      %v4221 = vpop.f32.mrf.mxu0
      %v4222 = vadd.f32 0.0, %v4221
      %v4223 = vpop.f32.mrf.mxu0
      %v4224 = vpop.f32.mrf.mxu0
      %v4225 = vadd.f32 0.0, %v4224
      %v4226 = vpop.f32.mrf.mxu0
      %4227 = vmatprep.mubr.bf16.mxu0 0
      %4228 = vmatmul.mubr.bf16.gmra.mxu0 %v4075
      %v4229 = vpop.f32.mrf.mxu0
      %v4230 = vadd.f32 0.0, %v4229
      %v4231 = vpop.f32.mrf.mxu0
      %v4232 = vpop.f32.mrf.mxu0
      %v4233 = vadd.f32 0.0, %v4232
      %v4234 = vpop.f32.mrf.mxu0
      %4235 = vmatprep.mubr.bf16.mxu0 0
      %4236 = vmatmul.mubr.bf16.gmra.mxu0 %v4077
      %v4237 = vpop.f32.mrf.mxu0
      %v4238 = vadd.f32 0.0, %v4237
      %v4239 = vpop.f32.mrf.mxu0
      %v4240 = vpop.f32.mrf.mxu0
      %v4241 = vadd.f32 0.0, %v4240
      %v4242 = vpop.f32.mrf.mxu0
      %4243 = vdwg.mxu0
      %v4244 = vsel %vm3730, %v4118, 0.0
      %v4245 = vsel %vm3730, %v4121, 0.0
      %v4246 = vadd.f32 %v4244, %v4245
      %v4247 = vsel %vm3730, %v4126, 0.0
      %v4248 = vadd.f32 %v4246, %v4247
      %v4249 = vsel %vm3730, %v4129, 0.0
      %v4250 = vadd.f32 %v4248, %v4249
      %v4251 = vsel %vm3730, %v4134, 0.0
      %v4252 = vadd.f32 %v4250, %v4251
      %v4253 = vsel %vm3730, %v4137, 0.0
      %v4254 = vadd.f32 %v4252, %v4253
      %v4255 = vsel %vm3730, %v4142, 0.0
      %v4256 = vadd.f32 %v4254, %v4255
      %v4257 = vsel %vm3730, %v4145, 0.0
      %v4258 = vadd.f32 %v4256, %v4257
      %v4259 = vsel %vm3730, %v4150, 0.0
      %v4260 = vadd.f32 %v4258, %v4259
      %v4261 = vsel %vm3730, %v4153, 0.0
      %v4262 = vadd.f32 %v4260, %v4261
      %v4263 = vsel %vm3730, %v4158, 0.0
      %v4264 = vadd.f32 %v4262, %v4263
      %v4265 = vsel %vm3730, %v4161, 0.0
      %v4266 = vadd.f32 %v4264, %v4265
      %v4267 = vsel %vm3730, %v4166, 0.0
      %v4268 = vadd.f32 %v4266, %v4267
      %v4269 = vsel %vm3730, %v4169, 0.0
      %v4270 = vadd.f32 %v4268, %v4269
      %v4271 = vsel %vm3730, %v4174, 0.0
      %v4272 = vadd.f32 %v4270, %v4271
      %v4273 = vsel %vm3730, %v4177, 0.0
      %v4274 = vadd.f32 %v4272, %v4273
      %v4275 = vsel %vm3730, %v4182, 0.0
      %v4276 = vadd.f32 %v4274, %v4275
      %v4277 = vsel %vm3730, %v4185, 0.0
      %v4278 = vadd.f32 %v4276, %v4277
      %v4279 = vsel %vm3730, %v4190, 0.0
      %v4280 = vadd.f32 %v4278, %v4279
      %v4281 = vsel %vm3730, %v4193, 0.0
      %v4282 = vadd.f32 %v4280, %v4281
      %v4283 = vsel %vm3730, %v4198, 0.0
      %v4284 = vadd.f32 %v4282, %v4283
      %v4285 = vsel %vm3730, %v4201, 0.0
      %v4286 = vadd.f32 %v4284, %v4285
      %v4287 = vsel %vm3730, %v4206, 0.0
      %v4288 = vadd.f32 %v4286, %v4287
      %v4289 = vsel %vm3730, %v4209, 0.0
      %v4290 = vadd.f32 %v4288, %v4289
      %v4291 = vsel %vm3730, %v4214, 0.0
      %v4292 = vadd.f32 %v4290, %v4291
      %v4293 = vsel %vm3730, %v4217, 0.0
      %v4294 = vadd.f32 %v4292, %v4293
      %v4295 = vsel %vm3730, %v4222, 0.0
      %v4296 = vadd.f32 %v4294, %v4295
      %v4297 = vsel %vm3730, %v4225, 0.0
      %v4298 = vadd.f32 %v4296, %v4297
      %v4299 = vsel %vm3730, %v4230, 0.0
      %v4300 = vadd.f32 %v4298, %v4299
      %v4301 = vsel %vm3730, %v4233, 0.0
      %v4302 = vadd.f32 %v4300, %v4301
      %v4303 = vsel %vm3730, %v4238, 0.0
      %v4304 = vadd.f32 %v4302, %v4303
      %v4305 = vsel %vm3730, %v4241, 0.0
      %v4306 = vadd.f32 %v4304, %v4305
      %v4307 = vrot.slane %v4306, 4
      %v4308 = vadd.f32 %v4306, %v4307
      %v4309 = vrot.slane %v4308, 2
      %v4310 = vadd.f32 %v4308, %v4309
      %v4311 = vrot.slane %v4310, 1
      %v4312 = vadd.f32 %v4310, %v4311
      %4313 = vst.msk [vmem:[%s265] sm:$0x1] %vm511, %v4312
      %v4314 = vmul.f32 %v4118, %v4118
      %v4315 = vmul.f32 %v4121, %v4121
      %v4316 = vmul.f32 %v4126, %v4126
      %v4317 = vmul.f32 %v4129, %v4129
      %v4318 = vmul.f32 %v4134, %v4134
      %v4319 = vmul.f32 %v4137, %v4137
      %v4320 = vmul.f32 %v4142, %v4142
      %v4321 = vmul.f32 %v4145, %v4145
      %v4322 = vmul.f32 %v4150, %v4150
      %v4323 = vmul.f32 %v4153, %v4153
      %v4324 = vmul.f32 %v4158, %v4158
      %v4325 = vmul.f32 %v4161, %v4161
      %v4326 = vmul.f32 %v4166, %v4166
      %v4327 = vmul.f32 %v4169, %v4169
      %v4328 = vmul.f32 %v4174, %v4174
      %v4329 = vmul.f32 %v4177, %v4177
      %v4330 = vmul.f32 %v4182, %v4182
      %v4331 = vmul.f32 %v4185, %v4185
      %v4332 = vmul.f32 %v4190, %v4190
      %v4333 = vmul.f32 %v4193, %v4193
      %v4334 = vmul.f32 %v4198, %v4198
      %v4335 = vmul.f32 %v4201, %v4201
      %v4336 = vmul.f32 %v4206, %v4206
      %v4337 = vmul.f32 %v4209, %v4209
      %v4338 = vmul.f32 %v4214, %v4214
      %v4339 = vmul.f32 %v4217, %v4217
      %v4340 = vmul.f32 %v4222, %v4222
      %v4341 = vmul.f32 %v4225, %v4225
      %v4342 = vmul.f32 %v4230, %v4230
      %v4343 = vmul.f32 %v4233, %v4233
      %v4344 = vmul.f32 %v4238, %v4238
      %v4345 = vmul.f32 %v4241, %v4241
      %v4346 = vsel %vm3730, %v4314, 0.0
      %v4347 = vsel %vm3730, %v4315, 0.0
      %v4348 = vadd.f32 %v4346, %v4347
      %v4349 = vsel %vm3730, %v4316, 0.0
      %v4350 = vadd.f32 %v4348, %v4349
      %v4351 = vsel %vm3730, %v4317, 0.0
      %v4352 = vadd.f32 %v4350, %v4351
      %v4353 = vsel %vm3730, %v4318, 0.0
      %v4354 = vadd.f32 %v4352, %v4353
      %v4355 = vsel %vm3730, %v4319, 0.0
      %v4356 = vadd.f32 %v4354, %v4355
      %v4357 = vsel %vm3730, %v4320, 0.0
      %v4358 = vadd.f32 %v4356, %v4357
      %v4359 = vsel %vm3730, %v4321, 0.0
      %v4360 = vadd.f32 %v4358, %v4359
      %v4361 = vsel %vm3730, %v4322, 0.0
      %v4362 = vadd.f32 %v4360, %v4361
      %v4363 = vsel %vm3730, %v4323, 0.0
      %v4364 = vadd.f32 %v4362, %v4363
      %v4365 = vsel %vm3730, %v4324, 0.0
      %v4366 = vadd.f32 %v4364, %v4365
      %v4367 = vsel %vm3730, %v4325, 0.0
      %v4368 = vadd.f32 %v4366, %v4367
      %v4369 = vsel %vm3730, %v4326, 0.0
      %v4370 = vadd.f32 %v4368, %v4369
      %v4371 = vsel %vm3730, %v4327, 0.0
      %v4372 = vadd.f32 %v4370, %v4371
      %v4373 = vsel %vm3730, %v4328, 0.0
      %v4374 = vadd.f32 %v4372, %v4373
      %v4375 = vsel %vm3730, %v4329, 0.0
      %v4376 = vadd.f32 %v4374, %v4375
      %v4377 = vsel %vm3730, %v4330, 0.0
      %v4378 = vadd.f32 %v4376, %v4377
      %v4379 = vsel %vm3730, %v4331, 0.0
      %v4380 = vadd.f32 %v4378, %v4379
      %v4381 = vsel %vm3730, %v4332, 0.0
      %v4382 = vadd.f32 %v4380, %v4381
      %v4383 = vsel %vm3730, %v4333, 0.0
      %v4384 = vadd.f32 %v4382, %v4383
      %v4385 = vsel %vm3730, %v4334, 0.0
      %v4386 = vadd.f32 %v4384, %v4385
      %v4387 = vsel %vm3730, %v4335, 0.0
      %v4388 = vadd.f32 %v4386, %v4387
      %v4389 = vsel %vm3730, %v4336, 0.0
      %v4390 = vadd.f32 %v4388, %v4389
      %v4391 = vsel %vm3730, %v4337, 0.0
      %v4392 = vadd.f32 %v4390, %v4391
      %v4393 = vsel %vm3730, %v4338, 0.0
      %v4394 = vadd.f32 %v4392, %v4393
      %v4395 = vsel %vm3730, %v4339, 0.0
      %v4396 = vadd.f32 %v4394, %v4395
      %v4397 = vsel %vm3730, %v4340, 0.0
      %v4398 = vadd.f32 %v4396, %v4397
      %v4399 = vsel %vm3730, %v4341, 0.0
      %v4400 = vadd.f32 %v4398, %v4399
      %v4401 = vsel %vm3730, %v4342, 0.0
      %v4402 = vadd.f32 %v4400, %v4401
      %v4403 = vsel %vm3730, %v4343, 0.0
      %v4404 = vadd.f32 %v4402, %v4403
      %v4405 = vsel %vm3730, %v4344, 0.0
      %v4406 = vadd.f32 %v4404, %v4405
      %v4407 = vsel %vm3730, %v4345, 0.0
      %v4408 = vadd.f32 %v4406, %v4407
      %v4409 = vrot.slane %v4408, 4
      %v4410 = vadd.f32 %v4408, %v4409
      %v4411 = vrot.slane %v4410, 2
      %v4412 = vadd.f32 %v4410, %v4411
      %v4413 = vrot.slane %v4412, 1
      %v4414 = vadd.f32 %v4412, %v4413
      %4415 = vst.msk [vmem:[%s268] sm:$0x1] %vm511, %v4414
      %v4416 = vpack.c.bf16 %v4121, %v4118
      %v4417 = vpack.c.bf16 %v4129, %v4126
      %v4418 = vpack.c.bf16 %v4137, %v4134
      %v4419 = vpack.c.bf16 %v4145, %v4142
      %v4420 = vpack.c.bf16 %v4153, %v4150
      %v4421 = vpack.c.bf16 %v4161, %v4158
      %v4422 = vpack.c.bf16 %v4169, %v4166
      %v4423 = vpack.c.bf16 %v4177, %v4174
      %v4424 = vpack.c.bf16 %v4185, %v4182
      %v4425 = vpack.c.bf16 %v4193, %v4190
      %v4426 = vpack.c.bf16 %v4201, %v4198
      %v4427 = vpack.c.bf16 %v4209, %v4206
      %v4428 = vpack.c.bf16 %v4217, %v4214
      %v4429 = vpack.c.bf16 %v4225, %v4222
      %v4430 = vpack.c.bf16 %v4233, %v4230
      %v4431 = vpack.c.bf16 %v4241, %v4238
      %v4448 = vunpack.c.l.b16 %v4416
      %v4449 = vunpack.c.h.b16 %v4416
      %v4450 = vunpack.c.l.b16 %v4417
      %v4451 = vunpack.c.h.b16 %v4417
      %v4452 = vunpack.c.l.b16 %v4418
      %v4453 = vunpack.c.h.b16 %v4418
      %v4454 = vunpack.c.l.b16 %v4419
      %v4455 = vunpack.c.h.b16 %v4419
      %v4456 = vunpack.c.l.b16 %v4420
      %v4457 = vunpack.c.h.b16 %v4420
      %v4458 = vunpack.c.l.b16 %v4421
      %v4459 = vunpack.c.h.b16 %v4421
      %v4460 = vunpack.c.l.b16 %v4422
      %v4461 = vunpack.c.h.b16 %v4422
      %v4462 = vunpack.c.l.b16 %v4423
      %v4463 = vunpack.c.h.b16 %v4423
      %v4464 = vunpack.c.l.b16 %v4424
      %v4465 = vunpack.c.h.b16 %v4424
      %v4466 = vunpack.c.l.b16 %v4425
      %v4467 = vunpack.c.h.b16 %v4425
      %v4468 = vunpack.c.l.b16 %v4426
      %v4469 = vunpack.c.h.b16 %v4426
      %v4470 = vunpack.c.l.b16 %v4427
      %v4471 = vunpack.c.h.b16 %v4427
      %v4472 = vunpack.c.l.b16 %v4428
      %v4473 = vunpack.c.h.b16 %v4428
      %v4474 = vunpack.c.l.b16 %v4429
      %v4475 = vunpack.c.h.b16 %v4429
      %v4476 = vunpack.c.l.b16 %v4430
      %v4477 = vunpack.c.h.b16 %v4430
      %v4478 = vunpack.c.l.b16 %v4431
      %v4479 = vunpack.c.h.b16 %v4431
      %v4480 = vpack.c.b16 %v4448, %v4448
      %v4481 = vpack.c.b16 %v4449, %v4449
      %v4482 = vpack.c.b16 %v4450, %v4450
      %v4483 = vpack.c.b16 %v4451, %v4451
      %v4484 = vpack.c.b16 %v4452, %v4452
      %v4485 = vpack.c.b16 %v4453, %v4453
      %v4486 = vpack.c.b16 %v4454, %v4454
      %v4487 = vpack.c.b16 %v4455, %v4455
      %v4488 = vpack.c.b16 %v4456, %v4456
      %v4489 = vpack.c.b16 %v4457, %v4457
      %v4490 = vpack.c.b16 %v4458, %v4458
      %v4491 = vpack.c.b16 %v4459, %v4459
      %v4492 = vpack.c.b16 %v4460, %v4460
      %v4493 = vpack.c.b16 %v4461, %v4461
      %v4494 = vpack.c.b16 %v4462, %v4462
      %v4495 = vpack.c.b16 %v4463, %v4463
      %v4496 = vpack.c.b16 %v4464, %v4464
      %v4497 = vpack.c.b16 %v4465, %v4465
      %v4498 = vpack.c.b16 %v4466, %v4466
      %v4499 = vpack.c.b16 %v4467, %v4467
      %v4500 = vpack.c.b16 %v4468, %v4468
      %v4501 = vpack.c.b16 %v4469, %v4469
      %v4502 = vpack.c.b16 %v4470, %v4470
      %v4503 = vpack.c.b16 %v4471, %v4471
      %v4504 = vpack.c.b16 %v4472, %v4472
      %v4505 = vpack.c.b16 %v4473, %v4473
      %v4506 = vpack.c.b16 %v4474, %v4474
      %v4507 = vpack.c.b16 %v4475, %v4475
      %v4508 = vpack.c.b16 %v4476, %v4476
      %v4509 = vpack.c.b16 %v4477, %v4477
      %v4510 = vpack.c.b16 %v4478, %v4478
      %v4511 = vpack.c.b16 %v4479, %v4479
      %4544 = vst.msk [vmem:[%s262] sm:$0xf] %vm508, %v4480
      %4545 = vst.msk [vmem:[%s262 + $0x4] sm:$0xf] %vm508, %v4481
      %4546 = vst.msk [vmem:[%s262 + $0x8] sm:$0xf] %vm508, %v4482
      %4547 = vst.msk [vmem:[%s262 + $0xc] sm:$0xf] %vm508, %v4483
      %4548 = vst.msk [vmem:[%s262 + $0x10] sm:$0xf] %vm508, %v4484
      %4549 = vst.msk [vmem:[%s262 + $0x14] sm:$0xf] %vm508, %v4485
      %4550 = vst.msk [vmem:[%s262 + $0x18] sm:$0xf] %vm508, %v4486
      %4551 = vst.msk [vmem:[%s262 + $0x1c] sm:$0xf] %vm508, %v4487
      %4552 = vst.msk [vmem:[%s262 + $0x20] sm:$0xf] %vm508, %v4488
      %4553 = vst.msk [vmem:[%s262 + $0x24] sm:$0xf] %vm508, %v4489
      %4554 = vst.msk [vmem:[%s262 + $0x28] sm:$0xf] %vm508, %v4490
      %4555 = vst.msk [vmem:[%s262 + $0x2c] sm:$0xf] %vm508, %v4491
      %4556 = vst.msk [vmem:[%s262 + $0x30] sm:$0xf] %vm508, %v4492
      %4557 = vst.msk [vmem:[%s262 + $0x34] sm:$0xf] %vm508, %v4493
      %4558 = vst.msk [vmem:[%s262 + $0x38] sm:$0xf] %vm508, %v4494
      %4559 = vst.msk [vmem:[%s262 + $0x3c] sm:$0xf] %vm508, %v4495
      %4560 = vst.msk [vmem:[%s262 + $0x40] sm:$0xf] %vm508, %v4496
      %4561 = vst.msk [vmem:[%s262 + $0x44] sm:$0xf] %vm508, %v4497
      %4562 = vst.msk [vmem:[%s262 + $0x48] sm:$0xf] %vm508, %v4498
      %4563 = vst.msk [vmem:[%s262 + $0x4c] sm:$0xf] %vm508, %v4499
      %4564 = vst.msk [vmem:[%s262 + $0x50] sm:$0xf] %vm508, %v4500
      %4565 = vst.msk [vmem:[%s262 + $0x54] sm:$0xf] %vm508, %v4501
      %4566 = vst.msk [vmem:[%s262 + $0x58] sm:$0xf] %vm508, %v4502
      %4567 = vst.msk [vmem:[%s262 + $0x5c] sm:$0xf] %vm508, %v4503
      %4568 = vst.msk [vmem:[%s262 + $0x60] sm:$0xf] %vm508, %v4504
      %4569 = vst.msk [vmem:[%s262 + $0x64] sm:$0xf] %vm508, %v4505
      %4570 = vst.msk [vmem:[%s262 + $0x68] sm:$0xf] %vm508, %v4506
      %4571 = vst.msk [vmem:[%s262 + $0x6c] sm:$0xf] %vm508, %v4507
      %4572 = vst.msk [vmem:[%s262 + $0x70] sm:$0xf] %vm508, %v4508
      %4573 = vst.msk [vmem:[%s262 + $0x74] sm:$0xf] %vm508, %v4509
      %4574 = vst.msk [vmem:[%s262 + $0x78] sm:$0xf] %vm508, %v4510
      %4575 = vst.msk [vmem:[%s262 + $0x7c] sm:$0xf] %vm508, %v4511
      %p4576 = scmp.lt.s32.totalorder %s18, 1
      %s4577 = scalar_select %p4576, %s18, 1
      %s4578 = smul.addr %s4577, 32
      %s4579 = smul.addr %s4578, 4
      %s4580 = scalar_lea.vmem %s4, %s4579
      %p4581 = scmp.lt.s32.totalorder %s18, 1
      %s4582 = scalar_select %p4581, %s18, 1
      %s4583 = scalar_lea.vmem %s5, %s4582
      %p4584 = scmp.lt.s32.totalorder %s18, 1
      %s4585 = scalar_select %p4584, %s18, 1
      %s4586 = scalar_lea.vmem %s6, %s4585
      // Predicated region
      $region37: #{doubleconv_forward.4} parent=35 // pred_check
        %p4587 = pneg %p125
      $region38: #{doubleconv_forward.4} parent=35 // pred_check_branch
        %4589 = sbr.rel (%p4587) target = $region40
      $region39: #{doubleconv_forward.4} parent=35 // pred_region
        _
      $region40: #{doubleconv_forward.4} parent=35 // pred_fallthru
        _
      // Predicated region
      $region41: #{doubleconv_forward.4} parent=35 // pred_check
        %p4590 = pneg %p151
      $region42: #{doubleconv_forward.4} parent=35 // pred_check_branch
        %4592 = sbr.rel (%p4590) target = $region44
      $region43: #{doubleconv_forward.4} parent=35 // pred_region
        _
      $region44: #{doubleconv_forward.4} parent=35 // pred_fallthru
        _
      // Predicated region
      $region45: #{doubleconv_forward.4} parent=35 // pred_check
        %p4593 = pneg %p177
      $region46: #{doubleconv_forward.4} parent=35 // pred_check_branch
        %4595 = sbr.rel (%p4593) target = $region48
      $region47: #{doubleconv_forward.4} parent=35 // pred_region
        _
      $region48: #{doubleconv_forward.4} parent=35 // pred_fallthru
        _
    $region36: #{doubleconv_forward.4} parent=5 // pred_fallthru
      _
    %p4596 = scmp.le.s32.totalorder 2, %s13
    // Predicated region
    $region49: #{doubleconv_forward.4} parent=5 // pred_check
      %p4597 = pneg %p4596
    $region50: #{doubleconv_forward.4} parent=5 // pred_check_branch
      %4599 = sbr.rel (%p4597) target = $region52
    $region51: #{doubleconv_forward.4} parent=5 // pred_region
      %s4600 = ssub.s32 %s13, 2
      // Predicated region
      $region53: #{doubleconv_forward.4} parent=51 // pred_check
        %p4601 = pneg %p131
      $region54: #{doubleconv_forward.4} parent=51 // pred_check_branch
        %4603 = sbr.rel (%p4601) target = $region56
      $region55: #{doubleconv_forward.4} parent=51 // pred_region
        %p4604 = scmp.lt.s32.totalorder %s19, 1
        %s4605 = scalar_select %p4604, %s19, 1
        %s4606 = smul.addr %s4605, 32
        %s4607 = smul.addr %s4606, 4
        %s4608 = scalar_lea.vmem %s4, %s4607
      $region56: #{doubleconv_forward.4} parent=51 // pred_fallthru
        _
      // Predicated region
      $region57: #{doubleconv_forward.4} parent=51 // pred_check
        %p4609 = pneg %p157
      $region58: #{doubleconv_forward.4} parent=51 // pred_check_branch
        %4611 = sbr.rel (%p4609) target = $region60
      $region59: #{doubleconv_forward.4} parent=51 // pred_region
        %p4612 = scmp.lt.s32.totalorder %s19, 1
        %s4613 = scalar_select %p4612, %s19, 1
        %s4614 = scalar_lea.vmem %s5, %s4613
      $region60: #{doubleconv_forward.4} parent=51 // pred_fallthru
        _
      // Predicated region
      $region61: #{doubleconv_forward.4} parent=51 // pred_check
        %p4615 = pneg %p183
      $region62: #{doubleconv_forward.4} parent=51 // pred_check_branch
        %4617 = sbr.rel (%p4615) target = $region64
      $region63: #{doubleconv_forward.4} parent=51 // pred_region
        %p4618 = scmp.lt.s32.totalorder %s19, 1
        %s4619 = scalar_select %p4618, %s19, 1
        %s4620 = scalar_lea.vmem %s6, %s4619
      $region64: #{doubleconv_forward.4} parent=51 // pred_fallthru
        _
    $region52: #{doubleconv_forward.4} parent=5 // pred_fallthru
      _
  $region6: #{doubleconv_forward.4} parent=0 // loop_footer
    %s17 = sadd.s32 1, %s13
  $region7: #{doubleconv_forward.4} parent=0 // loop_footer_branch
    %12 = sbr.rel target = $region3
  $region8: #{doubleconv_forward.4} parent=0 // loop_exit
    _

</llo_original>
